<compile_context>
chip_gen: v7x
topology: tpu7x:2x2x1
jax: 0.10.0
libtpu: 0.0.40
codegen_flags: <defaults>
</compile_context>

<pallas_src>
import functools
import math

import jax
import jax.numpy as jnp
from jax import lax
from jax.experimental import pallas as pl
from jax.experimental.pallas import tpu as pltpu

NEG_INF = -1e9  # additive mask fill (stands in for PyTorch's float('-inf'))
LN_EPS = 1e-5


# ----------------------------------------------------------------------------
# In-kernel helpers (operate on VMEM-resident values; everything stays on-chip)
# ----------------------------------------------------------------------------
def _layer_norm(x, g, b):
    mean = jnp.mean(x, axis=-1, keepdims=True)
    var = jnp.mean(jnp.square(x - mean), axis=-1, keepdims=True)
    return (x - mean) * lax.rsqrt(var + LN_EPS) * g + b


def _ffn(x, w1_ref, b1_ref, w2_ref, b2_ref):
    """relu(x@W1+b1)@W2+b2 — the (L, F) intermediate never leaves vregs."""
    h = jnp.dot(x.astype(jnp.bfloat16), w1_ref[...],
                preferred_element_type=jnp.float32) + b1_ref[...]
    h = jnp.maximum(h, 0.0)
    return jnp.dot(h.astype(jnp.bfloat16), w2_ref[...],
                   preferred_element_type=jnp.float32) + b2_ref[...]


def _mha(x, kv, wq_ref, bq_ref, wk_ref, bk_ref, wv_ref, bv_ref, wo_ref, bo_ref,
         *, num_heads, mask=None, causal=False):
    """Multi-head attention + output projection for one batch element.

    x: (Lq, E) f32 query source, kv: (Lk, E) f32 key/value source.
    Per-head weights wq/wk/wv: (H, E, Dh) bf16 (q pre-scaled by 1/sqrt(Dh)),
    wo: (H, Dh, E) bf16.  Heads are unrolled (H is small) and indexed on the
    leading weight dim; concat(heads) @ W_o is computed as a sum of per-head
    (Dh, E) projections, avoiding any lane-dim concat/slice.
    """
    Lq, Lk = x.shape[0], kv.shape[0]
    e_out = wo_ref.shape[2]
    xb = x.astype(jnp.bfloat16)
    kvb = kv.astype(jnp.bfloat16)

    causal_bias = None
    if causal:
        row = lax.broadcasted_iota(jnp.int32, (Lq, Lk), 0)
        col = lax.broadcasted_iota(jnp.int32, (Lq, Lk), 1)
        causal_bias = jnp.where(col > row, NEG_INF, 0.0).astype(jnp.float32)

    out = jnp.zeros((Lq, e_out), jnp.float32)
    for h in range(num_heads):
        q = jnp.dot(xb, wq_ref[h], preferred_element_type=jnp.float32) + bq_ref[h]
        k = jnp.dot(kvb, wk_ref[h], preferred_element_type=jnp.float32) + bk_ref[h]
        v = jnp.dot(kvb, wv_ref[h], preferred_element_type=jnp.float32) + bv_ref[h]
        s = jnp.einsum("qd,kd->qk", q.astype(jnp.bfloat16), k.astype(jnp.bfloat16),
                       preferred_element_type=jnp.float32)
        if mask is not None:
            s = s + mask            # (1, Lk) additive key-padding mask
        if causal_bias is not None:
            s = s + causal_bias
        s = s - jnp.max(s, axis=-1, keepdims=True)
        p = jnp.exp(s)
        p = p * pl.reciprocal(jnp.sum(p, axis=-1, keepdims=True), approx=True)
        ctx = jnp.dot(p.astype(jnp.bfloat16), v.astype(jnp.bfloat16),
                      preferred_element_type=jnp.float32)            # (Lq, Dh)
        out = out + jnp.dot(ctx.astype(jnp.bfloat16), wo_ref[h],
                            preferred_element_type=jnp.float32)
    return out + bo_ref[...]


# ----------------------------------------------------------------------------
# Fused layer kernels (one grid step = one batch element, whole layer in VMEM)
# ----------------------------------------------------------------------------
def _encoder_layer_kernel(x_ref, mask_ref,
                          wq, bq, wk, bk, wv, bv, wo, bo,
                          g1, b1, w1, fb1, w2, fb2, g2, b2,
                          *rest, num_heads, final_norm):
    if final_norm:
        fg, fbeta, o_ref = rest
    else:
        (o_ref,) = rest
    x = x_ref[...]                                               # (S, E)
    attn = _mha(x, x, wq, bq, wk, bk, wv, bv, wo, bo,
                num_heads=num_heads, mask=mask_ref[...])
    y = _layer_norm(x + attn, g1[...], b1[...])
    z = _layer_norm(y + _ffn(y, w1, fb1, w2, fb2), g2[...], b2[...])
    if final_norm:                                               # fused encoder.norm
        z = _layer_norm(z, fg[...], fbeta[...])
    o_ref[...] = z.astype(o_ref.dtype)


def _decoder_layer_kernel(x_ref, mem_ref,
                          swq, sbq, swk, sbk, swv, sbv, swo, sbo, g1, b1,
                          cwq, cbq, cwk, cbk, cwv, cbv, cwo, cbo, g2, b2,
                          w1, fb1, w2, fb2, g3, b3, o_ref, *, num_heads):
    x = x_ref[...]                                               # (T, E)
    mem = mem_ref[...]                                           # (S, E)
    # Masked self-attention (causal mask built in-kernel).
    sa = _mha(x, x, swq, sbq, swk, sbk, swv, sbv, swo, sbo,
              num_heads=num_heads, causal=True)
    y = _layer_norm(x + sa, g1[...], b1[...])
    # Cross-attention: no mask (memory_key_padding_mask=None in the reference).
    ca = _mha(y, mem, cwq, cbq, cwk, cbk, cwv, cbv, cwo, cbo, num_heads=num_heads)
    z = _layer_norm(y + ca, g2[...], b2[...])
    w = _layer_norm(z + _ffn(z, w1, fb1, w2, fb2), g3[...], b3[...])
    o_ref[...] = w.astype(o_ref.dtype)


def _norm_head_kernel(x_ref, g_ref, b_ref, w_ref, bias_ref, o_ref):
    """Final decoder LayerNorm + fc_out head (lane-dense padded vocab)."""
    y = _layer_norm(x_ref[...], g_ref[...], b_ref[...])
    o_ref[...] = (jnp.dot(y.astype(jnp.bfloat16), w_ref[...],
                          preferred_element_type=jnp.float32)
                  + bias_ref[...]).astype(o_ref.dtype)


# ----------------------------------------------------------------------------
# pallas_call wrappers: grid over batch, full blocks, shared (resident) weights
# ----------------------------------------------------------------------------
def _batched_spec(a):
    nd = a.ndim
    return pl.BlockSpec((None,) + tuple(a.shape[1:]),
                        lambda n, _k=nd - 1: (n,) + (0,) * _k)


def _shared_spec(a):
    nd = a.ndim
    return pl.BlockSpec(tuple(a.shape), lambda n, _k=nd: (0,) * _k)


def _call_per_batch(kernel_fn, batched, shared, out_tail, *, out_dtype=jnp.float32):
    n = batched[0].shape[0]
    out_tail = tuple(out_tail)
    out_spec = pl.BlockSpec((None,) + out_tail,
                            lambda i, _k=len(out_tail): (i,) + (0,) * _k)
    return pl.pallas_call(
        kernel_fn,
        out_shape=jax.ShapeDtypeStruct((n,) + out_tail, out_dtype),
        grid=(n,),
        in_specs=[_batched_spec(a) for a in batched] + [_shared_spec(a) for a in shared],
        out_specs=out_spec,
        compiler_params=pltpu.CompilerParams(dimension_semantics=("parallel",)),
    )(*batched, *shared)


def encoder_layer_pallas(x, pad_mask, p, num_heads, final_norm=None):
    """x: (N, S, E) f32, pad_mask: (N, 1, S) additive f32."""
    N, S, E = x.shape
    a = p["attn"]
    shared = [a["wq"], a["bq"], a["wk"], a["bk"], a["wv"], a["bv"], a["wo"], a["bo"],
              p["ln1_g"], p["ln1_b"], p["w1"], p["b1"], p["w2"], p["b2"],
              p["ln2_g"], p["ln2_b"]]
    if final_norm is not None:
        shared += [final_norm[0], final_norm[1]]
    kernel = functools.partial(_encoder_layer_kernel, num_heads=num_heads,
                               final_norm=final_norm is not None)
    return _call_per_batch(kernel, [x, pad_mask], shared, (S, E))


def decoder_layer_pallas(x, memory, p, num_heads):
    """x: (N, T, E) f32, memory: (N, S, E) f32."""
    N, T, E = x.shape
    sa, ca = p["attn"], p["cross"]
    shared = [sa["wq"], sa["bq"], sa["wk"], sa["bk"], sa["wv"], sa["bv"], sa["wo"], sa["bo"],
              p["ln1_g"], p["ln1_b"],
              ca["wq"], ca["bq"], ca["wk"], ca["bk"], ca["wv"], ca["bv"], ca["wo"], ca["bo"],
              p["ln2_g"], p["ln2_b"],
              p["w1"], p["b1"], p["w2"], p["b2"], p["ln3_g"], p["ln3_b"]]
    kernel = functools.partial(_decoder_layer_kernel, num_heads=num_heads)
    return _call_per_batch(kernel, [x, memory], shared, (T, E))


def norm_head_pallas(x, g, b, w, bias):
    """x: (N, T, E) -> (N, T, Vp) with Vp a multiple of 128 (lane-dense store)."""
    N, T, E = x.shape
    Vp = w.shape[1]
    return _call_per_batch(_norm_head_kernel, [x], [g, b, w, bias], (T, Vp))


# ----------------------------------------------------------------------------
# Forward pass (embedding gathers + boundary transpose stay in plain JAX)
# ----------------------------------------------------------------------------
def transformer_forward(params, src, trg, *, num_heads, src_pad_idx):
    """src: (S, N), trg: (T, N) int32 token ids -> logits (T, N, trg_vocab)."""
    S, N = src.shape
    T, _ = trg.shape
    V_trg = params["trg_word_emb"].shape[0]

    # Batch-major activations (N, L, E): each kernel grid step works on one
    # contiguous (L, E) tile -> no per-layer head/batch transposes anywhere.
    src_bm = src.T                                   # (N, S)
    trg_bm = trg.T                                   # (N, T)
    embed_src = (jnp.take(params["src_word_emb"], src_bm, axis=0)
                 + params["src_pos_emb"][None, :S, :])
    embed_trg = (jnp.take(params["trg_word_emb"], trg_bm, axis=0)
                 + params["trg_pos_emb"][None, :T, :])
    # TODO(synk): dropout is identity (inference / eval() semantics).

    # src key-padding mask as a tiny additive (N, 1, S) array, broadcast in-kernel.
    # NOTE: -1e9 instead of -inf; documented divergence for all-padding rows.
    pad_mask = jnp.where((src_bm == src_pad_idx)[:, None, :],
                         NEG_INF, 0.0).astype(jnp.float32)

    # Encoder stack (final encoder LayerNorm fused into the last layer kernel).
    memory = embed_src
    n_enc = len(params["encoder_layers"])
    for li, lp in enumerate(params["encoder_layers"]):
        fn = (params["enc_norm_g"], params["enc_norm_b"]) if li == n_enc - 1 else None
        memory = encoder_layer_pallas(memory, pad_mask, lp, num_heads, final_norm=fn)

    # Decoder stack.
    out = embed_trg
    for lp in params["decoder_layers"]:
        out = decoder_layer_pallas(out, memory, lp, num_heads)

    # Final decoder LayerNorm + fc_out head in one kernel (lane-dense output).
    logits_p = norm_head_pallas(out, params["dec_norm_g"], params["dec_norm_b"],
                                params["fc_w"], params["fc_b"])   # (N, T, Vp)
    logits = logits_p[:, :, :V_trg]                               # (N, T, V)
    return jnp.transpose(logits, (1, 0, 2))                       # (T, N, V)


# ----------------------------------------------------------------------------
# Deterministic parameter init (per-head bf16 weights, q pre-scaled, padded head)
# ----------------------------------------------------------------------------
def _init_params(key, *, E, V_src, V_trg, max_len, H, n_enc, n_dec, F):
    Dh = E // H
    q_scale = 1.0 / math.sqrt(Dh)
    keys = iter(jax.random.split(key, 1024))

    def nrm(shape, s=0.05, dtype=jnp.float32):
        return (s * jax.random.normal(next(keys), shape)).astype(dtype)

    def attn_block():
        # Per-head projection weights; the softmax 1/sqrt(Dh) is folded into q.
        return {
            "wq": (nrm((H, E, Dh)) * q_scale).astype(jnp.bfloat16),
            "bq": nrm((H, 1, Dh)) * q_scale,
            "wk": nrm((H, E, Dh), dtype=jnp.bfloat16), "bk": nrm((H, 1, Dh)),
            "wv": nrm((H, E, Dh), dtype=jnp.bfloat16), "bv": nrm((H, 1, Dh)),
            "wo": nrm((H, Dh, E), dtype=jnp.bfloat16), "bo": nrm((1, E)),
        }

    def enc_layer():
        return {
            "attn": attn_block(),
            "w1": nrm((E, F), dtype=jnp.bfloat16), "b1": nrm((1, F)),
            "w2": nrm((F, E), dtype=jnp.bfloat16), "b2": nrm((1, E)),
            "ln1_g": jnp.ones((1, E), jnp.float32), "ln1_b": jnp.zeros((1, E), jnp.float32),
            "ln2_g": jnp.ones((1, E), jnp.float32), "ln2_b": jnp.zeros((1, E), jnp.float32),
        }

    def dec_layer():
        d = enc_layer()
        d["cross"] = attn_block()
        d["ln3_g"] = jnp.ones((1, E), jnp.float32)
        d["ln3_b"] = jnp.zeros((1, E), jnp.float32)
        return d

    # fc_out padded to a lane-dense (multiple of 128) output width; the extra
    # columns are exact zeros and are sliced off after the kernel.
    Vp = -(-V_trg // 128) * 128
    fc_w = jnp.zeros((E, Vp), jnp.float32).at[:, :V_trg].set(nrm((E, V_trg)))
    fc_b = jnp.zeros((1, Vp), jnp.float32).at[:, :V_trg].set(nrm((1, V_trg)))

    return {
        "src_word_emb": nrm((V_src, E), 0.1),
        "src_pos_emb": nrm((max_len, E), 0.1),
        "trg_word_emb": nrm((V_trg, E), 0.1),
        "trg_pos_emb": nrm((max_len, E), 0.1),
        "encoder_layers": [enc_layer() for _ in range(n_enc)],
        "decoder_layers": [dec_layer() for _ in range(n_dec)],
        "enc_norm_g": jnp.ones((1, E), jnp.float32), "enc_norm_b": jnp.zeros((1, E), jnp.float32),
        "dec_norm_g": jnp.ones((1, E), jnp.float32), "dec_norm_b": jnp.zeros((1, E), jnp.float32),
        "fc_w": fc_w.astype(jnp.bfloat16),
        "fc_b": fc_b,
    }


if __name__ == "__main__":
    # Small, module-consistent config.
    E, H = 32, 2
    n_enc, n_dec = 2, 2
    F_dim = 64                 # forward_expansion -> dim_feedforward
    max_len = 16
    V_src, V_trg = 50, 60
    src_pad_idx = 0
    S, T, N = 10, 8, 2         # src seq len, trg seq len, batch

    root = jax.random.PRNGKey(0)
    k_par, k_src, k_trg = jax.random.split(root, 3)
    params = _init_params(k_par, E=E, V_src=V_src, V_trg=V_trg, max_len=max_len,
                          H=H, n_enc=n_enc, n_dec=n_dec, F=F_dim)

    src = jax.random.randint(k_src, (S, N), 1, V_src, dtype=jnp.int32)
    src = src.at[S - 2:, 0].set(src_pad_idx)       # a few padding tokens
    trg = jax.random.randint(k_trg, (T, N), 1, V_trg, dtype=jnp.int32)

    fwd = jax.jit(functools.partial(transformer_forward,
                                    num_heads=H, src_pad_idx=src_pad_idx))
    logits = fwd(params, src, trg)
    jax.block_until_ready(logits)
    assert logits.shape == (T, N, V_trg)
    assert bool(jnp.all(jnp.isfinite(logits)))
    print("KERNEL_OK")
</pallas_src>

<mosaic_0001>
module attributes {stable_mosaic.version = 11 : i64} {
  func.func @_encoder_layer_kernel(%arg0: i32, %arg1: memref<1x10x32xf32, #tpu.memory_space<vmem>>, %arg2: memref<1x1x10xf32, #tpu.memory_space<vmem>>, %arg3: memref<2x32x16xbf16, #tpu.memory_space<vmem>>, %arg4: memref<2x1x16xf32, #tpu.memory_space<vmem>>, %arg5: memref<2x32x16xbf16, #tpu.memory_space<vmem>>, %arg6: memref<2x1x16xf32, #tpu.memory_space<vmem>>, %arg7: memref<2x32x16xbf16, #tpu.memory_space<vmem>>, %arg8: memref<2x1x16xf32, #tpu.memory_space<vmem>>, %arg9: memref<2x16x32xbf16, #tpu.memory_space<vmem>>, %arg10: memref<1x32xf32, #tpu.memory_space<vmem>>, %arg11: memref<1x32xf32, #tpu.memory_space<vmem>>, %arg12: memref<1x32xf32, #tpu.memory_space<vmem>>, %arg13: memref<32x64xbf16, #tpu.memory_space<vmem>>, %arg14: memref<1x64xf32, #tpu.memory_space<vmem>>, %arg15: memref<64x32xbf16, #tpu.memory_space<vmem>>, %arg16: memref<1x32xf32, #tpu.memory_space<vmem>>, %arg17: memref<1x32xf32, #tpu.memory_space<vmem>>, %arg18: memref<1x32xf32, #tpu.memory_space<vmem>>, %arg19: memref<1x10x32xf32, #tpu.memory_space<vmem>>) attributes {dimension_semantics = [#tpu.dimension_semantics<parallel>], iteration_bounds = array<i64: 2>, scalar_prefetch = 0 : i64, scratch_operands = 0 : i64, tpu.core_type = #tpu.core_type<tc>, window_params = [{transform_indices = @transform_0, window_bounds = array<i64: 1, 10, 32>}, {transform_indices = @transform_1, window_bounds = array<i64: 1, 1, 10>}, {pipeline_mode = #tpu.pipeline_mode<synchronous>, transform_indices = @transform_2, window_bounds = array<i64: 2, 32, 16>}, {pipeline_mode = #tpu.pipeline_mode<synchronous>, transform_indices = @transform_3, window_bounds = array<i64: 2, 1, 16>}, {pipeline_mode = #tpu.pipeline_mode<synchronous>, transform_indices = @transform_4, window_bounds = array<i64: 2, 32, 16>}, {pipeline_mode = #tpu.pipeline_mode<synchronous>, transform_indices = @transform_5, window_bounds = array<i64: 2, 1, 16>}, {pipeline_mode = #tpu.pipeline_mode<synchronous>, transform_indices = @transform_6, window_bounds = array<i64: 2, 32, 16>}, {pipeline_mode = #tpu.pipeline_mode<synchronous>, transform_indices = @transform_7, window_bounds = array<i64: 2, 1, 16>}, {pipeline_mode = #tpu.pipeline_mode<synchronous>, transform_indices = @transform_8, window_bounds = array<i64: 2, 16, 32>}, {pipeline_mode = #tpu.pipeline_mode<synchronous>, transform_indices = @transform_9, window_bounds = array<i64: 1, 32>}, {pipeline_mode = #tpu.pipeline_mode<synchronous>, transform_indices = @transform_10, window_bounds = array<i64: 1, 32>}, {pipeline_mode = #tpu.pipeline_mode<synchronous>, transform_indices = @transform_11, window_bounds = array<i64: 1, 32>}, {pipeline_mode = #tpu.pipeline_mode<synchronous>, transform_indices = @transform_12, window_bounds = array<i64: 32, 64>}, {pipeline_mode = #tpu.pipeline_mode<synchronous>, transform_indices = @transform_13, window_bounds = array<i64: 1, 64>}, {pipeline_mode = #tpu.pipeline_mode<synchronous>, transform_indices = @transform_14, window_bounds = array<i64: 64, 32>}, {pipeline_mode = #tpu.pipeline_mode<synchronous>, transform_indices = @transform_15, window_bounds = array<i64: 1, 32>}, {pipeline_mode = #tpu.pipeline_mode<synchronous>, transform_indices = @transform_16, window_bounds = array<i64: 1, 32>}, {pipeline_mode = #tpu.pipeline_mode<synchronous>, transform_indices = @transform_17, window_bounds = array<i64: 1, 32>}, {transform_indices = @transform_18, window_bounds = array<i64: 1, 10, 32>}]} {
    %c0 = arith.constant 0 : index
    %c0_0 = arith.constant 0 : index
    %c0_1 = arith.constant 0 : index
    %0 = vector.load %arg1[%c0, %c0_0, %c0_1] : memref<1x10x32xf32, #tpu.memory_space<vmem>>, vector<1x10x32xf32>
    %1 = vector.shape_cast %0 : vector<1x10x32xf32> to vector<10x32xf32>
    %c0_2 = arith.constant 0 : index
    %c0_3 = arith.constant 0 : index
    %c0_4 = arith.constant 0 : index
    %2 = vector.load %arg2[%c0_2, %c0_3, %c0_4] : memref<1x1x10xf32, #tpu.memory_space<vmem>>, vector<1x1x10xf32>
    %3 = vector.shape_cast %2 : vector<1x1x10xf32> to vector<1x10xf32>
    %4 = arith.truncf %1 : vector<10x32xf32> to vector<10x32xbf16>
    %5 = arith.truncf %1 : vector<10x32xf32> to vector<10x32xbf16>
    %cst = arith.constant 0.000000e+00 : f32
    %6 = vector.broadcast %cst : f32 to vector<10x32xf32>
    %c0_5 = arith.constant 0 : index
    %c0_6 = arith.constant 0 : index
    %c0_7 = arith.constant 0 : index
    %7 = vector.load %arg3[%c0_5, %c0_6, %c0_7] : memref<2x32x16xbf16, #tpu.memory_space<vmem>>, vector<1x32x16xbf16>
    %8 = vector.shape_cast %7 : vector<1x32x16xbf16> to vector<32x16xbf16>
    %cst_8 = arith.constant dense<0.000000e+00> : vector<10x16xf32>
    %9 = tpu.matmul %4, %8, %cst_8 {dimension_numbers = #tpu.dot_dimension_numbers<[1], [0], [0], [1], [0, 0, 1, 1], [], []>} : vector<10x32xbf16>, vector<32x16xbf16>, vector<10x16xf32> -> vector<10x16xf32>
    %c0_9 = arith.constant 0 : index
    %c0_10 = arith.constant 0 : index
    %c0_11 = arith.constant 0 : index
    %10 = vector.load %arg4[%c0_9, %c0_10, %c0_11] : memref<2x1x16xf32, #tpu.memory_space<vmem>>, vector<1x1x16xf32>
    %11 = vector.shape_cast %10 : vector<1x1x16xf32> to vector<1x16xf32>
    %12 = vector.broadcast %11 : vector<1x16xf32> to vector<10x16xf32>
    %13 = arith.addf %9, %12 : vector<10x16xf32>
    %c0_12 = arith.constant 0 : index
    %c0_13 = arith.constant 0 : index
    %c0_14 = arith.constant 0 : index
    %14 = vector.load %arg5[%c0_12, %c0_13, %c0_14] : memref<2x32x16xbf16, #tpu.memory_space<vmem>>, vector<1x32x16xbf16>
    %15 = vector.shape_cast %14 : vector<1x32x16xbf16> to vector<32x16xbf16>
    %cst_15 = arith.constant dense<0.000000e+00> : vector<10x16xf32>
    %16 = tpu.matmul %5, %15, %cst_15 {dimension_numbers = #tpu.dot_dimension_numbers<[1], [0], [0], [1], [0, 0, 1, 1], [], []>} : vector<10x32xbf16>, vector<32x16xbf16>, vector<10x16xf32> -> vector<10x16xf32>
    %c0_16 = arith.constant 0 : index
    %c0_17 = arith.constant 0 : index
    %c0_18 = arith.constant 0 : index
    %17 = vector.load %arg6[%c0_16, %c0_17, %c0_18] : memref<2x1x16xf32, #tpu.memory_space<vmem>>, vector<1x1x16xf32>
    %18 = vector.shape_cast %17 : vector<1x1x16xf32> to vector<1x16xf32>
    %19 = vector.broadcast %18 : vector<1x16xf32> to vector<10x16xf32>
    %20 = arith.addf %16, %19 : vector<10x16xf32>
    %c0_19 = arith.constant 0 : index
    %c0_20 = arith.constant 0 : index
    %c0_21 = arith.constant 0 : index
    %21 = vector.load %arg7[%c0_19, %c0_20, %c0_21] : memref<2x32x16xbf16, #tpu.memory_space<vmem>>, vector<1x32x16xbf16>
    %22 = vector.shape_cast %21 : vector<1x32x16xbf16> to vector<32x16xbf16>
    %cst_22 = arith.constant dense<0.000000e+00> : vector<10x16xf32>
    %23 = tpu.matmul %5, %22, %cst_22 {dimension_numbers = #tpu.dot_dimension_numbers<[1], [0], [0], [1], [0, 0, 1, 1], [], []>} : vector<10x32xbf16>, vector<32x16xbf16>, vector<10x16xf32> -> vector<10x16xf32>
    %c0_23 = arith.constant 0 : index
    %c0_24 = arith.constant 0 : index
    %c0_25 = arith.constant 0 : index
    %24 = vector.load %arg8[%c0_23, %c0_24, %c0_25] : memref<2x1x16xf32, #tpu.memory_space<vmem>>, vector<1x1x16xf32>
    %25 = vector.shape_cast %24 : vector<1x1x16xf32> to vector<1x16xf32>
    %26 = vector.broadcast %25 : vector<1x16xf32> to vector<10x16xf32>
    %27 = arith.addf %23, %26 : vector<10x16xf32>
    %28 = arith.truncf %13 : vector<10x16xf32> to vector<10x16xbf16>
    %29 = arith.truncf %20 : vector<10x16xf32> to vector<10x16xbf16>
    "tpu.trace_start"() <{level = 10 : i32, message = "qd,kd->qk"}> : () -> ()
    %cst_26 = arith.constant dense<0.000000e+00> : vector<10x10xf32>
    %30 = tpu.matmul %28, %29, %cst_26 {dimension_numbers = #tpu.dot_dimension_numbers<[1], [1], [0], [0], [0, 0, 1, 0], [], []>} : vector<10x16xbf16>, vector<10x16xbf16>, vector<10x10xf32> -> vector<10x10xf32>
    "tpu.trace_stop"() : () -> ()
    %31 = vector.broadcast %3 : vector<1x10xf32> to vector<10x10xf32>
    %32 = arith.addf %30, %31 : vector<10x10xf32>
    %cst_27 = arith.constant dense<0xFF800000> : vector<10xf32>
    %33 = vector.multi_reduction <maximumf>, %32, %cst_27 [1] : vector<10x10xf32> to vector<10xf32>
    %34 = vector.shape_cast %33 : vector<10xf32> to vector<10x1xf32>
    %35 = vector.broadcast %34 : vector<10x1xf32> to vector<10x10xf32>
    %36 = arith.subf %32, %35 : vector<10x10xf32>
    %37 = math.exp %36 : vector<10x10xf32>
    %cst_28 = arith.constant dense<0.000000e+00> : vector<10xf32>
    %38 = vector.multi_reduction <add>, %37, %cst_28 [1] : vector<10x10xf32> to vector<10xf32>
    %39 = vector.shape_cast %38 : vector<10xf32> to vector<10x1xf32>
    %40 = tpu.reciprocal %39 {approx = true} : vector<10x1xf32> -> vector<10x1xf32>
    %41 = vector.broadcast %40 : vector<10x1xf32> to vector<10x10xf32>
    %42 = arith.mulf %37, %41 : vector<10x10xf32>
    %43 = arith.truncf %42 : vector<10x10xf32> to vector<10x10xbf16>
    %44 = arith.truncf %27 : vector<10x16xf32> to vector<10x16xbf16>
    %cst_29 = arith.constant dense<0.000000e+00> : vector<10x16xf32>
    %45 = tpu.matmul %43, %44, %cst_29 {dimension_numbers = #tpu.dot_dimension_numbers<[1], [0], [0], [1], [0, 0, 1, 1], [], []>} : vector<10x10xbf16>, vector<10x16xbf16>, vector<10x16xf32> -> vector<10x16xf32>
    %46 = arith.truncf %45 : vector<10x16xf32> to vector<10x16xbf16>
    %c0_30 = arith.constant 0 : index
    %c0_31 = arith.constant 0 : index
    %c0_32 = arith.constant 0 : index
    %47 = vector.load %arg9[%c0_30, %c0_31, %c0_32] : memref<2x16x32xbf16, #tpu.memory_space<vmem>>, vector<1x16x32xbf16>
    %48 = vector.shape_cast %47 : vector<1x16x32xbf16> to vector<16x32xbf16>
    %cst_33 = arith.constant dense<0.000000e+00> : vector<10x32xf32>
    %49 = tpu.matmul %46, %48, %cst_33 {dimension_numbers = #tpu.dot_dimension_numbers<[1], [0], [0], [1], [0, 0, 1, 1], [], []>} : vector<10x16xbf16>, vector<16x32xbf16>, vector<10x32xf32> -> vector<10x32xf32>
    %50 = arith.addf %6, %49 : vector<10x32xf32>
    %c1 = arith.constant 1 : index
    %c0_34 = arith.constant 0 : index
    %c0_35 = arith.constant 0 : index
    %51 = vector.load %arg3[%c1, %c0_34, %c0_35] : memref<2x32x16xbf16, #tpu.memory_space<vmem>>, vector<1x32x16xbf16>
    %52 = vector.shape_cast %51 : vector<1x32x16xbf16> to vector<32x16xbf16>
    %cst_36 = arith.constant dense<0.000000e+00> : vector<10x16xf32>
    %53 = tpu.matmul %4, %52, %cst_36 {dimension_numbers = #tpu.dot_dimension_numbers<[1], [0], [0], [1], [0, 0, 1, 1], [], []>} : vector<10x32xbf16>, vector<32x16xbf16>, vector<10x16xf32> -> vector<10x16xf32>
    %c1_37 = arith.constant 1 : index
    %c0_38 = arith.constant 0 : index
    %c0_39 = arith.constant 0 : index
    %54 = vector.load %arg4[%c1_37, %c0_38, %c0_39] : memref<2x1x16xf32, #tpu.memory_space<vmem>>, vector<1x1x16xf32>
    %55 = vector.shape_cast %54 : vector<1x1x16xf32> to vector<1x16xf32>
    %56 = vector.broadcast %55 : vector<1x16xf32> to vector<10x16xf32>
    %57 = arith.addf %53, %56 : vector<10x16xf32>
    %c1_40 = arith.constant 1 : index
    %c0_41 = arith.constant 0 : index
    %c0_42 = arith.constant 0 : index
    %58 = vector.load %arg5[%c1_40, %c0_41, %c0_42] : memref<2x32x16xbf16, #tpu.memory_space<vmem>>, vector<1x32x16xbf16>
    %59 = vector.shape_cast %58 : vector<1x32x16xbf16> to vector<32x16xbf16>
    %cst_43 = arith.constant dense<0.000000e+00> : vector<10x16xf32>
    %60 = tpu.matmul %5, %59, %cst_43 {dimension_numbers = #tpu.dot_dimension_numbers<[1], [0], [0], [1], [0, 0, 1, 1], [], []>} : vector<10x32xbf16>, vector<32x16xbf16>, vector<10x16xf32> -> vector<10x16xf32>
    %c1_44 = arith.constant 1 : index
    %c0_45 = arith.constant 0 : index
    %c0_46 = arith.constant 0 : index
    %61 = vector.load %arg6[%c1_44, %c0_45, %c0_46] : memref<2x1x16xf32, #tpu.memory_space<vmem>>, vector<1x1x16xf32>
    %62 = vector.shape_cast %61 : vector<1x1x16xf32> to vector<1x16xf32>
    %63 = vector.broadcast %62 : vector<1x16xf32> to vector<10x16xf32>
    %64 = arith.addf %60, %63 : vector<10x16xf32>
    %c1_47 = arith.constant 1 : index
    %c0_48 = arith.constant 0 : index
    %c0_49 = arith.constant 0 : index
    %65 = vector.load %arg7[%c1_47, %c0_48, %c0_49] : memref<2x32x16xbf16, #tpu.memory_space<vmem>>, vector<1x32x16xbf16>
    %66 = vector.shape_cast %65 : vector<1x32x16xbf16> to vector<32x16xbf16>
    %cst_50 = arith.constant dense<0.000000e+00> : vector<10x16xf32>
    %67 = tpu.matmul %5, %66, %cst_50 {dimension_numbers = #tpu.dot_dimension_numbers<[1], [0], [0], [1], [0, 0, 1, 1], [], []>} : vector<10x32xbf16>, vector<32x16xbf16>, vector<10x16xf32> -> vector<10x16xf32>
    %c1_51 = arith.constant 1 : index
    %c0_52 = arith.constant 0 : index
    %c0_53 = arith.constant 0 : index
    %68 = vector.load %arg8[%c1_51, %c0_52, %c0_53] : memref<2x1x16xf32, #tpu.memory_space<vmem>>, vector<1x1x16xf32>
    %69 = vector.shape_cast %68 : vector<1x1x16xf32> to vector<1x16xf32>
    %70 = vector.broadcast %69 : vector<1x16xf32> to vector<10x16xf32>
    %71 = arith.addf %67, %70 : vector<10x16xf32>
    %72 = arith.truncf %57 : vector<10x16xf32> to vector<10x16xbf16>
    %73 = arith.truncf %64 : vector<10x16xf32> to vector<10x16xbf16>
    "tpu.trace_start"() <{level = 10 : i32, message = "qd,kd->qk"}> : () -> ()
    %cst_54 = arith.constant dense<0.000000e+00> : vector<10x10xf32>
    %74 = tpu.matmul %72, %73, %cst_54 {dimension_numbers = #tpu.dot_dimension_numbers<[1], [1], [0], [0], [0, 0, 1, 0], [], []>} : vector<10x16xbf16>, vector<10x16xbf16>, vector<10x10xf32> -> vector<10x10xf32>
    "tpu.trace_stop"() : () -> ()
    %75 = vector.broadcast %3 : vector<1x10xf32> to vector<10x10xf32>
    %76 = arith.addf %74, %75 : vector<10x10xf32>
    %cst_55 = arith.constant dense<0xFF800000> : vector<10xf32>
    %77 = vector.multi_reduction <maximumf>, %76, %cst_55 [1] : vector<10x10xf32> to vector<10xf32>
    %78 = vector.shape_cast %77 : vector<10xf32> to vector<10x1xf32>
    %79 = vector.broadcast %78 : vector<10x1xf32> to vector<10x10xf32>
    %80 = arith.subf %76, %79 : vector<10x10xf32>
    %81 = math.exp %80 : vector<10x10xf32>
    %cst_56 = arith.constant dense<0.000000e+00> : vector<10xf32>
    %82 = vector.multi_reduction <add>, %81, %cst_56 [1] : vector<10x10xf32> to vector<10xf32>
    %83 = vector.shape_cast %82 : vector<10xf32> to vector<10x1xf32>
    %84 = tpu.reciprocal %83 {approx = true} : vector<10x1xf32> -> vector<10x1xf32>
    %85 = vector.broadcast %84 : vector<10x1xf32> to vector<10x10xf32>
    %86 = arith.mulf %81, %85 : vector<10x10xf32>
    %87 = arith.truncf %86 : vector<10x10xf32> to vector<10x10xbf16>
    %88 = arith.truncf %71 : vector<10x16xf32> to vector<10x16xbf16>
    %cst_57 = arith.constant dense<0.000000e+00> : vector<10x16xf32>
    %89 = tpu.matmul %87, %88, %cst_57 {dimension_numbers = #tpu.dot_dimension_numbers<[1], [0], [0], [1], [0, 0, 1, 1], [], []>} : vector<10x10xbf16>, vector<10x16xbf16>, vector<10x16xf32> -> vector<10x16xf32>
    %90 = arith.truncf %89 : vector<10x16xf32> to vector<10x16xbf16>
    %c1_58 = arith.constant 1 : index
    %c0_59 = arith.constant 0 : index
    %c0_60 = arith.constant 0 : index
    %91 = vector.load %arg9[%c1_58, %c0_59, %c0_60] : memref<2x16x32xbf16, #tpu.memory_space<vmem>>, vector<1x16x32xbf16>
    %92 = vector.shape_cast %91 : vector<1x16x32xbf16> to vector<16x32xbf16>
    %cst_61 = arith.constant dense<0.000000e+00> : vector<10x32xf32>
    %93 = tpu.matmul %90, %92, %cst_61 {dimension_numbers = #tpu.dot_dimension_numbers<[1], [0], [0], [1], [0, 0, 1, 1], [], []>} : vector<10x16xbf16>, vector<16x32xbf16>, vector<10x32xf32> -> vector<10x32xf32>
    %94 = arith.addf %50, %93 : vector<10x32xf32>
    %c0_62 = arith.constant 0 : index
    %c0_63 = arith.constant 0 : index
    %95 = vector.load %arg10[%c0_62, %c0_63] : memref<1x32xf32, #tpu.memory_space<vmem>>, vector<1x32xf32>
    %96 = vector.broadcast %95 : vector<1x32xf32> to vector<10x32xf32>
    %97 = arith.addf %94, %96 : vector<10x32xf32>
    %98 = arith.addf %1, %97 : vector<10x32xf32>
    %c0_64 = arith.constant 0 : index
    %c0_65 = arith.constant 0 : index
    %99 = vector.load %arg11[%c0_64, %c0_65] : memref<1x32xf32, #tpu.memory_space<vmem>>, vector<1x32xf32>
    %c0_66 = arith.constant 0 : index
    %c0_67 = arith.constant 0 : index
    %100 = vector.load %arg12[%c0_66, %c0_67] : memref<1x32xf32, #tpu.memory_space<vmem>>, vector<1x32xf32>
    %cst_68 = arith.constant dense<0.000000e+00> : vector<10xf32>
    %101 = vector.multi_reduction <add>, %98, %cst_68 [1] : vector<10x32xf32> to vector<10xf32>
    %102 = vector.shape_cast %101 : vector<10xf32> to vector<10x1xf32>
    %cst_69 = arith.constant 3.200000e+01 : f32
    %103 = vector.broadcast %cst_69 : f32 to vector<10x1xf32>
    %104 = arith.divf %102, %103 : vector<10x1xf32>
    %105 = vector.broadcast %104 : vector<10x1xf32> to vector<10x32xf32>
    %106 = arith.subf %98, %105 : vector<10x32xf32>
    %107 = arith.mulf %106, %106 : vector<10x32xf32>
    %cst_70 = arith.constant dense<0.000000e+00> : vector<10xf32>
    %108 = vector.multi_reduction <add>, %107, %cst_70 [1] : vector<10x32xf32> to vector<10xf32>
    %109 = vector.shape_cast %108 : vector<10xf32> to vector<10x1xf32>
    %cst_71 = arith.constant 3.200000e+01 : f32
    %110 = vector.broadcast %cst_71 : f32 to vector<10x1xf32>
    %111 = arith.divf %109, %110 : vector<10x1xf32>
    %112 = vector.broadcast %104 : vector<10x1xf32> to vector<10x32xf32>
    %113 = arith.subf %98, %112 : vector<10x32xf32>
    %cst_72 = arith.constant 9.99999974E-6 : f32
    %114 = vector.broadcast %cst_72 : f32 to vector<10x1xf32>
    %115 = arith.addf %111, %114 : vector<10x1xf32>
    %116 = math.rsqrt %115 : vector<10x1xf32>
    %117 = vector.broadcast %116 : vector<10x1xf32> to vector<10x32xf32>
    %118 = arith.mulf %113, %117 : vector<10x32xf32>
    %119 = vector.broadcast %99 : vector<1x32xf32> to vector<10x32xf32>
    %120 = arith.mulf %118, %119 : vector<10x32xf32>
    %121 = vector.broadcast %100 : vector<1x32xf32> to vector<10x32xf32>
    %122 = arith.addf %120, %121 : vector<10x32xf32>
    %123 = arith.truncf %122 : vector<10x32xf32> to vector<10x32xbf16>
    %c0_73 = arith.constant 0 : index
    %c0_74 = arith.constant 0 : index
    %124 = vector.load %arg13[%c0_73, %c0_74] : memref<32x64xbf16, #tpu.memory_space<vmem>>, vector<32x64xbf16>
    %cst_75 = arith.constant dense<0.000000e+00> : vector<10x64xf32>
    %125 = tpu.matmul %123, %124, %cst_75 {dimension_numbers = #tpu.dot_dimension_numbers<[1], [0], [0], [1], [0, 0, 1, 1], [], []>} : vector<10x32xbf16>, vector<32x64xbf16>, vector<10x64xf32> -> vector<10x64xf32>
    %c0_76 = arith.constant 0 : index
    %c0_77 = arith.constant 0 : index
    %126 = vector.load %arg14[%c0_76, %c0_77] : memref<1x64xf32, #tpu.memory_space<vmem>>, vector<1x64xf32>
    %127 = vector.broadcast %126 : vector<1x64xf32> to vector<10x64xf32>
    %128 = arith.addf %125, %127 : vector<10x64xf32>
    %cst_78 = arith.constant 0.000000e+00 : f32
    %129 = vector.broadcast %cst_78 : f32 to vector<10x64xf32>
    %130 = arith.maximumf %128, %129 : vector<10x64xf32>
    %131 = arith.truncf %130 : vector<10x64xf32> to vector<10x64xbf16>
    %c0_79 = arith.constant 0 : index
    %c0_80 = arith.constant 0 : index
    %132 = vector.load %arg15[%c0_79, %c0_80] : memref<64x32xbf16, #tpu.memory_space<vmem>>, vector<64x32xbf16>
    %cst_81 = arith.constant dense<0.000000e+00> : vector<10x32xf32>
    %133 = tpu.matmul %131, %132, %cst_81 {dimension_numbers = #tpu.dot_dimension_numbers<[1], [0], [0], [1], [0, 0, 1, 1], [], []>} : vector<10x64xbf16>, vector<64x32xbf16>, vector<10x32xf32> -> vector<10x32xf32>
    %c0_82 = arith.constant 0 : index
    %c0_83 = arith.constant 0 : index
    %134 = vector.load %arg16[%c0_82, %c0_83] : memref<1x32xf32, #tpu.memory_space<vmem>>, vector<1x32xf32>
    %135 = vector.broadcast %134 : vector<1x32xf32> to vector<10x32xf32>
    %136 = arith.addf %133, %135 : vector<10x32xf32>
    %137 = arith.addf %122, %136 : vector<10x32xf32>
    %c0_84 = arith.constant 0 : index
    %c0_85 = arith.constant 0 : index
    %138 = vector.load %arg17[%c0_84, %c0_85] : memref<1x32xf32, #tpu.memory_space<vmem>>, vector<1x32xf32>
    %c0_86 = arith.constant 0 : index
    %c0_87 = arith.constant 0 : index
    %139 = vector.load %arg18[%c0_86, %c0_87] : memref<1x32xf32, #tpu.memory_space<vmem>>, vector<1x32xf32>
    %cst_88 = arith.constant dense<0.000000e+00> : vector<10xf32>
    %140 = vector.multi_reduction <add>, %137, %cst_88 [1] : vector<10x32xf32> to vector<10xf32>
    %141 = vector.shape_cast %140 : vector<10xf32> to vector<10x1xf32>
    %cst_89 = arith.constant 3.200000e+01 : f32
    %142 = vector.broadcast %cst_89 : f32 to vector<10x1xf32>
    %143 = arith.divf %141, %142 : vector<10x1xf32>
    %144 = vector.broadcast %143 : vector<10x1xf32> to vector<10x32xf32>
    %145 = arith.subf %137, %144 : vector<10x32xf32>
    %146 = arith.mulf %145, %145 : vector<10x32xf32>
    %cst_90 = arith.constant dense<0.000000e+00> : vector<10xf32>
    %147 = vector.multi_reduction <add>, %146, %cst_90 [1] : vector<10x32xf32> to vector<10xf32>
    %148 = vector.shape_cast %147 : vector<10xf32> to vector<10x1xf32>
    %cst_91 = arith.constant 3.200000e+01 : f32
    %149 = vector.broadcast %cst_91 : f32 to vector<10x1xf32>
    %150 = arith.divf %148, %149 : vector<10x1xf32>
    %151 = vector.broadcast %143 : vector<10x1xf32> to vector<10x32xf32>
    %152 = arith.subf %137, %151 : vector<10x32xf32>
    %cst_92 = arith.constant 9.99999974E-6 : f32
    %153 = vector.broadcast %cst_92 : f32 to vector<10x1xf32>
    %154 = arith.addf %150, %153 : vector<10x1xf32>
    %155 = math.rsqrt %154 : vector<10x1xf32>
    %156 = vector.broadcast %155 : vector<10x1xf32> to vector<10x32xf32>
    %157 = arith.mulf %152, %156 : vector<10x32xf32>
    %158 = vector.broadcast %138 : vector<1x32xf32> to vector<10x32xf32>
    %159 = arith.mulf %157, %158 : vector<10x32xf32>
    %160 = vector.broadcast %139 : vector<1x32xf32> to vector<10x32xf32>
    %161 = arith.addf %159, %160 : vector<10x32xf32>
    %c0_93 = arith.constant 0 : index
    %c0_94 = arith.constant 0 : index
    %c0_95 = arith.constant 0 : index
    %162 = vector.load %arg19[%c0_93, %c0_94, %c0_95] : memref<1x10x32xf32, #tpu.memory_space<vmem>>, vector<1x10x32xf32>
    %163 = vector.shape_cast %162 : vector<1x10x32xf32> to vector<10x32xf32>
    %164 = vector.shape_cast %161 : vector<10x32xf32> to vector<1x10x32xf32>
    tpu.vector_store %arg19[%c0_93, %c0_94, %c0_95], %164 {strides = array<i32>} : memref<1x10x32xf32, #tpu.memory_space<vmem>>, vector<1x10x32xf32>,
    return
  }
  func.func @transform_0(%arg0: i32) -> (i32, i32, i32) {
    %c0_i32 = arith.constant 0 : i32
    %c0_i32_0 = arith.constant 0 : i32
    %c0_i32_1 = arith.constant 0 : i32
    return %arg0, %c0_i32, %c0_i32_0 : i32, i32, i32
  }
  func.func @transform_1(%arg0: i32) -> (i32, i32, i32) {
    %c0_i32 = arith.constant 0 : i32
    %c0_i32_0 = arith.constant 0 : i32
    %c0_i32_1 = arith.constant 0 : i32
    return %arg0, %c0_i32, %c0_i32_0 : i32, i32, i32
  }
  func.func @transform_2(%arg0: i32) -> (i32, i32, i32) {
    %c0_i32 = arith.constant 0 : i32
    %c0_i32_0 = arith.constant 0 : i32
    %c0_i32_1 = arith.constant 0 : i32
    %c0_i32_2 = arith.constant 0 : i32
    return %c0_i32, %c0_i32_0, %c0_i32_1 : i32, i32, i32
  }
  func.func @transform_3(%arg0: i32) -> (i32, i32, i32) {
    %c0_i32 = arith.constant 0 : i32
    %c0_i32_0 = arith.constant 0 : i32
    %c0_i32_1 = arith.constant 0 : i32
    %c0_i32_2 = arith.constant 0 : i32
    return %c0_i32, %c0_i32_0, %c0_i32_1 : i32, i32, i32
  }
  func.func @transform_4(%arg0: i32) -> (i32, i32, i32) {
    %c0_i32 = arith.constant 0 : i32
    %c0_i32_0 = arith.constant 0 : i32
    %c0_i32_1 = arith.constant 0 : i32
    %c0_i32_2 = arith.constant 0 : i32
    return %c0_i32, %c0_i32_0, %c0_i32_1 : i32, i32, i32
  }
  func.func @transform_5(%arg0: i32) -> (i32, i32, i32) {
    %c0_i32 = arith.constant 0 : i32
    %c0_i32_0 = arith.constant 0 : i32
    %c0_i32_1 = arith.constant 0 : i32
    %c0_i32_2 = arith.constant 0 : i32
    return %c0_i32, %c0_i32_0, %c0_i32_1 : i32, i32, i32
  }
  func.func @transform_6(%arg0: i32) -> (i32, i32, i32) {
    %c0_i32 = arith.constant 0 : i32
    %c0_i32_0 = arith.constant 0 : i32
    %c0_i32_1 = arith.constant 0 : i32
    %c0_i32_2 = arith.constant 0 : i32
    return %c0_i32, %c0_i32_0, %c0_i32_1 : i32, i32, i32
  }
  func.func @transform_7(%arg0: i32) -> (i32, i32, i32) {
    %c0_i32 = arith.constant 0 : i32
    %c0_i32_0 = arith.constant 0 : i32
    %c0_i32_1 = arith.constant 0 : i32
    %c0_i32_2 = arith.constant 0 : i32
    return %c0_i32, %c0_i32_0, %c0_i32_1 : i32, i32, i32
  }
  func.func @transform_8(%arg0: i32) -> (i32, i32, i32) {
    %c0_i32 = arith.constant 0 : i32
    %c0_i32_0 = arith.constant 0 : i32
    %c0_i32_1 = arith.constant 0 : i32
    %c0_i32_2 = arith.constant 0 : i32
    return %c0_i32, %c0_i32_0, %c0_i32_1 : i32, i32, i32
  }
  func.func @transform_9(%arg0: i32) -> (i32, i32) {
    %c0_i32 = arith.constant 0 : i32
    %c0_i32_0 = arith.constant 0 : i32
    %c0_i32_1 = arith.constant 0 : i32
    return %c0_i32, %c0_i32_0 : i32, i32
  }
  func.func @transform_10(%arg0: i32) -> (i32, i32) {
    %c0_i32 = arith.constant 0 : i32
    %c0_i32_0 = arith.constant 0 : i32
    %c0_i32_1 = arith.constant 0 : i32
    return %c0_i32, %c0_i32_0 : i32, i32
  }
  func.func @transform_11(%arg0: i32) -> (i32, i32) {
    %c0_i32 = arith.constant 0 : i32
    %c0_i32_0 = arith.constant 0 : i32
    %c0_i32_1 = arith.constant 0 : i32
    return %c0_i32, %c0_i32_0 : i32, i32
  }
  func.func @transform_12(%arg0: i32) -> (i32, i32) {
    %c0_i32 = arith.constant 0 : i32
    %c0_i32_0 = arith.constant 0 : i32
    %c0_i32_1 = arith.constant 0 : i32
    return %c0_i32, %c0_i32_0 : i32, i32
  }
  func.func @transform_13(%arg0: i32) -> (i32, i32) {
    %c0_i32 = arith.constant 0 : i32
    %c0_i32_0 = arith.constant 0 : i32
    %c0_i32_1 = arith.constant 0 : i32
    return %c0_i32, %c0_i32_0 : i32, i32
  }
  func.func @transform_14(%arg0: i32) -> (i32, i32) {
    %c0_i32 = arith.constant 0 : i32
    %c0_i32_0 = arith.constant 0 : i32
    %c0_i32_1 = arith.constant 0 : i32
    return %c0_i32, %c0_i32_0 : i32, i32
  }
  func.func @transform_15(%arg0: i32) -> (i32, i32) {
    %c0_i32 = arith.constant 0 : i32
    %c0_i32_0 = arith.constant 0 : i32
    %c0_i32_1 = arith.constant 0 : i32
    return %c0_i32, %c0_i32_0 : i32, i32
  }
  func.func @transform_16(%arg0: i32) -> (i32, i32) {
    %c0_i32 = arith.constant 0 : i32
    %c0_i32_0 = arith.constant 0 : i32
    %c0_i32_1 = arith.constant 0 : i32
    return %c0_i32, %c0_i32_0 : i32, i32
  }
  func.func @transform_17(%arg0: i32) -> (i32, i32) {
    %c0_i32 = arith.constant 0 : i32
    %c0_i32_0 = arith.constant 0 : i32
    %c0_i32_1 = arith.constant 0 : i32
    return %c0_i32, %c0_i32_0 : i32, i32
  }
  func.func @transform_18(%arg0: i32) -> (i32, i32, i32) {
    %c0_i32 = arith.constant 0 : i32
    %c0_i32_0 = arith.constant 0 : i32
    %c0_i32_1 = arith.constant 0 : i32
    return %arg0, %c0_i32, %c0_i32_0 : i32, i32, i32
  }
}

module attributes {stable_mosaic.version = 11 : i64} {
  func.func @_encoder_layer_kernel(%arg0: i32, %arg1: memref<1x10x32xf32, #tpu.memory_space<vmem>>, %arg2: memref<1x1x10xf32, #tpu.memory_space<vmem>>, %arg3: memref<2x32x16xbf16, #tpu.memory_space<vmem>>, %arg4: memref<2x1x16xf32, #tpu.memory_space<vmem>>, %arg5: memref<2x32x16xbf16, #tpu.memory_space<vmem>>, %arg6: memref<2x1x16xf32, #tpu.memory_space<vmem>>, %arg7: memref<2x32x16xbf16, #tpu.memory_space<vmem>>, %arg8: memref<2x1x16xf32, #tpu.memory_space<vmem>>, %arg9: memref<2x16x32xbf16, #tpu.memory_space<vmem>>, %arg10: memref<1x32xf32, #tpu.memory_space<vmem>>, %arg11: memref<1x32xf32, #tpu.memory_space<vmem>>, %arg12: memref<1x32xf32, #tpu.memory_space<vmem>>, %arg13: memref<32x64xbf16, #tpu.memory_space<vmem>>, %arg14: memref<1x64xf32, #tpu.memory_space<vmem>>, %arg15: memref<64x32xbf16, #tpu.memory_space<vmem>>, %arg16: memref<1x32xf32, #tpu.memory_space<vmem>>, %arg17: memref<1x32xf32, #tpu.memory_space<vmem>>, %arg18: memref<1x32xf32, #tpu.memory_space<vmem>>, %arg19: memref<1x32xf32, #tpu.memory_space<vmem>>, %arg20: memref<1x32xf32, #tpu.memory_space<vmem>>, %arg21: memref<1x10x32xf32, #tpu.memory_space<vmem>>) attributes {dimension_semantics = [#tpu.dimension_semantics<parallel>], iteration_bounds = array<i64: 2>, scalar_prefetch = 0 : i64, scratch_operands = 0 : i64, tpu.core_type = #tpu.core_type<tc>, window_params = [{transform_indices = @transform_0, window_bounds = array<i64: 1, 10, 32>}, {transform_indices = @transform_1, window_bounds = array<i64: 1, 1, 10>}, {pipeline_mode = #tpu.pipeline_mode<synchronous>, transform_indices = @transform_2, window_bounds = array<i64: 2, 32, 16>}, {pipeline_mode = #tpu.pipeline_mode<synchronous>, transform_indices = @transform_3, window_bounds = array<i64: 2, 1, 16>}, {pipeline_mode = #tpu.pipeline_mode<synchronous>, transform_indices = @transform_4, window_bounds = array<i64: 2, 32, 16>}, {pipeline_mode = #tpu.pipeline_mode<synchronous>, transform_indices = @transform_5, window_bounds = array<i64: 2, 1, 16>}, {pipeline_mode = #tpu.pipeline_mode<synchronous>, transform_indices = @transform_6, window_bounds = array<i64: 2, 32, 16>}, {pipeline_mode = #tpu.pipeline_mode<synchronous>, transform_indices = @transform_7, window_bounds = array<i64: 2, 1, 16>}, {pipeline_mode = #tpu.pipeline_mode<synchronous>, transform_indices = @transform_8, window_bounds = array<i64: 2, 16, 32>}, {pipeline_mode = #tpu.pipeline_mode<synchronous>, transform_indices = @transform_9, window_bounds = array<i64: 1, 32>}, {pipeline_mode = #tpu.pipeline_mode<synchronous>, transform_indices = @transform_10, window_bounds = array<i64: 1, 32>}, {pipeline_mode = #tpu.pipeline_mode<synchronous>, transform_indices = @transform_11, window_bounds = array<i64: 1, 32>}, {pipeline_mode = #tpu.pipeline_mode<synchronous>, transform_indices = @transform_12, window_bounds = array<i64: 32, 64>}, {pipeline_mode = #tpu.pipeline_mode<synchronous>, transform_indices = @transform_13, window_bounds = array<i64: 1, 64>}, {pipeline_mode = #tpu.pipeline_mode<synchronous>, transform_indices = @transform_14, window_bounds = array<i64: 64, 32>}, {pipeline_mode = #tpu.pipeline_mode<synchronous>, transform_indices = @transform_15, window_bounds = array<i64: 1, 32>}, {pipeline_mode = #tpu.pipeline_mode<synchronous>, transform_indices = @transform_16, window_bounds = array<i64: 1, 32>}, {pipeline_mode = #tpu.pipeline_mode<synchronous>, transform_indices = @transform_17, window_bounds = array<i64: 1, 32>}, {pipeline_mode = #tpu.pipeline_mode<synchronous>, transform_indices = @transform_18, window_bounds = array<i64: 1, 32>}, {pipeline_mode = #tpu.pipeline_mode<synchronous>, transform_indices = @transform_19, window_bounds = array<i64: 1, 32>}, {transform_indices = @transform_20, window_bounds = array<i64: 1, 10, 32>}]} {
    %c0 = arith.constant 0 : index
    %c0_0 = arith.constant 0 : index
    %c0_1 = arith.constant 0 : index
    %0 = vector.load %arg1[%c0, %c0_0, %c0_1] : memref<1x10x32xf32, #tpu.memory_space<vmem>>, vector<1x10x32xf32>
    %1 = vector.shape_cast %0 : vector<1x10x32xf32> to vector<10x32xf32>
    %c0_2 = arith.constant 0 : index
    %c0_3 = arith.constant 0 : index
    %c0_4 = arith.constant 0 : index
    %2 = vector.load %arg2[%c0_2, %c0_3, %c0_4] : memref<1x1x10xf32, #tpu.memory_space<vmem>>, vector<1x1x10xf32>
    %3 = vector.shape_cast %2 : vector<1x1x10xf32> to vector<1x10xf32>
    %4 = arith.truncf %1 : vector<10x32xf32> to vector<10x32xbf16>
    %5 = arith.truncf %1 : vector<10x32xf32> to vector<10x32xbf16>
    %cst = arith.constant 0.000000e+00 : f32
    %6 = vector.broadcast %cst : f32 to vector<10x32xf32>
    %c0_5 = arith.constant 0 : index
    %c0_6 = arith.constant 0 : index
    %c0_7 = arith.constant 0 : index
    %7 = vector.load %arg3[%c0_5, %c0_6, %c0_7] : memref<2x32x16xbf16, #tpu.memory_space<vmem>>, vector<1x32x16xbf16>
    %8 = vector.shape_cast %7 : vector<1x32x16xbf16> to vector<32x16xbf16>
    %cst_8 = arith.constant dense<0.000000e+00> : vector<10x16xf32>
    %9 = tpu.matmul %4, %8, %cst_8 {dimension_numbers = #tpu.dot_dimension_numbers<[1], [0], [0], [1], [0, 0, 1, 1], [], []>} : vector<10x32xbf16>, vector<32x16xbf16>, vector<10x16xf32> -> vector<10x16xf32>
    %c0_9 = arith.constant 0 : index
    %c0_10 = arith.constant 0 : index
    %c0_11 = arith.constant 0 : index
    %10 = vector.load %arg4[%c0_9, %c0_10, %c0_11] : memref<2x1x16xf32, #tpu.memory_space<vmem>>, vector<1x1x16xf32>
    %11 = vector.shape_cast %10 : vector<1x1x16xf32> to vector<1x16xf32>
    %12 = vector.broadcast %11 : vector<1x16xf32> to vector<10x16xf32>
    %13 = arith.addf %9, %12 : vector<10x16xf32>
    %c0_12 = arith.constant 0 : index
    %c0_13 = arith.constant 0 : index
    %c0_14 = arith.constant 0 : index
    %14 = vector.load %arg5[%c0_12, %c0_13, %c0_14] : memref<2x32x16xbf16, #tpu.memory_space<vmem>>, vector<1x32x16xbf16>
    %15 = vector.shape_cast %14 : vector<1x32x16xbf16> to vector<32x16xbf16>
    %cst_15 = arith.constant dense<0.000000e+00> : vector<10x16xf32>
    %16 = tpu.matmul %5, %15, %cst_15 {dimension_numbers = #tpu.dot_dimension_numbers<[1], [0], [0], [1], [0, 0, 1, 1], [], []>} : vector<10x32xbf16>, vector<32x16xbf16>, vector<10x16xf32> -> vector<10x16xf32>
    %c0_16 = arith.constant 0 : index
    %c0_17 = arith.constant 0 : index
    %c0_18 = arith.constant 0 : index
    %17 = vector.load %arg6[%c0_16, %c0_17, %c0_18] : memref<2x1x16xf32, #tpu.memory_space<vmem>>, vector<1x1x16xf32>
    %18 = vector.shape_cast %17 : vector<1x1x16xf32> to vector<1x16xf32>
    %19 = vector.broadcast %18 : vector<1x16xf32> to vector<10x16xf32>
    %20 = arith.addf %16, %19 : vector<10x16xf32>
    %c0_19 = arith.constant 0 : index
    %c0_20 = arith.constant 0 : index
    %c0_21 = arith.constant 0 : index
    %21 = vector.load %arg7[%c0_19, %c0_20, %c0_21] : memref<2x32x16xbf16, #tpu.memory_space<vmem>>, vector<1x32x16xbf16>
    %22 = vector.shape_cast %21 : vector<1x32x16xbf16> to vector<32x16xbf16>
    %cst_22 = arith.constant dense<0.000000e+00> : vector<10x16xf32>
    %23 = tpu.matmul %5, %22, %cst_22 {dimension_numbers = #tpu.dot_dimension_numbers<[1], [0], [0], [1], [0, 0, 1, 1], [], []>} : vector<10x32xbf16>, vector<32x16xbf16>, vector<10x16xf32> -> vector<10x16xf32>
    %c0_23 = arith.constant 0 : index
    %c0_24 = arith.constant 0 : index
    %c0_25 = arith.constant 0 : index
    %24 = vector.load %arg8[%c0_23, %c0_24, %c0_25] : memref<2x1x16xf32, #tpu.memory_space<vmem>>, vector<1x1x16xf32>
    %25 = vector.shape_cast %24 : vector<1x1x16xf32> to vector<1x16xf32>
    %26 = vector.broadcast %25 : vector<1x16xf32> to vector<10x16xf32>
    %27 = arith.addf %23, %26 : vector<10x16xf32>
    %28 = arith.truncf %13 : vector<10x16xf32> to vector<10x16xbf16>
    %29 = arith.truncf %20 : vector<10x16xf32> to vector<10x16xbf16>
    "tpu.trace_start"() <{level = 10 : i32, message = "qd,kd->qk"}> : () -> ()
    %cst_26 = arith.constant dense<0.000000e+00> : vector<10x10xf32>
    %30 = tpu.matmul %28, %29, %cst_26 {dimension_numbers = #tpu.dot_dimension_numbers<[1], [1], [0], [0], [0, 0, 1, 0], [], []>} : vector<10x16xbf16>, vector<10x16xbf16>, vector<10x10xf32> -> vector<10x10xf32>
    "tpu.trace_stop"() : () -> ()
    %31 = vector.broadcast %3 : vector<1x10xf32> to vector<10x10xf32>
    %32 = arith.addf %30, %31 : vector<10x10xf32>
    %cst_27 = arith.constant dense<0xFF800000> : vector<10xf32>
    %33 = vector.multi_reduction <maximumf>, %32, %cst_27 [1] : vector<10x10xf32> to vector<10xf32>
    %34 = vector.shape_cast %33 : vector<10xf32> to vector<10x1xf32>
    %35 = vector.broadcast %34 : vector<10x1xf32> to vector<10x10xf32>
    %36 = arith.subf %32, %35 : vector<10x10xf32>
    %37 = math.exp %36 : vector<10x10xf32>
    %cst_28 = arith.constant dense<0.000000e+00> : vector<10xf32>
    %38 = vector.multi_reduction <add>, %37, %cst_28 [1] : vector<10x10xf32> to vector<10xf32>
    %39 = vector.shape_cast %38 : vector<10xf32> to vector<10x1xf32>
    %40 = tpu.reciprocal %39 {approx = true} : vector<10x1xf32> -> vector<10x1xf32>
    %41 = vector.broadcast %40 : vector<10x1xf32> to vector<10x10xf32>
    %42 = arith.mulf %37, %41 : vector<10x10xf32>
    %43 = arith.truncf %42 : vector<10x10xf32> to vector<10x10xbf16>
    %44 = arith.truncf %27 : vector<10x16xf32> to vector<10x16xbf16>
    %cst_29 = arith.constant dense<0.000000e+00> : vector<10x16xf32>
    %45 = tpu.matmul %43, %44, %cst_29 {dimension_numbers = #tpu.dot_dimension_numbers<[1], [0], [0], [1], [0, 0, 1, 1], [], []>} : vector<10x10xbf16>, vector<10x16xbf16>, vector<10x16xf32> -> vector<10x16xf32>
    %46 = arith.truncf %45 : vector<10x16xf32> to vector<10x16xbf16>
    %c0_30 = arith.constant 0 : index
    %c0_31 = arith.constant 0 : index
    %c0_32 = arith.constant 0 : index
    %47 = vector.load %arg9[%c0_30, %c0_31, %c0_32] : memref<2x16x32xbf16, #tpu.memory_space<vmem>>, vector<1x16x32xbf16>
    %48 = vector.shape_cast %47 : vector<1x16x32xbf16> to vector<16x32xbf16>
    %cst_33 = arith.constant dense<0.000000e+00> : vector<10x32xf32>
    %49 = tpu.matmul %46, %48, %cst_33 {dimension_numbers = #tpu.dot_dimension_numbers<[1], [0], [0], [1], [0, 0, 1, 1], [], []>} : vector<10x16xbf16>, vector<16x32xbf16>, vector<10x32xf32> -> vector<10x32xf32>
    %50 = arith.addf %6, %49 : vector<10x32xf32>
    %c1 = arith.constant 1 : index
    %c0_34 = arith.constant 0 : index
    %c0_35 = arith.constant 0 : index
    %51 = vector.load %arg3[%c1, %c0_34, %c0_35] : memref<2x32x16xbf16, #tpu.memory_space<vmem>>, vector<1x32x16xbf16>
    %52 = vector.shape_cast %51 : vector<1x32x16xbf16> to vector<32x16xbf16>
    %cst_36 = arith.constant dense<0.000000e+00> : vector<10x16xf32>
    %53 = tpu.matmul %4, %52, %cst_36 {dimension_numbers = #tpu.dot_dimension_numbers<[1], [0], [0], [1], [0, 0, 1, 1], [], []>} : vector<10x32xbf16>, vector<32x16xbf16>, vector<10x16xf32> -> vector<10x16xf32>
    %c1_37 = arith.constant 1 : index
    %c0_38 = arith.constant 0 : index
    %c0_39 = arith.constant 0 : index
    %54 = vector.load %arg4[%c1_37, %c0_38, %c0_39] : memref<2x1x16xf32, #tpu.memory_space<vmem>>, vector<1x1x16xf32>
    %55 = vector.shape_cast %54 : vector<1x1x16xf32> to vector<1x16xf32>
    %56 = vector.broadcast %55 : vector<1x16xf32> to vector<10x16xf32>
    %57 = arith.addf %53, %56 : vector<10x16xf32>
    %c1_40 = arith.constant 1 : index
    %c0_41 = arith.constant 0 : index
    %c0_42 = arith.constant 0 : index
    %58 = vector.load %arg5[%c1_40, %c0_41, %c0_42] : memref<2x32x16xbf16, #tpu.memory_space<vmem>>, vector<1x32x16xbf16>
    %59 = vector.shape_cast %58 : vector<1x32x16xbf16> to vector<32x16xbf16>
    %cst_43 = arith.constant dense<0.000000e+00> : vector<10x16xf32>
    %60 = tpu.matmul %5, %59, %cst_43 {dimension_numbers = #tpu.dot_dimension_numbers<[1], [0], [0], [1], [0, 0, 1, 1], [], []>} : vector<10x32xbf16>, vector<32x16xbf16>, vector<10x16xf32> -> vector<10x16xf32>
    %c1_44 = arith.constant 1 : index
    %c0_45 = arith.constant 0 : index
    %c0_46 = arith.constant 0 : index
    %61 = vector.load %arg6[%c1_44, %c0_45, %c0_46] : memref<2x1x16xf32, #tpu.memory_space<vmem>>, vector<1x1x16xf32>
    %62 = vector.shape_cast %61 : vector<1x1x16xf32> to vector<1x16xf32>
    %63 = vector.broadcast %62 : vector<1x16xf32> to vector<10x16xf32>
    %64 = arith.addf %60, %63 : vector<10x16xf32>
    %c1_47 = arith.constant 1 : index
    %c0_48 = arith.constant 0 : index
    %c0_49 = arith.constant 0 : index
    %65 = vector.load %arg7[%c1_47, %c0_48, %c0_49] : memref<2x32x16xbf16, #tpu.memory_space<vmem>>, vector<1x32x16xbf16>
    %66 = vector.shape_cast %65 : vector<1x32x16xbf16> to vector<32x16xbf16>
    %cst_50 = arith.constant dense<0.000000e+00> : vector<10x16xf32>
    %67 = tpu.matmul %5, %66, %cst_50 {dimension_numbers = #tpu.dot_dimension_numbers<[1], [0], [0], [1], [0, 0, 1, 1], [], []>} : vector<10x32xbf16>, vector<32x16xbf16>, vector<10x16xf32> -> vector<10x16xf32>
    %c1_51 = arith.constant 1 : index
    %c0_52 = arith.constant 0 : index
    %c0_53 = arith.constant 0 : index
    %68 = vector.load %arg8[%c1_51, %c0_52, %c0_53] : memref<2x1x16xf32, #tpu.memory_space<vmem>>, vector<1x1x16xf32>
    %69 = vector.shape_cast %68 : vector<1x1x16xf32> to vector<1x16xf32>
    %70 = vector.broadcast %69 : vector<1x16xf32> to vector<10x16xf32>
    %71 = arith.addf %67, %70 : vector<10x16xf32>
    %72 = arith.truncf %57 : vector<10x16xf32> to vector<10x16xbf16>
    %73 = arith.truncf %64 : vector<10x16xf32> to vector<10x16xbf16>
    "tpu.trace_start"() <{level = 10 : i32, message = "qd,kd->qk"}> : () -> ()
    %cst_54 = arith.constant dense<0.000000e+00> : vector<10x10xf32>
    %74 = tpu.matmul %72, %73, %cst_54 {dimension_numbers = #tpu.dot_dimension_numbers<[1], [1], [0], [0], [0, 0, 1, 0], [], []>} : vector<10x16xbf16>, vector<10x16xbf16>, vector<10x10xf32> -> vector<10x10xf32>
    "tpu.trace_stop"() : () -> ()
    %75 = vector.broadcast %3 : vector<1x10xf32> to vector<10x10xf32>
    %76 = arith.addf %74, %75 : vector<10x10xf32>
    %cst_55 = arith.constant dense<0xFF800000> : vector<10xf32>
    %77 = vector.multi_reduction <maximumf>, %76, %cst_55 [1] : vector<10x10xf32> to vector<10xf32>
    %78 = vector.shape_cast %77 : vector<10xf32> to vector<10x1xf32>
    %79 = vector.broadcast %78 : vector<10x1xf32> to vector<10x10xf32>
    %80 = arith.subf %76, %79 : vector<10x10xf32>
    %81 = math.exp %80 : vector<10x10xf32>
    %cst_56 = arith.constant dense<0.000000e+00> : vector<10xf32>
    %82 = vector.multi_reduction <add>, %81, %cst_56 [1] : vector<10x10xf32> to vector<10xf32>
    %83 = vector.shape_cast %82 : vector<10xf32> to vector<10x1xf32>
    %84 = tpu.reciprocal %83 {approx = true} : vector<10x1xf32> -> vector<10x1xf32>
    %85 = vector.broadcast %84 : vector<10x1xf32> to vector<10x10xf32>
    %86 = arith.mulf %81, %85 : vector<10x10xf32>
    %87 = arith.truncf %86 : vector<10x10xf32> to vector<10x10xbf16>
    %88 = arith.truncf %71 : vector<10x16xf32> to vector<10x16xbf16>
    %cst_57 = arith.constant dense<0.000000e+00> : vector<10x16xf32>
    %89 = tpu.matmul %87, %88, %cst_57 {dimension_numbers = #tpu.dot_dimension_numbers<[1], [0], [0], [1], [0, 0, 1, 1], [], []>} : vector<10x10xbf16>, vector<10x16xbf16>, vector<10x16xf32> -> vector<10x16xf32>
    %90 = arith.truncf %89 : vector<10x16xf32> to vector<10x16xbf16>
    %c1_58 = arith.constant 1 : index
    %c0_59 = arith.constant 0 : index
    %c0_60 = arith.constant 0 : index
    %91 = vector.load %arg9[%c1_58, %c0_59, %c0_60] : memref<2x16x32xbf16, #tpu.memory_space<vmem>>, vector<1x16x32xbf16>
    %92 = vector.shape_cast %91 : vector<1x16x32xbf16> to vector<16x32xbf16>
    %cst_61 = arith.constant dense<0.000000e+00> : vector<10x32xf32>
    %93 = tpu.matmul %90, %92, %cst_61 {dimension_numbers = #tpu.dot_dimension_numbers<[1], [0], [0], [1], [0, 0, 1, 1], [], []>} : vector<10x16xbf16>, vector<16x32xbf16>, vector<10x32xf32> -> vector<10x32xf32>
    %94 = arith.addf %50, %93 : vector<10x32xf32>
    %c0_62 = arith.constant 0 : index
    %c0_63 = arith.constant 0 : index
    %95 = vector.load %arg10[%c0_62, %c0_63] : memref<1x32xf32, #tpu.memory_space<vmem>>, vector<1x32xf32>
    %96 = vector.broadcast %95 : vector<1x32xf32> to vector<10x32xf32>
    %97 = arith.addf %94, %96 : vector<10x32xf32>
    %98 = arith.addf %1, %97 : vector<10x32xf32>
    %c0_64 = arith.constant 0 : index
    %c0_65 = arith.constant 0 : index
    %99 = vector.load %arg11[%c0_64, %c0_65] : memref<1x32xf32, #tpu.memory_space<vmem>>, vector<1x32xf32>
    %c0_66 = arith.constant 0 : index
    %c0_67 = arith.constant 0 : index
    %100 = vector.load %arg12[%c0_66, %c0_67] : memref<1x32xf32, #tpu.memory_space<vmem>>, vector<1x32xf32>
    %cst_68 = arith.constant dense<0.000000e+00> : vector<10xf32>
    %101 = vector.multi_reduction <add>, %98, %cst_68 [1] : vector<10x32xf32> to vector<10xf32>
    %102 = vector.shape_cast %101 : vector<10xf32> to vector<10x1xf32>
    %cst_69 = arith.constant 3.200000e+01 : f32
    %103 = vector.broadcast %cst_69 : f32 to vector<10x1xf32>
    %104 = arith.divf %102, %103 : vector<10x1xf32>
    %105 = vector.broadcast %104 : vector<10x1xf32> to vector<10x32xf32>
    %106 = arith.subf %98, %105 : vector<10x32xf32>
    %107 = arith.mulf %106, %106 : vector<10x32xf32>
    %cst_70 = arith.constant dense<0.000000e+00> : vector<10xf32>
    %108 = vector.multi_reduction <add>, %107, %cst_70 [1] : vector<10x32xf32> to vector<10xf32>
    %109 = vector.shape_cast %108 : vector<10xf32> to vector<10x1xf32>
    %cst_71 = arith.constant 3.200000e+01 : f32
    %110 = vector.broadcast %cst_71 : f32 to vector<10x1xf32>
    %111 = arith.divf %109, %110 : vector<10x1xf32>
    %112 = vector.broadcast %104 : vector<10x1xf32> to vector<10x32xf32>
    %113 = arith.subf %98, %112 : vector<10x32xf32>
    %cst_72 = arith.constant 9.99999974E-6 : f32
    %114 = vector.broadcast %cst_72 : f32 to vector<10x1xf32>
    %115 = arith.addf %111, %114 : vector<10x1xf32>
    %116 = math.rsqrt %115 : vector<10x1xf32>
    %117 = vector.broadcast %116 : vector<10x1xf32> to vector<10x32xf32>
    %118 = arith.mulf %113, %117 : vector<10x32xf32>
    %119 = vector.broadcast %99 : vector<1x32xf32> to vector<10x32xf32>
    %120 = arith.mulf %118, %119 : vector<10x32xf32>
    %121 = vector.broadcast %100 : vector<1x32xf32> to vector<10x32xf32>
    %122 = arith.addf %120, %121 : vector<10x32xf32>
    %123 = arith.truncf %122 : vector<10x32xf32> to vector<10x32xbf16>
    %c0_73 = arith.constant 0 : index
    %c0_74 = arith.constant 0 : index
    %124 = vector.load %arg13[%c0_73, %c0_74] : memref<32x64xbf16, #tpu.memory_space<vmem>>, vector<32x64xbf16>
    %cst_75 = arith.constant dense<0.000000e+00> : vector<10x64xf32>
    %125 = tpu.matmul %123, %124, %cst_75 {dimension_numbers = #tpu.dot_dimension_numbers<[1], [0], [0], [1], [0, 0, 1, 1], [], []>} : vector<10x32xbf16>, vector<32x64xbf16>, vector<10x64xf32> -> vector<10x64xf32>
    %c0_76 = arith.constant 0 : index
    %c0_77 = arith.constant 0 : index
    %126 = vector.load %arg14[%c0_76, %c0_77] : memref<1x64xf32, #tpu.memory_space<vmem>>, vector<1x64xf32>
    %127 = vector.broadcast %126 : vector<1x64xf32> to vector<10x64xf32>
    %128 = arith.addf %125, %127 : vector<10x64xf32>
    %cst_78 = arith.constant 0.000000e+00 : f32
    %129 = vector.broadcast %cst_78 : f32 to vector<10x64xf32>
    %130 = arith.maximumf %128, %129 : vector<10x64xf32>
    %131 = arith.truncf %130 : vector<10x64xf32> to vector<10x64xbf16>
    %c0_79 = arith.constant 0 : index
    %c0_80 = arith.constant 0 : index
    %132 = vector.load %arg15[%c0_79, %c0_80] : memref<64x32xbf16, #tpu.memory_space<vmem>>, vector<64x32xbf16>
    %cst_81 = arith.constant dense<0.000000e+00> : vector<10x32xf32>
    %133 = tpu.matmul %131, %132, %cst_81 {dimension_numbers = #tpu.dot_dimension_numbers<[1], [0], [0], [1], [0, 0, 1, 1], [], []>} : vector<10x64xbf16>, vector<64x32xbf16>, vector<10x32xf32> -> vector<10x32xf32>
    %c0_82 = arith.constant 0 : index
    %c0_83 = arith.constant 0 : index
    %134 = vector.load %arg16[%c0_82, %c0_83] : memref<1x32xf32, #tpu.memory_space<vmem>>, vector<1x32xf32>
    %135 = vector.broadcast %134 : vector<1x32xf32> to vector<10x32xf32>
    %136 = arith.addf %133, %135 : vector<10x32xf32>
    %137 = arith.addf %122, %136 : vector<10x32xf32>
    %c0_84 = arith.constant 0 : index
    %c0_85 = arith.constant 0 : index
    %138 = vector.load %arg17[%c0_84, %c0_85] : memref<1x32xf32, #tpu.memory_space<vmem>>, vector<1x32xf32>
    %c0_86 = arith.constant 0 : index
    %c0_87 = arith.constant 0 : index
    %139 = vector.load %arg18[%c0_86, %c0_87] : memref<1x32xf32, #tpu.memory_space<vmem>>, vector<1x32xf32>
    %cst_88 = arith.constant dense<0.000000e+00> : vector<10xf32>
    %140 = vector.multi_reduction <add>, %137, %cst_88 [1] : vector<10x32xf32> to vector<10xf32>
    %141 = vector.shape_cast %140 : vector<10xf32> to vector<10x1xf32>
    %cst_89 = arith.constant 3.200000e+01 : f32
    %142 = vector.broadcast %cst_89 : f32 to vector<10x1xf32>
    %143 = arith.divf %141, %142 : vector<10x1xf32>
    %144 = vector.broadcast %143 : vector<10x1xf32> to vector<10x32xf32>
    %145 = arith.subf %137, %144 : vector<10x32xf32>
    %146 = arith.mulf %145, %145 : vector<10x32xf32>
    %cst_90 = arith.constant dense<0.000000e+00> : vector<10xf32>
    %147 = vector.multi_reduction <add>, %146, %cst_90 [1] : vector<10x32xf32> to vector<10xf32>
    %148 = vector.shape_cast %147 : vector<10xf32> to vector<10x1xf32>
    %cst_91 = arith.constant 3.200000e+01 : f32
    %149 = vector.broadcast %cst_91 : f32 to vector<10x1xf32>
    %150 = arith.divf %148, %149 : vector<10x1xf32>
    %151 = vector.broadcast %143 : vector<10x1xf32> to vector<10x32xf32>
    %152 = arith.subf %137, %151 : vector<10x32xf32>
    %cst_92 = arith.constant 9.99999974E-6 : f32
    %153 = vector.broadcast %cst_92 : f32 to vector<10x1xf32>
    %154 = arith.addf %150, %153 : vector<10x1xf32>
    %155 = math.rsqrt %154 : vector<10x1xf32>
    %156 = vector.broadcast %155 : vector<10x1xf32> to vector<10x32xf32>
    %157 = arith.mulf %152, %156 : vector<10x32xf32>
    %158 = vector.broadcast %138 : vector<1x32xf32> to vector<10x32xf32>
    %159 = arith.mulf %157, %158 : vector<10x32xf32>
    %160 = vector.broadcast %139 : vector<1x32xf32> to vector<10x32xf32>
    %161 = arith.addf %159, %160 : vector<10x32xf32>
    %c0_93 = arith.constant 0 : index
    %c0_94 = arith.constant 0 : index
    %162 = vector.load %arg19[%c0_93, %c0_94] : memref<1x32xf32, #tpu.memory_space<vmem>>, vector<1x32xf32>
    %c0_95 = arith.constant 0 : index
    %c0_96 = arith.constant 0 : index
    %163 = vector.load %arg20[%c0_95, %c0_96] : memref<1x32xf32, #tpu.memory_space<vmem>>, vector<1x32xf32>
    %cst_97 = arith.constant dense<0.000000e+00> : vector<10xf32>
    %164 = vector.multi_reduction <add>, %161, %cst_97 [1] : vector<10x32xf32> to vector<10xf32>
    %165 = vector.shape_cast %164 : vector<10xf32> to vector<10x1xf32>
    %cst_98 = arith.constant 3.200000e+01 : f32
    %166 = vector.broadcast %cst_98 : f32 to vector<10x1xf32>
    %167 = arith.divf %165, %166 : vector<10x1xf32>
    %168 = vector.broadcast %167 : vector<10x1xf32> to vector<10x32xf32>
    %169 = arith.subf %161, %168 : vector<10x32xf32>
    %170 = arith.mulf %169, %169 : vector<10x32xf32>
    %cst_99 = arith.constant dense<0.000000e+00> : vector<10xf32>
    %171 = vector.multi_reduction <add>, %170, %cst_99 [1] : vector<10x32xf32> to vector<10xf32>
    %172 = vector.shape_cast %171 : vector<10xf32> to vector<10x1xf32>
    %cst_100 = arith.constant 3.200000e+01 : f32
    %173 = vector.broadcast %cst_100 : f32 to vector<10x1xf32>
    %174 = arith.divf %172, %173 : vector<10x1xf32>
    %175 = vector.broadcast %167 : vector<10x1xf32> to vector<10x32xf32>
    %176 = arith.subf %161, %175 : vector<10x32xf32>
    %cst_101 = arith.constant 9.99999974E-6 : f32
    %177 = vector.broadcast %cst_101 : f32 to vector<10x1xf32>
    %178 = arith.addf %174, %177 : vector<10x1xf32>
    %179 = math.rsqrt %178 : vector<10x1xf32>
    %180 = vector.broadcast %179 : vector<10x1xf32> to vector<10x32xf32>
    %181 = arith.mulf %176, %180 : vector<10x32xf32>
    %182 = vector.broadcast %162 : vector<1x32xf32> to vector<10x32xf32>
    %183 = arith.mulf %181, %182 : vector<10x32xf32>
    %184 = vector.broadcast %163 : vector<1x32xf32> to vector<10x32xf32>
    %185 = arith.addf %183, %184 : vector<10x32xf32>
    %c0_102 = arith.constant 0 : index
    %c0_103 = arith.constant 0 : index
    %c0_104 = arith.constant 0 : index
    %186 = vector.load %arg21[%c0_102, %c0_103, %c0_104] : memref<1x10x32xf32, #tpu.memory_space<vmem>>, vector<1x10x32xf32>
    %187 = vector.shape_cast %186 : vector<1x10x32xf32> to vector<10x32xf32>
    %188 = vector.shape_cast %185 : vector<10x32xf32> to vector<1x10x32xf32>
    tpu.vector_store %arg21[%c0_102, %c0_103, %c0_104], %188 {strides = array<i32>} : memref<1x10x32xf32, #tpu.memory_space<vmem>>, vector<1x10x32xf32>,
    return
  }
  func.func @transform_0(%arg0: i32) -> (i32, i32, i32) {
    %c0_i32 = arith.constant 0 : i32
    %c0_i32_0 = arith.constant 0 : i32
    %c0_i32_1 = arith.constant 0 : i32
    return %arg0, %c0_i32, %c0_i32_0 : i32, i32, i32
  }
  func.func @transform_1(%arg0: i32) -> (i32, i32, i32) {
    %c0_i32 = arith.constant 0 : i32
    %c0_i32_0 = arith.constant 0 : i32
    %c0_i32_1 = arith.constant 0 : i32
    return %arg0, %c0_i32, %c0_i32_0 : i32, i32, i32
  }
  func.func @transform_2(%arg0: i32) -> (i32, i32, i32) {
    %c0_i32 = arith.constant 0 : i32
    %c0_i32_0 = arith.constant 0 : i32
    %c0_i32_1 = arith.constant 0 : i32
    %c0_i32_2 = arith.constant 0 : i32
    return %c0_i32, %c0_i32_0, %c0_i32_1 : i32, i32, i32
  }
  func.func @transform_3(%arg0: i32) -> (i32, i32, i32) {
    %c0_i32 = arith.constant 0 : i32
    %c0_i32_0 = arith.constant 0 : i32
    %c0_i32_1 = arith.constant 0 : i32
    %c0_i32_2 = arith.constant 0 : i32
    return %c0_i32, %c0_i32_0, %c0_i32_1 : i32, i32, i32
  }
  func.func @transform_4(%arg0: i32) -> (i32, i32, i32) {
    %c0_i32 = arith.constant 0 : i32
    %c0_i32_0 = arith.constant 0 : i32
    %c0_i32_1 = arith.constant 0 : i32
    %c0_i32_2 = arith.constant 0 : i32
    return %c0_i32, %c0_i32_0, %c0_i32_1 : i32, i32, i32
  }
  func.func @transform_5(%arg0: i32) -> (i32, i32, i32) {
    %c0_i32 = arith.constant 0 : i32
    %c0_i32_0 = arith.constant 0 : i32
    %c0_i32_1 = arith.constant 0 : i32
    %c0_i32_2 = arith.constant 0 : i32
    return %c0_i32, %c0_i32_0, %c0_i32_1 : i32, i32, i32
  }
  func.func @transform_6(%arg0: i32) -> (i32, i32, i32) {
    %c0_i32 = arith.constant 0 : i32
    %c0_i32_0 = arith.constant 0 : i32
    %c0_i32_1 = arith.constant 0 : i32
    %c0_i32_2 = arith.constant 0 : i32
    return %c0_i32, %c0_i32_0, %c0_i32_1 : i32, i32, i32
  }
  func.func @transform_7(%arg0: i32) -> (i32, i32, i32) {
    %c0_i32 = arith.constant 0 : i32
    %c0_i32_0 = arith.constant 0 : i32
    %c0_i32_1 = arith.constant 0 : i32
    %c0_i32_2 = arith.constant 0 : i32
    return %c0_i32, %c0_i32_0, %c0_i32_1 : i32, i32, i32
  }
  func.func @transform_8(%arg0: i32) -> (i32, i32, i32) {
    %c0_i32 = arith.constant 0 : i32
    %c0_i32_0 = arith.constant 0 : i32
    %c0_i32_1 = arith.constant 0 : i32
    %c0_i32_2 = arith.constant 0 : i32
    return %c0_i32, %c0_i32_0, %c0_i32_1 : i32, i32, i32
  }
  func.func @transform_9(%arg0: i32) -> (i32, i32) {
    %c0_i32 = arith.constant 0 : i32
    %c0_i32_0 = arith.constant 0 : i32
    %c0_i32_1 = arith.constant 0 : i32
    return %c0_i32, %c0_i32_0 : i32, i32
  }
  func.func @transform_10(%arg0: i32) -> (i32, i32) {
    %c0_i32 = arith.constant 0 : i32
    %c0_i32_0 = arith.constant 0 : i32
    %c0_i32_1 = arith.constant 0 : i32
    return %c0_i32, %c0_i32_0 : i32, i32
  }
  func.func @transform_11(%arg0: i32) -> (i32, i32) {
    %c0_i32 = arith.constant 0 : i32
    %c0_i32_0 = arith.constant 0 : i32
    %c0_i32_1 = arith.constant 0 : i32
    return %c0_i32, %c0_i32_0 : i32, i32
  }
  func.func @transform_12(%arg0: i32) -> (i32, i32) {
    %c0_i32 = arith.constant 0 : i32
    %c0_i32_0 = arith.constant 0 : i32
    %c0_i32_1 = arith.constant 0 : i32
    return %c0_i32, %c0_i32_0 : i32, i32
  }
  func.func @transform_13(%arg0: i32) -> (i32, i32) {
    %c0_i32 = arith.constant 0 : i32
    %c0_i32_0 = arith.constant 0 : i32
    %c0_i32_1 = arith.constant 0 : i32
    return %c0_i32, %c0_i32_0 : i32, i32
  }
  func.func @transform_14(%arg0: i32) -> (i32, i32) {
    %c0_i32 = arith.constant 0 : i32
    %c0_i32_0 = arith.constant 0 : i32
    %c0_i32_1 = arith.constant 0 : i32
    return %c0_i32, %c0_i32_0 : i32, i32
  }
  func.func @transform_15(%arg0: i32) -> (i32, i32) {
    %c0_i32 = arith.constant 0 : i32
    %c0_i32_0 = arith.constant 0 : i32
    %c0_i32_1 = arith.constant 0 : i32
    return %c0_i32, %c0_i32_0 : i32, i32
  }
  func.func @transform_16(%arg0: i32) -> (i32, i32) {
    %c0_i32 = arith.constant 0 : i32
    %c0_i32_0 = arith.constant 0 : i32
    %c0_i32_1 = arith.constant 0 : i32
    return %c0_i32, %c0_i32_0 : i32, i32
  }
  func.func @transform_17(%arg0: i32) -> (i32, i32) {
    %c0_i32 = arith.constant 0 : i32
    %c0_i32_0 = arith.constant 0 : i32
    %c0_i32_1 = arith.constant 0 : i32
    return %c0_i32, %c0_i32_0 : i32, i32
  }
  func.func @transform_18(%arg0: i32) -> (i32, i32) {
    %c0_i32 = arith.constant 0 : i32
    %c0_i32_0 = arith.constant 0 : i32
    %c0_i32_1 = arith.constant 0 : i32
    return %c0_i32, %c0_i32_0 : i32, i32
  }
  func.func @transform_19(%arg0: i32) -> (i32, i32) {
    %c0_i32 = arith.constant 0 : i32
    %c0_i32_0 = arith.constant 0 : i32
    %c0_i32_1 = arith.constant 0 : i32
    return %c0_i32, %c0_i32_0 : i32, i32
  }
  func.func @transform_20(%arg0: i32) -> (i32, i32, i32) {
    %c0_i32 = arith.constant 0 : i32
    %c0_i32_0 = arith.constant 0 : i32
    %c0_i32_1 = arith.constant 0 : i32
    return %arg0, %c0_i32, %c0_i32_0 : i32, i32, i32
  }
}

module attributes {stable_mosaic.version = 11 : i64} {
  func.func @_norm_head_kernel(%arg0: i32, %arg1: memref<1x8x32xf32, #tpu.memory_space<vmem>>, %arg2: memref<1x32xf32, #tpu.memory_space<vmem>>, %arg3: memref<1x32xf32, #tpu.memory_space<vmem>>, %arg4: memref<32x128xbf16, #tpu.memory_space<vmem>>, %arg5: memref<1x128xf32, #tpu.memory_space<vmem>>, %arg6: memref<1x8x128xf32, #tpu.memory_space<vmem>>) attributes {dimension_semantics = [#tpu.dimension_semantics<parallel>], iteration_bounds = array<i64: 2>, scalar_prefetch = 0 : i64, scratch_operands = 0 : i64, tpu.core_type = #tpu.core_type<tc>, window_params = [{transform_indices = @transform_0, window_bounds = array<i64: 1, 8, 32>}, {pipeline_mode = #tpu.pipeline_mode<synchronous>, transform_indices = @transform_1, window_bounds = array<i64: 1, 32>}, {pipeline_mode = #tpu.pipeline_mode<synchronous>, transform_indices = @transform_2, window_bounds = array<i64: 1, 32>}, {pipeline_mode = #tpu.pipeline_mode<synchronous>, transform_indices = @transform_3, window_bounds = array<i64: 32, 128>}, {pipeline_mode = #tpu.pipeline_mode<synchronous>, transform_indices = @transform_4, window_bounds = array<i64: 1, 128>}, {transform_indices = @transform_5, window_bounds = array<i64: 1, 8, 128>}]} {
    %c0 = arith.constant 0 : index
    %c0_0 = arith.constant 0 : index
    %c0_1 = arith.constant 0 : index
    %0 = vector.load %arg1[%c0, %c0_0, %c0_1] : memref<1x8x32xf32, #tpu.memory_space<vmem>>, vector<1x8x32xf32>
    %1 = vector.shape_cast %0 : vector<1x8x32xf32> to vector<8x32xf32>
    %c0_2 = arith.constant 0 : index
    %c0_3 = arith.constant 0 : index
    %2 = vector.load %arg2[%c0_2, %c0_3] : memref<1x32xf32, #tpu.memory_space<vmem>>, vector<1x32xf32>
    %c0_4 = arith.constant 0 : index
    %c0_5 = arith.constant 0 : index
    %3 = vector.load %arg3[%c0_4, %c0_5] : memref<1x32xf32, #tpu.memory_space<vmem>>, vector<1x32xf32>
    %cst = arith.constant dense<0.000000e+00> : vector<8xf32>
    %4 = vector.multi_reduction <add>, %1, %cst [1] : vector<8x32xf32> to vector<8xf32>
    %5 = vector.shape_cast %4 : vector<8xf32> to vector<8x1xf32>
    %cst_6 = arith.constant 3.200000e+01 : f32
    %6 = vector.broadcast %cst_6 : f32 to vector<8x1xf32>
    %7 = arith.divf %5, %6 : vector<8x1xf32>
    %8 = vector.broadcast %7 : vector<8x1xf32> to vector<8x32xf32>
    %9 = arith.subf %1, %8 : vector<8x32xf32>
    %10 = arith.mulf %9, %9 : vector<8x32xf32>
    %cst_7 = arith.constant dense<0.000000e+00> : vector<8xf32>
    %11 = vector.multi_reduction <add>, %10, %cst_7 [1] : vector<8x32xf32> to vector<8xf32>
    %12 = vector.shape_cast %11 : vector<8xf32> to vector<8x1xf32>
    %cst_8 = arith.constant 3.200000e+01 : f32
    %13 = vector.broadcast %cst_8 : f32 to vector<8x1xf32>
    %14 = arith.divf %12, %13 : vector<8x1xf32>
    %15 = vector.broadcast %7 : vector<8x1xf32> to vector<8x32xf32>
    %16 = arith.subf %1, %15 : vector<8x32xf32>
    %cst_9 = arith.constant 9.99999974E-6 : f32
    %17 = vector.broadcast %cst_9 : f32 to vector<8x1xf32>
    %18 = arith.addf %14, %17 : vector<8x1xf32>
    %19 = math.rsqrt %18 : vector<8x1xf32>
    %20 = vector.broadcast %19 : vector<8x1xf32> to vector<8x32xf32>
    %21 = arith.mulf %16, %20 : vector<8x32xf32>
    %22 = vector.broadcast %2 : vector<1x32xf32> to vector<8x32xf32>
    %23 = arith.mulf %21, %22 : vector<8x32xf32>
    %24 = vector.broadcast %3 : vector<1x32xf32> to vector<8x32xf32>
    %25 = arith.addf %23, %24 : vector<8x32xf32>
    %26 = arith.truncf %25 : vector<8x32xf32> to vector<8x32xbf16>
    %c0_10 = arith.constant 0 : index
    %c0_11 = arith.constant 0 : index
    %27 = vector.load %arg4[%c0_10, %c0_11] : memref<32x128xbf16, #tpu.memory_space<vmem>>, vector<32x128xbf16>
    %cst_12 = arith.constant dense<0.000000e+00> : vector<8x128xf32>
    %28 = tpu.matmul %26, %27, %cst_12 {dimension_numbers = #tpu.dot_dimension_numbers<[1], [0], [0], [1], [0, 0, 1, 1], [], []>} : vector<8x32xbf16>, vector<32x128xbf16>, vector<8x128xf32> -> vector<8x128xf32>
    %c0_13 = arith.constant 0 : index
    %c0_14 = arith.constant 0 : index
    %29 = vector.load %arg5[%c0_13, %c0_14] : memref<1x128xf32, #tpu.memory_space<vmem>>, vector<1x128xf32>
    %30 = vector.broadcast %29 : vector<1x128xf32> to vector<8x128xf32>
    %31 = arith.addf %28, %30 : vector<8x128xf32>
    %c0_15 = arith.constant 0 : index
    %c0_16 = arith.constant 0 : index
    %c0_17 = arith.constant 0 : index
    %32 = vector.load %arg6[%c0_15, %c0_16, %c0_17] : memref<1x8x128xf32, #tpu.memory_space<vmem>>, vector<1x8x128xf32>
    %33 = vector.shape_cast %32 : vector<1x8x128xf32> to vector<8x128xf32>
    %34 = vector.shape_cast %31 : vector<8x128xf32> to vector<1x8x128xf32>
    tpu.vector_store %arg6[%c0_15, %c0_16, %c0_17], %34 {strides = array<i32>} : memref<1x8x128xf32, #tpu.memory_space<vmem>>, vector<1x8x128xf32>,
    return
  }
  func.func @transform_0(%arg0: i32) -> (i32, i32, i32) {
    %c0_i32 = arith.constant 0 : i32
    %c0_i32_0 = arith.constant 0 : i32
    %c0_i32_1 = arith.constant 0 : i32
    return %arg0, %c0_i32, %c0_i32_0 : i32, i32, i32
  }
  func.func @transform_1(%arg0: i32) -> (i32, i32) {
    %c0_i32 = arith.constant 0 : i32
    %c0_i32_0 = arith.constant 0 : i32
    %c0_i32_1 = arith.constant 0 : i32
    return %c0_i32, %c0_i32_0 : i32, i32
  }
  func.func @transform_2(%arg0: i32) -> (i32, i32) {
    %c0_i32 = arith.constant 0 : i32
    %c0_i32_0 = arith.constant 0 : i32
    %c0_i32_1 = arith.constant 0 : i32
    return %c0_i32, %c0_i32_0 : i32, i32
  }
  func.func @transform_3(%arg0: i32) -> (i32, i32) {
    %c0_i32 = arith.constant 0 : i32
    %c0_i32_0 = arith.constant 0 : i32
    %c0_i32_1 = arith.constant 0 : i32
    return %c0_i32, %c0_i32_0 : i32, i32
  }
  func.func @transform_4(%arg0: i32) -> (i32, i32) {
    %c0_i32 = arith.constant 0 : i32
    %c0_i32_0 = arith.constant 0 : i32
    %c0_i32_1 = arith.constant 0 : i32
    return %c0_i32, %c0_i32_0 : i32, i32
  }
  func.func @transform_5(%arg0: i32) -> (i32, i32, i32) {
    %c0_i32 = arith.constant 0 : i32
    %c0_i32_0 = arith.constant 0 : i32
    %c0_i32_1 = arith.constant 0 : i32
    return %arg0, %c0_i32, %c0_i32_0 : i32, i32, i32
  }
}

module attributes {stable_mosaic.version = 11 : i64} {
  func.func @_decoder_layer_kernel(%arg0: i32, %arg1: memref<1x8x32xf32, #tpu.memory_space<vmem>>, %arg2: memref<1x10x32xf32, #tpu.memory_space<vmem>>, %arg3: memref<2x32x16xbf16, #tpu.memory_space<vmem>>, %arg4: memref<2x1x16xf32, #tpu.memory_space<vmem>>, %arg5: memref<2x32x16xbf16, #tpu.memory_space<vmem>>, %arg6: memref<2x1x16xf32, #tpu.memory_space<vmem>>, %arg7: memref<2x32x16xbf16, #tpu.memory_space<vmem>>, %arg8: memref<2x1x16xf32, #tpu.memory_space<vmem>>, %arg9: memref<2x16x32xbf16, #tpu.memory_space<vmem>>, %arg10: memref<1x32xf32, #tpu.memory_space<vmem>>, %arg11: memref<1x32xf32, #tpu.memory_space<vmem>>, %arg12: memref<1x32xf32, #tpu.memory_space<vmem>>, %arg13: memref<2x32x16xbf16, #tpu.memory_space<vmem>>, %arg14: memref<2x1x16xf32, #tpu.memory_space<vmem>>, %arg15: memref<2x32x16xbf16, #tpu.memory_space<vmem>>, %arg16: memref<2x1x16xf32, #tpu.memory_space<vmem>>, %arg17: memref<2x32x16xbf16, #tpu.memory_space<vmem>>, %arg18: memref<2x1x16xf32, #tpu.memory_space<vmem>>, %arg19: memref<2x16x32xbf16, #tpu.memory_space<vmem>>, %arg20: memref<1x32xf32, #tpu.memory_space<vmem>>, %arg21: memref<1x32xf32, #tpu.memory_space<vmem>>, %arg22: memref<1x32xf32, #tpu.memory_space<vmem>>, %arg23: memref<32x64xbf16, #tpu.memory_space<vmem>>, %arg24: memref<1x64xf32, #tpu.memory_space<vmem>>, %arg25: memref<64x32xbf16, #tpu.memory_space<vmem>>, %arg26: memref<1x32xf32, #tpu.memory_space<vmem>>, %arg27: memref<1x32xf32, #tpu.memory_space<vmem>>, %arg28: memref<1x32xf32, #tpu.memory_space<vmem>>, %arg29: memref<1x8x32xf32, #tpu.memory_space<vmem>>) attributes {dimension_semantics = [#tpu.dimension_semantics<parallel>], iteration_bounds = array<i64: 2>, scalar_prefetch = 0 : i64, scratch_operands = 0 : i64, tpu.core_type = #tpu.core_type<tc>, window_params = [{transform_indices = @transform_0, window_bounds = array<i64: 1, 8, 32>}, {transform_indices = @transform_1, window_bounds = array<i64: 1, 10, 32>}, {pipeline_mode = #tpu.pipeline_mode<synchronous>, transform_indices = @transform_2, window_bounds = array<i64: 2, 32, 16>}, {pipeline_mode = #tpu.pipeline_mode<synchronous>, transform_indices = @transform_3, window_bounds = array<i64: 2, 1, 16>}, {pipeline_mode = #tpu.pipeline_mode<synchronous>, transform_indices = @transform_4, window_bounds = array<i64: 2, 32, 16>}, {pipeline_mode = #tpu.pipeline_mode<synchronous>, transform_indices = @transform_5, window_bounds = array<i64: 2, 1, 16>}, {pipeline_mode = #tpu.pipeline_mode<synchronous>, transform_indices = @transform_6, window_bounds = array<i64: 2, 32, 16>}, {pipeline_mode = #tpu.pipeline_mode<synchronous>, transform_indices = @transform_7, window_bounds = array<i64: 2, 1, 16>}, {pipeline_mode = #tpu.pipeline_mode<synchronous>, transform_indices = @transform_8, window_bounds = array<i64: 2, 16, 32>}, {pipeline_mode = #tpu.pipeline_mode<synchronous>, transform_indices = @transform_9, window_bounds = array<i64: 1, 32>}, {pipeline_mode = #tpu.pipeline_mode<synchronous>, transform_indices = @transform_10, window_bounds = array<i64: 1, 32>}, {pipeline_mode = #tpu.pipeline_mode<synchronous>, transform_indices = @transform_11, window_bounds = array<i64: 1, 32>}, {pipeline_mode = #tpu.pipeline_mode<synchronous>, transform_indices = @transform_12, window_bounds = array<i64: 2, 32, 16>}, {pipeline_mode = #tpu.pipeline_mode<synchronous>, transform_indices = @transform_13, window_bounds = array<i64: 2, 1, 16>}, {pipeline_mode = #tpu.pipeline_mode<synchronous>, transform_indices = @transform_14, window_bounds = array<i64: 2, 32, 16>}, {pipeline_mode = #tpu.pipeline_mode<synchronous>, transform_indices = @transform_15, window_bounds = array<i64: 2, 1, 16>}, {pipeline_mode = #tpu.pipeline_mode<synchronous>, transform_indices = @transform_16, window_bounds = array<i64: 2, 32, 16>}, {pipeline_mode = #tpu.pipeline_mode<synchronous>, transform_indices = @transform_17, window_bounds = array<i64: 2, 1, 16>}, {pipeline_mode = #tpu.pipeline_mode<synchronous>, transform_indices = @transform_18, window_bounds = array<i64: 2, 16, 32>}, {pipeline_mode = #tpu.pipeline_mode<synchronous>, transform_indices = @transform_19, window_bounds = array<i64: 1, 32>}, {pipeline_mode = #tpu.pipeline_mode<synchronous>, transform_indices = @transform_20, window_bounds = array<i64: 1, 32>}, {pipeline_mode = #tpu.pipeline_mode<synchronous>, transform_indices = @transform_21, window_bounds = array<i64: 1, 32>}, {pipeline_mode = #tpu.pipeline_mode<synchronous>, transform_indices = @transform_22, window_bounds = array<i64: 32, 64>}, {pipeline_mode = #tpu.pipeline_mode<synchronous>, transform_indices = @transform_23, window_bounds = array<i64: 1, 64>}, {pipeline_mode = #tpu.pipeline_mode<synchronous>, transform_indices = @transform_24, window_bounds = array<i64: 64, 32>}, {pipeline_mode = #tpu.pipeline_mode<synchronous>, transform_indices = @transform_25, window_bounds = array<i64: 1, 32>}, {pipeline_mode = #tpu.pipeline_mode<synchronous>, transform_indices = @transform_26, window_bounds = array<i64: 1, 32>}, {pipeline_mode = #tpu.pipeline_mode<synchronous>, transform_indices = @transform_27, window_bounds = array<i64: 1, 32>}, {transform_indices = @transform_28, window_bounds = array<i64: 1, 8, 32>}]} {
    %c0 = arith.constant 0 : index
    %c0_0 = arith.constant 0 : index
    %c0_1 = arith.constant 0 : index
    %0 = vector.load %arg1[%c0, %c0_0, %c0_1] : memref<1x8x32xf32, #tpu.memory_space<vmem>>, vector<1x8x32xf32>
    %1 = vector.shape_cast %0 : vector<1x8x32xf32> to vector<8x32xf32>
    %c0_2 = arith.constant 0 : index
    %c0_3 = arith.constant 0 : index
    %c0_4 = arith.constant 0 : index
    %2 = vector.load %arg2[%c0_2, %c0_3, %c0_4] : memref<1x10x32xf32, #tpu.memory_space<vmem>>, vector<1x10x32xf32>
    %3 = vector.shape_cast %2 : vector<1x10x32xf32> to vector<10x32xf32>
    %4 = arith.truncf %1 : vector<8x32xf32> to vector<8x32xbf16>
    %5 = arith.truncf %1 : vector<8x32xf32> to vector<8x32xbf16>
    %6 = tpu.iota {dimensions = array<i32: 0>} : vector<8x8xi32>
    %7 = tpu.iota {dimensions = array<i32: 1>} : vector<8x8xi32>
    %8 = arith.cmpi sgt, %7, %6 : vector<8x8xi32>
    %cst = arith.constant -1.000000e+09 : f32
    %cst_5 = arith.constant 0.000000e+00 : f32
    %9 = vector.broadcast %cst : f32 to vector<8x8xf32>
    %10 = vector.broadcast %cst_5 : f32 to vector<8x8xf32>
    %11 = arith.select %8, %9, %10 : vector<8x8xi1>, vector<8x8xf32>
    %cst_6 = arith.constant 0.000000e+00 : f32
    %12 = vector.broadcast %cst_6 : f32 to vector<8x32xf32>
    %c0_7 = arith.constant 0 : index
    %c0_8 = arith.constant 0 : index
    %c0_9 = arith.constant 0 : index
    %13 = vector.load %arg3[%c0_7, %c0_8, %c0_9] : memref<2x32x16xbf16, #tpu.memory_space<vmem>>, vector<1x32x16xbf16>
    %14 = vector.shape_cast %13 : vector<1x32x16xbf16> to vector<32x16xbf16>
    %cst_10 = arith.constant dense<0.000000e+00> : vector<8x16xf32>
    %15 = tpu.matmul %4, %14, %cst_10 {dimension_numbers = #tpu.dot_dimension_numbers<[1], [0], [0], [1], [0, 0, 1, 1], [], []>} : vector<8x32xbf16>, vector<32x16xbf16>, vector<8x16xf32> -> vector<8x16xf32>
    %c0_11 = arith.constant 0 : index
    %c0_12 = arith.constant 0 : index
    %c0_13 = arith.constant 0 : index
    %16 = vector.load %arg4[%c0_11, %c0_12, %c0_13] : memref<2x1x16xf32, #tpu.memory_space<vmem>>, vector<1x1x16xf32>
    %17 = vector.shape_cast %16 : vector<1x1x16xf32> to vector<1x16xf32>
    %18 = vector.broadcast %17 : vector<1x16xf32> to vector<8x16xf32>
    %19 = arith.addf %15, %18 : vector<8x16xf32>
    %c0_14 = arith.constant 0 : index
    %c0_15 = arith.constant 0 : index
    %c0_16 = arith.constant 0 : index
    %20 = vector.load %arg5[%c0_14, %c0_15, %c0_16] : memref<2x32x16xbf16, #tpu.memory_space<vmem>>, vector<1x32x16xbf16>
    %21 = vector.shape_cast %20 : vector<1x32x16xbf16> to vector<32x16xbf16>
    %cst_17 = arith.constant dense<0.000000e+00> : vector<8x16xf32>
    %22 = tpu.matmul %5, %21, %cst_17 {dimension_numbers = #tpu.dot_dimension_numbers<[1], [0], [0], [1], [0, 0, 1, 1], [], []>} : vector<8x32xbf16>, vector<32x16xbf16>, vector<8x16xf32> -> vector<8x16xf32>
    %c0_18 = arith.constant 0 : index
    %c0_19 = arith.constant 0 : index
    %c0_20 = arith.constant 0 : index
    %23 = vector.load %arg6[%c0_18, %c0_19, %c0_20] : memref<2x1x16xf32, #tpu.memory_space<vmem>>, vector<1x1x16xf32>
    %24 = vector.shape_cast %23 : vector<1x1x16xf32> to vector<1x16xf32>
    %25 = vector.broadcast %24 : vector<1x16xf32> to vector<8x16xf32>
    %26 = arith.addf %22, %25 : vector<8x16xf32>
    %c0_21 = arith.constant 0 : index
    %c0_22 = arith.constant 0 : index
    %c0_23 = arith.constant 0 : index
    %27 = vector.load %arg7[%c0_21, %c0_22, %c0_23] : memref<2x32x16xbf16, #tpu.memory_space<vmem>>, vector<1x32x16xbf16>
    %28 = vector.shape_cast %27 : vector<1x32x16xbf16> to vector<32x16xbf16>
    %cst_24 = arith.constant dense<0.000000e+00> : vector<8x16xf32>
    %29 = tpu.matmul %5, %28, %cst_24 {dimension_numbers = #tpu.dot_dimension_numbers<[1], [0], [0], [1], [0, 0, 1, 1], [], []>} : vector<8x32xbf16>, vector<32x16xbf16>, vector<8x16xf32> -> vector<8x16xf32>
    %c0_25 = arith.constant 0 : index
    %c0_26 = arith.constant 0 : index
    %c0_27 = arith.constant 0 : index
    %30 = vector.load %arg8[%c0_25, %c0_26, %c0_27] : memref<2x1x16xf32, #tpu.memory_space<vmem>>, vector<1x1x16xf32>
    %31 = vector.shape_cast %30 : vector<1x1x16xf32> to vector<1x16xf32>
    %32 = vector.broadcast %31 : vector<1x16xf32> to vector<8x16xf32>
    %33 = arith.addf %29, %32 : vector<8x16xf32>
    %34 = arith.truncf %19 : vector<8x16xf32> to vector<8x16xbf16>
    %35 = arith.truncf %26 : vector<8x16xf32> to vector<8x16xbf16>
    "tpu.trace_start"() <{level = 10 : i32, message = "qd,kd->qk"}> : () -> ()
    %cst_28 = arith.constant dense<0.000000e+00> : vector<8x8xf32>
    %36 = tpu.matmul %34, %35, %cst_28 {dimension_numbers = #tpu.dot_dimension_numbers<[1], [1], [0], [0], [0, 0, 1, 0], [], []>} : vector<8x16xbf16>, vector<8x16xbf16>, vector<8x8xf32> -> vector<8x8xf32>
    "tpu.trace_stop"() : () -> ()
    %37 = arith.addf %36, %11 : vector<8x8xf32>
    %cst_29 = arith.constant dense<0xFF800000> : vector<8xf32>
    %38 = vector.multi_reduction <maximumf>, %37, %cst_29 [1] : vector<8x8xf32> to vector<8xf32>
    %39 = vector.shape_cast %38 : vector<8xf32> to vector<8x1xf32>
    %40 = vector.broadcast %39 : vector<8x1xf32> to vector<8x8xf32>
    %41 = arith.subf %37, %40 : vector<8x8xf32>
    %42 = math.exp %41 : vector<8x8xf32>
    %cst_30 = arith.constant dense<0.000000e+00> : vector<8xf32>
    %43 = vector.multi_reduction <add>, %42, %cst_30 [1] : vector<8x8xf32> to vector<8xf32>
    %44 = vector.shape_cast %43 : vector<8xf32> to vector<8x1xf32>
    %45 = tpu.reciprocal %44 {approx = true} : vector<8x1xf32> -> vector<8x1xf32>
    %46 = vector.broadcast %45 : vector<8x1xf32> to vector<8x8xf32>
    %47 = arith.mulf %42, %46 : vector<8x8xf32>
    %48 = arith.truncf %47 : vector<8x8xf32> to vector<8x8xbf16>
    %49 = arith.truncf %33 : vector<8x16xf32> to vector<8x16xbf16>
    %cst_31 = arith.constant dense<0.000000e+00> : vector<8x16xf32>
    %50 = tpu.matmul %48, %49, %cst_31 {dimension_numbers = #tpu.dot_dimension_numbers<[1], [0], [0], [1], [0, 0, 1, 1], [], []>} : vector<8x8xbf16>, vector<8x16xbf16>, vector<8x16xf32> -> vector<8x16xf32>
    %51 = arith.truncf %50 : vector<8x16xf32> to vector<8x16xbf16>
    %c0_32 = arith.constant 0 : index
    %c0_33 = arith.constant 0 : index
    %c0_34 = arith.constant 0 : index
    %52 = vector.load %arg9[%c0_32, %c0_33, %c0_34] : memref<2x16x32xbf16, #tpu.memory_space<vmem>>, vector<1x16x32xbf16>
    %53 = vector.shape_cast %52 : vector<1x16x32xbf16> to vector<16x32xbf16>
    %cst_35 = arith.constant dense<0.000000e+00> : vector<8x32xf32>
    %54 = tpu.matmul %51, %53, %cst_35 {dimension_numbers = #tpu.dot_dimension_numbers<[1], [0], [0], [1], [0, 0, 1, 1], [], []>} : vector<8x16xbf16>, vector<16x32xbf16>, vector<8x32xf32> -> vector<8x32xf32>
    %55 = arith.addf %12, %54 : vector<8x32xf32>
    %c1 = arith.constant 1 : index
    %c0_36 = arith.constant 0 : index
    %c0_37 = arith.constant 0 : index
    %56 = vector.load %arg3[%c1, %c0_36, %c0_37] : memref<2x32x16xbf16, #tpu.memory_space<vmem>>, vector<1x32x16xbf16>
    %57 = vector.shape_cast %56 : vector<1x32x16xbf16> to vector<32x16xbf16>
    %cst_38 = arith.constant dense<0.000000e+00> : vector<8x16xf32>
    %58 = tpu.matmul %4, %57, %cst_38 {dimension_numbers = #tpu.dot_dimension_numbers<[1], [0], [0], [1], [0, 0, 1, 1], [], []>} : vector<8x32xbf16>, vector<32x16xbf16>, vector<8x16xf32> -> vector<8x16xf32>
    %c1_39 = arith.constant 1 : index
    %c0_40 = arith.constant 0 : index
    %c0_41 = arith.constant 0 : index
    %59 = vector.load %arg4[%c1_39, %c0_40, %c0_41] : memref<2x1x16xf32, #tpu.memory_space<vmem>>, vector<1x1x16xf32>
    %60 = vector.shape_cast %59 : vector<1x1x16xf32> to vector<1x16xf32>
    %61 = vector.broadcast %60 : vector<1x16xf32> to vector<8x16xf32>
    %62 = arith.addf %58, %61 : vector<8x16xf32>
    %c1_42 = arith.constant 1 : index
    %c0_43 = arith.constant 0 : index
    %c0_44 = arith.constant 0 : index
    %63 = vector.load %arg5[%c1_42, %c0_43, %c0_44] : memref<2x32x16xbf16, #tpu.memory_space<vmem>>, vector<1x32x16xbf16>
    %64 = vector.shape_cast %63 : vector<1x32x16xbf16> to vector<32x16xbf16>
    %cst_45 = arith.constant dense<0.000000e+00> : vector<8x16xf32>
    %65 = tpu.matmul %5, %64, %cst_45 {dimension_numbers = #tpu.dot_dimension_numbers<[1], [0], [0], [1], [0, 0, 1, 1], [], []>} : vector<8x32xbf16>, vector<32x16xbf16>, vector<8x16xf32> -> vector<8x16xf32>
    %c1_46 = arith.constant 1 : index
    %c0_47 = arith.constant 0 : index
    %c0_48 = arith.constant 0 : index
    %66 = vector.load %arg6[%c1_46, %c0_47, %c0_48] : memref<2x1x16xf32, #tpu.memory_space<vmem>>, vector<1x1x16xf32>
    %67 = vector.shape_cast %66 : vector<1x1x16xf32> to vector<1x16xf32>
    %68 = vector.broadcast %67 : vector<1x16xf32> to vector<8x16xf32>
    %69 = arith.addf %65, %68 : vector<8x16xf32>
    %c1_49 = arith.constant 1 : index
    %c0_50 = arith.constant 0 : index
    %c0_51 = arith.constant 0 : index
    %70 = vector.load %arg7[%c1_49, %c0_50, %c0_51] : memref<2x32x16xbf16, #tpu.memory_space<vmem>>, vector<1x32x16xbf16>
    %71 = vector.shape_cast %70 : vector<1x32x16xbf16> to vector<32x16xbf16>
    %cst_52 = arith.constant dense<0.000000e+00> : vector<8x16xf32>
    %72 = tpu.matmul %5, %71, %cst_52 {dimension_numbers = #tpu.dot_dimension_numbers<[1], [0], [0], [1], [0, 0, 1, 1], [], []>} : vector<8x32xbf16>, vector<32x16xbf16>, vector<8x16xf32> -> vector<8x16xf32>
    %c1_53 = arith.constant 1 : index
    %c0_54 = arith.constant 0 : index
    %c0_55 = arith.constant 0 : index
    %73 = vector.load %arg8[%c1_53, %c0_54, %c0_55] : memref<2x1x16xf32, #tpu.memory_space<vmem>>, vector<1x1x16xf32>
    %74 = vector.shape_cast %73 : vector<1x1x16xf32> to vector<1x16xf32>
    %75 = vector.broadcast %74 : vector<1x16xf32> to vector<8x16xf32>
    %76 = arith.addf %72, %75 : vector<8x16xf32>
    %77 = arith.truncf %62 : vector<8x16xf32> to vector<8x16xbf16>
    %78 = arith.truncf %69 : vector<8x16xf32> to vector<8x16xbf16>
    "tpu.trace_start"() <{level = 10 : i32, message = "qd,kd->qk"}> : () -> ()
    %cst_56 = arith.constant dense<0.000000e+00> : vector<8x8xf32>
    %79 = tpu.matmul %77, %78, %cst_56 {dimension_numbers = #tpu.dot_dimension_numbers<[1], [1], [0], [0], [0, 0, 1, 0], [], []>} : vector<8x16xbf16>, vector<8x16xbf16>, vector<8x8xf32> -> vector<8x8xf32>
    "tpu.trace_stop"() : () -> ()
    %80 = arith.addf %79, %11 : vector<8x8xf32>
    %cst_57 = arith.constant dense<0xFF800000> : vector<8xf32>
    %81 = vector.multi_reduction <maximumf>, %80, %cst_57 [1] : vector<8x8xf32> to vector<8xf32>
    %82 = vector.shape_cast %81 : vector<8xf32> to vector<8x1xf32>
    %83 = vector.broadcast %82 : vector<8x1xf32> to vector<8x8xf32>
    %84 = arith.subf %80, %83 : vector<8x8xf32>
    %85 = math.exp %84 : vector<8x8xf32>
    %cst_58 = arith.constant dense<0.000000e+00> : vector<8xf32>
    %86 = vector.multi_reduction <add>, %85, %cst_58 [1] : vector<8x8xf32> to vector<8xf32>
    %87 = vector.shape_cast %86 : vector<8xf32> to vector<8x1xf32>
    %88 = tpu.reciprocal %87 {approx = true} : vector<8x1xf32> -> vector<8x1xf32>
    %89 = vector.broadcast %88 : vector<8x1xf32> to vector<8x8xf32>
    %90 = arith.mulf %85, %89 : vector<8x8xf32>
    %91 = arith.truncf %90 : vector<8x8xf32> to vector<8x8xbf16>
    %92 = arith.truncf %76 : vector<8x16xf32> to vector<8x16xbf16>
    %cst_59 = arith.constant dense<0.000000e+00> : vector<8x16xf32>
    %93 = tpu.matmul %91, %92, %cst_59 {dimension_numbers = #tpu.dot_dimension_numbers<[1], [0], [0], [1], [0, 0, 1, 1], [], []>} : vector<8x8xbf16>, vector<8x16xbf16>, vector<8x16xf32> -> vector<8x16xf32>
    %94 = arith.truncf %93 : vector<8x16xf32> to vector<8x16xbf16>
    %c1_60 = arith.constant 1 : index
    %c0_61 = arith.constant 0 : index
    %c0_62 = arith.constant 0 : index
    %95 = vector.load %arg9[%c1_60, %c0_61, %c0_62] : memref<2x16x32xbf16, #tpu.memory_space<vmem>>, vector<1x16x32xbf16>
    %96 = vector.shape_cast %95 : vector<1x16x32xbf16> to vector<16x32xbf16>
    %cst_63 = arith.constant dense<0.000000e+00> : vector<8x32xf32>
    %97 = tpu.matmul %94, %96, %cst_63 {dimension_numbers = #tpu.dot_dimension_numbers<[1], [0], [0], [1], [0, 0, 1, 1], [], []>} : vector<8x16xbf16>, vector<16x32xbf16>, vector<8x32xf32> -> vector<8x32xf32>
    %98 = arith.addf %55, %97 : vector<8x32xf32>
    %c0_64 = arith.constant 0 : index
    %c0_65 = arith.constant 0 : index
    %99 = vector.load %arg10[%c0_64, %c0_65] : memref<1x32xf32, #tpu.memory_space<vmem>>, vector<1x32xf32>
    %100 = vector.broadcast %99 : vector<1x32xf32> to vector<8x32xf32>
    %101 = arith.addf %98, %100 : vector<8x32xf32>
    %102 = arith.addf %1, %101 : vector<8x32xf32>
    %c0_66 = arith.constant 0 : index
    %c0_67 = arith.constant 0 : index
    %103 = vector.load %arg11[%c0_66, %c0_67] : memref<1x32xf32, #tpu.memory_space<vmem>>, vector<1x32xf32>
    %c0_68 = arith.constant 0 : index
    %c0_69 = arith.constant 0 : index
    %104 = vector.load %arg12[%c0_68, %c0_69] : memref<1x32xf32, #tpu.memory_space<vmem>>, vector<1x32xf32>
    %cst_70 = arith.constant dense<0.000000e+00> : vector<8xf32>
    %105 = vector.multi_reduction <add>, %102, %cst_70 [1] : vector<8x32xf32> to vector<8xf32>
    %106 = vector.shape_cast %105 : vector<8xf32> to vector<8x1xf32>
    %cst_71 = arith.constant 3.200000e+01 : f32
    %107 = vector.broadcast %cst_71 : f32 to vector<8x1xf32>
    %108 = arith.divf %106, %107 : vector<8x1xf32>
    %109 = vector.broadcast %108 : vector<8x1xf32> to vector<8x32xf32>
    %110 = arith.subf %102, %109 : vector<8x32xf32>
    %111 = arith.mulf %110, %110 : vector<8x32xf32>
    %cst_72 = arith.constant dense<0.000000e+00> : vector<8xf32>
    %112 = vector.multi_reduction <add>, %111, %cst_72 [1] : vector<8x32xf32> to vector<8xf32>
    %113 = vector.shape_cast %112 : vector<8xf32> to vector<8x1xf32>
    %cst_73 = arith.constant 3.200000e+01 : f32
    %114 = vector.broadcast %cst_73 : f32 to vector<8x1xf32>
    %115 = arith.divf %113, %114 : vector<8x1xf32>
    %116 = vector.broadcast %108 : vector<8x1xf32> to vector<8x32xf32>
    %117 = arith.subf %102, %116 : vector<8x32xf32>
    %cst_74 = arith.constant 9.99999974E-6 : f32
    %118 = vector.broadcast %cst_74 : f32 to vector<8x1xf32>
    %119 = arith.addf %115, %118 : vector<8x1xf32>
    %120 = math.rsqrt %119 : vector<8x1xf32>
    %121 = vector.broadcast %120 : vector<8x1xf32> to vector<8x32xf32>
    %122 = arith.mulf %117, %121 : vector<8x32xf32>
    %123 = vector.broadcast %103 : vector<1x32xf32> to vector<8x32xf32>
    %124 = arith.mulf %122, %123 : vector<8x32xf32>
    %125 = vector.broadcast %104 : vector<1x32xf32> to vector<8x32xf32>
    %126 = arith.addf %124, %125 : vector<8x32xf32>
    %127 = arith.truncf %126 : vector<8x32xf32> to vector<8x32xbf16>
    %128 = arith.truncf %3 : vector<10x32xf32> to vector<10x32xbf16>
    %cst_75 = arith.constant 0.000000e+00 : f32
    %129 = vector.broadcast %cst_75 : f32 to vector<8x32xf32>
    %c0_76 = arith.constant 0 : index
    %c0_77 = arith.constant 0 : index
    %c0_78 = arith.constant 0 : index
    %130 = vector.load %arg13[%c0_76, %c0_77, %c0_78] : memref<2x32x16xbf16, #tpu.memory_space<vmem>>, vector<1x32x16xbf16>
    %131 = vector.shape_cast %130 : vector<1x32x16xbf16> to vector<32x16xbf16>
    %cst_79 = arith.constant dense<0.000000e+00> : vector<8x16xf32>
    %132 = tpu.matmul %127, %131, %cst_79 {dimension_numbers = #tpu.dot_dimension_numbers<[1], [0], [0], [1], [0, 0, 1, 1], [], []>} : vector<8x32xbf16>, vector<32x16xbf16>, vector<8x16xf32> -> vector<8x16xf32>
    %c0_80 = arith.constant 0 : index
    %c0_81 = arith.constant 0 : index
    %c0_82 = arith.constant 0 : index
    %133 = vector.load %arg14[%c0_80, %c0_81, %c0_82] : memref<2x1x16xf32, #tpu.memory_space<vmem>>, vector<1x1x16xf32>
    %134 = vector.shape_cast %133 : vector<1x1x16xf32> to vector<1x16xf32>
    %135 = vector.broadcast %134 : vector<1x16xf32> to vector<8x16xf32>
    %136 = arith.addf %132, %135 : vector<8x16xf32>
    %c0_83 = arith.constant 0 : index
    %c0_84 = arith.constant 0 : index
    %c0_85 = arith.constant 0 : index
    %137 = vector.load %arg15[%c0_83, %c0_84, %c0_85] : memref<2x32x16xbf16, #tpu.memory_space<vmem>>, vector<1x32x16xbf16>
    %138 = vector.shape_cast %137 : vector<1x32x16xbf16> to vector<32x16xbf16>
    %cst_86 = arith.constant dense<0.000000e+00> : vector<10x16xf32>
    %139 = tpu.matmul %128, %138, %cst_86 {dimension_numbers = #tpu.dot_dimension_numbers<[1], [0], [0], [1], [0, 0, 1, 1], [], []>} : vector<10x32xbf16>, vector<32x16xbf16>, vector<10x16xf32> -> vector<10x16xf32>
    %c0_87 = arith.constant 0 : index
    %c0_88 = arith.constant 0 : index
    %c0_89 = arith.constant 0 : index
    %140 = vector.load %arg16[%c0_87, %c0_88, %c0_89] : memref<2x1x16xf32, #tpu.memory_space<vmem>>, vector<1x1x16xf32>
    %141 = vector.shape_cast %140 : vector<1x1x16xf32> to vector<1x16xf32>
    %142 = vector.broadcast %141 : vector<1x16xf32> to vector<10x16xf32>
    %143 = arith.addf %139, %142 : vector<10x16xf32>
    %c0_90 = arith.constant 0 : index
    %c0_91 = arith.constant 0 : index
    %c0_92 = arith.constant 0 : index
    %144 = vector.load %arg17[%c0_90, %c0_91, %c0_92] : memref<2x32x16xbf16, #tpu.memory_space<vmem>>, vector<1x32x16xbf16>
    %145 = vector.shape_cast %144 : vector<1x32x16xbf16> to vector<32x16xbf16>
    %cst_93 = arith.constant dense<0.000000e+00> : vector<10x16xf32>
    %146 = tpu.matmul %128, %145, %cst_93 {dimension_numbers = #tpu.dot_dimension_numbers<[1], [0], [0], [1], [0, 0, 1, 1], [], []>} : vector<10x32xbf16>, vector<32x16xbf16>, vector<10x16xf32> -> vector<10x16xf32>
    %c0_94 = arith.constant 0 : index
    %c0_95 = arith.constant 0 : index
    %c0_96 = arith.constant 0 : index
    %147 = vector.load %arg18[%c0_94, %c0_95, %c0_96] : memref<2x1x16xf32, #tpu.memory_space<vmem>>, vector<1x1x16xf32>
    %148 = vector.shape_cast %147 : vector<1x1x16xf32> to vector<1x16xf32>
    %149 = vector.broadcast %148 : vector<1x16xf32> to vector<10x16xf32>
    %150 = arith.addf %146, %149 : vector<10x16xf32>
    %151 = arith.truncf %136 : vector<8x16xf32> to vector<8x16xbf16>
    %152 = arith.truncf %143 : vector<10x16xf32> to vector<10x16xbf16>
    "tpu.trace_start"() <{level = 10 : i32, message = "qd,kd->qk"}> : () -> ()
    %cst_97 = arith.constant dense<0.000000e+00> : vector<8x10xf32>
    %153 = tpu.matmul %151, %152, %cst_97 {dimension_numbers = #tpu.dot_dimension_numbers<[1], [1], [0], [0], [0, 0, 1, 0], [], []>} : vector<8x16xbf16>, vector<10x16xbf16>, vector<8x10xf32> -> vector<8x10xf32>
    "tpu.trace_stop"() : () -> ()
    %cst_98 = arith.constant dense<0xFF800000> : vector<8xf32>
    %154 = vector.multi_reduction <maximumf>, %153, %cst_98 [1] : vector<8x10xf32> to vector<8xf32>
    %155 = vector.shape_cast %154 : vector<8xf32> to vector<8x1xf32>
    %156 = vector.broadcast %155 : vector<8x1xf32> to vector<8x10xf32>
    %157 = arith.subf %153, %156 : vector<8x10xf32>
    %158 = math.exp %157 : vector<8x10xf32>
    %cst_99 = arith.constant dense<0.000000e+00> : vector<8xf32>
    %159 = vector.multi_reduction <add>, %158, %cst_99 [1] : vector<8x10xf32> to vector<8xf32>
    %160 = vector.shape_cast %159 : vector<8xf32> to vector<8x1xf32>
    %161 = tpu.reciprocal %160 {approx = true} : vector<8x1xf32> -> vector<8x1xf32>
    %162 = vector.broadcast %161 : vector<8x1xf32> to vector<8x10xf32>
    %163 = arith.mulf %158, %162 : vector<8x10xf32>
    %164 = arith.truncf %163 : vector<8x10xf32> to vector<8x10xbf16>
    %165 = arith.truncf %150 : vector<10x16xf32> to vector<10x16xbf16>
    %cst_100 = arith.constant dense<0.000000e+00> : vector<8x16xf32>
    %166 = tpu.matmul %164, %165, %cst_100 {dimension_numbers = #tpu.dot_dimension_numbers<[1], [0], [0], [1], [0, 0, 1, 1], [], []>} : vector<8x10xbf16>, vector<10x16xbf16>, vector<8x16xf32> -> vector<8x16xf32>
    %167 = arith.truncf %166 : vector<8x16xf32> to vector<8x16xbf16>
    %c0_101 = arith.constant 0 : index
    %c0_102 = arith.constant 0 : index
    %c0_103 = arith.constant 0 : index
    %168 = vector.load %arg19[%c0_101, %c0_102, %c0_103] : memref<2x16x32xbf16, #tpu.memory_space<vmem>>, vector<1x16x32xbf16>
    %169 = vector.shape_cast %168 : vector<1x16x32xbf16> to vector<16x32xbf16>
    %cst_104 = arith.constant dense<0.000000e+00> : vector<8x32xf32>
    %170 = tpu.matmul %167, %169, %cst_104 {dimension_numbers = #tpu.dot_dimension_numbers<[1], [0], [0], [1], [0, 0, 1, 1], [], []>} : vector<8x16xbf16>, vector<16x32xbf16>, vector<8x32xf32> -> vector<8x32xf32>
    %171 = arith.addf %129, %170 : vector<8x32xf32>
    %c1_105 = arith.constant 1 : index
    %c0_106 = arith.constant 0 : index
    %c0_107 = arith.constant 0 : index
    %172 = vector.load %arg13[%c1_105, %c0_106, %c0_107] : memref<2x32x16xbf16, #tpu.memory_space<vmem>>, vector<1x32x16xbf16>
    %173 = vector.shape_cast %172 : vector<1x32x16xbf16> to vector<32x16xbf16>
    %cst_108 = arith.constant dense<0.000000e+00> : vector<8x16xf32>
    %174 = tpu.matmul %127, %173, %cst_108 {dimension_numbers = #tpu.dot_dimension_numbers<[1], [0], [0], [1], [0, 0, 1, 1], [], []>} : vector<8x32xbf16>, vector<32x16xbf16>, vector<8x16xf32> -> vector<8x16xf32>
    %c1_109 = arith.constant 1 : index
    %c0_110 = arith.constant 0 : index
    %c0_111 = arith.constant 0 : index
    %175 = vector.load %arg14[%c1_109, %c0_110, %c0_111] : memref<2x1x16xf32, #tpu.memory_space<vmem>>, vector<1x1x16xf32>
    %176 = vector.shape_cast %175 : vector<1x1x16xf32> to vector<1x16xf32>
    %177 = vector.broadcast %176 : vector<1x16xf32> to vector<8x16xf32>
    %178 = arith.addf %174, %177 : vector<8x16xf32>
    %c1_112 = arith.constant 1 : index
    %c0_113 = arith.constant 0 : index
    %c0_114 = arith.constant 0 : index
    %179 = vector.load %arg15[%c1_112, %c0_113, %c0_114] : memref<2x32x16xbf16, #tpu.memory_space<vmem>>, vector<1x32x16xbf16>
    %180 = vector.shape_cast %179 : vector<1x32x16xbf16> to vector<32x16xbf16>
    %cst_115 = arith.constant dense<0.000000e+00> : vector<10x16xf32>
    %181 = tpu.matmul %128, %180, %cst_115 {dimension_numbers = #tpu.dot_dimension_numbers<[1], [0], [0], [1], [0, 0, 1, 1], [], []>} : vector<10x32xbf16>, vector<32x16xbf16>, vector<10x16xf32> -> vector<10x16xf32>
    %c1_116 = arith.constant 1 : index
    %c0_117 = arith.constant 0 : index
    %c0_118 = arith.constant 0 : index
    %182 = vector.load %arg16[%c1_116, %c0_117, %c0_118] : memref<2x1x16xf32, #tpu.memory_space<vmem>>, vector<1x1x16xf32>
    %183 = vector.shape_cast %182 : vector<1x1x16xf32> to vector<1x16xf32>
    %184 = vector.broadcast %183 : vector<1x16xf32> to vector<10x16xf32>
    %185 = arith.addf %181, %184 : vector<10x16xf32>
    %c1_119 = arith.constant 1 : index
    %c0_120 = arith.constant 0 : index
    %c0_121 = arith.constant 0 : index
    %186 = vector.load %arg17[%c1_119, %c0_120, %c0_121] : memref<2x32x16xbf16, #tpu.memory_space<vmem>>, vector<1x32x16xbf16>
    %187 = vector.shape_cast %186 : vector<1x32x16xbf16> to vector<32x16xbf16>
    %cst_122 = arith.constant dense<0.000000e+00> : vector<10x16xf32>
    %188 = tpu.matmul %128, %187, %cst_122 {dimension_numbers = #tpu.dot_dimension_numbers<[1], [0], [0], [1], [0, 0, 1, 1], [], []>} : vector<10x32xbf16>, vector<32x16xbf16>, vector<10x16xf32> -> vector<10x16xf32>
    %c1_123 = arith.constant 1 : index
    %c0_124 = arith.constant 0 : index
    %c0_125 = arith.constant 0 : index
    %189 = vector.load %arg18[%c1_123, %c0_124, %c0_125] : memref<2x1x16xf32, #tpu.memory_space<vmem>>, vector<1x1x16xf32>
    %190 = vector.shape_cast %189 : vector<1x1x16xf32> to vector<1x16xf32>
    %191 = vector.broadcast %190 : vector<1x16xf32> to vector<10x16xf32>
    %192 = arith.addf %188, %191 : vector<10x16xf32>
    %193 = arith.truncf %178 : vector<8x16xf32> to vector<8x16xbf16>
    %194 = arith.truncf %185 : vector<10x16xf32> to vector<10x16xbf16>
    "tpu.trace_start"() <{level = 10 : i32, message = "qd,kd->qk"}> : () -> ()
    %cst_126 = arith.constant dense<0.000000e+00> : vector<8x10xf32>
    %195 = tpu.matmul %193, %194, %cst_126 {dimension_numbers = #tpu.dot_dimension_numbers<[1], [1], [0], [0], [0, 0, 1, 0], [], []>} : vector<8x16xbf16>, vector<10x16xbf16>, vector<8x10xf32> -> vector<8x10xf32>
    "tpu.trace_stop"() : () -> ()
    %cst_127 = arith.constant dense<0xFF800000> : vector<8xf32>
    %196 = vector.multi_reduction <maximumf>, %195, %cst_127 [1] : vector<8x10xf32> to vector<8xf32>
    %197 = vector.shape_cast %196 : vector<8xf32> to vector<8x1xf32>
    %198 = vector.broadcast %197 : vector<8x1xf32> to vector<8x10xf32>
    %199 = arith.subf %195, %198 : vector<8x10xf32>
    %200 = math.exp %199 : vector<8x10xf32>
    %cst_128 = arith.constant dense<0.000000e+00> : vector<8xf32>
    %201 = vector.multi_reduction <add>, %200, %cst_128 [1] : vector<8x10xf32> to vector<8xf32>
    %202 = vector.shape_cast %201 : vector<8xf32> to vector<8x1xf32>
    %203 = tpu.reciprocal %202 {approx = true} : vector<8x1xf32> -> vector<8x1xf32>
    %204 = vector.broadcast %203 : vector<8x1xf32> to vector<8x10xf32>
    %205 = arith.mulf %200, %204 : vector<8x10xf32>
    %206 = arith.truncf %205 : vector<8x10xf32> to vector<8x10xbf16>
    %207 = arith.truncf %192 : vector<10x16xf32> to vector<10x16xbf16>
    %cst_129 = arith.constant dense<0.000000e+00> : vector<8x16xf32>
    %208 = tpu.matmul %206, %207, %cst_129 {dimension_numbers = #tpu.dot_dimension_numbers<[1], [0], [0], [1], [0, 0, 1, 1], [], []>} : vector<8x10xbf16>, vector<10x16xbf16>, vector<8x16xf32> -> vector<8x16xf32>
    %209 = arith.truncf %208 : vector<8x16xf32> to vector<8x16xbf16>
    %c1_130 = arith.constant 1 : index
    %c0_131 = arith.constant 0 : index
    %c0_132 = arith.constant 0 : index
    %210 = vector.load %arg19[%c1_130, %c0_131, %c0_132] : memref<2x16x32xbf16, #tpu.memory_space<vmem>>, vector<1x16x32xbf16>
    %211 = vector.shape_cast %210 : vector<1x16x32xbf16> to vector<16x32xbf16>
    %cst_133 = arith.constant dense<0.000000e+00> : vector<8x32xf32>
    %212 = tpu.matmul %209, %211, %cst_133 {dimension_numbers = #tpu.dot_dimension_numbers<[1], [0], [0], [1], [0, 0, 1, 1], [], []>} : vector<8x16xbf16>, vector<16x32xbf16>, vector<8x32xf32> -> vector<8x32xf32>
    %213 = arith.addf %171, %212 : vector<8x32xf32>
    %c0_134 = arith.constant 0 : index
    %c0_135 = arith.constant 0 : index
    %214 = vector.load %arg20[%c0_134, %c0_135] : memref<1x32xf32, #tpu.memory_space<vmem>>, vector<1x32xf32>
    %215 = vector.broadcast %214 : vector<1x32xf32> to vector<8x32xf32>
    %216 = arith.addf %213, %215 : vector<8x32xf32>
    %217 = arith.addf %126, %216 : vector<8x32xf32>
    %c0_136 = arith.constant 0 : index
    %c0_137 = arith.constant 0 : index
    %218 = vector.load %arg21[%c0_136, %c0_137] : memref<1x32xf32, #tpu.memory_space<vmem>>, vector<1x32xf32>
    %c0_138 = arith.constant 0 : index
    %c0_139 = arith.constant 0 : index
    %219 = vector.load %arg22[%c0_138, %c0_139] : memref<1x32xf32, #tpu.memory_space<vmem>>, vector<1x32xf32>
    %cst_140 = arith.constant dense<0.000000e+00> : vector<8xf32>
    %220 = vector.multi_reduction <add>, %217, %cst_140 [1] : vector<8x32xf32> to vector<8xf32>
    %221 = vector.shape_cast %220 : vector<8xf32> to vector<8x1xf32>
    %cst_141 = arith.constant 3.200000e+01 : f32
    %222 = vector.broadcast %cst_141 : f32 to vector<8x1xf32>
    %223 = arith.divf %221, %222 : vector<8x1xf32>
    %224 = vector.broadcast %223 : vector<8x1xf32> to vector<8x32xf32>
    %225 = arith.subf %217, %224 : vector<8x32xf32>
    %226 = arith.mulf %225, %225 : vector<8x32xf32>
    %cst_142 = arith.constant dense<0.000000e+00> : vector<8xf32>
    %227 = vector.multi_reduction <add>, %226, %cst_142 [1] : vector<8x32xf32> to vector<8xf32>
    %228 = vector.shape_cast %227 : vector<8xf32> to vector<8x1xf32>
    %cst_143 = arith.constant 3.200000e+01 : f32
    %229 = vector.broadcast %cst_143 : f32 to vector<8x1xf32>
    %230 = arith.divf %228, %229 : vector<8x1xf32>
    %231 = vector.broadcast %223 : vector<8x1xf32> to vector<8x32xf32>
    %232 = arith.subf %217, %231 : vector<8x32xf32>
    %cst_144 = arith.constant 9.99999974E-6 : f32
    %233 = vector.broadcast %cst_144 : f32 to vector<8x1xf32>
    %234 = arith.addf %230, %233 : vector<8x1xf32>
    %235 = math.rsqrt %234 : vector<8x1xf32>
    %236 = vector.broadcast %235 : vector<8x1xf32> to vector<8x32xf32>
    %237 = arith.mulf %232, %236 : vector<8x32xf32>
    %238 = vector.broadcast %218 : vector<1x32xf32> to vector<8x32xf32>
    %239 = arith.mulf %237, %238 : vector<8x32xf32>
    %240 = vector.broadcast %219 : vector<1x32xf32> to vector<8x32xf32>
    %241 = arith.addf %239, %240 : vector<8x32xf32>
    %242 = arith.truncf %241 : vector<8x32xf32> to vector<8x32xbf16>
    %c0_145 = arith.constant 0 : index
    %c0_146 = arith.constant 0 : index
    %243 = vector.load %arg23[%c0_145, %c0_146] : memref<32x64xbf16, #tpu.memory_space<vmem>>, vector<32x64xbf16>
    %cst_147 = arith.constant dense<0.000000e+00> : vector<8x64xf32>
    %244 = tpu.matmul %242, %243, %cst_147 {dimension_numbers = #tpu.dot_dimension_numbers<[1], [0], [0], [1], [0, 0, 1, 1], [], []>} : vector<8x32xbf16>, vector<32x64xbf16>, vector<8x64xf32> -> vector<8x64xf32>
    %c0_148 = arith.constant 0 : index
    %c0_149 = arith.constant 0 : index
    %245 = vector.load %arg24[%c0_148, %c0_149] : memref<1x64xf32, #tpu.memory_space<vmem>>, vector<1x64xf32>
    %246 = vector.broadcast %245 : vector<1x64xf32> to vector<8x64xf32>
    %247 = arith.addf %244, %246 : vector<8x64xf32>
    %cst_150 = arith.constant 0.000000e+00 : f32
    %248 = vector.broadcast %cst_150 : f32 to vector<8x64xf32>
    %249 = arith.maximumf %247, %248 : vector<8x64xf32>
    %250 = arith.truncf %249 : vector<8x64xf32> to vector<8x64xbf16>
    %c0_151 = arith.constant 0 : index
    %c0_152 = arith.constant 0 : index
    %251 = vector.load %arg25[%c0_151, %c0_152] : memref<64x32xbf16, #tpu.memory_space<vmem>>, vector<64x32xbf16>
    %cst_153 = arith.constant dense<0.000000e+00> : vector<8x32xf32>
    %252 = tpu.matmul %250, %251, %cst_153 {dimension_numbers = #tpu.dot_dimension_numbers<[1], [0], [0], [1], [0, 0, 1, 1], [], []>} : vector<8x64xbf16>, vector<64x32xbf16>, vector<8x32xf32> -> vector<8x32xf32>
    %c0_154 = arith.constant 0 : index
    %c0_155 = arith.constant 0 : index
    %253 = vector.load %arg26[%c0_154, %c0_155] : memref<1x32xf32, #tpu.memory_space<vmem>>, vector<1x32xf32>
    %254 = vector.broadcast %253 : vector<1x32xf32> to vector<8x32xf32>
    %255 = arith.addf %252, %254 : vector<8x32xf32>
    %256 = arith.addf %241, %255 : vector<8x32xf32>
    %c0_156 = arith.constant 0 : index
    %c0_157 = arith.constant 0 : index
    %257 = vector.load %arg27[%c0_156, %c0_157] : memref<1x32xf32, #tpu.memory_space<vmem>>, vector<1x32xf32>
    %c0_158 = arith.constant 0 : index
    %c0_159 = arith.constant 0 : index
    %258 = vector.load %arg28[%c0_158, %c0_159] : memref<1x32xf32, #tpu.memory_space<vmem>>, vector<1x32xf32>
    %cst_160 = arith.constant dense<0.000000e+00> : vector<8xf32>
    %259 = vector.multi_reduction <add>, %256, %cst_160 [1] : vector<8x32xf32> to vector<8xf32>
    %260 = vector.shape_cast %259 : vector<8xf32> to vector<8x1xf32>
    %cst_161 = arith.constant 3.200000e+01 : f32
    %261 = vector.broadcast %cst_161 : f32 to vector<8x1xf32>
    %262 = arith.divf %260, %261 : vector<8x1xf32>
    %263 = vector.broadcast %262 : vector<8x1xf32> to vector<8x32xf32>
    %264 = arith.subf %256, %263 : vector<8x32xf32>
    %265 = arith.mulf %264, %264 : vector<8x32xf32>
    %cst_162 = arith.constant dense<0.000000e+00> : vector<8xf32>
    %266 = vector.multi_reduction <add>, %265, %cst_162 [1] : vector<8x32xf32> to vector<8xf32>
    %267 = vector.shape_cast %266 : vector<8xf32> to vector<8x1xf32>
    %cst_163 = arith.constant 3.200000e+01 : f32
    %268 = vector.broadcast %cst_163 : f32 to vector<8x1xf32>
    %269 = arith.divf %267, %268 : vector<8x1xf32>
    %270 = vector.broadcast %262 : vector<8x1xf32> to vector<8x32xf32>
    %271 = arith.subf %256, %270 : vector<8x32xf32>
    %cst_164 = arith.constant 9.99999974E-6 : f32
    %272 = vector.broadcast %cst_164 : f32 to vector<8x1xf32>
    %273 = arith.addf %269, %272 : vector<8x1xf32>
    %274 = math.rsqrt %273 : vector<8x1xf32>
    %275 = vector.broadcast %274 : vector<8x1xf32> to vector<8x32xf32>
    %276 = arith.mulf %271, %275 : vector<8x32xf32>
    %277 = vector.broadcast %257 : vector<1x32xf32> to vector<8x32xf32>
    %278 = arith.mulf %276, %277 : vector<8x32xf32>
    %279 = vector.broadcast %258 : vector<1x32xf32> to vector<8x32xf32>
    %280 = arith.addf %278, %279 : vector<8x32xf32>
    %c0_165 = arith.constant 0 : index
    %c0_166 = arith.constant 0 : index
    %c0_167 = arith.constant 0 : index
    %281 = vector.load %arg29[%c0_165, %c0_166, %c0_167] : memref<1x8x32xf32, #tpu.memory_space<vmem>>, vector<1x8x32xf32>
    %282 = vector.shape_cast %281 : vector<1x8x32xf32> to vector<8x32xf32>
    %283 = vector.shape_cast %280 : vector<8x32xf32> to vector<1x8x32xf32>
    tpu.vector_store %arg29[%c0_165, %c0_166, %c0_167], %283 {strides = array<i32>} : memref<1x8x32xf32, #tpu.memory_space<vmem>>, vector<1x8x32xf32>,
    return
  }
  func.func @transform_0(%arg0: i32) -> (i32, i32, i32) {
    %c0_i32 = arith.constant 0 : i32
    %c0_i32_0 = arith.constant 0 : i32
    %c0_i32_1 = arith.constant 0 : i32
    return %arg0, %c0_i32, %c0_i32_0 : i32, i32, i32
  }
  func.func @transform_1(%arg0: i32) -> (i32, i32, i32) {
    %c0_i32 = arith.constant 0 : i32
    %c0_i32_0 = arith.constant 0 : i32
    %c0_i32_1 = arith.constant 0 : i32
    return %arg0, %c0_i32, %c0_i32_0 : i32, i32, i32
  }
  func.func @transform_2(%arg0: i32) -> (i32, i32, i32) {
    %c0_i32 = arith.constant 0 : i32
    %c0_i32_0 = arith.constant 0 : i32
    %c0_i32_1 = arith.constant 0 : i32
    %c0_i32_2 = arith.constant 0 : i32
    return %c0_i32, %c0_i32_0, %c0_i32_1 : i32, i32, i32
  }
  func.func @transform_3(%arg0: i32) -> (i32, i32, i32) {
    %c0_i32 = arith.constant 0 : i32
    %c0_i32_0 = arith.constant 0 : i32
    %c0_i32_1 = arith.constant 0 : i32
    %c0_i32_2 = arith.constant 0 : i32
    return %c0_i32, %c0_i32_0, %c0_i32_1 : i32, i32, i32
  }
  func.func @transform_4(%arg0: i32) -> (i32, i32, i32) {
    %c0_i32 = arith.constant 0 : i32
    %c0_i32_0 = arith.constant 0 : i32
    %c0_i32_1 = arith.constant 0 : i32
    %c0_i32_2 = arith.constant 0 : i32
    return %c0_i32, %c0_i32_0, %c0_i32_1 : i32, i32, i32
  }
  func.func @transform_5(%arg0: i32) -> (i32, i32, i32) {
    %c0_i32 = arith.constant 0 : i32
    %c0_i32_0 = arith.constant 0 : i32
    %c0_i32_1 = arith.constant 0 : i32
    %c0_i32_2 = arith.constant 0 : i32
    return %c0_i32, %c0_i32_0, %c0_i32_1 : i32, i32, i32
  }
  func.func @transform_6(%arg0: i32) -> (i32, i32, i32) {
    %c0_i32 = arith.constant 0 : i32
    %c0_i32_0 = arith.constant 0 : i32
    %c0_i32_1 = arith.constant 0 : i32
    %c0_i32_2 = arith.constant 0 : i32
    return %c0_i32, %c0_i32_0, %c0_i32_1 : i32, i32, i32
  }
  func.func @transform_7(%arg0: i32) -> (i32, i32, i32) {
    %c0_i32 = arith.constant 0 : i32
    %c0_i32_0 = arith.constant 0 : i32
    %c0_i32_1 = arith.constant 0 : i32
    %c0_i32_2 = arith.constant 0 : i32
    return %c0_i32, %c0_i32_0, %c0_i32_1 : i32, i32, i32
  }
  func.func @transform_8(%arg0: i32) -> (i32, i32, i32) {
    %c0_i32 = arith.constant 0 : i32
    %c0_i32_0 = arith.constant 0 : i32
    %c0_i32_1 = arith.constant 0 : i32
    %c0_i32_2 = arith.constant 0 : i32
    return %c0_i32, %c0_i32_0, %c0_i32_1 : i32, i32, i32
  }
  func.func @transform_9(%arg0: i32) -> (i32, i32) {
    %c0_i32 = arith.constant 0 : i32
    %c0_i32_0 = arith.constant 0 : i32
    %c0_i32_1 = arith.constant 0 : i32
    return %c0_i32, %c0_i32_0 : i32, i32
  }
  func.func @transform_10(%arg0: i32) -> (i32, i32) {
    %c0_i32 = arith.constant 0 : i32
    %c0_i32_0 = arith.constant 0 : i32
    %c0_i32_1 = arith.constant 0 : i32
    return %c0_i32, %c0_i32_0 : i32, i32
  }
  func.func @transform_11(%arg0: i32) -> (i32, i32) {
    %c0_i32 = arith.constant 0 : i32
    %c0_i32_0 = arith.constant 0 : i32
    %c0_i32_1 = arith.constant 0 : i32
    return %c0_i32, %c0_i32_0 : i32, i32
  }
  func.func @transform_12(%arg0: i32) -> (i32, i32, i32) {
    %c0_i32 = arith.constant 0 : i32
    %c0_i32_0 = arith.constant 0 : i32
    %c0_i32_1 = arith.constant 0 : i32
    %c0_i32_2 = arith.constant 0 : i32
    return %c0_i32, %c0_i32_0, %c0_i32_1 : i32, i32, i32
  }
  func.func @transform_13(%arg0: i32) -> (i32, i32, i32) {
    %c0_i32 = arith.constant 0 : i32
    %c0_i32_0 = arith.constant 0 : i32
    %c0_i32_1 = arith.constant 0 : i32
    %c0_i32_2 = arith.constant 0 : i32
    return %c0_i32, %c0_i32_0, %c0_i32_1 : i32, i32, i32
  }
  func.func @transform_14(%arg0: i32) -> (i32, i32, i32) {
    %c0_i32 = arith.constant 0 : i32
    %c0_i32_0 = arith.constant 0 : i32
    %c0_i32_1 = arith.constant 0 : i32
    %c0_i32_2 = arith.constant 0 : i32
    return %c0_i32, %c0_i32_0, %c0_i32_1 : i32, i32, i32
  }
  func.func @transform_15(%arg0: i32) -> (i32, i32, i32) {
    %c0_i32 = arith.constant 0 : i32
    %c0_i32_0 = arith.constant 0 : i32
    %c0_i32_1 = arith.constant 0 : i32
    %c0_i32_2 = arith.constant 0 : i32
    return %c0_i32, %c0_i32_0, %c0_i32_1 : i32, i32, i32
  }
  func.func @transform_16(%arg0: i32) -> (i32, i32, i32) {
    %c0_i32 = arith.constant 0 : i32
    %c0_i32_0 = arith.constant 0 : i32
    %c0_i32_1 = arith.constant 0 : i32
    %c0_i32_2 = arith.constant 0 : i32
    return %c0_i32, %c0_i32_0, %c0_i32_1 : i32, i32, i32
  }
  func.func @transform_17(%arg0: i32) -> (i32, i32, i32) {
    %c0_i32 = arith.constant 0 : i32
    %c0_i32_0 = arith.constant 0 : i32
    %c0_i32_1 = arith.constant 0 : i32
    %c0_i32_2 = arith.constant 0 : i32
    return %c0_i32, %c0_i32_0, %c0_i32_1 : i32, i32, i32
  }
  func.func @transform_18(%arg0: i32) -> (i32, i32, i32) {
    %c0_i32 = arith.constant 0 : i32
    %c0_i32_0 = arith.constant 0 : i32
    %c0_i32_1 = arith.constant 0 : i32
    %c0_i32_2 = arith.constant 0 : i32
    return %c0_i32, %c0_i32_0, %c0_i32_1 : i32, i32, i32
  }
  func.func @transform_19(%arg0: i32) -> (i32, i32) {
    %c0_i32 = arith.constant 0 : i32
    %c0_i32_0 = arith.constant 0 : i32
    %c0_i32_1 = arith.constant 0 : i32
    return %c0_i32, %c0_i32_0 : i32, i32
  }
  func.func @transform_20(%arg0: i32) -> (i32, i32) {
    %c0_i32 = arith.constant 0 : i32
    %c0_i32_0 = arith.constant 0 : i32
    %c0_i32_1 = arith.constant 0 : i32
    return %c0_i32, %c0_i32_0 : i32, i32
  }
  func.func @transform_21(%arg0: i32) -> (i32, i32) {
    %c0_i32 = arith.constant 0 : i32
    %c0_i32_0 = arith.constant 0 : i32
    %c0_i32_1 = arith.constant 0 : i32
    return %c0_i32, %c0_i32_0 : i32, i32
  }
  func.func @transform_22(%arg0: i32) -> (i32, i32) {
    %c0_i32 = arith.constant 0 : i32
    %c0_i32_0 = arith.constant 0 : i32
    %c0_i32_1 = arith.constant 0 : i32
    return %c0_i32, %c0_i32_0 : i32, i32
  }
  func.func @transform_23(%arg0: i32) -> (i32, i32) {
    %c0_i32 = arith.constant 0 : i32
    %c0_i32_0 = arith.constant 0 : i32
    %c0_i32_1 = arith.constant 0 : i32
    return %c0_i32, %c0_i32_0 : i32, i32
  }
  func.func @transform_24(%arg0: i32) -> (i32, i32) {
    %c0_i32 = arith.constant 0 : i32
    %c0_i32_0 = arith.constant 0 : i32
    %c0_i32_1 = arith.constant 0 : i32
    return %c0_i32, %c0_i32_0 : i32, i32
  }
  func.func @transform_25(%arg0: i32) -> (i32, i32) {
    %c0_i32 = arith.constant 0 : i32
    %c0_i32_0 = arith.constant 0 : i32
    %c0_i32_1 = arith.constant 0 : i32
    return %c0_i32, %c0_i32_0 : i32, i32
  }
  func.func @transform_26(%arg0: i32) -> (i32, i32) {
    %c0_i32 = arith.constant 0 : i32
    %c0_i32_0 = arith.constant 0 : i32
    %c0_i32_1 = arith.constant 0 : i32
    return %c0_i32, %c0_i32_0 : i32, i32
  }
  func.func @transform_27(%arg0: i32) -> (i32, i32) {
    %c0_i32 = arith.constant 0 : i32
    %c0_i32_0 = arith.constant 0 : i32
    %c0_i32_1 = arith.constant 0 : i32
    return %c0_i32, %c0_i32_0 : i32, i32
  }
  func.func @transform_28(%arg0: i32) -> (i32, i32, i32) {
    %c0_i32 = arith.constant 0 : i32
    %c0_i32_0 = arith.constant 0 : i32
    %c0_i32_1 = arith.constant 0 : i32
    return %arg0, %c0_i32, %c0_i32_0 : i32, i32, i32
  }
}

</mosaic_0001>

<llo_original>
// kernel: transformer_forward.9
$region0: #{transformer_forward.9}
  #allocation0 [shape = 'u32[]', space=smem, size = 0x4, offset = 0x4, fixed_abs, tag = 'smem constant byte address 0x4 - core index']
  #allocation1 [shape = 'u32[144,128]{1,0:T(1,128)}', space=vmem, size = 0x12000, scoped, tag = 'internal scratch']
  %s0 = inlined_call_operand.vmem [shape: f32[2,8,32], index: 0, kind: input, shape index: {}]
  %s1 = inlined_call_operand.vmem [shape: f32[1,32], index: 1, kind: input, shape index: {}]
  %s2 = inlined_call_operand.vmem [shape: f32[1,32], index: 2, kind: input, shape index: {}]
  %s3 = inlined_call_operand.vmem [shape: bf16[32,128], index: 3, kind: input, shape index: {}]
  %s4 = inlined_call_operand.vmem [shape: f32[1,128], index: 4, kind: input, shape index: {}]
  %s5 = inlined_call_operand.vmem [shape: f32[2,8,128], index: 5, kind: output, shape index: {}]
  %s6 = sld [smem:[#allocation0]]
  $region53: #{transformer_forward.9} parent=0
    _
  %s8 = ssub.s32 1, %s6
  %s9 = scalar_select 0, %s8, %s6
  loop: start=0, step=1, limit=4
  $region2: #{transformer_forward.9} parent=0 // loop_pre_header
    _
  $region3: #{transformer_forward.9} parent=0 // loop_header
    %s11 = sphi 0, %s15
    %p12 = scmp.ge.s32.totalorder %s11, 4
    %s21 = sphi 0, %s23
    %s24 = sphi 0, %s21
    %s25 = sphi 0, %s24
    %s41 = sphi 0, %s25
    %s45 = sphi 0, %s45
    %s47 = sphi 0, %s45
    %s48 = sphi 0, %s47
    %s62 = sphi 0, %s48
    %s66 = sphi 0, %s66
    %s68 = sphi 0, %s66
    %s69 = sphi 0, %s68
    %s83 = sphi 0, %s69
    %s87 = sphi 0, %s87
    %s89 = sphi 0, %s87
    %s90 = sphi 0, %s89
    %s104 = sphi 0, %s90
    %s108 = sphi 0, %s108
    %s110 = sphi 0, %s108
    %s111 = sphi 0, %s110
    %s125 = sphi 0, %s111
    %s131 = sphi 0, %s133
    %s134 = sphi 0, %s131
    %s135 = sphi 0, %s134
    %s151 = sphi 0, %s135
  $region4: #{transformer_forward.9} parent=0 // loop_header_branch
    %14 = sbr.rel (%p12) target = $region8
  $region5: #{transformer_forward.9} parent=0 // loop_body
    %s16 = ssub.s32 %s11, 1
    %s17 = ssub.s32 %s11, 2
    %s18 = sadd.s32 %s11, 1
    %s19 = ssub.s32 %s11, %s18
    %p20 = scmp.eq.s32.totalorder %s19, 0
    %s22 = sadd.s32 %s21, 1
    %s23 = scalar_select %p20, %s21, %s22
    %p26 = pneg %p20
    %p27 = scmp.eq.s32.totalorder %s11, 1
    %p28 = por %p26, %p27
    %p29 = scmp.ne.s32.totalorder %s21, %s24
    %p30 = scmp.eq.s32.totalorder %s11, 0
    %p31 = por %p29, %p30
    %p32 = scmp.ne.s32.totalorder %s21, %s24
    %p33 = scmp.eq.s32.totalorder %s16, 1
    %p34 = por %p32, %p33
    %p35 = scmp.ne.s32.totalorder %s24, %s25
    %p36 = scmp.eq.s32.totalorder %s16, 0
    %p37 = por %p35, %p36
    %p38 = scmp.ne.s32.totalorder %s24, %s25
    %p39 = scmp.eq.s32.totalorder %s17, 1
    %p40 = por %p38, %p39
    %p42 = scmp.ne.s32.totalorder %s25, %s41
    %p43 = scmp.eq.s32.totalorder %s17, 0
    %p44 = por %p42, %p43
    %s46 = sadd.s32 %s45, 1
    %p49 = scmp.eq.s32.totalorder %s11, 1
    %p50 = scmp.ne.s32.totalorder %s45, %s47
    %p51 = scmp.eq.s32.totalorder %s11, 0
    %p52 = por %p50, %p51
    %p53 = scmp.ne.s32.totalorder %s45, %s47
    %p54 = scmp.eq.s32.totalorder %s16, 1
    %p55 = por %p53, %p54
    %p56 = scmp.ne.s32.totalorder %s47, %s48
    %p57 = scmp.eq.s32.totalorder %s16, 0
    %p58 = por %p56, %p57
    %p59 = scmp.ne.s32.totalorder %s47, %s48
    %p60 = scmp.eq.s32.totalorder %s17, 1
    %p61 = por %p59, %p60
    %p63 = scmp.ne.s32.totalorder %s48, %s62
    %p64 = scmp.eq.s32.totalorder %s17, 0
    %p65 = por %p63, %p64
    %s67 = sadd.s32 %s66, 1
    %p70 = scmp.eq.s32.totalorder %s11, 1
    %p71 = scmp.ne.s32.totalorder %s66, %s68
    %p72 = scmp.eq.s32.totalorder %s11, 0
    %p73 = por %p71, %p72
    %p74 = scmp.ne.s32.totalorder %s66, %s68
    %p75 = scmp.eq.s32.totalorder %s16, 1
    %p76 = por %p74, %p75
    %p77 = scmp.ne.s32.totalorder %s68, %s69
    %p78 = scmp.eq.s32.totalorder %s16, 0
    %p79 = por %p77, %p78
    %p80 = scmp.ne.s32.totalorder %s68, %s69
    %p81 = scmp.eq.s32.totalorder %s17, 1
    %p82 = por %p80, %p81
    %p84 = scmp.ne.s32.totalorder %s69, %s83
    %p85 = scmp.eq.s32.totalorder %s17, 0
    %p86 = por %p84, %p85
    %s88 = sadd.s32 %s87, 1
    %p91 = scmp.eq.s32.totalorder %s11, 1
    %p92 = scmp.ne.s32.totalorder %s87, %s89
    %p93 = scmp.eq.s32.totalorder %s11, 0
    %p94 = por %p92, %p93
    %p95 = scmp.ne.s32.totalorder %s87, %s89
    %p96 = scmp.eq.s32.totalorder %s16, 1
    %p97 = por %p95, %p96
    %p98 = scmp.ne.s32.totalorder %s89, %s90
    %p99 = scmp.eq.s32.totalorder %s16, 0
    %p100 = por %p98, %p99
    %p101 = scmp.ne.s32.totalorder %s89, %s90
    %p102 = scmp.eq.s32.totalorder %s17, 1
    %p103 = por %p101, %p102
    %p105 = scmp.ne.s32.totalorder %s90, %s104
    %p106 = scmp.eq.s32.totalorder %s17, 0
    %p107 = por %p105, %p106
    %s109 = sadd.s32 %s108, 1
    %p112 = scmp.eq.s32.totalorder %s11, 1
    %p113 = scmp.ne.s32.totalorder %s108, %s110
    %p114 = scmp.eq.s32.totalorder %s11, 0
    %p115 = por %p113, %p114
    %p116 = scmp.ne.s32.totalorder %s108, %s110
    %p117 = scmp.eq.s32.totalorder %s16, 1
    %p118 = por %p116, %p117
    %p119 = scmp.ne.s32.totalorder %s110, %s111
    %p120 = scmp.eq.s32.totalorder %s16, 0
    %p121 = por %p119, %p120
    %p122 = scmp.ne.s32.totalorder %s110, %s111
    %p123 = scmp.eq.s32.totalorder %s17, 1
    %p124 = por %p122, %p123
    %p126 = scmp.ne.s32.totalorder %s111, %s125
    %p127 = scmp.eq.s32.totalorder %s17, 0
    %p128 = por %p126, %p127
    %s129 = ssub.s32 %s11, %s18
    %p130 = scmp.eq.s32.totalorder %s129, 0
    %s132 = sadd.s32 %s131, 1
    %s133 = scalar_select %p130, %s131, %s132
    %p136 = pneg %p130
    %p137 = scmp.eq.s32.totalorder %s11, 1
    %p138 = por %p136, %p137
    %p139 = scmp.ne.s32.totalorder %s131, %s134
    %p140 = scmp.eq.s32.totalorder %s11, 0
    %p141 = por %p139, %p140
    %p142 = scmp.ne.s32.totalorder %s131, %s134
    %p143 = scmp.eq.s32.totalorder %s16, 1
    %p144 = por %p142, %p143
    %p145 = scmp.ne.s32.totalorder %s134, %s135
    %p146 = scmp.eq.s32.totalorder %s16, 0
    %p147 = por %p145, %p146
    %p148 = scmp.ne.s32.totalorder %s134, %s135
    %p149 = scmp.eq.s32.totalorder %s17, 1
    %p150 = por %p148, %p149
    %p152 = scmp.ne.s32.totalorder %s135, %s151
    %p153 = scmp.eq.s32.totalorder %s17, 0
    %p154 = por %p152, %p153
    %p155 = scmp.le.s32.totalorder 1, %s11
    %p156 = scmp.lt.s32.totalorder %s11, 3
    %p157 = pnand %p155, %p156
    %p158 = pneg %p157
    // Predicated region
    $region9: #{transformer_forward.9} parent=5 // pred_check
      _
    $region10: #{transformer_forward.9} parent=5 // pred_check_branch
      %160 = sbr.rel (%p157) target = $region12
    $region11: #{transformer_forward.9} parent=5 // pred_region
      %s161 = ssub.s32 %s11, 1
      // Predicated region
      $region13: #{transformer_forward.9} parent=11 // pred_check
        %p162 = pneg %p58
      $region14: #{transformer_forward.9} parent=11 // pred_check_branch
        %164 = sbr.rel (%p162) target = $region16
      $region15: #{transformer_forward.9} parent=11 // pred_region
        _
      $region16: #{transformer_forward.9} parent=11 // pred_fallthru
        _
      // Predicated region
      $region17: #{transformer_forward.9} parent=11 // pred_check
        %p165 = pneg %p79
      $region18: #{transformer_forward.9} parent=11 // pred_check_branch
        %167 = sbr.rel (%p165) target = $region20
      $region19: #{transformer_forward.9} parent=11 // pred_region
        _
      $region20: #{transformer_forward.9} parent=11 // pred_fallthru
        _
      // Predicated region
      $region21: #{transformer_forward.9} parent=11 // pred_check
        %p168 = pneg %p100
      $region22: #{transformer_forward.9} parent=11 // pred_check_branch
        %170 = sbr.rel (%p168) target = $region24
      $region23: #{transformer_forward.9} parent=11 // pred_region
        _
      $region24: #{transformer_forward.9} parent=11 // pred_fallthru
        _
      // Predicated region
      $region25: #{transformer_forward.9} parent=11 // pred_check
        %p171 = pneg %p121
      $region26: #{transformer_forward.9} parent=11 // pred_check_branch
        %173 = sbr.rel (%p171) target = $region28
      $region27: #{transformer_forward.9} parent=11 // pred_region
        _
      $region28: #{transformer_forward.9} parent=11 // pred_fallthru
        _
    $region12: #{transformer_forward.9} parent=5 // pred_fallthru
      _
    %p174 = scmp.lt.s32.totalorder %s11, 2
    // Predicated region
    $region29: #{transformer_forward.9} parent=5 // pred_check
      %p175 = pneg %p174
    $region30: #{transformer_forward.9} parent=5 // pred_check_branch
      %177 = sbr.rel (%p175) target = $region32
    $region31: #{transformer_forward.9} parent=5 // pred_region
      // Predicated region
      $region33: #{transformer_forward.9} parent=31 // pred_check
        %p178 = pneg %p31
      $region34: #{transformer_forward.9} parent=31 // pred_check_branch
        %180 = sbr.rel (%p178) target = $region36
      $region35: #{transformer_forward.9} parent=31 // pred_region
        %p181 = scmp.lt.s32.totalorder %s11, 1
        %s182 = scalar_select %p181, %s11, 1
        %s183 = smul.addr %s182, 8
        %s184 = scalar_lea.vmem %s0, %s183
      $region36: #{transformer_forward.9} parent=31 // pred_fallthru
        _
    $region32: #{transformer_forward.9} parent=5 // pred_fallthru
      _
    %p185 = scmp.le.s32.totalorder 1, %s11
    %p186 = scmp.lt.s32.totalorder %s11, 3
    %p187 = pnand %p185, %p186
    %p188 = pneg %p187
    // Predicated region
    $region37: #{transformer_forward.9} parent=5 // pred_check
      _
    $region38: #{transformer_forward.9} parent=5 // pred_check_branch
      %190 = sbr.rel (%p187) target = $region40
    $region39: #{transformer_forward.9} parent=5 // pred_region
      %s191 = ssub.s32 %s11, 1
      %p192 = scmp.lt.s32.totalorder %s16, 1
      %s193 = scalar_select %p192, %s16, 1
      %s194 = smul.addr %s193, 8
      %s195 = scalar_lea.vmem %s0, %s194
      %p196 = pneg %p37
      %p197 = pneg %p34
      %p198 = pneg %p58
      %p199 = pneg %p55
      %p200 = pneg %p79
      %p201 = pneg %p76
      %p202 = pneg %p100
      %p203 = pneg %p97
      %p204 = pneg %p121
      %p205 = pneg %p118
      %p206 = pneg %p147
      %p207 = pneg %p144
      %p208 = scmp.lt.s32.totalorder %s16, 1
      %s209 = scalar_select %p208, %s16, 1
      %s210 = smul.addr %s209, 8
      %s211 = scalar_lea.vmem %s5, %s210
      %p212 = scmp.lt.s32.totalorder %s16, 1
      %s213 = scalar_select %p212, %s16, 1
      %s214 = smul.addr %s213, 8
      %s215 = scalar_lea.vmem %s0, %s214
      %p216 = scmp.lt.s32.totalorder %s16, 1
      %s217 = scalar_select %p216, %s16, 1
      %s218 = smul.addr %s217, 8
      %s219 = scalar_lea.vmem %s5, %s218
      %v221 = vld [vmem:[%s215] sm:$0xff]
      %v222 = vld [vmem:[%s1] sm:$0x1]
      %v223 = vld [vmem:[%s2] sm:$0x1]
      %vm224 = vcmask 261120
      %v225 = vsel %vm224, %v221, 0.0
      %226 = vadd.xlane.f32.xlu0 %v225
      %v227 = vpop.xlane.xlu0 %226
      %v228 = vrcp.pop 32.0
      %v229 = vmul.f32 %v227, %v228
      %v230 = vsub.f32 %v221, %v229
      %v231 = vmul.f32 %v230, %v230
      %v232 = vsel %vm224, %v231, 0.0
      %233 = vadd.xlane.f32.xlu0 %v232
      %v234 = vpop.xlane.xlu0 %233
      %v235 = vmul.f32 %v234, %v228
      %v236 = vadd.f32 %v235, 1e-05
      %v237 = vrsqrt.pop %v236
      %v238 = vmul.f32 %v230, %v237
      %v240 = vlaneseq
      %v241 = vshrl.u32 %v240, 7
      %v242 = vsub.s32 0, %v241
      %v243 = vrot.slane %v222, %v242
      %v245 = vmul.f32 %v238, %v243
      %v247 = vlaneseq
      %v248 = vshrl.u32 %v247, 7
      %v249 = vsub.s32 0, %v248
      %v250 = vrot.slane %v223, %v249
      %v252 = vadd.f32 %v245, %v250
      %v253 = vpack.c.bf16 %v252, %v252
      %v254 = vld [vmem:[%s3] sm:$0xf]
      %v255 = vld [vmem:[%s3 + $0x4] sm:$0xf]
      %v256 = vld [vmem:[%s3 + $0x8] sm:$0xf]
      %v257 = vld [vmem:[%s3 + $0xc] sm:$0xf]
      %v258 = vld [vmem:[%s4] sm:$0x1]
      %v260 = vlaneseq
      %v261 = vshrl.u32 %v260, 7
      %v262 = vsub.s32 0, %v261
      %v263 = vrot.slane %v258, %v262
      %v269 = vunpack.c.l.b16 %v254
      %v270 = vunpack.c.l.b16 %v255
      %v271 = vunpack.c.l.b16 %v256
      %v272 = vunpack.c.l.b16 %v257
      %v273 = vpack.c.b16 %v270, %v269
      %v274 = vpack.c.b16 %v272, %v271
      %v278 = vsel %vm224, %v253, 0
      %280 = vmatprep.subr.bf16.mxu0 0
      %281 = vmatpush1.bf16.msra.mxu0 %v273
      %282 = vmatprep.subr.bf16.mxu0 0
      %283 = vmatpush1.bf16.msra.mxu0 %v274
      %284 = vmatprep.subr.bf16.mxu0 0
      %285 = vmatpush1.bf16.msra.mxu0 0
      %286 = vmatprep.subr.bf16.mxu0 0
      %287 = vmatpush1.bf16.msra.mxu0 0
      %288 = vmatprep.subr.bf16.mxu0 0
      %289 = vmatpush1.bf16.msra.mxu0 0
      %290 = vmatprep.subr.bf16.mxu0 0
      %291 = vmatpush1.bf16.msra.mxu0 0
      %292 = vmatprep.subr.bf16.mxu0 0
      %293 = vmatpush1.bf16.msra.mxu0 0
      %294 = vmatprep.subr.bf16.mxu0 0
      %295 = vmatpush1.bf16.msra.mxu0 0
      %296 = vmatprep.subr.bf16.mxu0 0
      %297 = vmatpush1.bf16.msra.mxu0 0
      %298 = vmatprep.subr.bf16.mxu0 0
      %299 = vmatpush1.bf16.msra.mxu0 0
      %300 = vmatprep.subr.bf16.mxu0 0
      %301 = vmatpush1.bf16.msra.mxu0 0
      %302 = vmatprep.subr.bf16.mxu0 0
      %303 = vmatpush1.bf16.msra.mxu0 0
      %304 = vmatprep.subr.bf16.mxu0 0
      %305 = vmatpush1.bf16.msra.mxu0 0
      %306 = vmatprep.subr.bf16.mxu0 0
      %307 = vmatpush1.bf16.msra.mxu0 0
      %308 = vmatprep.subr.bf16.mxu0 0
      %309 = vmatpush1.bf16.msra.mxu0 0
      %310 = vmatprep.subr.bf16.mxu0 0
      %311 = vmatpush1.bf16.msra.mxu0 0
      %312 = vmatprep.mubr.bf16.mxu0 0
      %313 = vmatmul.mubr.bf16.gmra.mrb[0].mxu0 %v278
      %v314 = vpop.f32.mrb[0].mxu0
      %v315 = vadd.f32 %v263, %v314
      %v316 = vpop.f32.mrb[0].mxu0
      %v317 = vpop.f32.mrb[0].mxu0
      %v318 = vpop.f32.mrb[0].mxu0
      %319 = vdwg.mxu0
      %320 = vst [vmem:[%s219] sm:$0xff] %v315
      %p321 = scmp.lt.s32.totalorder %s16, 1
      %s322 = scalar_select %p321, %s16, 1
      %s323 = smul.addr %s322, 8
      %s324 = scalar_lea.vmem %s5, %s323
      // Predicated region
      $region41: #{transformer_forward.9} parent=39 // pred_check
        %p325 = pneg %p144
      $region42: #{transformer_forward.9} parent=39 // pred_check_branch
        %327 = sbr.rel (%p325) target = $region44
      $region43: #{transformer_forward.9} parent=39 // pred_region
        _
      $region44: #{transformer_forward.9} parent=39 // pred_fallthru
        _
    $region40: #{transformer_forward.9} parent=5 // pred_fallthru
      _
    %p328 = scmp.le.s32.totalorder 2, %s11
    // Predicated region
    $region45: #{transformer_forward.9} parent=5 // pred_check
      %p329 = pneg %p328
    $region46: #{transformer_forward.9} parent=5 // pred_check_branch
      %331 = sbr.rel (%p329) target = $region48
    $region47: #{transformer_forward.9} parent=5 // pred_region
      %s332 = ssub.s32 %s11, 2
      // Predicated region
      $region49: #{transformer_forward.9} parent=47 // pred_check
        %p333 = pneg %p150
      $region50: #{transformer_forward.9} parent=47 // pred_check_branch
        %335 = sbr.rel (%p333) target = $region52
      $region51: #{transformer_forward.9} parent=47 // pred_region
        %p336 = scmp.lt.s32.totalorder %s17, 1
        %s337 = scalar_select %p336, %s17, 1
        %s338 = smul.addr %s337, 8
        %s339 = scalar_lea.vmem %s5, %s338
      $region52: #{transformer_forward.9} parent=47 // pred_fallthru
        _
    $region48: #{transformer_forward.9} parent=5 // pred_fallthru
      _
  $region6: #{transformer_forward.9} parent=0 // loop_footer
    %s15 = sadd.s32 1, %s11
  $region7: #{transformer_forward.9} parent=0 // loop_footer_branch
    %10 = sbr.rel target = $region3
  $region8: #{transformer_forward.9} parent=0 // loop_exit
    _

// kernel: transformer_forward.6
$region0: #{transformer_forward.6}
  #allocation0 [shape = 'u32[]', space=smem, size = 0x4, offset = 0x4, fixed_abs, tag = 'smem constant byte address 0x4 - core index']
  #allocation1 [shape = 'u32[144,128]{1,0:T(1,128)}', space=vmem, size = 0x12000, scoped, tag = 'internal scratch']
  %s0 = inlined_call_operand.vmem [shape: f32[2,10,32], index: 0, kind: input, shape index: {}]
  %s1 = inlined_call_operand.vmem [shape: f32[2,1,10], index: 1, kind: input, shape index: {}]
  %s2 = inlined_call_operand.vmem [shape: bf16[2,32,16], index: 2, kind: input, shape index: {}]
  %s3 = inlined_call_operand.vmem [shape: f32[2,1,16], index: 3, kind: input, shape index: {}]
  %s4 = inlined_call_operand.vmem [shape: bf16[2,32,16], index: 4, kind: input, shape index: {}]
  %s5 = inlined_call_operand.vmem [shape: f32[2,1,16], index: 5, kind: input, shape index: {}]
  %s6 = inlined_call_operand.vmem [shape: bf16[2,32,16], index: 6, kind: input, shape index: {}]
  %s7 = inlined_call_operand.vmem [shape: f32[2,1,16], index: 7, kind: input, shape index: {}]
  %s8 = inlined_call_operand.vmem [shape: bf16[2,16,32], index: 8, kind: input, shape index: {}]
  %s9 = inlined_call_operand.vmem [shape: f32[1,32], index: 9, kind: input, shape index: {}]
  %s10 = inlined_call_operand.vmem [shape: f32[1,32], index: 10, kind: input, shape index: {}]
  %s11 = inlined_call_operand.vmem [shape: f32[1,32], index: 11, kind: input, shape index: {}]
  %s12 = inlined_call_operand.vmem [shape: bf16[32,64], index: 12, kind: input, shape index: {}]
  %s13 = inlined_call_operand.vmem [shape: f32[1,64], index: 13, kind: input, shape index: {}]
  %s14 = inlined_call_operand.vmem [shape: bf16[64,32], index: 14, kind: input, shape index: {}]
  %s15 = inlined_call_operand.vmem [shape: f32[1,32], index: 15, kind: input, shape index: {}]
  %s16 = inlined_call_operand.vmem [shape: f32[1,32], index: 16, kind: input, shape index: {}]
  %s17 = inlined_call_operand.vmem [shape: f32[1,32], index: 17, kind: input, shape index: {}]
  %s18 = inlined_call_operand.vmem [shape: f32[1,32], index: 18, kind: input, shape index: {}]
  %s19 = inlined_call_operand.vmem [shape: f32[1,32], index: 19, kind: input, shape index: {}]
  %s20 = inlined_call_operand.vmem [shape: f32[2,10,32], index: 20, kind: output, shape index: {}]
  %s21 = sld [smem:[#allocation0]]
  $region113: #{transformer_forward.6} parent=0
    _
  %s23 = ssub.s32 1, %s21
  %s24 = scalar_select 0, %s23, %s21
  loop: start=0, step=1, limit=4
  $region2: #{transformer_forward.6} parent=0 // loop_pre_header
    _
  $region3: #{transformer_forward.6} parent=0 // loop_header
    %s26 = sphi 0, %s30
    %p27 = scmp.ge.s32.totalorder %s26, 4
    %s36 = sphi 0, %s38
    %s39 = sphi 0, %s36
    %s40 = sphi 0, %s39
    %s56 = sphi 0, %s40
    %s62 = sphi 0, %s64
    %s65 = sphi 0, %s62
    %s66 = sphi 0, %s65
    %s82 = sphi 0, %s66
    %s86 = sphi 0, %s86
    %s88 = sphi 0, %s86
    %s89 = sphi 0, %s88
    %s103 = sphi 0, %s89
    %s107 = sphi 0, %s107
    %s109 = sphi 0, %s107
    %s110 = sphi 0, %s109
    %s124 = sphi 0, %s110
    %s128 = sphi 0, %s128
    %s130 = sphi 0, %s128
    %s131 = sphi 0, %s130
    %s145 = sphi 0, %s131
    %s149 = sphi 0, %s149
    %s151 = sphi 0, %s149
    %s152 = sphi 0, %s151
    %s166 = sphi 0, %s152
    %s170 = sphi 0, %s170
    %s172 = sphi 0, %s170
    %s173 = sphi 0, %s172
    %s187 = sphi 0, %s173
    %s191 = sphi 0, %s191
    %s193 = sphi 0, %s191
    %s194 = sphi 0, %s193
    %s208 = sphi 0, %s194
    %s212 = sphi 0, %s212
    %s214 = sphi 0, %s212
    %s215 = sphi 0, %s214
    %s229 = sphi 0, %s215
    %s233 = sphi 0, %s233
    %s235 = sphi 0, %s233
    %s236 = sphi 0, %s235
    %s250 = sphi 0, %s236
    %s254 = sphi 0, %s254
    %s256 = sphi 0, %s254
    %s257 = sphi 0, %s256
    %s271 = sphi 0, %s257
    %s275 = sphi 0, %s275
    %s277 = sphi 0, %s275
    %s278 = sphi 0, %s277
    %s292 = sphi 0, %s278
    %s296 = sphi 0, %s296
    %s298 = sphi 0, %s296
    %s299 = sphi 0, %s298
    %s313 = sphi 0, %s299
    %s317 = sphi 0, %s317
    %s319 = sphi 0, %s317
    %s320 = sphi 0, %s319
    %s334 = sphi 0, %s320
    %s338 = sphi 0, %s338
    %s340 = sphi 0, %s338
    %s341 = sphi 0, %s340
    %s355 = sphi 0, %s341
    %s359 = sphi 0, %s359
    %s361 = sphi 0, %s359
    %s362 = sphi 0, %s361
    %s376 = sphi 0, %s362
    %s380 = sphi 0, %s380
    %s382 = sphi 0, %s380
    %s383 = sphi 0, %s382
    %s397 = sphi 0, %s383
    %s401 = sphi 0, %s401
    %s403 = sphi 0, %s401
    %s404 = sphi 0, %s403
    %s418 = sphi 0, %s404
    %s422 = sphi 0, %s422
    %s424 = sphi 0, %s422
    %s425 = sphi 0, %s424
    %s439 = sphi 0, %s425
    %s443 = sphi 0, %s443
    %s445 = sphi 0, %s443
    %s446 = sphi 0, %s445
    %s460 = sphi 0, %s446
    %s466 = sphi 0, %s468
    %s469 = sphi 0, %s466
    %s470 = sphi 0, %s469
    %s486 = sphi 0, %s470
  $region4: #{transformer_forward.6} parent=0 // loop_header_branch
    %29 = sbr.rel (%p27) target = $region8
  $region5: #{transformer_forward.6} parent=0 // loop_body
    %s31 = ssub.s32 %s26, 1
    %s32 = ssub.s32 %s26, 2
    %s33 = sadd.s32 %s26, 1
    %s34 = ssub.s32 %s26, %s33
    %p35 = scmp.eq.s32.totalorder %s34, 0
    %s37 = sadd.s32 %s36, 1
    %s38 = scalar_select %p35, %s36, %s37
    %p41 = pneg %p35
    %p42 = scmp.eq.s32.totalorder %s26, 1
    %p43 = por %p41, %p42
    %p44 = scmp.ne.s32.totalorder %s36, %s39
    %p45 = scmp.eq.s32.totalorder %s26, 0
    %p46 = por %p44, %p45
    %p47 = scmp.ne.s32.totalorder %s36, %s39
    %p48 = scmp.eq.s32.totalorder %s31, 1
    %p49 = por %p47, %p48
    %p50 = scmp.ne.s32.totalorder %s39, %s40
    %p51 = scmp.eq.s32.totalorder %s31, 0
    %p52 = por %p50, %p51
    %p53 = scmp.ne.s32.totalorder %s39, %s40
    %p54 = scmp.eq.s32.totalorder %s32, 1
    %p55 = por %p53, %p54
    %p57 = scmp.ne.s32.totalorder %s40, %s56
    %p58 = scmp.eq.s32.totalorder %s32, 0
    %p59 = por %p57, %p58
    %s60 = ssub.s32 %s26, %s33
    %p61 = scmp.eq.s32.totalorder %s60, 0
    %s63 = sadd.s32 %s62, 1
    %s64 = scalar_select %p61, %s62, %s63
    %p67 = pneg %p61
    %p68 = scmp.eq.s32.totalorder %s26, 1
    %p69 = por %p67, %p68
    %p70 = scmp.ne.s32.totalorder %s62, %s65
    %p71 = scmp.eq.s32.totalorder %s26, 0
    %p72 = por %p70, %p71
    %p73 = scmp.ne.s32.totalorder %s62, %s65
    %p74 = scmp.eq.s32.totalorder %s31, 1
    %p75 = por %p73, %p74
    %p76 = scmp.ne.s32.totalorder %s65, %s66
    %p77 = scmp.eq.s32.totalorder %s31, 0
    %p78 = por %p76, %p77
    %p79 = scmp.ne.s32.totalorder %s65, %s66
    %p80 = scmp.eq.s32.totalorder %s32, 1
    %p81 = por %p79, %p80
    %p83 = scmp.ne.s32.totalorder %s66, %s82
    %p84 = scmp.eq.s32.totalorder %s32, 0
    %p85 = por %p83, %p84
    %s87 = sadd.s32 %s86, 1
    %p90 = scmp.eq.s32.totalorder %s26, 1
    %p91 = scmp.ne.s32.totalorder %s86, %s88
    %p92 = scmp.eq.s32.totalorder %s26, 0
    %p93 = por %p91, %p92
    %p94 = scmp.ne.s32.totalorder %s86, %s88
    %p95 = scmp.eq.s32.totalorder %s31, 1
    %p96 = por %p94, %p95
    %p97 = scmp.ne.s32.totalorder %s88, %s89
    %p98 = scmp.eq.s32.totalorder %s31, 0
    %p99 = por %p97, %p98
    %p100 = scmp.ne.s32.totalorder %s88, %s89
    %p101 = scmp.eq.s32.totalorder %s32, 1
    %p102 = por %p100, %p101
    %p104 = scmp.ne.s32.totalorder %s89, %s103
    %p105 = scmp.eq.s32.totalorder %s32, 0
    %p106 = por %p104, %p105
    %s108 = sadd.s32 %s107, 1
    %p111 = scmp.eq.s32.totalorder %s26, 1
    %p112 = scmp.ne.s32.totalorder %s107, %s109
    %p113 = scmp.eq.s32.totalorder %s26, 0
    %p114 = por %p112, %p113
    %p115 = scmp.ne.s32.totalorder %s107, %s109
    %p116 = scmp.eq.s32.totalorder %s31, 1
    %p117 = por %p115, %p116
    %p118 = scmp.ne.s32.totalorder %s109, %s110
    %p119 = scmp.eq.s32.totalorder %s31, 0
    %p120 = por %p118, %p119
    %p121 = scmp.ne.s32.totalorder %s109, %s110
    %p122 = scmp.eq.s32.totalorder %s32, 1
    %p123 = por %p121, %p122
    %p125 = scmp.ne.s32.totalorder %s110, %s124
    %p126 = scmp.eq.s32.totalorder %s32, 0
    %p127 = por %p125, %p126
    %s129 = sadd.s32 %s128, 1
    %p132 = scmp.eq.s32.totalorder %s26, 1
    %p133 = scmp.ne.s32.totalorder %s128, %s130
    %p134 = scmp.eq.s32.totalorder %s26, 0
    %p135 = por %p133, %p134
    %p136 = scmp.ne.s32.totalorder %s128, %s130
    %p137 = scmp.eq.s32.totalorder %s31, 1
    %p138 = por %p136, %p137
    %p139 = scmp.ne.s32.totalorder %s130, %s131
    %p140 = scmp.eq.s32.totalorder %s31, 0
    %p141 = por %p139, %p140
    %p142 = scmp.ne.s32.totalorder %s130, %s131
    %p143 = scmp.eq.s32.totalorder %s32, 1
    %p144 = por %p142, %p143
    %p146 = scmp.ne.s32.totalorder %s131, %s145
    %p147 = scmp.eq.s32.totalorder %s32, 0
    %p148 = por %p146, %p147
    %s150 = sadd.s32 %s149, 1
    %p153 = scmp.eq.s32.totalorder %s26, 1
    %p154 = scmp.ne.s32.totalorder %s149, %s151
    %p155 = scmp.eq.s32.totalorder %s26, 0
    %p156 = por %p154, %p155
    %p157 = scmp.ne.s32.totalorder %s149, %s151
    %p158 = scmp.eq.s32.totalorder %s31, 1
    %p159 = por %p157, %p158
    %p160 = scmp.ne.s32.totalorder %s151, %s152
    %p161 = scmp.eq.s32.totalorder %s31, 0
    %p162 = por %p160, %p161
    %p163 = scmp.ne.s32.totalorder %s151, %s152
    %p164 = scmp.eq.s32.totalorder %s32, 1
    %p165 = por %p163, %p164
    %p167 = scmp.ne.s32.totalorder %s152, %s166
    %p168 = scmp.eq.s32.totalorder %s32, 0
    %p169 = por %p167, %p168
    %s171 = sadd.s32 %s170, 1
    %p174 = scmp.eq.s32.totalorder %s26, 1
    %p175 = scmp.ne.s32.totalorder %s170, %s172
    %p176 = scmp.eq.s32.totalorder %s26, 0
    %p177 = por %p175, %p176
    %p178 = scmp.ne.s32.totalorder %s170, %s172
    %p179 = scmp.eq.s32.totalorder %s31, 1
    %p180 = por %p178, %p179
    %p181 = scmp.ne.s32.totalorder %s172, %s173
    %p182 = scmp.eq.s32.totalorder %s31, 0
    %p183 = por %p181, %p182
    %p184 = scmp.ne.s32.totalorder %s172, %s173
    %p185 = scmp.eq.s32.totalorder %s32, 1
    %p186 = por %p184, %p185
    %p188 = scmp.ne.s32.totalorder %s173, %s187
    %p189 = scmp.eq.s32.totalorder %s32, 0
    %p190 = por %p188, %p189
    %s192 = sadd.s32 %s191, 1
    %p195 = scmp.eq.s32.totalorder %s26, 1
    %p196 = scmp.ne.s32.totalorder %s191, %s193
    %p197 = scmp.eq.s32.totalorder %s26, 0
    %p198 = por %p196, %p197
    %p199 = scmp.ne.s32.totalorder %s191, %s193
    %p200 = scmp.eq.s32.totalorder %s31, 1
    %p201 = por %p199, %p200
    %p202 = scmp.ne.s32.totalorder %s193, %s194
    %p203 = scmp.eq.s32.totalorder %s31, 0
    %p204 = por %p202, %p203
    %p205 = scmp.ne.s32.totalorder %s193, %s194
    %p206 = scmp.eq.s32.totalorder %s32, 1
    %p207 = por %p205, %p206
    %p209 = scmp.ne.s32.totalorder %s194, %s208
    %p210 = scmp.eq.s32.totalorder %s32, 0
    %p211 = por %p209, %p210
    %s213 = sadd.s32 %s212, 1
    %p216 = scmp.eq.s32.totalorder %s26, 1
    %p217 = scmp.ne.s32.totalorder %s212, %s214
    %p218 = scmp.eq.s32.totalorder %s26, 0
    %p219 = por %p217, %p218
    %p220 = scmp.ne.s32.totalorder %s212, %s214
    %p221 = scmp.eq.s32.totalorder %s31, 1
    %p222 = por %p220, %p221
    %p223 = scmp.ne.s32.totalorder %s214, %s215
    %p224 = scmp.eq.s32.totalorder %s31, 0
    %p225 = por %p223, %p224
    %p226 = scmp.ne.s32.totalorder %s214, %s215
    %p227 = scmp.eq.s32.totalorder %s32, 1
    %p228 = por %p226, %p227
    %p230 = scmp.ne.s32.totalorder %s215, %s229
    %p231 = scmp.eq.s32.totalorder %s32, 0
    %p232 = por %p230, %p231
    %s234 = sadd.s32 %s233, 1
    %p237 = scmp.eq.s32.totalorder %s26, 1
    %p238 = scmp.ne.s32.totalorder %s233, %s235
    %p239 = scmp.eq.s32.totalorder %s26, 0
    %p240 = por %p238, %p239
    %p241 = scmp.ne.s32.totalorder %s233, %s235
    %p242 = scmp.eq.s32.totalorder %s31, 1
    %p243 = por %p241, %p242
    %p244 = scmp.ne.s32.totalorder %s235, %s236
    %p245 = scmp.eq.s32.totalorder %s31, 0
    %p246 = por %p244, %p245
    %p247 = scmp.ne.s32.totalorder %s235, %s236
    %p248 = scmp.eq.s32.totalorder %s32, 1
    %p249 = por %p247, %p248
    %p251 = scmp.ne.s32.totalorder %s236, %s250
    %p252 = scmp.eq.s32.totalorder %s32, 0
    %p253 = por %p251, %p252
    %s255 = sadd.s32 %s254, 1
    %p258 = scmp.eq.s32.totalorder %s26, 1
    %p259 = scmp.ne.s32.totalorder %s254, %s256
    %p260 = scmp.eq.s32.totalorder %s26, 0
    %p261 = por %p259, %p260
    %p262 = scmp.ne.s32.totalorder %s254, %s256
    %p263 = scmp.eq.s32.totalorder %s31, 1
    %p264 = por %p262, %p263
    %p265 = scmp.ne.s32.totalorder %s256, %s257
    %p266 = scmp.eq.s32.totalorder %s31, 0
    %p267 = por %p265, %p266
    %p268 = scmp.ne.s32.totalorder %s256, %s257
    %p269 = scmp.eq.s32.totalorder %s32, 1
    %p270 = por %p268, %p269
    %p272 = scmp.ne.s32.totalorder %s257, %s271
    %p273 = scmp.eq.s32.totalorder %s32, 0
    %p274 = por %p272, %p273
    %s276 = sadd.s32 %s275, 1
    %p279 = scmp.eq.s32.totalorder %s26, 1
    %p280 = scmp.ne.s32.totalorder %s275, %s277
    %p281 = scmp.eq.s32.totalorder %s26, 0
    %p282 = por %p280, %p281
    %p283 = scmp.ne.s32.totalorder %s275, %s277
    %p284 = scmp.eq.s32.totalorder %s31, 1
    %p285 = por %p283, %p284
    %p286 = scmp.ne.s32.totalorder %s277, %s278
    %p287 = scmp.eq.s32.totalorder %s31, 0
    %p288 = por %p286, %p287
    %p289 = scmp.ne.s32.totalorder %s277, %s278
    %p290 = scmp.eq.s32.totalorder %s32, 1
    %p291 = por %p289, %p290
    %p293 = scmp.ne.s32.totalorder %s278, %s292
    %p294 = scmp.eq.s32.totalorder %s32, 0
    %p295 = por %p293, %p294
    %s297 = sadd.s32 %s296, 1
    %p300 = scmp.eq.s32.totalorder %s26, 1
    %p301 = scmp.ne.s32.totalorder %s296, %s298
    %p302 = scmp.eq.s32.totalorder %s26, 0
    %p303 = por %p301, %p302
    %p304 = scmp.ne.s32.totalorder %s296, %s298
    %p305 = scmp.eq.s32.totalorder %s31, 1
    %p306 = por %p304, %p305
    %p307 = scmp.ne.s32.totalorder %s298, %s299
    %p308 = scmp.eq.s32.totalorder %s31, 0
    %p309 = por %p307, %p308
    %p310 = scmp.ne.s32.totalorder %s298, %s299
    %p311 = scmp.eq.s32.totalorder %s32, 1
    %p312 = por %p310, %p311
    %p314 = scmp.ne.s32.totalorder %s299, %s313
    %p315 = scmp.eq.s32.totalorder %s32, 0
    %p316 = por %p314, %p315
    %s318 = sadd.s32 %s317, 1
    %p321 = scmp.eq.s32.totalorder %s26, 1
    %p322 = scmp.ne.s32.totalorder %s317, %s319
    %p323 = scmp.eq.s32.totalorder %s26, 0
    %p324 = por %p322, %p323
    %p325 = scmp.ne.s32.totalorder %s317, %s319
    %p326 = scmp.eq.s32.totalorder %s31, 1
    %p327 = por %p325, %p326
    %p328 = scmp.ne.s32.totalorder %s319, %s320
    %p329 = scmp.eq.s32.totalorder %s31, 0
    %p330 = por %p328, %p329
    %p331 = scmp.ne.s32.totalorder %s319, %s320
    %p332 = scmp.eq.s32.totalorder %s32, 1
    %p333 = por %p331, %p332
    %p335 = scmp.ne.s32.totalorder %s320, %s334
    %p336 = scmp.eq.s32.totalorder %s32, 0
    %p337 = por %p335, %p336
    %s339 = sadd.s32 %s338, 1
    %p342 = scmp.eq.s32.totalorder %s26, 1
    %p343 = scmp.ne.s32.totalorder %s338, %s340
    %p344 = scmp.eq.s32.totalorder %s26, 0
    %p345 = por %p343, %p344
    %p346 = scmp.ne.s32.totalorder %s338, %s340
    %p347 = scmp.eq.s32.totalorder %s31, 1
    %p348 = por %p346, %p347
    %p349 = scmp.ne.s32.totalorder %s340, %s341
    %p350 = scmp.eq.s32.totalorder %s31, 0
    %p351 = por %p349, %p350
    %p352 = scmp.ne.s32.totalorder %s340, %s341
    %p353 = scmp.eq.s32.totalorder %s32, 1
    %p354 = por %p352, %p353
    %p356 = scmp.ne.s32.totalorder %s341, %s355
    %p357 = scmp.eq.s32.totalorder %s32, 0
    %p358 = por %p356, %p357
    %s360 = sadd.s32 %s359, 1
    %p363 = scmp.eq.s32.totalorder %s26, 1
    %p364 = scmp.ne.s32.totalorder %s359, %s361
    %p365 = scmp.eq.s32.totalorder %s26, 0
    %p366 = por %p364, %p365
    %p367 = scmp.ne.s32.totalorder %s359, %s361
    %p368 = scmp.eq.s32.totalorder %s31, 1
    %p369 = por %p367, %p368
    %p370 = scmp.ne.s32.totalorder %s361, %s362
    %p371 = scmp.eq.s32.totalorder %s31, 0
    %p372 = por %p370, %p371
    %p373 = scmp.ne.s32.totalorder %s361, %s362
    %p374 = scmp.eq.s32.totalorder %s32, 1
    %p375 = por %p373, %p374
    %p377 = scmp.ne.s32.totalorder %s362, %s376
    %p378 = scmp.eq.s32.totalorder %s32, 0
    %p379 = por %p377, %p378
    %s381 = sadd.s32 %s380, 1
    %p384 = scmp.eq.s32.totalorder %s26, 1
    %p385 = scmp.ne.s32.totalorder %s380, %s382
    %p386 = scmp.eq.s32.totalorder %s26, 0
    %p387 = por %p385, %p386
    %p388 = scmp.ne.s32.totalorder %s380, %s382
    %p389 = scmp.eq.s32.totalorder %s31, 1
    %p390 = por %p388, %p389
    %p391 = scmp.ne.s32.totalorder %s382, %s383
    %p392 = scmp.eq.s32.totalorder %s31, 0
    %p393 = por %p391, %p392
    %p394 = scmp.ne.s32.totalorder %s382, %s383
    %p395 = scmp.eq.s32.totalorder %s32, 1
    %p396 = por %p394, %p395
    %p398 = scmp.ne.s32.totalorder %s383, %s397
    %p399 = scmp.eq.s32.totalorder %s32, 0
    %p400 = por %p398, %p399
    %s402 = sadd.s32 %s401, 1
    %p405 = scmp.eq.s32.totalorder %s26, 1
    %p406 = scmp.ne.s32.totalorder %s401, %s403
    %p407 = scmp.eq.s32.totalorder %s26, 0
    %p408 = por %p406, %p407
    %p409 = scmp.ne.s32.totalorder %s401, %s403
    %p410 = scmp.eq.s32.totalorder %s31, 1
    %p411 = por %p409, %p410
    %p412 = scmp.ne.s32.totalorder %s403, %s404
    %p413 = scmp.eq.s32.totalorder %s31, 0
    %p414 = por %p412, %p413
    %p415 = scmp.ne.s32.totalorder %s403, %s404
    %p416 = scmp.eq.s32.totalorder %s32, 1
    %p417 = por %p415, %p416
    %p419 = scmp.ne.s32.totalorder %s404, %s418
    %p420 = scmp.eq.s32.totalorder %s32, 0
    %p421 = por %p419, %p420
    %s423 = sadd.s32 %s422, 1
    %p426 = scmp.eq.s32.totalorder %s26, 1
    %p427 = scmp.ne.s32.totalorder %s422, %s424
    %p428 = scmp.eq.s32.totalorder %s26, 0
    %p429 = por %p427, %p428
    %p430 = scmp.ne.s32.totalorder %s422, %s424
    %p431 = scmp.eq.s32.totalorder %s31, 1
    %p432 = por %p430, %p431
    %p433 = scmp.ne.s32.totalorder %s424, %s425
    %p434 = scmp.eq.s32.totalorder %s31, 0
    %p435 = por %p433, %p434
    %p436 = scmp.ne.s32.totalorder %s424, %s425
    %p437 = scmp.eq.s32.totalorder %s32, 1
    %p438 = por %p436, %p437
    %p440 = scmp.ne.s32.totalorder %s425, %s439
    %p441 = scmp.eq.s32.totalorder %s32, 0
    %p442 = por %p440, %p441
    %s444 = sadd.s32 %s443, 1
    %p447 = scmp.eq.s32.totalorder %s26, 1
    %p448 = scmp.ne.s32.totalorder %s443, %s445
    %p449 = scmp.eq.s32.totalorder %s26, 0
    %p450 = por %p448, %p449
    %p451 = scmp.ne.s32.totalorder %s443, %s445
    %p452 = scmp.eq.s32.totalorder %s31, 1
    %p453 = por %p451, %p452
    %p454 = scmp.ne.s32.totalorder %s445, %s446
    %p455 = scmp.eq.s32.totalorder %s31, 0
    %p456 = por %p454, %p455
    %p457 = scmp.ne.s32.totalorder %s445, %s446
    %p458 = scmp.eq.s32.totalorder %s32, 1
    %p459 = por %p457, %p458
    %p461 = scmp.ne.s32.totalorder %s446, %s460
    %p462 = scmp.eq.s32.totalorder %s32, 0
    %p463 = por %p461, %p462
    %s464 = ssub.s32 %s26, %s33
    %p465 = scmp.eq.s32.totalorder %s464, 0
    %s467 = sadd.s32 %s466, 1
    %s468 = scalar_select %p465, %s466, %s467
    %p471 = pneg %p465
    %p472 = scmp.eq.s32.totalorder %s26, 1
    %p473 = por %p471, %p472
    %p474 = scmp.ne.s32.totalorder %s466, %s469
    %p475 = scmp.eq.s32.totalorder %s26, 0
    %p476 = por %p474, %p475
    %p477 = scmp.ne.s32.totalorder %s466, %s469
    %p478 = scmp.eq.s32.totalorder %s31, 1
    %p479 = por %p477, %p478
    %p480 = scmp.ne.s32.totalorder %s469, %s470
    %p481 = scmp.eq.s32.totalorder %s31, 0
    %p482 = por %p480, %p481
    %p483 = scmp.ne.s32.totalorder %s469, %s470
    %p484 = scmp.eq.s32.totalorder %s32, 1
    %p485 = por %p483, %p484
    %p487 = scmp.ne.s32.totalorder %s470, %s486
    %p488 = scmp.eq.s32.totalorder %s32, 0
    %p489 = por %p487, %p488
    %p490 = scmp.le.s32.totalorder 1, %s26
    %p491 = scmp.lt.s32.totalorder %s26, 3
    %p492 = pnand %p490, %p491
    %p493 = pneg %p492
    // Predicated region
    $region9: #{transformer_forward.6} parent=5 // pred_check
      _
    $region10: #{transformer_forward.6} parent=5 // pred_check_branch
      %495 = sbr.rel (%p492) target = $region12
    $region11: #{transformer_forward.6} parent=5 // pred_region
      %s496 = ssub.s32 %s26, 1
      // Predicated region
      $region13: #{transformer_forward.6} parent=11 // pred_check
        %p497 = pneg %p99
      $region14: #{transformer_forward.6} parent=11 // pred_check_branch
        %499 = sbr.rel (%p497) target = $region16
      $region15: #{transformer_forward.6} parent=11 // pred_region
        _
      $region16: #{transformer_forward.6} parent=11 // pred_fallthru
        _
      // Predicated region
      $region17: #{transformer_forward.6} parent=11 // pred_check
        %p500 = pneg %p120
      $region18: #{transformer_forward.6} parent=11 // pred_check_branch
        %502 = sbr.rel (%p500) target = $region20
      $region19: #{transformer_forward.6} parent=11 // pred_region
        _
      $region20: #{transformer_forward.6} parent=11 // pred_fallthru
        _
      // Predicated region
      $region21: #{transformer_forward.6} parent=11 // pred_check
        %p503 = pneg %p141
      $region22: #{transformer_forward.6} parent=11 // pred_check_branch
        %505 = sbr.rel (%p503) target = $region24
      $region23: #{transformer_forward.6} parent=11 // pred_region
        _
      $region24: #{transformer_forward.6} parent=11 // pred_fallthru
        _
      // Predicated region
      $region25: #{transformer_forward.6} parent=11 // pred_check
        %p506 = pneg %p162
      $region26: #{transformer_forward.6} parent=11 // pred_check_branch
        %508 = sbr.rel (%p506) target = $region28
      $region27: #{transformer_forward.6} parent=11 // pred_region
        _
      $region28: #{transformer_forward.6} parent=11 // pred_fallthru
        _
      // Predicated region
      $region29: #{transformer_forward.6} parent=11 // pred_check
        %p509 = pneg %p183
      $region30: #{transformer_forward.6} parent=11 // pred_check_branch
        %511 = sbr.rel (%p509) target = $region32
      $region31: #{transformer_forward.6} parent=11 // pred_region
        _
      $region32: #{transformer_forward.6} parent=11 // pred_fallthru
        _
      // Predicated region
      $region33: #{transformer_forward.6} parent=11 // pred_check
        %p512 = pneg %p204
      $region34: #{transformer_forward.6} parent=11 // pred_check_branch
        %514 = sbr.rel (%p512) target = $region36
      $region35: #{transformer_forward.6} parent=11 // pred_region
        _
      $region36: #{transformer_forward.6} parent=11 // pred_fallthru
        _
      // Predicated region
      $region37: #{transformer_forward.6} parent=11 // pred_check
        %p515 = pneg %p225
      $region38: #{transformer_forward.6} parent=11 // pred_check_branch
        %517 = sbr.rel (%p515) target = $region40
      $region39: #{transformer_forward.6} parent=11 // pred_region
        _
      $region40: #{transformer_forward.6} parent=11 // pred_fallthru
        _
      // Predicated region
      $region41: #{transformer_forward.6} parent=11 // pred_check
        %p518 = pneg %p246
      $region42: #{transformer_forward.6} parent=11 // pred_check_branch
        %520 = sbr.rel (%p518) target = $region44
      $region43: #{transformer_forward.6} parent=11 // pred_region
        _
      $region44: #{transformer_forward.6} parent=11 // pred_fallthru
        _
      // Predicated region
      $region45: #{transformer_forward.6} parent=11 // pred_check
        %p521 = pneg %p267
      $region46: #{transformer_forward.6} parent=11 // pred_check_branch
        %523 = sbr.rel (%p521) target = $region48
      $region47: #{transformer_forward.6} parent=11 // pred_region
        _
      $region48: #{transformer_forward.6} parent=11 // pred_fallthru
        _
      // Predicated region
      $region49: #{transformer_forward.6} parent=11 // pred_check
        %p524 = pneg %p288
      $region50: #{transformer_forward.6} parent=11 // pred_check_branch
        %526 = sbr.rel (%p524) target = $region52
      $region51: #{transformer_forward.6} parent=11 // pred_region
        _
      $region52: #{transformer_forward.6} parent=11 // pred_fallthru
        _
      // Predicated region
      $region53: #{transformer_forward.6} parent=11 // pred_check
        %p527 = pneg %p309
      $region54: #{transformer_forward.6} parent=11 // pred_check_branch
        %529 = sbr.rel (%p527) target = $region56
      $region55: #{transformer_forward.6} parent=11 // pred_region
        _
      $region56: #{transformer_forward.6} parent=11 // pred_fallthru
        _
      // Predicated region
      $region57: #{transformer_forward.6} parent=11 // pred_check
        %p530 = pneg %p330
      $region58: #{transformer_forward.6} parent=11 // pred_check_branch
        %532 = sbr.rel (%p530) target = $region60
      $region59: #{transformer_forward.6} parent=11 // pred_region
        _
      $region60: #{transformer_forward.6} parent=11 // pred_fallthru
        _
      // Predicated region
      $region61: #{transformer_forward.6} parent=11 // pred_check
        %p533 = pneg %p351
      $region62: #{transformer_forward.6} parent=11 // pred_check_branch
        %535 = sbr.rel (%p533) target = $region64
      $region63: #{transformer_forward.6} parent=11 // pred_region
        _
      $region64: #{transformer_forward.6} parent=11 // pred_fallthru
        _
      // Predicated region
      $region65: #{transformer_forward.6} parent=11 // pred_check
        %p536 = pneg %p372
      $region66: #{transformer_forward.6} parent=11 // pred_check_branch
        %538 = sbr.rel (%p536) target = $region68
      $region67: #{transformer_forward.6} parent=11 // pred_region
        _
      $region68: #{transformer_forward.6} parent=11 // pred_fallthru
        _
      // Predicated region
      $region69: #{transformer_forward.6} parent=11 // pred_check
        %p539 = pneg %p393
      $region70: #{transformer_forward.6} parent=11 // pred_check_branch
        %541 = sbr.rel (%p539) target = $region72
      $region71: #{transformer_forward.6} parent=11 // pred_region
        _
      $region72: #{transformer_forward.6} parent=11 // pred_fallthru
        _
      // Predicated region
      $region73: #{transformer_forward.6} parent=11 // pred_check
        %p542 = pneg %p414
      $region74: #{transformer_forward.6} parent=11 // pred_check_branch
        %544 = sbr.rel (%p542) target = $region76
      $region75: #{transformer_forward.6} parent=11 // pred_region
        _
      $region76: #{transformer_forward.6} parent=11 // pred_fallthru
        _
      // Predicated region
      $region77: #{transformer_forward.6} parent=11 // pred_check
        %p545 = pneg %p435
      $region78: #{transformer_forward.6} parent=11 // pred_check_branch
        %547 = sbr.rel (%p545) target = $region80
      $region79: #{transformer_forward.6} parent=11 // pred_region
        _
      $region80: #{transformer_forward.6} parent=11 // pred_fallthru
        _
      // Predicated region
      $region81: #{transformer_forward.6} parent=11 // pred_check
        %p548 = pneg %p456
      $region82: #{transformer_forward.6} parent=11 // pred_check_branch
        %550 = sbr.rel (%p548) target = $region84
      $region83: #{transformer_forward.6} parent=11 // pred_region
        _
      $region84: #{transformer_forward.6} parent=11 // pred_fallthru
        _
    $region12: #{transformer_forward.6} parent=5 // pred_fallthru
      _
    %p551 = scmp.lt.s32.totalorder %s26, 2
    // Predicated region
    $region85: #{transformer_forward.6} parent=5 // pred_check
      %p552 = pneg %p551
    $region86: #{transformer_forward.6} parent=5 // pred_check_branch
      %554 = sbr.rel (%p552) target = $region88
    $region87: #{transformer_forward.6} parent=5 // pred_region
      // Predicated region
      $region89: #{transformer_forward.6} parent=87 // pred_check
        %p555 = pneg %p46
      $region90: #{transformer_forward.6} parent=87 // pred_check_branch
        %557 = sbr.rel (%p555) target = $region92
      $region91: #{transformer_forward.6} parent=87 // pred_region
        %p558 = scmp.lt.s32.totalorder %s26, 1
        %s559 = scalar_select %p558, %s26, 1
        %s560 = smul.addr %s559, 2
        %s561 = smul.addr %s560, 8
        %s562 = scalar_lea.vmem %s0, %s561
      $region92: #{transformer_forward.6} parent=87 // pred_fallthru
        _
      // Predicated region
      $region93: #{transformer_forward.6} parent=87 // pred_check
        %p563 = pneg %p72
      $region94: #{transformer_forward.6} parent=87 // pred_check_branch
        %565 = sbr.rel (%p563) target = $region96
      $region95: #{transformer_forward.6} parent=87 // pred_region
        %p566 = scmp.lt.s32.totalorder %s26, 1
        %s567 = scalar_select %p566, %s26, 1
        %s568 = scalar_lea.vmem %s1, %s567
      $region96: #{transformer_forward.6} parent=87 // pred_fallthru
        _
    $region88: #{transformer_forward.6} parent=5 // pred_fallthru
      _
    %p569 = scmp.le.s32.totalorder 1, %s26
    %p570 = scmp.lt.s32.totalorder %s26, 3
    %p571 = pnand %p569, %p570
    %p572 = pneg %p571
    // Predicated region
    $region97: #{transformer_forward.6} parent=5 // pred_check
      _
    $region98: #{transformer_forward.6} parent=5 // pred_check_branch
      %574 = sbr.rel (%p571) target = $region100
    $region99: #{transformer_forward.6} parent=5 // pred_region
      %s575 = ssub.s32 %s26, 1
      %p576 = scmp.lt.s32.totalorder %s31, 1
      %s577 = scalar_select %p576, %s31, 1
      %s578 = smul.addr %s577, 2
      %s579 = smul.addr %s578, 8
      %s580 = scalar_lea.vmem %s0, %s579
      %p581 = pneg %p52
      %p582 = pneg %p49
      %p583 = scmp.lt.s32.totalorder %s31, 1
      %s584 = scalar_select %p583, %s31, 1
      %s585 = scalar_lea.vmem %s1, %s584
      %p586 = pneg %p78
      %p587 = pneg %p75
      %p588 = pneg %p99
      %p589 = pneg %p96
      %p590 = pneg %p120
      %p591 = pneg %p117
      %p592 = pneg %p141
      %p593 = pneg %p138
      %p594 = pneg %p162
      %p595 = pneg %p159
      %p596 = pneg %p183
      %p597 = pneg %p180
      %p598 = pneg %p204
      %p599 = pneg %p201
      %p600 = pneg %p225
      %p601 = pneg %p222
      %p602 = pneg %p246
      %p603 = pneg %p243
      %p604 = pneg %p267
      %p605 = pneg %p264
      %p606 = pneg %p288
      %p607 = pneg %p285
      %p608 = pneg %p309
      %p609 = pneg %p306
      %p610 = pneg %p330
      %p611 = pneg %p327
      %p612 = pneg %p351
      %p613 = pneg %p348
      %p614 = pneg %p372
      %p615 = pneg %p369
      %p616 = pneg %p393
      %p617 = pneg %p390
      %p618 = pneg %p414
      %p619 = pneg %p411
      %p620 = pneg %p435
      %p621 = pneg %p432
      %p622 = pneg %p456
      %p623 = pneg %p453
      %p624 = pneg %p482
      %p625 = pneg %p479
      %p626 = scmp.lt.s32.totalorder %s31, 1
      %s627 = scalar_select %p626, %s31, 1
      %s628 = smul.addr %s627, 2
      %s629 = smul.addr %s628, 8
      %s630 = scalar_lea.vmem %s20, %s629
      %p631 = scmp.lt.s32.totalorder %s31, 1
      %s632 = scalar_select %p631, %s31, 1
      %s633 = smul.addr %s632, 2
      %s634 = smul.addr %s633, 8
      %s635 = scalar_lea.vmem %s0, %s634
      %p636 = scmp.lt.s32.totalorder %s31, 1
      %s637 = scalar_select %p636, %s31, 1
      %s638 = scalar_lea.vmem %s1, %s637
      %p639 = scmp.lt.s32.totalorder %s31, 1
      %s640 = scalar_select %p639, %s31, 1
      %s641 = smul.addr %s640, 2
      %s642 = smul.addr %s641, 8
      %s643 = scalar_lea.vmem %s20, %s642
      %v645 = vld [vmem:[%s635] sm:$0xff]
      %v646 = vld [vmem:[%s635 + $0x8] sm:$0x3]
      %v647 = vld [vmem:[%s638] sm:$0x1]
      %v648 = vpack.c.bf16 %v646, %v645
      %v649 = vld [vmem:[%s2] sm:$0xf]
      %v650 = vld [vmem:[%s2 + $0x4] sm:$0xf]
      %v651 = vld [vmem:[%s2 + $0x8] sm:$0xf]
      %v652 = vld [vmem:[%s2 + $0xc] sm:$0xf]
      %v653 = vld [vmem:[%s3] sm:$0x1]
      %v655 = vlaneseq
      %v656 = vshrl.u32 %v655, 7
      %v657 = vsub.s32 0, %v656
      %v658 = vrot.slane %v653, %v657
      %v664 = vunpack.c.l.b16 %v649
      %v665 = vunpack.c.l.b16 %v650
      %v666 = vunpack.c.l.b16 %v651
      %v667 = vunpack.c.l.b16 %v652
      %v668 = vpack.c.b16 %v665, %v664
      %v669 = vpack.c.b16 %v667, %v666
      %vm672 = vcmask 261120
      %v674 = vsel %vm672, %v648, 0
      %676 = vmatprep.subr.bf16.mxu0 0
      %677 = vmatpush1.bf16.msra.mxu0 %v668
      %678 = vmatprep.subr.bf16.mxu0 0
      %679 = vmatpush1.bf16.msra.mxu0 %v669
      %680 = vmatprep.subr.bf16.mxu0 0
      %681 = vmatpush1.bf16.msra.mxu0 0
      %682 = vmatprep.subr.bf16.mxu0 0
      %683 = vmatpush1.bf16.msra.mxu0 0
      %684 = vmatprep.subr.bf16.mxu0 0
      %685 = vmatpush1.bf16.msra.mxu0 0
      %686 = vmatprep.subr.bf16.mxu0 0
      %687 = vmatpush1.bf16.msra.mxu0 0
      %688 = vmatprep.subr.bf16.mxu0 0
      %689 = vmatpush1.bf16.msra.mxu0 0
      %690 = vmatprep.subr.bf16.mxu0 0
      %691 = vmatpush1.bf16.msra.mxu0 0
      %692 = vmatprep.subr.bf16.mxu0 0
      %693 = vmatpush1.bf16.msra.mxu0 0
      %694 = vmatprep.subr.bf16.mxu0 0
      %695 = vmatpush1.bf16.msra.mxu0 0
      %696 = vmatprep.subr.bf16.mxu0 0
      %697 = vmatpush1.bf16.msra.mxu0 0
      %698 = vmatprep.subr.bf16.mxu0 0
      %699 = vmatpush1.bf16.msra.mxu0 0
      %700 = vmatprep.subr.bf16.mxu0 0
      %701 = vmatpush1.bf16.msra.mxu0 0
      %702 = vmatprep.subr.bf16.mxu0 0
      %703 = vmatpush1.bf16.msra.mxu0 0
      %704 = vmatprep.subr.bf16.mxu0 0
      %705 = vmatpush1.bf16.msra.mxu0 0
      %706 = vmatprep.subr.bf16.mxu0 0
      %707 = vmatpush1.bf16.msra.mxu0 0
      %708 = vmatprep.mubr.bf16.mxu0 0
      %709 = vmatmul.mubr.bf16.gmra.mrb[0].mxu0 %v674
      %v710 = vpop.f32.mrb[0].mxu0
      %v711 = vadd.f32 %v658, %v710
      %v712 = vpop.f32.mrb[0].mxu0
      %v713 = vpop.f32.mrb[0].mxu0
      %v714 = vadd.f32 %v658, %v713
      %v715 = vpop.f32.mrb[0].mxu0
      %716 = vdwg.mxu0
      %v717 = vld [vmem:[%s4] sm:$0xf]
      %v718 = vld [vmem:[%s4 + $0x4] sm:$0xf]
      %v719 = vld [vmem:[%s4 + $0x8] sm:$0xf]
      %v720 = vld [vmem:[%s4 + $0xc] sm:$0xf]
      %v721 = vld [vmem:[%s5] sm:$0x1]
      %v723 = vlaneseq
      %v724 = vshrl.u32 %v723, 7
      %v725 = vsub.s32 0, %v724
      %v726 = vrot.slane %v721, %v725
      %v732 = vunpack.c.l.b16 %v717
      %v733 = vunpack.c.l.b16 %v718
      %v734 = vunpack.c.l.b16 %v719
      %v735 = vunpack.c.l.b16 %v720
      %v736 = vpack.c.b16 %v733, %v732
      %v737 = vpack.c.b16 %v735, %v734
      %740 = vmatprep.subr.bf16.mxu0 0
      %741 = vmatpush1.bf16.msra.mxu0 %v736
      %742 = vmatprep.subr.bf16.mxu0 0
      %743 = vmatpush1.bf16.msra.mxu0 %v737
      %744 = vmatprep.subr.bf16.mxu0 0
      %745 = vmatpush1.bf16.msra.mxu0 0
      %746 = vmatprep.subr.bf16.mxu0 0
      %747 = vmatpush1.bf16.msra.mxu0 0
      %748 = vmatprep.subr.bf16.mxu0 0
      %749 = vmatpush1.bf16.msra.mxu0 0
      %750 = vmatprep.subr.bf16.mxu0 0
      %751 = vmatpush1.bf16.msra.mxu0 0
      %752 = vmatprep.subr.bf16.mxu0 0
      %753 = vmatpush1.bf16.msra.mxu0 0
      %754 = vmatprep.subr.bf16.mxu0 0
      %755 = vmatpush1.bf16.msra.mxu0 0
      %756 = vmatprep.subr.bf16.mxu0 0
      %757 = vmatpush1.bf16.msra.mxu0 0
      %758 = vmatprep.subr.bf16.mxu0 0
      %759 = vmatpush1.bf16.msra.mxu0 0
      %760 = vmatprep.subr.bf16.mxu0 0
      %761 = vmatpush1.bf16.msra.mxu0 0
      %762 = vmatprep.subr.bf16.mxu0 0
      %763 = vmatpush1.bf16.msra.mxu0 0
      %764 = vmatprep.subr.bf16.mxu0 0
      %765 = vmatpush1.bf16.msra.mxu0 0
      %766 = vmatprep.subr.bf16.mxu0 0
      %767 = vmatpush1.bf16.msra.mxu0 0
      %768 = vmatprep.subr.bf16.mxu0 0
      %769 = vmatpush1.bf16.msra.mxu0 0
      %770 = vmatprep.subr.bf16.mxu0 0
      %771 = vmatpush1.bf16.msra.mxu0 0
      %772 = vmatprep.mubr.bf16.mxu0 0
      %773 = vmatmul.mubr.bf16.gmra.mrb[0].mxu0 %v674
      %v774 = vpop.f32.mrb[0].mxu0
      %v775 = vadd.f32 %v726, %v774
      %v776 = vpop.f32.mrb[0].mxu0
      %v777 = vpop.f32.mrb[0].mxu0
      %v778 = vadd.f32 %v726, %v777
      %v779 = vpop.f32.mrb[0].mxu0
      %780 = vdwg.mxu0
      %v781 = vld [vmem:[%s6] sm:$0xf]
      %v782 = vld [vmem:[%s6 + $0x4] sm:$0xf]
      %v783 = vld [vmem:[%s6 + $0x8] sm:$0xf]
      %v784 = vld [vmem:[%s6 + $0xc] sm:$0xf]
      %v785 = vld [vmem:[%s7] sm:$0x1]
      %v787 = vlaneseq
      %v788 = vshrl.u32 %v787, 7
      %v789 = vsub.s32 0, %v788
      %v790 = vrot.slane %v785, %v789
      %v796 = vunpack.c.l.b16 %v781
      %v797 = vunpack.c.l.b16 %v782
      %v798 = vunpack.c.l.b16 %v783
      %v799 = vunpack.c.l.b16 %v784
      %v800 = vpack.c.b16 %v797, %v796
      %v801 = vpack.c.b16 %v799, %v798
      %804 = vmatprep.subr.bf16.mxu0 0
      %805 = vmatpush1.bf16.msra.mxu0 %v800
      %806 = vmatprep.subr.bf16.mxu0 0
      %807 = vmatpush1.bf16.msra.mxu0 %v801
      %808 = vmatprep.subr.bf16.mxu0 0
      %809 = vmatpush1.bf16.msra.mxu0 0
      %810 = vmatprep.subr.bf16.mxu0 0
      %811 = vmatpush1.bf16.msra.mxu0 0
      %812 = vmatprep.subr.bf16.mxu0 0
      %813 = vmatpush1.bf16.msra.mxu0 0
      %814 = vmatprep.subr.bf16.mxu0 0
      %815 = vmatpush1.bf16.msra.mxu0 0
      %816 = vmatprep.subr.bf16.mxu0 0
      %817 = vmatpush1.bf16.msra.mxu0 0
      %818 = vmatprep.subr.bf16.mxu0 0
      %819 = vmatpush1.bf16.msra.mxu0 0
      %820 = vmatprep.subr.bf16.mxu0 0
      %821 = vmatpush1.bf16.msra.mxu0 0
      %822 = vmatprep.subr.bf16.mxu0 0
      %823 = vmatpush1.bf16.msra.mxu0 0
      %824 = vmatprep.subr.bf16.mxu0 0
      %825 = vmatpush1.bf16.msra.mxu0 0
      %826 = vmatprep.subr.bf16.mxu0 0
      %827 = vmatpush1.bf16.msra.mxu0 0
      %828 = vmatprep.subr.bf16.mxu0 0
      %829 = vmatpush1.bf16.msra.mxu0 0
      %830 = vmatprep.subr.bf16.mxu0 0
      %831 = vmatpush1.bf16.msra.mxu0 0
      %832 = vmatprep.subr.bf16.mxu0 0
      %833 = vmatpush1.bf16.msra.mxu0 0
      %834 = vmatprep.subr.bf16.mxu0 0
      %835 = vmatpush1.bf16.msra.mxu0 0
      %836 = vmatprep.mubr.bf16.mxu0 0
      %837 = vmatmul.mubr.bf16.gmra.mrb[0].mxu0 %v674
      %v838 = vpop.f32.mrb[0].mxu0
      %v839 = vadd.f32 %v790, %v838
      %v840 = vpop.f32.mrb[0].mxu0
      %v841 = vpop.f32.mrb[0].mxu0
      %v842 = vadd.f32 %v790, %v841
      %v843 = vpop.f32.mrb[0].mxu0
      %844 = vdwg.mxu0
      %v845 = vpack.c.bf16 %v714, %v711
      %v846 = vpack.c.bf16 %v778, %v775
      %v848 = vlaneseq
      %v849 = vshrl.u32 %v848, 7
      %v850 = vsub.s32 0, %v849
      %v851 = vrot.slane %v647, %v850
      %vm853 = vcmask 130048
      %v855 = vsel %vm853, %v845, 0
      %v858 = vsel %vm853, %v846, 0
      %860 = vmatprep.subr.bf16.mxu0 0
      %861 = vmatpush1.bf16.xpose.msra.mxu0 %v858
      %862 = vmatprep.subr.bf16.mxu0 0
      %863 = vmatpush1.bf16.xpose.msra.mxu0 0
      %864 = vmatprep.subr.bf16.mxu0 0
      %865 = vmatpush1.bf16.xpose.msra.mxu0 0
      %866 = vmatprep.subr.bf16.mxu0 0
      %867 = vmatpush1.bf16.xpose.msra.mxu0 0
      %868 = vmatprep.subr.bf16.mxu0 0
      %869 = vmatpush1.bf16.xpose.msra.mxu0 0
      %870 = vmatprep.subr.bf16.mxu0 0
      %871 = vmatpush1.bf16.xpose.msra.mxu0 0
      %872 = vmatprep.subr.bf16.mxu0 0
      %873 = vmatpush1.bf16.xpose.msra.mxu0 0
      %874 = vmatprep.subr.bf16.mxu0 0
      %875 = vmatpush1.bf16.xpose.msra.mxu0 0
      %876 = vmatprep.subr.bf16.mxu0 0
      %877 = vmatpush1.bf16.xpose.msra.mxu0 0
      %878 = vmatprep.subr.bf16.mxu0 0
      %879 = vmatpush1.bf16.xpose.msra.mxu0 0
      %880 = vmatprep.subr.bf16.mxu0 0
      %881 = vmatpush1.bf16.xpose.msra.mxu0 0
      %882 = vmatprep.subr.bf16.mxu0 0
      %883 = vmatpush1.bf16.xpose.msra.mxu0 0
      %884 = vmatprep.subr.bf16.mxu0 0
      %885 = vmatpush1.bf16.xpose.msra.mxu0 0
      %886 = vmatprep.subr.bf16.mxu0 0
      %887 = vmatpush1.bf16.xpose.msra.mxu0 0
      %888 = vmatprep.subr.bf16.mxu0 0
      %889 = vmatpush1.bf16.xpose.msra.mxu0 0
      %890 = vmatprep.subr.bf16.mxu0 0
      %891 = vmatpush1.bf16.xpose.msra.mxu0 0
      %892 = vmatprep.mubr.bf16.mxu0 0
      %893 = vmatmul.mubr.bf16.gmra.mrb[0].mxu0 %v855
      %v894 = vpop.f32.mrb[0].mxu0
      %v895 = vadd.f32 %v851, %v894
      %v896 = vpop.f32.mrb[0].mxu0
      %v897 = vpop.f32.mrb[0].mxu0
      %v898 = vadd.f32 %v851, %v897
      %v899 = vpop.f32.mrb[0].mxu0
      %900 = vdwg.mxu0
      %vm901 = vcmask 80896
      %v902 = vsel %vm901, %v895, -inf
      %903 = vmax.xlane.f32.xlu0 %v902
      %v904 = vpop.xlane.xlu0 %903
      %vm905 = vcmask 74752
      %v906 = vsel %vm905, %v898, -inf
      %907 = vmax.xlane.f32.xlu0 %v906
      %v908 = vpop.xlane.xlu0 %907
      %v909 = vsub.f32 %v895, %v904
      %v910 = vsub.f32 %v898, %v908
      %v911 = vmul.f32 %v909, 1.442695
      %v912 = vpow.pop %v911
      %v913 = vmul.f32 %v910, 1.442695
      %v914 = vpow.pop %v913
      %v915 = vsel %vm901, %v912, 0.0
      %916 = vadd.xlane.f32.xlu0 %v915
      %v917 = vpop.xlane.xlu0 %916
      %v918 = vsel %vm905, %v914, 0.0
      %919 = vadd.xlane.f32.xlu0 %v918
      %v920 = vpop.xlane.xlu0 %919
      %v921 = vrcp.pop %v917
      %v922 = vrcp.pop %v920
      %v923 = vmul.f32 %v912, %v921
      %v924 = vmul.f32 %v914, %v922
      %v925 = vpack.c.bf16 %v924, %v923
      %v926 = vpack.c.bf16 %v842, %v839
      %v928 = vsel %vm901, %v925, 0
      %vm930 = vcmask 1044480
      %v932 = vsel %vm930, %v926, 0
      %934 = vmatprep.subr.bf16.mxu0 0
      %935 = vmatpush1.bf16.msra.mxu0 %v932
      %936 = vmatprep.subr.bf16.mxu0 0
      %937 = vmatpush1.bf16.msra.mxu0 0
      %938 = vmatprep.subr.bf16.mxu0 0
      %939 = vmatpush1.bf16.msra.mxu0 0
      %940 = vmatprep.subr.bf16.mxu0 0
      %941 = vmatpush1.bf16.msra.mxu0 0
      %942 = vmatprep.subr.bf16.mxu0 0
      %943 = vmatpush1.bf16.msra.mxu0 0
      %944 = vmatprep.subr.bf16.mxu0 0
      %945 = vmatpush1.bf16.msra.mxu0 0
      %946 = vmatprep.subr.bf16.mxu0 0
      %947 = vmatpush1.bf16.msra.mxu0 0
      %948 = vmatprep.subr.bf16.mxu0 0
      %949 = vmatpush1.bf16.msra.mxu0 0
      %950 = vmatprep.subr.bf16.mxu0 0
      %951 = vmatpush1.bf16.msra.mxu0 0
      %952 = vmatprep.subr.bf16.mxu0 0
      %953 = vmatpush1.bf16.msra.mxu0 0
      %954 = vmatprep.subr.bf16.mxu0 0
      %955 = vmatpush1.bf16.msra.mxu0 0
      %956 = vmatprep.subr.bf16.mxu0 0
      %957 = vmatpush1.bf16.msra.mxu0 0
      %958 = vmatprep.subr.bf16.mxu0 0
      %959 = vmatpush1.bf16.msra.mxu0 0
      %960 = vmatprep.subr.bf16.mxu0 0
      %961 = vmatpush1.bf16.msra.mxu0 0
      %962 = vmatprep.subr.bf16.mxu0 0
      %963 = vmatpush1.bf16.msra.mxu0 0
      %964 = vmatprep.subr.bf16.mxu0 0
      %965 = vmatpush1.bf16.msra.mxu0 0
      %966 = vmatprep.mubr.bf16.mxu0 0
      %967 = vmatmul.mubr.bf16.gmra.mrb[0].mxu0 %v928
      %v968 = vpop.f32.mrb[0].mxu0
      %v969 = vadd.f32 0.0, %v968
      %v970 = vpop.f32.mrb[0].mxu0
      %v971 = vpop.f32.mrb[0].mxu0
      %v972 = vadd.f32 0.0, %v971
      %v973 = vpop.f32.mrb[0].mxu0
      %974 = vdwg.mxu0
      %v975 = vpack.c.bf16 %v972, %v969
      %v976 = vld [vmem:[%s8] sm:$0xf]
      %v977 = vld [vmem:[%s8 + $0x4] sm:$0xf]
      %s978 = scalar_lea.vmem %s2, 16
      %v979 = vld [vmem:[%s978] sm:$0xf]
      %v980 = vld [vmem:[%s978 + $0x4] sm:$0xf]
      %v981 = vld [vmem:[%s978 + $0x8] sm:$0xf]
      %v982 = vld [vmem:[%s978 + $0xc] sm:$0xf]
      %s983 = scalar_lea.vmem %s3, 1
      %v984 = vld [vmem:[%s983] sm:$0x1]
      %v986 = vlaneseq
      %v987 = vshrl.u32 %v986, 7
      %v988 = vsub.s32 0, %v987
      %v989 = vrot.slane %v984, %v988
      %v995 = vunpack.c.l.b16 %v979
      %v996 = vunpack.c.l.b16 %v980
      %v997 = vunpack.c.l.b16 %v981
      %v998 = vunpack.c.l.b16 %v982
      %v999 = vpack.c.b16 %v996, %v995
      %v1000 = vpack.c.b16 %v998, %v997
      %1003 = vmatprep.subr.bf16.mxu0 0
      %1004 = vmatpush1.bf16.msra.mxu0 %v999
      %1005 = vmatprep.subr.bf16.mxu0 0
      %1006 = vmatpush1.bf16.msra.mxu0 %v1000
      %1007 = vmatprep.subr.bf16.mxu0 0
      %1008 = vmatpush1.bf16.msra.mxu0 0
      %1009 = vmatprep.subr.bf16.mxu0 0
      %1010 = vmatpush1.bf16.msra.mxu0 0
      %1011 = vmatprep.subr.bf16.mxu0 0
      %1012 = vmatpush1.bf16.msra.mxu0 0
      %1013 = vmatprep.subr.bf16.mxu0 0
      %1014 = vmatpush1.bf16.msra.mxu0 0
      %1015 = vmatprep.subr.bf16.mxu0 0
      %1016 = vmatpush1.bf16.msra.mxu0 0
      %1017 = vmatprep.subr.bf16.mxu0 0
      %1018 = vmatpush1.bf16.msra.mxu0 0
      %1019 = vmatprep.subr.bf16.mxu0 0
      %1020 = vmatpush1.bf16.msra.mxu0 0
      %1021 = vmatprep.subr.bf16.mxu0 0
      %1022 = vmatpush1.bf16.msra.mxu0 0
      %1023 = vmatprep.subr.bf16.mxu0 0
      %1024 = vmatpush1.bf16.msra.mxu0 0
      %1025 = vmatprep.subr.bf16.mxu0 0
      %1026 = vmatpush1.bf16.msra.mxu0 0
      %1027 = vmatprep.subr.bf16.mxu0 0
      %1028 = vmatpush1.bf16.msra.mxu0 0
      %1029 = vmatprep.subr.bf16.mxu0 0
      %1030 = vmatpush1.bf16.msra.mxu0 0
      %1031 = vmatprep.subr.bf16.mxu0 0
      %1032 = vmatpush1.bf16.msra.mxu0 0
      %1033 = vmatprep.subr.bf16.mxu0 0
      %1034 = vmatpush1.bf16.msra.mxu0 0
      %1035 = vmatprep.mubr.bf16.mxu0 0
      %1036 = vmatmul.mubr.bf16.gmra.mrb[0].mxu0 %v674
      %v1037 = vpop.f32.mrb[0].mxu0
      %v1038 = vadd.f32 %v989, %v1037
      %v1039 = vpop.f32.mrb[0].mxu0
      %v1040 = vpop.f32.mrb[0].mxu0
      %v1041 = vadd.f32 %v989, %v1040
      %v1042 = vpop.f32.mrb[0].mxu0
      %1043 = vdwg.mxu0
      %s1044 = scalar_lea.vmem %s4, 16
      %v1045 = vld [vmem:[%s1044] sm:$0xf]
      %v1046 = vld [vmem:[%s1044 + $0x4] sm:$0xf]
      %v1047 = vld [vmem:[%s1044 + $0x8] sm:$0xf]
      %v1048 = vld [vmem:[%s1044 + $0xc] sm:$0xf]
      %s1049 = scalar_lea.vmem %s5, 1
      %v1050 = vld [vmem:[%s1049] sm:$0x1]
      %v1052 = vlaneseq
      %v1053 = vshrl.u32 %v1052, 7
      %v1054 = vsub.s32 0, %v1053
      %v1055 = vrot.slane %v1050, %v1054
      %v1061 = vunpack.c.l.b16 %v1045
      %v1062 = vunpack.c.l.b16 %v1046
      %v1063 = vunpack.c.l.b16 %v1047
      %v1064 = vunpack.c.l.b16 %v1048
      %v1065 = vpack.c.b16 %v1062, %v1061
      %v1066 = vpack.c.b16 %v1064, %v1063
      %1069 = vmatprep.subr.bf16.mxu0 0
      %1070 = vmatpush1.bf16.msra.mxu0 %v1065
      %1071 = vmatprep.subr.bf16.mxu0 0
      %1072 = vmatpush1.bf16.msra.mxu0 %v1066
      %1073 = vmatprep.subr.bf16.mxu0 0
      %1074 = vmatpush1.bf16.msra.mxu0 0
      %1075 = vmatprep.subr.bf16.mxu0 0
      %1076 = vmatpush1.bf16.msra.mxu0 0
      %1077 = vmatprep.subr.bf16.mxu0 0
      %1078 = vmatpush1.bf16.msra.mxu0 0
      %1079 = vmatprep.subr.bf16.mxu0 0
      %1080 = vmatpush1.bf16.msra.mxu0 0
      %1081 = vmatprep.subr.bf16.mxu0 0
      %1082 = vmatpush1.bf16.msra.mxu0 0
      %1083 = vmatprep.subr.bf16.mxu0 0
      %1084 = vmatpush1.bf16.msra.mxu0 0
      %1085 = vmatprep.subr.bf16.mxu0 0
      %1086 = vmatpush1.bf16.msra.mxu0 0
      %1087 = vmatprep.subr.bf16.mxu0 0
      %1088 = vmatpush1.bf16.msra.mxu0 0
      %1089 = vmatprep.subr.bf16.mxu0 0
      %1090 = vmatpush1.bf16.msra.mxu0 0
      %1091 = vmatprep.subr.bf16.mxu0 0
      %1092 = vmatpush1.bf16.msra.mxu0 0
      %1093 = vmatprep.subr.bf16.mxu0 0
      %1094 = vmatpush1.bf16.msra.mxu0 0
      %1095 = vmatprep.subr.bf16.mxu0 0
      %1096 = vmatpush1.bf16.msra.mxu0 0
      %1097 = vmatprep.subr.bf16.mxu0 0
      %1098 = vmatpush1.bf16.msra.mxu0 0
      %1099 = vmatprep.subr.bf16.mxu0 0
      %1100 = vmatpush1.bf16.msra.mxu0 0
      %1101 = vmatprep.mubr.bf16.mxu0 0
      %1102 = vmatmul.mubr.bf16.gmra.mrb[0].mxu0 %v674
      %v1103 = vpop.f32.mrb[0].mxu0
      %v1104 = vadd.f32 %v1055, %v1103
      %v1105 = vpop.f32.mrb[0].mxu0
      %v1106 = vpop.f32.mrb[0].mxu0
      %v1107 = vadd.f32 %v1055, %v1106
      %v1108 = vpop.f32.mrb[0].mxu0
      %1109 = vdwg.mxu0
      %s1110 = scalar_lea.vmem %s6, 16
      %v1111 = vld [vmem:[%s1110] sm:$0xf]
      %v1112 = vld [vmem:[%s1110 + $0x4] sm:$0xf]
      %v1113 = vld [vmem:[%s1110 + $0x8] sm:$0xf]
      %v1114 = vld [vmem:[%s1110 + $0xc] sm:$0xf]
      %s1115 = scalar_lea.vmem %s7, 1
      %v1116 = vld [vmem:[%s1115] sm:$0x1]
      %v1118 = vlaneseq
      %v1119 = vshrl.u32 %v1118, 7
      %v1120 = vsub.s32 0, %v1119
      %v1121 = vrot.slane %v1116, %v1120
      %v1127 = vunpack.c.l.b16 %v1111
      %v1128 = vunpack.c.l.b16 %v1112
      %v1129 = vunpack.c.l.b16 %v1113
      %v1130 = vunpack.c.l.b16 %v1114
      %v1131 = vpack.c.b16 %v1128, %v1127
      %v1132 = vpack.c.b16 %v1130, %v1129
      %1135 = vmatprep.subr.bf16.mxu0 0
      %1136 = vmatpush1.bf16.msra.mxu0 %v1131
      %1137 = vmatprep.subr.bf16.mxu0 0
      %1138 = vmatpush1.bf16.msra.mxu0 %v1132
      %1139 = vmatprep.subr.bf16.mxu0 0
      %1140 = vmatpush1.bf16.msra.mxu0 0
      %1141 = vmatprep.subr.bf16.mxu0 0
      %1142 = vmatpush1.bf16.msra.mxu0 0
      %1143 = vmatprep.subr.bf16.mxu0 0
      %1144 = vmatpush1.bf16.msra.mxu0 0
      %1145 = vmatprep.subr.bf16.mxu0 0
      %1146 = vmatpush1.bf16.msra.mxu0 0
      %1147 = vmatprep.subr.bf16.mxu0 0
      %1148 = vmatpush1.bf16.msra.mxu0 0
      %1149 = vmatprep.subr.bf16.mxu0 0
      %1150 = vmatpush1.bf16.msra.mxu0 0
      %1151 = vmatprep.subr.bf16.mxu0 0
      %1152 = vmatpush1.bf16.msra.mxu0 0
      %1153 = vmatprep.subr.bf16.mxu0 0
      %1154 = vmatpush1.bf16.msra.mxu0 0
      %1155 = vmatprep.subr.bf16.mxu0 0
      %1156 = vmatpush1.bf16.msra.mxu0 0
      %1157 = vmatprep.subr.bf16.mxu0 0
      %1158 = vmatpush1.bf16.msra.mxu0 0
      %1159 = vmatprep.subr.bf16.mxu0 0
      %1160 = vmatpush1.bf16.msra.mxu0 0
      %1161 = vmatprep.subr.bf16.mxu0 0
      %1162 = vmatpush1.bf16.msra.mxu0 0
      %1163 = vmatprep.subr.bf16.mxu0 0
      %1164 = vmatpush1.bf16.msra.mxu0 0
      %1165 = vmatprep.subr.bf16.mxu0 0
      %1166 = vmatpush1.bf16.msra.mxu0 0
      %1167 = vmatprep.mubr.bf16.mxu0 0
      %1168 = vmatmul.mubr.bf16.gmra.mrb[0].mxu0 %v674
      %v1169 = vpop.f32.mrb[0].mxu0
      %v1170 = vadd.f32 %v1121, %v1169
      %v1171 = vpop.f32.mrb[0].mxu0
      %v1172 = vpop.f32.mrb[0].mxu0
      %v1173 = vadd.f32 %v1121, %v1172
      %v1174 = vpop.f32.mrb[0].mxu0
      %1175 = vdwg.mxu0
      %v1176 = vpack.c.bf16 %v1041, %v1038
      %v1177 = vpack.c.bf16 %v1107, %v1104
      %v1179 = vsel %vm853, %v1176, 0
      %v1182 = vsel %vm853, %v1177, 0
      %1184 = vmatprep.subr.bf16.mxu0 0
      %1185 = vmatpush1.bf16.xpose.msra.mxu0 %v1182
      %1186 = vmatprep.subr.bf16.mxu0 0
      %1187 = vmatpush1.bf16.xpose.msra.mxu0 0
      %1188 = vmatprep.subr.bf16.mxu0 0
      %1189 = vmatpush1.bf16.xpose.msra.mxu0 0
      %1190 = vmatprep.subr.bf16.mxu0 0
      %1191 = vmatpush1.bf16.xpose.msra.mxu0 0
      %1192 = vmatprep.subr.bf16.mxu0 0
      %1193 = vmatpush1.bf16.xpose.msra.mxu0 0
      %1194 = vmatprep.subr.bf16.mxu0 0
      %1195 = vmatpush1.bf16.xpose.msra.mxu0 0
      %1196 = vmatprep.subr.bf16.mxu0 0
      %1197 = vmatpush1.bf16.xpose.msra.mxu0 0
      %1198 = vmatprep.subr.bf16.mxu0 0
      %1199 = vmatpush1.bf16.xpose.msra.mxu0 0
      %1200 = vmatprep.subr.bf16.mxu0 0
      %1201 = vmatpush1.bf16.xpose.msra.mxu0 0
      %1202 = vmatprep.subr.bf16.mxu0 0
      %1203 = vmatpush1.bf16.xpose.msra.mxu0 0
      %1204 = vmatprep.subr.bf16.mxu0 0
      %1205 = vmatpush1.bf16.xpose.msra.mxu0 0
      %1206 = vmatprep.subr.bf16.mxu0 0
      %1207 = vmatpush1.bf16.xpose.msra.mxu0 0
      %1208 = vmatprep.subr.bf16.mxu0 0
      %1209 = vmatpush1.bf16.xpose.msra.mxu0 0
      %1210 = vmatprep.subr.bf16.mxu0 0
      %1211 = vmatpush1.bf16.xpose.msra.mxu0 0
      %1212 = vmatprep.subr.bf16.mxu0 0
      %1213 = vmatpush1.bf16.xpose.msra.mxu0 0
      %1214 = vmatprep.subr.bf16.mxu0 0
      %1215 = vmatpush1.bf16.xpose.msra.mxu0 0
      %1216 = vmatprep.mubr.bf16.mxu0 0
      %1217 = vmatmul.mubr.bf16.gmra.mrb[0].mxu0 %v1179
      %v1218 = vpop.f32.mrb[0].mxu0
      %v1219 = vadd.f32 %v851, %v1218
      %v1220 = vpop.f32.mrb[0].mxu0
      %v1221 = vpop.f32.mrb[0].mxu0
      %v1222 = vadd.f32 %v851, %v1221
      %v1223 = vpop.f32.mrb[0].mxu0
      %1224 = vdwg.mxu0
      %v1225 = vsel %vm901, %v1219, -inf
      %1226 = vmax.xlane.f32.xlu0 %v1225
      %v1227 = vpop.xlane.xlu0 %1226
      %v1228 = vsel %vm905, %v1222, -inf
      %1229 = vmax.xlane.f32.xlu0 %v1228
      %v1230 = vpop.xlane.xlu0 %1229
      %v1231 = vsub.f32 %v1219, %v1227
      %v1232 = vsub.f32 %v1222, %v1230
      %v1233 = vmul.f32 %v1231, 1.442695
      %v1234 = vpow.pop %v1233
      %v1235 = vmul.f32 %v1232, 1.442695
      %v1236 = vpow.pop %v1235
      %v1237 = vsel %vm901, %v1234, 0.0
      %1238 = vadd.xlane.f32.xlu0 %v1237
      %v1239 = vpop.xlane.xlu0 %1238
      %v1240 = vsel %vm905, %v1236, 0.0
      %1241 = vadd.xlane.f32.xlu0 %v1240
      %v1242 = vpop.xlane.xlu0 %1241
      %v1243 = vrcp.pop %v1239
      %v1244 = vrcp.pop %v1242
      %v1245 = vmul.f32 %v1234, %v1243
      %v1246 = vmul.f32 %v1236, %v1244
      %v1247 = vpack.c.bf16 %v1246, %v1245
      %v1248 = vpack.c.bf16 %v1173, %v1170
      %v1250 = vsel %vm901, %v1247, 0
      %v1253 = vsel %vm930, %v1248, 0
      %1255 = vmatprep.subr.bf16.mxu0 0
      %1256 = vmatpush1.bf16.msra.mxu0 %v1253
      %1257 = vmatprep.subr.bf16.mxu0 0
      %1258 = vmatpush1.bf16.msra.mxu0 0
      %1259 = vmatprep.subr.bf16.mxu0 0
      %1260 = vmatpush1.bf16.msra.mxu0 0
      %1261 = vmatprep.subr.bf16.mxu0 0
      %1262 = vmatpush1.bf16.msra.mxu0 0
      %1263 = vmatprep.subr.bf16.mxu0 0
      %1264 = vmatpush1.bf16.msra.mxu0 0
      %1265 = vmatprep.subr.bf16.mxu0 0
      %1266 = vmatpush1.bf16.msra.mxu0 0
      %1267 = vmatprep.subr.bf16.mxu0 0
      %1268 = vmatpush1.bf16.msra.mxu0 0
      %1269 = vmatprep.subr.bf16.mxu0 0
      %1270 = vmatpush1.bf16.msra.mxu0 0
      %1271 = vmatprep.subr.bf16.mxu0 0
      %1272 = vmatpush1.bf16.msra.mxu0 0
      %1273 = vmatprep.subr.bf16.mxu0 0
      %1274 = vmatpush1.bf16.msra.mxu0 0
      %1275 = vmatprep.subr.bf16.mxu0 0
      %1276 = vmatpush1.bf16.msra.mxu0 0
      %1277 = vmatprep.subr.bf16.mxu0 0
      %1278 = vmatpush1.bf16.msra.mxu0 0
      %1279 = vmatprep.subr.bf16.mxu0 0
      %1280 = vmatpush1.bf16.msra.mxu0 0
      %1281 = vmatprep.subr.bf16.mxu0 0
      %1282 = vmatpush1.bf16.msra.mxu0 0
      %1283 = vmatprep.subr.bf16.mxu0 0
      %1284 = vmatpush1.bf16.msra.mxu0 0
      %1285 = vmatprep.subr.bf16.mxu0 0
      %1286 = vmatpush1.bf16.msra.mxu0 0
      %1287 = vmatprep.mubr.bf16.mxu0 0
      %1288 = vmatmul.mubr.bf16.gmra.mrb[0].mxu0 %v1250
      %v1289 = vpop.f32.mrb[0].mxu0
      %v1290 = vadd.f32 0.0, %v1289
      %v1291 = vpop.f32.mrb[0].mxu0
      %v1292 = vpop.f32.mrb[0].mxu0
      %v1293 = vadd.f32 0.0, %v1292
      %v1294 = vpop.f32.mrb[0].mxu0
      %1295 = vdwg.mxu0
      %v1296 = vpack.c.bf16 %v1293, %v1290
      %s1297 = scalar_lea.vmem %s8, 8
      %v1298 = vld [vmem:[%s1297] sm:$0xf]
      %v1299 = vld [vmem:[%s1297 + $0x4] sm:$0xf]
      %v1302 = vunpack.c.l.b16 %v1298
      %v1303 = vunpack.c.l.b16 %v1299
      %v1304 = vpack.c.b16 %v1303, %v1302
      %v1307 = vsel %vm853, %v1296, 0
      %1309 = vmatprep.subr.bf16.mxu0 0
      %1310 = vmatpush1.bf16.msra.mxu0 %v1304
      %1311 = vmatprep.subr.bf16.mxu0 0
      %1312 = vmatpush1.bf16.msra.mxu0 0
      %1313 = vmatprep.subr.bf16.mxu0 0
      %1314 = vmatpush1.bf16.msra.mxu0 0
      %1315 = vmatprep.subr.bf16.mxu0 0
      %1316 = vmatpush1.bf16.msra.mxu0 0
      %1317 = vmatprep.subr.bf16.mxu0 0
      %1318 = vmatpush1.bf16.msra.mxu0 0
      %1319 = vmatprep.subr.bf16.mxu0 0
      %1320 = vmatpush1.bf16.msra.mxu0 0
      %1321 = vmatprep.subr.bf16.mxu0 0
      %1322 = vmatpush1.bf16.msra.mxu0 0
      %1323 = vmatprep.subr.bf16.mxu0 0
      %1324 = vmatpush1.bf16.msra.mxu0 0
      %1325 = vmatprep.subr.bf16.mxu0 0
      %1326 = vmatpush1.bf16.msra.mxu0 0
      %1327 = vmatprep.subr.bf16.mxu0 0
      %1328 = vmatpush1.bf16.msra.mxu0 0
      %1329 = vmatprep.subr.bf16.mxu0 0
      %1330 = vmatpush1.bf16.msra.mxu0 0
      %1331 = vmatprep.subr.bf16.mxu0 0
      %1332 = vmatpush1.bf16.msra.mxu0 0
      %1333 = vmatprep.subr.bf16.mxu0 0
      %1334 = vmatpush1.bf16.msra.mxu0 0
      %1335 = vmatprep.subr.bf16.mxu0 0
      %1336 = vmatpush1.bf16.msra.mxu0 0
      %1337 = vmatprep.subr.bf16.mxu0 0
      %1338 = vmatpush1.bf16.msra.mxu0 0
      %1339 = vmatprep.subr.bf16.mxu0 0
      %1340 = vmatpush1.bf16.msra.mxu0 0
      %1341 = vmatprep.mubr.bf16.mxu0 0
      %1342 = vmatmul.mubr.bf16.gmra.mrb[0].mxu0 %v1307
      %v1343 = vpop.f32.mrb[0].mxu0
      %v1344 = vadd.f32 0.0, %v1343
      %v1345 = vpop.f32.mrb[0].mxu0
      %v1346 = vpop.f32.mrb[0].mxu0
      %v1347 = vadd.f32 0.0, %v1346
      %v1348 = vpop.f32.mrb[0].mxu0
      %1349 = vdwg.mxu0
      %v1352 = vunpack.c.l.b16 %v976
      %v1353 = vunpack.c.l.b16 %v977
      %v1354 = vpack.c.b16 %v1353, %v1352
      %v1357 = vsel %vm853, %v975, 0
      %1359 = vmatprep.subr.bf16.mxu0 0
      %1360 = vmatpush1.bf16.msra.mxu0 %v1354
      %1361 = vmatprep.subr.bf16.mxu0 0
      %1362 = vmatpush1.bf16.msra.mxu0 0
      %1363 = vmatprep.subr.bf16.mxu0 0
      %1364 = vmatpush1.bf16.msra.mxu0 0
      %1365 = vmatprep.subr.bf16.mxu0 0
      %1366 = vmatpush1.bf16.msra.mxu0 0
      %1367 = vmatprep.subr.bf16.mxu0 0
      %1368 = vmatpush1.bf16.msra.mxu0 0
      %1369 = vmatprep.subr.bf16.mxu0 0
      %1370 = vmatpush1.bf16.msra.mxu0 0
      %1371 = vmatprep.subr.bf16.mxu0 0
      %1372 = vmatpush1.bf16.msra.mxu0 0
      %1373 = vmatprep.subr.bf16.mxu0 0
      %1374 = vmatpush1.bf16.msra.mxu0 0
      %1375 = vmatprep.subr.bf16.mxu0 0
      %1376 = vmatpush1.bf16.msra.mxu0 0
      %1377 = vmatprep.subr.bf16.mxu0 0
      %1378 = vmatpush1.bf16.msra.mxu0 0
      %1379 = vmatprep.subr.bf16.mxu0 0
      %1380 = vmatpush1.bf16.msra.mxu0 0
      %1381 = vmatprep.subr.bf16.mxu0 0
      %1382 = vmatpush1.bf16.msra.mxu0 0
      %1383 = vmatprep.subr.bf16.mxu0 0
      %1384 = vmatpush1.bf16.msra.mxu0 0
      %1385 = vmatprep.subr.bf16.mxu0 0
      %1386 = vmatpush1.bf16.msra.mxu0 0
      %1387 = vmatprep.subr.bf16.mxu0 0
      %1388 = vmatpush1.bf16.msra.mxu0 0
      %1389 = vmatprep.subr.bf16.mxu0 0
      %1390 = vmatpush1.bf16.msra.mxu0 0
      %1391 = vmatprep.mubr.bf16.mxu0 0
      %1392 = vmatmul.mubr.bf16.gmra.mrb[0].mxu0 %v1357
      %v1393 = vpop.f32.mrb[0].mxu0
      %v1394 = vadd.f32 %v1344, %v1393
      %v1395 = vpop.f32.mrb[0].mxu0
      %v1396 = vpop.f32.mrb[0].mxu0
      %v1397 = vadd.f32 %v1347, %v1396
      %v1398 = vpop.f32.mrb[0].mxu0
      %1399 = vdwg.mxu0
      %v1400 = vld [vmem:[%s9] sm:$0x1]
      %v1402 = vlaneseq
      %v1403 = vshrl.u32 %v1402, 7
      %v1404 = vsub.s32 0, %v1403
      %v1405 = vrot.slane %v1400, %v1404
      %v1407 = vadd.f32 %v1394, %v1405
      %v1408 = vadd.f32 %v1397, %v1405
      %v1409 = vadd.f32 %v645, %v1407
      %v1410 = vadd.f32 %v646, %v1408
      %v1411 = vld [vmem:[%s10] sm:$0x1]
      %v1412 = vld [vmem:[%s11] sm:$0x1]
      %v1413 = vsel %vm672, %v1409, 0.0
      %1414 = vadd.xlane.f32.xlu0 %v1413
      %v1415 = vpop.xlane.xlu0 %1414
      %vm1416 = vcmask 254976
      %v1417 = vsel %vm1416, %v1410, 0.0
      %1418 = vadd.xlane.f32.xlu0 %v1417
      %v1419 = vpop.xlane.xlu0 %1418
      %v1420 = vrcp.pop 32.0
      %v1421 = vmul.f32 %v1415, %v1420
      %v1422 = vmul.f32 %v1419, %v1420
      %v1423 = vsub.f32 %v1409, %v1421
      %v1424 = vsub.f32 %v1410, %v1422
      %v1425 = vmul.f32 %v1423, %v1423
      %v1426 = vmul.f32 %v1424, %v1424
      %v1427 = vsel %vm672, %v1425, 0.0
      %1428 = vadd.xlane.f32.xlu0 %v1427
      %v1429 = vpop.xlane.xlu0 %1428
      %v1430 = vsel %vm1416, %v1426, 0.0
      %1431 = vadd.xlane.f32.xlu0 %v1430
      %v1432 = vpop.xlane.xlu0 %1431
      %v1433 = vmul.f32 %v1429, %v1420
      %v1434 = vmul.f32 %v1432, %v1420
      %v1435 = vadd.f32 %v1433, 1e-05
      %v1436 = vadd.f32 %v1434, 1e-05
      %v1437 = vrsqrt.pop %v1435
      %v1438 = vrsqrt.pop %v1436
      %v1439 = vmul.f32 %v1423, %v1437
      %v1440 = vmul.f32 %v1424, %v1438
      %v1442 = vlaneseq
      %v1443 = vshrl.u32 %v1442, 7
      %v1444 = vsub.s32 0, %v1443
      %v1445 = vrot.slane %v1411, %v1444
      %v1447 = vmul.f32 %v1439, %v1445
      %v1448 = vmul.f32 %v1440, %v1445
      %v1450 = vlaneseq
      %v1451 = vshrl.u32 %v1450, 7
      %v1452 = vsub.s32 0, %v1451
      %v1453 = vrot.slane %v1412, %v1452
      %v1455 = vadd.f32 %v1447, %v1453
      %v1456 = vadd.f32 %v1448, %v1453
      %v1457 = vpack.c.bf16 %v1456, %v1455
      %v1458 = vld [vmem:[%s12] sm:$0xf]
      %v1459 = vld [vmem:[%s12 + $0x4] sm:$0xf]
      %v1460 = vld [vmem:[%s12 + $0x8] sm:$0xf]
      %v1461 = vld [vmem:[%s12 + $0xc] sm:$0xf]
      %v1462 = vld [vmem:[%s13] sm:$0x1]
      %v1464 = vlaneseq
      %v1465 = vshrl.u32 %v1464, 7
      %v1466 = vsub.s32 0, %v1465
      %v1467 = vrot.slane %v1462, %v1466
      %v1473 = vunpack.c.l.b16 %v1458
      %v1474 = vunpack.c.l.b16 %v1459
      %v1475 = vunpack.c.l.b16 %v1460
      %v1476 = vunpack.c.l.b16 %v1461
      %v1477 = vpack.c.b16 %v1474, %v1473
      %v1478 = vpack.c.b16 %v1476, %v1475
      %v1482 = vsel %vm672, %v1457, 0
      %1484 = vmatprep.subr.bf16.mxu0 0
      %1485 = vmatpush1.bf16.msra.mxu0 %v1477
      %1486 = vmatprep.subr.bf16.mxu0 0
      %1487 = vmatpush1.bf16.msra.mxu0 %v1478
      %1488 = vmatprep.subr.bf16.mxu0 0
      %1489 = vmatpush1.bf16.msra.mxu0 0
      %1490 = vmatprep.subr.bf16.mxu0 0
      %1491 = vmatpush1.bf16.msra.mxu0 0
      %1492 = vmatprep.subr.bf16.mxu0 0
      %1493 = vmatpush1.bf16.msra.mxu0 0
      %1494 = vmatprep.subr.bf16.mxu0 0
      %1495 = vmatpush1.bf16.msra.mxu0 0
      %1496 = vmatprep.subr.bf16.mxu0 0
      %1497 = vmatpush1.bf16.msra.mxu0 0
      %1498 = vmatprep.subr.bf16.mxu0 0
      %1499 = vmatpush1.bf16.msra.mxu0 0
      %1500 = vmatprep.subr.bf16.mxu0 0
      %1501 = vmatpush1.bf16.msra.mxu0 0
      %1502 = vmatprep.subr.bf16.mxu0 0
      %1503 = vmatpush1.bf16.msra.mxu0 0
      %1504 = vmatprep.subr.bf16.mxu0 0
      %1505 = vmatpush1.bf16.msra.mxu0 0
      %1506 = vmatprep.subr.bf16.mxu0 0
      %1507 = vmatpush1.bf16.msra.mxu0 0
      %1508 = vmatprep.subr.bf16.mxu0 0
      %1509 = vmatpush1.bf16.msra.mxu0 0
      %1510 = vmatprep.subr.bf16.mxu0 0
      %1511 = vmatpush1.bf16.msra.mxu0 0
      %1512 = vmatprep.subr.bf16.mxu0 0
      %1513 = vmatpush1.bf16.msra.mxu0 0
      %1514 = vmatprep.subr.bf16.mxu0 0
      %1515 = vmatpush1.bf16.msra.mxu0 0
      %1516 = vmatprep.mubr.bf16.mxu0 0
      %1517 = vmatmul.mubr.bf16.gmra.mrb[0].mxu0 %v1482
      %v1518 = vpop.f32.mrb[0].mxu0
      %v1519 = vadd.f32 %v1467, %v1518
      %v1520 = vpop.f32.mrb[0].mxu0
      %v1521 = vpop.f32.mrb[0].mxu0
      %v1522 = vadd.f32 %v1467, %v1521
      %v1523 = vpop.f32.mrb[0].mxu0
      %1524 = vdwg.mxu0
      %v1525 = vmax.f32 %v1519, 0.0
      %v1526 = vmax.f32 %v1522, 0.0
      %v1527 = vpack.c.bf16 %v1526, %v1525
      %v1528 = vld [vmem:[%s14] sm:$0xf]
      %v1529 = vld [vmem:[%s14 + $0x4] sm:$0xf]
      %v1530 = vld [vmem:[%s14 + $0x8] sm:$0xf]
      %v1531 = vld [vmem:[%s14 + $0xc] sm:$0xf]
      %v1532 = vld [vmem:[%s14 + $0x10] sm:$0xf]
      %v1533 = vld [vmem:[%s14 + $0x14] sm:$0xf]
      %v1534 = vld [vmem:[%s14 + $0x18] sm:$0xf]
      %v1535 = vld [vmem:[%s14 + $0x1c] sm:$0xf]
      %v1536 = vld [vmem:[%s15] sm:$0x1]
      %v1538 = vlaneseq
      %v1539 = vshrl.u32 %v1538, 7
      %v1540 = vsub.s32 0, %v1539
      %v1541 = vrot.slane %v1536, %v1540
      %v1551 = vunpack.c.l.b16 %v1528
      %v1552 = vunpack.c.l.b16 %v1529
      %v1553 = vunpack.c.l.b16 %v1530
      %v1554 = vunpack.c.l.b16 %v1531
      %v1555 = vunpack.c.l.b16 %v1532
      %v1556 = vunpack.c.l.b16 %v1533
      %v1557 = vunpack.c.l.b16 %v1534
      %v1558 = vunpack.c.l.b16 %v1535
      %v1559 = vpack.c.b16 %v1552, %v1551
      %v1560 = vpack.c.b16 %v1554, %v1553
      %v1561 = vpack.c.b16 %v1556, %v1555
      %v1562 = vpack.c.b16 %v1558, %v1557
      %vm1567 = vcmask 523264
      %v1569 = vsel %vm1567, %v1527, 0
      %1571 = vmatprep.subr.bf16.mxu0 0
      %1572 = vmatpush1.bf16.msra.mxu0 %v1559
      %1573 = vmatprep.subr.bf16.mxu0 0
      %1574 = vmatpush1.bf16.msra.mxu0 %v1560
      %1575 = vmatprep.subr.bf16.mxu0 0
      %1576 = vmatpush1.bf16.msra.mxu0 %v1561
      %1577 = vmatprep.subr.bf16.mxu0 0
      %1578 = vmatpush1.bf16.msra.mxu0 %v1562
      %1579 = vmatprep.subr.bf16.mxu0 0
      %1580 = vmatpush1.bf16.msra.mxu0 0
      %1581 = vmatprep.subr.bf16.mxu0 0
      %1582 = vmatpush1.bf16.msra.mxu0 0
      %1583 = vmatprep.subr.bf16.mxu0 0
      %1584 = vmatpush1.bf16.msra.mxu0 0
      %1585 = vmatprep.subr.bf16.mxu0 0
      %1586 = vmatpush1.bf16.msra.mxu0 0
      %1587 = vmatprep.subr.bf16.mxu0 0
      %1588 = vmatpush1.bf16.msra.mxu0 0
      %1589 = vmatprep.subr.bf16.mxu0 0
      %1590 = vmatpush1.bf16.msra.mxu0 0
      %1591 = vmatprep.subr.bf16.mxu0 0
      %1592 = vmatpush1.bf16.msra.mxu0 0
      %1593 = vmatprep.subr.bf16.mxu0 0
      %1594 = vmatpush1.bf16.msra.mxu0 0
      %1595 = vmatprep.subr.bf16.mxu0 0
      %1596 = vmatpush1.bf16.msra.mxu0 0
      %1597 = vmatprep.subr.bf16.mxu0 0
      %1598 = vmatpush1.bf16.msra.mxu0 0
      %1599 = vmatprep.subr.bf16.mxu0 0
      %1600 = vmatpush1.bf16.msra.mxu0 0
      %1601 = vmatprep.subr.bf16.mxu0 0
      %1602 = vmatpush1.bf16.msra.mxu0 0
      %1603 = vmatprep.mubr.bf16.mxu0 0
      %1604 = vmatmul.mubr.bf16.gmra.mrb[0].mxu0 %v1569
      %v1605 = vpop.f32.mrb[0].mxu0
      %v1606 = vadd.f32 %v1541, %v1605
      %v1607 = vpop.f32.mrb[0].mxu0
      %v1608 = vpop.f32.mrb[0].mxu0
      %v1609 = vadd.f32 %v1541, %v1608
      %v1610 = vpop.f32.mrb[0].mxu0
      %1611 = vdwg.mxu0
      %v1612 = vadd.f32 %v1455, %v1606
      %v1613 = vadd.f32 %v1456, %v1609
      %v1614 = vld [vmem:[%s16] sm:$0x1]
      %v1615 = vld [vmem:[%s17] sm:$0x1]
      %v1616 = vsel %vm672, %v1612, 0.0
      %1617 = vadd.xlane.f32.xlu0 %v1616
      %v1618 = vpop.xlane.xlu0 %1617
      %v1619 = vsel %vm1416, %v1613, 0.0
      %1620 = vadd.xlane.f32.xlu0 %v1619
      %v1621 = vpop.xlane.xlu0 %1620
      %v1622 = vmul.f32 %v1618, %v1420
      %v1623 = vmul.f32 %v1621, %v1420
      %v1624 = vsub.f32 %v1612, %v1622
      %v1625 = vsub.f32 %v1613, %v1623
      %v1626 = vmul.f32 %v1624, %v1624
      %v1627 = vmul.f32 %v1625, %v1625
      %v1628 = vsel %vm672, %v1626, 0.0
      %1629 = vadd.xlane.f32.xlu0 %v1628
      %v1630 = vpop.xlane.xlu0 %1629
      %v1631 = vsel %vm1416, %v1627, 0.0
      %1632 = vadd.xlane.f32.xlu0 %v1631
      %v1633 = vpop.xlane.xlu0 %1632
      %v1634 = vmul.f32 %v1630, %v1420
      %v1635 = vmul.f32 %v1633, %v1420
      %v1636 = vadd.f32 %v1634, 1e-05
      %v1637 = vadd.f32 %v1635, 1e-05
      %v1638 = vrsqrt.pop %v1636
      %v1639 = vrsqrt.pop %v1637
      %v1640 = vmul.f32 %v1624, %v1638
      %v1641 = vmul.f32 %v1625, %v1639
      %v1643 = vlaneseq
      %v1644 = vshrl.u32 %v1643, 7
      %v1645 = vsub.s32 0, %v1644
      %v1646 = vrot.slane %v1614, %v1645
      %v1648 = vmul.f32 %v1640, %v1646
      %v1649 = vmul.f32 %v1641, %v1646
      %v1651 = vlaneseq
      %v1652 = vshrl.u32 %v1651, 7
      %v1653 = vsub.s32 0, %v1652
      %v1654 = vrot.slane %v1615, %v1653
      %v1656 = vadd.f32 %v1648, %v1654
      %v1657 = vadd.f32 %v1649, %v1654
      %v1658 = vld [vmem:[%s18] sm:$0x1]
      %v1659 = vld [vmem:[%s19] sm:$0x1]
      %v1660 = vsel %vm672, %v1656, 0.0
      %1661 = vadd.xlane.f32.xlu0 %v1660
      %v1662 = vpop.xlane.xlu0 %1661
      %v1663 = vsel %vm1416, %v1657, 0.0
      %1664 = vadd.xlane.f32.xlu0 %v1663
      %v1665 = vpop.xlane.xlu0 %1664
      %v1666 = vmul.f32 %v1662, %v1420
      %v1667 = vmul.f32 %v1665, %v1420
      %v1668 = vsub.f32 %v1656, %v1666
      %v1669 = vsub.f32 %v1657, %v1667
      %v1670 = vmul.f32 %v1668, %v1668
      %v1671 = vmul.f32 %v1669, %v1669
      %v1672 = vsel %vm672, %v1670, 0.0
      %1673 = vadd.xlane.f32.xlu0 %v1672
      %v1674 = vpop.xlane.xlu0 %1673
      %v1675 = vsel %vm1416, %v1671, 0.0
      %1676 = vadd.xlane.f32.xlu0 %v1675
      %v1677 = vpop.xlane.xlu0 %1676
      %v1678 = vmul.f32 %v1674, %v1420
      %v1679 = vmul.f32 %v1677, %v1420
      %v1680 = vadd.f32 %v1678, 1e-05
      %v1681 = vadd.f32 %v1679, 1e-05
      %v1682 = vrsqrt.pop %v1680
      %v1683 = vrsqrt.pop %v1681
      %v1684 = vmul.f32 %v1668, %v1682
      %v1685 = vmul.f32 %v1669, %v1683
      %v1687 = vlaneseq
      %v1688 = vshrl.u32 %v1687, 7
      %v1689 = vsub.s32 0, %v1688
      %v1690 = vrot.slane %v1658, %v1689
      %v1692 = vmul.f32 %v1684, %v1690
      %v1693 = vmul.f32 %v1685, %v1690
      %v1695 = vlaneseq
      %v1696 = vshrl.u32 %v1695, 7
      %v1697 = vsub.s32 0, %v1696
      %v1698 = vrot.slane %v1659, %v1697
      %v1700 = vadd.f32 %v1692, %v1698
      %v1701 = vadd.f32 %v1693, %v1698
      %1702 = vst.msk [vmem:[%s643] sm:$0xff] %vm672, %v1700
      %1703 = vst.msk [vmem:[%s643 + $0x8] sm:$0x3] %vm1416, %v1701
      %p1704 = scmp.lt.s32.totalorder %s31, 1
      %s1705 = scalar_select %p1704, %s31, 1
      %s1706 = smul.addr %s1705, 2
      %s1707 = smul.addr %s1706, 8
      %s1708 = scalar_lea.vmem %s20, %s1707
      // Predicated region
      $region101: #{transformer_forward.6} parent=99 // pred_check
        %p1709 = pneg %p479
      $region102: #{transformer_forward.6} parent=99 // pred_check_branch
        %1711 = sbr.rel (%p1709) target = $region104
      $region103: #{transformer_forward.6} parent=99 // pred_region
        _
      $region104: #{transformer_forward.6} parent=99 // pred_fallthru
        _
    $region100: #{transformer_forward.6} parent=5 // pred_fallthru
      _
    %p1712 = scmp.le.s32.totalorder 2, %s26
    // Predicated region
    $region105: #{transformer_forward.6} parent=5 // pred_check
      %p1713 = pneg %p1712
    $region106: #{transformer_forward.6} parent=5 // pred_check_branch
      %1715 = sbr.rel (%p1713) target = $region108
    $region107: #{transformer_forward.6} parent=5 // pred_region
      %s1716 = ssub.s32 %s26, 2
      // Predicated region
      $region109: #{transformer_forward.6} parent=107 // pred_check
        %p1717 = pneg %p485
      $region110: #{transformer_forward.6} parent=107 // pred_check_branch
        %1719 = sbr.rel (%p1717) target = $region112
      $region111: #{transformer_forward.6} parent=107 // pred_region
        %p1720 = scmp.lt.s32.totalorder %s32, 1
        %s1721 = scalar_select %p1720, %s32, 1
        %s1722 = smul.addr %s1721, 2
        %s1723 = smul.addr %s1722, 8
        %s1724 = scalar_lea.vmem %s20, %s1723
      $region112: #{transformer_forward.6} parent=107 // pred_fallthru
        _
    $region108: #{transformer_forward.6} parent=5 // pred_fallthru
      _
  $region6: #{transformer_forward.6} parent=0 // loop_footer
    %s30 = sadd.s32 1, %s26
  $region7: #{transformer_forward.6} parent=0 // loop_footer_branch
    %25 = sbr.rel target = $region3
  $region8: #{transformer_forward.6} parent=0 // loop_exit
    _

// kernel: transformer_forward.5
$region0: #{transformer_forward.5}
  #allocation0 [shape = 'u32[]', space=smem, size = 0x4, offset = 0x4, fixed_abs, tag = 'smem constant byte address 0x4 - core index']
  #allocation1 [shape = 'u32[144,128]{1,0:T(1,128)}', space=vmem, size = 0x12000, scoped, tag = 'internal scratch']
  %s0 = inlined_call_operand.vmem [shape: f32[2,10,32], index: 0, kind: input, shape index: {}]
  %s1 = inlined_call_operand.vmem [shape: f32[2,1,10], index: 1, kind: input, shape index: {}]
  %s2 = inlined_call_operand.vmem [shape: bf16[2,32,16], index: 2, kind: input, shape index: {}]
  %s3 = inlined_call_operand.vmem [shape: f32[2,1,16], index: 3, kind: input, shape index: {}]
  %s4 = inlined_call_operand.vmem [shape: bf16[2,32,16], index: 4, kind: input, shape index: {}]
  %s5 = inlined_call_operand.vmem [shape: f32[2,1,16], index: 5, kind: input, shape index: {}]
  %s6 = inlined_call_operand.vmem [shape: bf16[2,32,16], index: 6, kind: input, shape index: {}]
  %s7 = inlined_call_operand.vmem [shape: f32[2,1,16], index: 7, kind: input, shape index: {}]
  %s8 = inlined_call_operand.vmem [shape: bf16[2,16,32], index: 8, kind: input, shape index: {}]
  %s9 = inlined_call_operand.vmem [shape: f32[1,32], index: 9, kind: input, shape index: {}]
  %s10 = inlined_call_operand.vmem [shape: f32[1,32], index: 10, kind: input, shape index: {}]
  %s11 = inlined_call_operand.vmem [shape: f32[1,32], index: 11, kind: input, shape index: {}]
  %s12 = inlined_call_operand.vmem [shape: bf16[32,64], index: 12, kind: input, shape index: {}]
  %s13 = inlined_call_operand.vmem [shape: f32[1,64], index: 13, kind: input, shape index: {}]
  %s14 = inlined_call_operand.vmem [shape: bf16[64,32], index: 14, kind: input, shape index: {}]
  %s15 = inlined_call_operand.vmem [shape: f32[1,32], index: 15, kind: input, shape index: {}]
  %s16 = inlined_call_operand.vmem [shape: f32[1,32], index: 16, kind: input, shape index: {}]
  %s17 = inlined_call_operand.vmem [shape: f32[1,32], index: 17, kind: input, shape index: {}]
  %s18 = inlined_call_operand.vmem [shape: f32[2,10,32], index: 18, kind: output, shape index: {}]
  %s19 = sld [smem:[#allocation0]]
  $region105: #{transformer_forward.5} parent=0
    _
  %s21 = ssub.s32 1, %s19
  %s22 = scalar_select 0, %s21, %s19
  loop: start=0, step=1, limit=4
  $region2: #{transformer_forward.5} parent=0 // loop_pre_header
    _
  $region3: #{transformer_forward.5} parent=0 // loop_header
    %s24 = sphi 0, %s28
    %p25 = scmp.ge.s32.totalorder %s24, 4
    %s34 = sphi 0, %s36
    %s37 = sphi 0, %s34
    %s38 = sphi 0, %s37
    %s54 = sphi 0, %s38
    %s60 = sphi 0, %s62
    %s63 = sphi 0, %s60
    %s64 = sphi 0, %s63
    %s80 = sphi 0, %s64
    %s84 = sphi 0, %s84
    %s86 = sphi 0, %s84
    %s87 = sphi 0, %s86
    %s101 = sphi 0, %s87
    %s105 = sphi 0, %s105
    %s107 = sphi 0, %s105
    %s108 = sphi 0, %s107
    %s122 = sphi 0, %s108
    %s126 = sphi 0, %s126
    %s128 = sphi 0, %s126
    %s129 = sphi 0, %s128
    %s143 = sphi 0, %s129
    %s147 = sphi 0, %s147
    %s149 = sphi 0, %s147
    %s150 = sphi 0, %s149
    %s164 = sphi 0, %s150
    %s168 = sphi 0, %s168
    %s170 = sphi 0, %s168
    %s171 = sphi 0, %s170
    %s185 = sphi 0, %s171
    %s189 = sphi 0, %s189
    %s191 = sphi 0, %s189
    %s192 = sphi 0, %s191
    %s206 = sphi 0, %s192
    %s210 = sphi 0, %s210
    %s212 = sphi 0, %s210
    %s213 = sphi 0, %s212
    %s227 = sphi 0, %s213
    %s231 = sphi 0, %s231
    %s233 = sphi 0, %s231
    %s234 = sphi 0, %s233
    %s248 = sphi 0, %s234
    %s252 = sphi 0, %s252
    %s254 = sphi 0, %s252
    %s255 = sphi 0, %s254
    %s269 = sphi 0, %s255
    %s273 = sphi 0, %s273
    %s275 = sphi 0, %s273
    %s276 = sphi 0, %s275
    %s290 = sphi 0, %s276
    %s294 = sphi 0, %s294
    %s296 = sphi 0, %s294
    %s297 = sphi 0, %s296
    %s311 = sphi 0, %s297
    %s315 = sphi 0, %s315
    %s317 = sphi 0, %s315
    %s318 = sphi 0, %s317
    %s332 = sphi 0, %s318
    %s336 = sphi 0, %s336
    %s338 = sphi 0, %s336
    %s339 = sphi 0, %s338
    %s353 = sphi 0, %s339
    %s357 = sphi 0, %s357
    %s359 = sphi 0, %s357
    %s360 = sphi 0, %s359
    %s374 = sphi 0, %s360
    %s378 = sphi 0, %s378
    %s380 = sphi 0, %s378
    %s381 = sphi 0, %s380
    %s395 = sphi 0, %s381
    %s399 = sphi 0, %s399
    %s401 = sphi 0, %s399
    %s402 = sphi 0, %s401
    %s416 = sphi 0, %s402
    %s422 = sphi 0, %s424
    %s425 = sphi 0, %s422
    %s426 = sphi 0, %s425
    %s442 = sphi 0, %s426
  $region4: #{transformer_forward.5} parent=0 // loop_header_branch
    %27 = sbr.rel (%p25) target = $region8
  $region5: #{transformer_forward.5} parent=0 // loop_body
    %s29 = ssub.s32 %s24, 1
    %s30 = ssub.s32 %s24, 2
    %s31 = sadd.s32 %s24, 1
    %s32 = ssub.s32 %s24, %s31
    %p33 = scmp.eq.s32.totalorder %s32, 0
    %s35 = sadd.s32 %s34, 1
    %s36 = scalar_select %p33, %s34, %s35
    %p39 = pneg %p33
    %p40 = scmp.eq.s32.totalorder %s24, 1
    %p41 = por %p39, %p40
    %p42 = scmp.ne.s32.totalorder %s34, %s37
    %p43 = scmp.eq.s32.totalorder %s24, 0
    %p44 = por %p42, %p43
    %p45 = scmp.ne.s32.totalorder %s34, %s37
    %p46 = scmp.eq.s32.totalorder %s29, 1
    %p47 = por %p45, %p46
    %p48 = scmp.ne.s32.totalorder %s37, %s38
    %p49 = scmp.eq.s32.totalorder %s29, 0
    %p50 = por %p48, %p49
    %p51 = scmp.ne.s32.totalorder %s37, %s38
    %p52 = scmp.eq.s32.totalorder %s30, 1
    %p53 = por %p51, %p52
    %p55 = scmp.ne.s32.totalorder %s38, %s54
    %p56 = scmp.eq.s32.totalorder %s30, 0
    %p57 = por %p55, %p56
    %s58 = ssub.s32 %s24, %s31
    %p59 = scmp.eq.s32.totalorder %s58, 0
    %s61 = sadd.s32 %s60, 1
    %s62 = scalar_select %p59, %s60, %s61
    %p65 = pneg %p59
    %p66 = scmp.eq.s32.totalorder %s24, 1
    %p67 = por %p65, %p66
    %p68 = scmp.ne.s32.totalorder %s60, %s63
    %p69 = scmp.eq.s32.totalorder %s24, 0
    %p70 = por %p68, %p69
    %p71 = scmp.ne.s32.totalorder %s60, %s63
    %p72 = scmp.eq.s32.totalorder %s29, 1
    %p73 = por %p71, %p72
    %p74 = scmp.ne.s32.totalorder %s63, %s64
    %p75 = scmp.eq.s32.totalorder %s29, 0
    %p76 = por %p74, %p75
    %p77 = scmp.ne.s32.totalorder %s63, %s64
    %p78 = scmp.eq.s32.totalorder %s30, 1
    %p79 = por %p77, %p78
    %p81 = scmp.ne.s32.totalorder %s64, %s80
    %p82 = scmp.eq.s32.totalorder %s30, 0
    %p83 = por %p81, %p82
    %s85 = sadd.s32 %s84, 1
    %p88 = scmp.eq.s32.totalorder %s24, 1
    %p89 = scmp.ne.s32.totalorder %s84, %s86
    %p90 = scmp.eq.s32.totalorder %s24, 0
    %p91 = por %p89, %p90
    %p92 = scmp.ne.s32.totalorder %s84, %s86
    %p93 = scmp.eq.s32.totalorder %s29, 1
    %p94 = por %p92, %p93
    %p95 = scmp.ne.s32.totalorder %s86, %s87
    %p96 = scmp.eq.s32.totalorder %s29, 0
    %p97 = por %p95, %p96
    %p98 = scmp.ne.s32.totalorder %s86, %s87
    %p99 = scmp.eq.s32.totalorder %s30, 1
    %p100 = por %p98, %p99
    %p102 = scmp.ne.s32.totalorder %s87, %s101
    %p103 = scmp.eq.s32.totalorder %s30, 0
    %p104 = por %p102, %p103
    %s106 = sadd.s32 %s105, 1
    %p109 = scmp.eq.s32.totalorder %s24, 1
    %p110 = scmp.ne.s32.totalorder %s105, %s107
    %p111 = scmp.eq.s32.totalorder %s24, 0
    %p112 = por %p110, %p111
    %p113 = scmp.ne.s32.totalorder %s105, %s107
    %p114 = scmp.eq.s32.totalorder %s29, 1
    %p115 = por %p113, %p114
    %p116 = scmp.ne.s32.totalorder %s107, %s108
    %p117 = scmp.eq.s32.totalorder %s29, 0
    %p118 = por %p116, %p117
    %p119 = scmp.ne.s32.totalorder %s107, %s108
    %p120 = scmp.eq.s32.totalorder %s30, 1
    %p121 = por %p119, %p120
    %p123 = scmp.ne.s32.totalorder %s108, %s122
    %p124 = scmp.eq.s32.totalorder %s30, 0
    %p125 = por %p123, %p124
    %s127 = sadd.s32 %s126, 1
    %p130 = scmp.eq.s32.totalorder %s24, 1
    %p131 = scmp.ne.s32.totalorder %s126, %s128
    %p132 = scmp.eq.s32.totalorder %s24, 0
    %p133 = por %p131, %p132
    %p134 = scmp.ne.s32.totalorder %s126, %s128
    %p135 = scmp.eq.s32.totalorder %s29, 1
    %p136 = por %p134, %p135
    %p137 = scmp.ne.s32.totalorder %s128, %s129
    %p138 = scmp.eq.s32.totalorder %s29, 0
    %p139 = por %p137, %p138
    %p140 = scmp.ne.s32.totalorder %s128, %s129
    %p141 = scmp.eq.s32.totalorder %s30, 1
    %p142 = por %p140, %p141
    %p144 = scmp.ne.s32.totalorder %s129, %s143
    %p145 = scmp.eq.s32.totalorder %s30, 0
    %p146 = por %p144, %p145
    %s148 = sadd.s32 %s147, 1
    %p151 = scmp.eq.s32.totalorder %s24, 1
    %p152 = scmp.ne.s32.totalorder %s147, %s149
    %p153 = scmp.eq.s32.totalorder %s24, 0
    %p154 = por %p152, %p153
    %p155 = scmp.ne.s32.totalorder %s147, %s149
    %p156 = scmp.eq.s32.totalorder %s29, 1
    %p157 = por %p155, %p156
    %p158 = scmp.ne.s32.totalorder %s149, %s150
    %p159 = scmp.eq.s32.totalorder %s29, 0
    %p160 = por %p158, %p159
    %p161 = scmp.ne.s32.totalorder %s149, %s150
    %p162 = scmp.eq.s32.totalorder %s30, 1
    %p163 = por %p161, %p162
    %p165 = scmp.ne.s32.totalorder %s150, %s164
    %p166 = scmp.eq.s32.totalorder %s30, 0
    %p167 = por %p165, %p166
    %s169 = sadd.s32 %s168, 1
    %p172 = scmp.eq.s32.totalorder %s24, 1
    %p173 = scmp.ne.s32.totalorder %s168, %s170
    %p174 = scmp.eq.s32.totalorder %s24, 0
    %p175 = por %p173, %p174
    %p176 = scmp.ne.s32.totalorder %s168, %s170
    %p177 = scmp.eq.s32.totalorder %s29, 1
    %p178 = por %p176, %p177
    %p179 = scmp.ne.s32.totalorder %s170, %s171
    %p180 = scmp.eq.s32.totalorder %s29, 0
    %p181 = por %p179, %p180
    %p182 = scmp.ne.s32.totalorder %s170, %s171
    %p183 = scmp.eq.s32.totalorder %s30, 1
    %p184 = por %p182, %p183
    %p186 = scmp.ne.s32.totalorder %s171, %s185
    %p187 = scmp.eq.s32.totalorder %s30, 0
    %p188 = por %p186, %p187
    %s190 = sadd.s32 %s189, 1
    %p193 = scmp.eq.s32.totalorder %s24, 1
    %p194 = scmp.ne.s32.totalorder %s189, %s191
    %p195 = scmp.eq.s32.totalorder %s24, 0
    %p196 = por %p194, %p195
    %p197 = scmp.ne.s32.totalorder %s189, %s191
    %p198 = scmp.eq.s32.totalorder %s29, 1
    %p199 = por %p197, %p198
    %p200 = scmp.ne.s32.totalorder %s191, %s192
    %p201 = scmp.eq.s32.totalorder %s29, 0
    %p202 = por %p200, %p201
    %p203 = scmp.ne.s32.totalorder %s191, %s192
    %p204 = scmp.eq.s32.totalorder %s30, 1
    %p205 = por %p203, %p204
    %p207 = scmp.ne.s32.totalorder %s192, %s206
    %p208 = scmp.eq.s32.totalorder %s30, 0
    %p209 = por %p207, %p208
    %s211 = sadd.s32 %s210, 1
    %p214 = scmp.eq.s32.totalorder %s24, 1
    %p215 = scmp.ne.s32.totalorder %s210, %s212
    %p216 = scmp.eq.s32.totalorder %s24, 0
    %p217 = por %p215, %p216
    %p218 = scmp.ne.s32.totalorder %s210, %s212
    %p219 = scmp.eq.s32.totalorder %s29, 1
    %p220 = por %p218, %p219
    %p221 = scmp.ne.s32.totalorder %s212, %s213
    %p222 = scmp.eq.s32.totalorder %s29, 0
    %p223 = por %p221, %p222
    %p224 = scmp.ne.s32.totalorder %s212, %s213
    %p225 = scmp.eq.s32.totalorder %s30, 1
    %p226 = por %p224, %p225
    %p228 = scmp.ne.s32.totalorder %s213, %s227
    %p229 = scmp.eq.s32.totalorder %s30, 0
    %p230 = por %p228, %p229
    %s232 = sadd.s32 %s231, 1
    %p235 = scmp.eq.s32.totalorder %s24, 1
    %p236 = scmp.ne.s32.totalorder %s231, %s233
    %p237 = scmp.eq.s32.totalorder %s24, 0
    %p238 = por %p236, %p237
    %p239 = scmp.ne.s32.totalorder %s231, %s233
    %p240 = scmp.eq.s32.totalorder %s29, 1
    %p241 = por %p239, %p240
    %p242 = scmp.ne.s32.totalorder %s233, %s234
    %p243 = scmp.eq.s32.totalorder %s29, 0
    %p244 = por %p242, %p243
    %p245 = scmp.ne.s32.totalorder %s233, %s234
    %p246 = scmp.eq.s32.totalorder %s30, 1
    %p247 = por %p245, %p246
    %p249 = scmp.ne.s32.totalorder %s234, %s248
    %p250 = scmp.eq.s32.totalorder %s30, 0
    %p251 = por %p249, %p250
    %s253 = sadd.s32 %s252, 1
    %p256 = scmp.eq.s32.totalorder %s24, 1
    %p257 = scmp.ne.s32.totalorder %s252, %s254
    %p258 = scmp.eq.s32.totalorder %s24, 0
    %p259 = por %p257, %p258
    %p260 = scmp.ne.s32.totalorder %s252, %s254
    %p261 = scmp.eq.s32.totalorder %s29, 1
    %p262 = por %p260, %p261
    %p263 = scmp.ne.s32.totalorder %s254, %s255
    %p264 = scmp.eq.s32.totalorder %s29, 0
    %p265 = por %p263, %p264
    %p266 = scmp.ne.s32.totalorder %s254, %s255
    %p267 = scmp.eq.s32.totalorder %s30, 1
    %p268 = por %p266, %p267
    %p270 = scmp.ne.s32.totalorder %s255, %s269
    %p271 = scmp.eq.s32.totalorder %s30, 0
    %p272 = por %p270, %p271
    %s274 = sadd.s32 %s273, 1
    %p277 = scmp.eq.s32.totalorder %s24, 1
    %p278 = scmp.ne.s32.totalorder %s273, %s275
    %p279 = scmp.eq.s32.totalorder %s24, 0
    %p280 = por %p278, %p279
    %p281 = scmp.ne.s32.totalorder %s273, %s275
    %p282 = scmp.eq.s32.totalorder %s29, 1
    %p283 = por %p281, %p282
    %p284 = scmp.ne.s32.totalorder %s275, %s276
    %p285 = scmp.eq.s32.totalorder %s29, 0
    %p286 = por %p284, %p285
    %p287 = scmp.ne.s32.totalorder %s275, %s276
    %p288 = scmp.eq.s32.totalorder %s30, 1
    %p289 = por %p287, %p288
    %p291 = scmp.ne.s32.totalorder %s276, %s290
    %p292 = scmp.eq.s32.totalorder %s30, 0
    %p293 = por %p291, %p292
    %s295 = sadd.s32 %s294, 1
    %p298 = scmp.eq.s32.totalorder %s24, 1
    %p299 = scmp.ne.s32.totalorder %s294, %s296
    %p300 = scmp.eq.s32.totalorder %s24, 0
    %p301 = por %p299, %p300
    %p302 = scmp.ne.s32.totalorder %s294, %s296
    %p303 = scmp.eq.s32.totalorder %s29, 1
    %p304 = por %p302, %p303
    %p305 = scmp.ne.s32.totalorder %s296, %s297
    %p306 = scmp.eq.s32.totalorder %s29, 0
    %p307 = por %p305, %p306
    %p308 = scmp.ne.s32.totalorder %s296, %s297
    %p309 = scmp.eq.s32.totalorder %s30, 1
    %p310 = por %p308, %p309
    %p312 = scmp.ne.s32.totalorder %s297, %s311
    %p313 = scmp.eq.s32.totalorder %s30, 0
    %p314 = por %p312, %p313
    %s316 = sadd.s32 %s315, 1
    %p319 = scmp.eq.s32.totalorder %s24, 1
    %p320 = scmp.ne.s32.totalorder %s315, %s317
    %p321 = scmp.eq.s32.totalorder %s24, 0
    %p322 = por %p320, %p321
    %p323 = scmp.ne.s32.totalorder %s315, %s317
    %p324 = scmp.eq.s32.totalorder %s29, 1
    %p325 = por %p323, %p324
    %p326 = scmp.ne.s32.totalorder %s317, %s318
    %p327 = scmp.eq.s32.totalorder %s29, 0
    %p328 = por %p326, %p327
    %p329 = scmp.ne.s32.totalorder %s317, %s318
    %p330 = scmp.eq.s32.totalorder %s30, 1
    %p331 = por %p329, %p330
    %p333 = scmp.ne.s32.totalorder %s318, %s332
    %p334 = scmp.eq.s32.totalorder %s30, 0
    %p335 = por %p333, %p334
    %s337 = sadd.s32 %s336, 1
    %p340 = scmp.eq.s32.totalorder %s24, 1
    %p341 = scmp.ne.s32.totalorder %s336, %s338
    %p342 = scmp.eq.s32.totalorder %s24, 0
    %p343 = por %p341, %p342
    %p344 = scmp.ne.s32.totalorder %s336, %s338
    %p345 = scmp.eq.s32.totalorder %s29, 1
    %p346 = por %p344, %p345
    %p347 = scmp.ne.s32.totalorder %s338, %s339
    %p348 = scmp.eq.s32.totalorder %s29, 0
    %p349 = por %p347, %p348
    %p350 = scmp.ne.s32.totalorder %s338, %s339
    %p351 = scmp.eq.s32.totalorder %s30, 1
    %p352 = por %p350, %p351
    %p354 = scmp.ne.s32.totalorder %s339, %s353
    %p355 = scmp.eq.s32.totalorder %s30, 0
    %p356 = por %p354, %p355
    %s358 = sadd.s32 %s357, 1
    %p361 = scmp.eq.s32.totalorder %s24, 1
    %p362 = scmp.ne.s32.totalorder %s357, %s359
    %p363 = scmp.eq.s32.totalorder %s24, 0
    %p364 = por %p362, %p363
    %p365 = scmp.ne.s32.totalorder %s357, %s359
    %p366 = scmp.eq.s32.totalorder %s29, 1
    %p367 = por %p365, %p366
    %p368 = scmp.ne.s32.totalorder %s359, %s360
    %p369 = scmp.eq.s32.totalorder %s29, 0
    %p370 = por %p368, %p369
    %p371 = scmp.ne.s32.totalorder %s359, %s360
    %p372 = scmp.eq.s32.totalorder %s30, 1
    %p373 = por %p371, %p372
    %p375 = scmp.ne.s32.totalorder %s360, %s374
    %p376 = scmp.eq.s32.totalorder %s30, 0
    %p377 = por %p375, %p376
    %s379 = sadd.s32 %s378, 1
    %p382 = scmp.eq.s32.totalorder %s24, 1
    %p383 = scmp.ne.s32.totalorder %s378, %s380
    %p384 = scmp.eq.s32.totalorder %s24, 0
    %p385 = por %p383, %p384
    %p386 = scmp.ne.s32.totalorder %s378, %s380
    %p387 = scmp.eq.s32.totalorder %s29, 1
    %p388 = por %p386, %p387
    %p389 = scmp.ne.s32.totalorder %s380, %s381
    %p390 = scmp.eq.s32.totalorder %s29, 0
    %p391 = por %p389, %p390
    %p392 = scmp.ne.s32.totalorder %s380, %s381
    %p393 = scmp.eq.s32.totalorder %s30, 1
    %p394 = por %p392, %p393
    %p396 = scmp.ne.s32.totalorder %s381, %s395
    %p397 = scmp.eq.s32.totalorder %s30, 0
    %p398 = por %p396, %p397
    %s400 = sadd.s32 %s399, 1
    %p403 = scmp.eq.s32.totalorder %s24, 1
    %p404 = scmp.ne.s32.totalorder %s399, %s401
    %p405 = scmp.eq.s32.totalorder %s24, 0
    %p406 = por %p404, %p405
    %p407 = scmp.ne.s32.totalorder %s399, %s401
    %p408 = scmp.eq.s32.totalorder %s29, 1
    %p409 = por %p407, %p408
    %p410 = scmp.ne.s32.totalorder %s401, %s402
    %p411 = scmp.eq.s32.totalorder %s29, 0
    %p412 = por %p410, %p411
    %p413 = scmp.ne.s32.totalorder %s401, %s402
    %p414 = scmp.eq.s32.totalorder %s30, 1
    %p415 = por %p413, %p414
    %p417 = scmp.ne.s32.totalorder %s402, %s416
    %p418 = scmp.eq.s32.totalorder %s30, 0
    %p419 = por %p417, %p418
    %s420 = ssub.s32 %s24, %s31
    %p421 = scmp.eq.s32.totalorder %s420, 0
    %s423 = sadd.s32 %s422, 1
    %s424 = scalar_select %p421, %s422, %s423
    %p427 = pneg %p421
    %p428 = scmp.eq.s32.totalorder %s24, 1
    %p429 = por %p427, %p428
    %p430 = scmp.ne.s32.totalorder %s422, %s425
    %p431 = scmp.eq.s32.totalorder %s24, 0
    %p432 = por %p430, %p431
    %p433 = scmp.ne.s32.totalorder %s422, %s425
    %p434 = scmp.eq.s32.totalorder %s29, 1
    %p435 = por %p433, %p434
    %p436 = scmp.ne.s32.totalorder %s425, %s426
    %p437 = scmp.eq.s32.totalorder %s29, 0
    %p438 = por %p436, %p437
    %p439 = scmp.ne.s32.totalorder %s425, %s426
    %p440 = scmp.eq.s32.totalorder %s30, 1
    %p441 = por %p439, %p440
    %p443 = scmp.ne.s32.totalorder %s426, %s442
    %p444 = scmp.eq.s32.totalorder %s30, 0
    %p445 = por %p443, %p444
    %p446 = scmp.le.s32.totalorder 1, %s24
    %p447 = scmp.lt.s32.totalorder %s24, 3
    %p448 = pnand %p446, %p447
    %p449 = pneg %p448
    // Predicated region
    $region9: #{transformer_forward.5} parent=5 // pred_check
      _
    $region10: #{transformer_forward.5} parent=5 // pred_check_branch
      %451 = sbr.rel (%p448) target = $region12
    $region11: #{transformer_forward.5} parent=5 // pred_region
      %s452 = ssub.s32 %s24, 1
      // Predicated region
      $region13: #{transformer_forward.5} parent=11 // pred_check
        %p453 = pneg %p97
      $region14: #{transformer_forward.5} parent=11 // pred_check_branch
        %455 = sbr.rel (%p453) target = $region16
      $region15: #{transformer_forward.5} parent=11 // pred_region
        _
      $region16: #{transformer_forward.5} parent=11 // pred_fallthru
        _
      // Predicated region
      $region17: #{transformer_forward.5} parent=11 // pred_check
        %p456 = pneg %p118
      $region18: #{transformer_forward.5} parent=11 // pred_check_branch
        %458 = sbr.rel (%p456) target = $region20
      $region19: #{transformer_forward.5} parent=11 // pred_region
        _
      $region20: #{transformer_forward.5} parent=11 // pred_fallthru
        _
      // Predicated region
      $region21: #{transformer_forward.5} parent=11 // pred_check
        %p459 = pneg %p139
      $region22: #{transformer_forward.5} parent=11 // pred_check_branch
        %461 = sbr.rel (%p459) target = $region24
      $region23: #{transformer_forward.5} parent=11 // pred_region
        _
      $region24: #{transformer_forward.5} parent=11 // pred_fallthru
        _
      // Predicated region
      $region25: #{transformer_forward.5} parent=11 // pred_check
        %p462 = pneg %p160
      $region26: #{transformer_forward.5} parent=11 // pred_check_branch
        %464 = sbr.rel (%p462) target = $region28
      $region27: #{transformer_forward.5} parent=11 // pred_region
        _
      $region28: #{transformer_forward.5} parent=11 // pred_fallthru
        _
      // Predicated region
      $region29: #{transformer_forward.5} parent=11 // pred_check
        %p465 = pneg %p181
      $region30: #{transformer_forward.5} parent=11 // pred_check_branch
        %467 = sbr.rel (%p465) target = $region32
      $region31: #{transformer_forward.5} parent=11 // pred_region
        _
      $region32: #{transformer_forward.5} parent=11 // pred_fallthru
        _
      // Predicated region
      $region33: #{transformer_forward.5} parent=11 // pred_check
        %p468 = pneg %p202
      $region34: #{transformer_forward.5} parent=11 // pred_check_branch
        %470 = sbr.rel (%p468) target = $region36
      $region35: #{transformer_forward.5} parent=11 // pred_region
        _
      $region36: #{transformer_forward.5} parent=11 // pred_fallthru
        _
      // Predicated region
      $region37: #{transformer_forward.5} parent=11 // pred_check
        %p471 = pneg %p223
      $region38: #{transformer_forward.5} parent=11 // pred_check_branch
        %473 = sbr.rel (%p471) target = $region40
      $region39: #{transformer_forward.5} parent=11 // pred_region
        _
      $region40: #{transformer_forward.5} parent=11 // pred_fallthru
        _
      // Predicated region
      $region41: #{transformer_forward.5} parent=11 // pred_check
        %p474 = pneg %p244
      $region42: #{transformer_forward.5} parent=11 // pred_check_branch
        %476 = sbr.rel (%p474) target = $region44
      $region43: #{transformer_forward.5} parent=11 // pred_region
        _
      $region44: #{transformer_forward.5} parent=11 // pred_fallthru
        _
      // Predicated region
      $region45: #{transformer_forward.5} parent=11 // pred_check
        %p477 = pneg %p265
      $region46: #{transformer_forward.5} parent=11 // pred_check_branch
        %479 = sbr.rel (%p477) target = $region48
      $region47: #{transformer_forward.5} parent=11 // pred_region
        _
      $region48: #{transformer_forward.5} parent=11 // pred_fallthru
        _
      // Predicated region
      $region49: #{transformer_forward.5} parent=11 // pred_check
        %p480 = pneg %p286
      $region50: #{transformer_forward.5} parent=11 // pred_check_branch
        %482 = sbr.rel (%p480) target = $region52
      $region51: #{transformer_forward.5} parent=11 // pred_region
        _
      $region52: #{transformer_forward.5} parent=11 // pred_fallthru
        _
      // Predicated region
      $region53: #{transformer_forward.5} parent=11 // pred_check
        %p483 = pneg %p307
      $region54: #{transformer_forward.5} parent=11 // pred_check_branch
        %485 = sbr.rel (%p483) target = $region56
      $region55: #{transformer_forward.5} parent=11 // pred_region
        _
      $region56: #{transformer_forward.5} parent=11 // pred_fallthru
        _
      // Predicated region
      $region57: #{transformer_forward.5} parent=11 // pred_check
        %p486 = pneg %p328
      $region58: #{transformer_forward.5} parent=11 // pred_check_branch
        %488 = sbr.rel (%p486) target = $region60
      $region59: #{transformer_forward.5} parent=11 // pred_region
        _
      $region60: #{transformer_forward.5} parent=11 // pred_fallthru
        _
      // Predicated region
      $region61: #{transformer_forward.5} parent=11 // pred_check
        %p489 = pneg %p349
      $region62: #{transformer_forward.5} parent=11 // pred_check_branch
        %491 = sbr.rel (%p489) target = $region64
      $region63: #{transformer_forward.5} parent=11 // pred_region
        _
      $region64: #{transformer_forward.5} parent=11 // pred_fallthru
        _
      // Predicated region
      $region65: #{transformer_forward.5} parent=11 // pred_check
        %p492 = pneg %p370
      $region66: #{transformer_forward.5} parent=11 // pred_check_branch
        %494 = sbr.rel (%p492) target = $region68
      $region67: #{transformer_forward.5} parent=11 // pred_region
        _
      $region68: #{transformer_forward.5} parent=11 // pred_fallthru
        _
      // Predicated region
      $region69: #{transformer_forward.5} parent=11 // pred_check
        %p495 = pneg %p391
      $region70: #{transformer_forward.5} parent=11 // pred_check_branch
        %497 = sbr.rel (%p495) target = $region72
      $region71: #{transformer_forward.5} parent=11 // pred_region
        _
      $region72: #{transformer_forward.5} parent=11 // pred_fallthru
        _
      // Predicated region
      $region73: #{transformer_forward.5} parent=11 // pred_check
        %p498 = pneg %p412
      $region74: #{transformer_forward.5} parent=11 // pred_check_branch
        %500 = sbr.rel (%p498) target = $region76
      $region75: #{transformer_forward.5} parent=11 // pred_region
        _
      $region76: #{transformer_forward.5} parent=11 // pred_fallthru
        _
    $region12: #{transformer_forward.5} parent=5 // pred_fallthru
      _
    %p501 = scmp.lt.s32.totalorder %s24, 2
    // Predicated region
    $region77: #{transformer_forward.5} parent=5 // pred_check
      %p502 = pneg %p501
    $region78: #{transformer_forward.5} parent=5 // pred_check_branch
      %504 = sbr.rel (%p502) target = $region80
    $region79: #{transformer_forward.5} parent=5 // pred_region
      // Predicated region
      $region81: #{transformer_forward.5} parent=79 // pred_check
        %p505 = pneg %p44
      $region82: #{transformer_forward.5} parent=79 // pred_check_branch
        %507 = sbr.rel (%p505) target = $region84
      $region83: #{transformer_forward.5} parent=79 // pred_region
        %p508 = scmp.lt.s32.totalorder %s24, 1
        %s509 = scalar_select %p508, %s24, 1
        %s510 = smul.addr %s509, 2
        %s511 = smul.addr %s510, 8
        %s512 = scalar_lea.vmem %s0, %s511
      $region84: #{transformer_forward.5} parent=79 // pred_fallthru
        _
      // Predicated region
      $region85: #{transformer_forward.5} parent=79 // pred_check
        %p513 = pneg %p70
      $region86: #{transformer_forward.5} parent=79 // pred_check_branch
        %515 = sbr.rel (%p513) target = $region88
      $region87: #{transformer_forward.5} parent=79 // pred_region
        %p516 = scmp.lt.s32.totalorder %s24, 1
        %s517 = scalar_select %p516, %s24, 1
        %s518 = scalar_lea.vmem %s1, %s517
      $region88: #{transformer_forward.5} parent=79 // pred_fallthru
        _
    $region80: #{transformer_forward.5} parent=5 // pred_fallthru
      _
    %p519 = scmp.le.s32.totalorder 1, %s24
    %p520 = scmp.lt.s32.totalorder %s24, 3
    %p521 = pnand %p519, %p520
    %p522 = pneg %p521
    // Predicated region
    $region89: #{transformer_forward.5} parent=5 // pred_check
      _
    $region90: #{transformer_forward.5} parent=5 // pred_check_branch
      %524 = sbr.rel (%p521) target = $region92
    $region91: #{transformer_forward.5} parent=5 // pred_region
      %s525 = ssub.s32 %s24, 1
      %p526 = scmp.lt.s32.totalorder %s29, 1
      %s527 = scalar_select %p526, %s29, 1
      %s528 = smul.addr %s527, 2
      %s529 = smul.addr %s528, 8
      %s530 = scalar_lea.vmem %s0, %s529
      %p531 = pneg %p50
      %p532 = pneg %p47
      %p533 = scmp.lt.s32.totalorder %s29, 1
      %s534 = scalar_select %p533, %s29, 1
      %s535 = scalar_lea.vmem %s1, %s534
      %p536 = pneg %p76
      %p537 = pneg %p73
      %p538 = pneg %p97
      %p539 = pneg %p94
      %p540 = pneg %p118
      %p541 = pneg %p115
      %p542 = pneg %p139
      %p543 = pneg %p136
      %p544 = pneg %p160
      %p545 = pneg %p157
      %p546 = pneg %p181
      %p547 = pneg %p178
      %p548 = pneg %p202
      %p549 = pneg %p199
      %p550 = pneg %p223
      %p551 = pneg %p220
      %p552 = pneg %p244
      %p553 = pneg %p241
      %p554 = pneg %p265
      %p555 = pneg %p262
      %p556 = pneg %p286
      %p557 = pneg %p283
      %p558 = pneg %p307
      %p559 = pneg %p304
      %p560 = pneg %p328
      %p561 = pneg %p325
      %p562 = pneg %p349
      %p563 = pneg %p346
      %p564 = pneg %p370
      %p565 = pneg %p367
      %p566 = pneg %p391
      %p567 = pneg %p388
      %p568 = pneg %p412
      %p569 = pneg %p409
      %p570 = pneg %p438
      %p571 = pneg %p435
      %p572 = scmp.lt.s32.totalorder %s29, 1
      %s573 = scalar_select %p572, %s29, 1
      %s574 = smul.addr %s573, 2
      %s575 = smul.addr %s574, 8
      %s576 = scalar_lea.vmem %s18, %s575
      %p577 = scmp.lt.s32.totalorder %s29, 1
      %s578 = scalar_select %p577, %s29, 1
      %s579 = smul.addr %s578, 2
      %s580 = smul.addr %s579, 8
      %s581 = scalar_lea.vmem %s0, %s580
      %p582 = scmp.lt.s32.totalorder %s29, 1
      %s583 = scalar_select %p582, %s29, 1
      %s584 = scalar_lea.vmem %s1, %s583
      %p585 = scmp.lt.s32.totalorder %s29, 1
      %s586 = scalar_select %p585, %s29, 1
      %s587 = smul.addr %s586, 2
      %s588 = smul.addr %s587, 8
      %s589 = scalar_lea.vmem %s18, %s588
      %v591 = vld [vmem:[%s581] sm:$0xff]
      %v592 = vld [vmem:[%s581 + $0x8] sm:$0x3]
      %v593 = vld [vmem:[%s584] sm:$0x1]
      %v594 = vpack.c.bf16 %v592, %v591
      %v595 = vld [vmem:[%s2] sm:$0xf]
      %v596 = vld [vmem:[%s2 + $0x4] sm:$0xf]
      %v597 = vld [vmem:[%s2 + $0x8] sm:$0xf]
      %v598 = vld [vmem:[%s2 + $0xc] sm:$0xf]
      %v599 = vld [vmem:[%s3] sm:$0x1]
      %v601 = vlaneseq
      %v602 = vshrl.u32 %v601, 7
      %v603 = vsub.s32 0, %v602
      %v604 = vrot.slane %v599, %v603
      %v610 = vunpack.c.l.b16 %v595
      %v611 = vunpack.c.l.b16 %v596
      %v612 = vunpack.c.l.b16 %v597
      %v613 = vunpack.c.l.b16 %v598
      %v614 = vpack.c.b16 %v611, %v610
      %v615 = vpack.c.b16 %v613, %v612
      %vm618 = vcmask 261120
      %v620 = vsel %vm618, %v594, 0
      %622 = vmatprep.subr.bf16.mxu0 0
      %623 = vmatpush1.bf16.msra.mxu0 %v614
      %624 = vmatprep.subr.bf16.mxu0 0
      %625 = vmatpush1.bf16.msra.mxu0 %v615
      %626 = vmatprep.subr.bf16.mxu0 0
      %627 = vmatpush1.bf16.msra.mxu0 0
      %628 = vmatprep.subr.bf16.mxu0 0
      %629 = vmatpush1.bf16.msra.mxu0 0
      %630 = vmatprep.subr.bf16.mxu0 0
      %631 = vmatpush1.bf16.msra.mxu0 0
      %632 = vmatprep.subr.bf16.mxu0 0
      %633 = vmatpush1.bf16.msra.mxu0 0
      %634 = vmatprep.subr.bf16.mxu0 0
      %635 = vmatpush1.bf16.msra.mxu0 0
      %636 = vmatprep.subr.bf16.mxu0 0
      %637 = vmatpush1.bf16.msra.mxu0 0
      %638 = vmatprep.subr.bf16.mxu0 0
      %639 = vmatpush1.bf16.msra.mxu0 0
      %640 = vmatprep.subr.bf16.mxu0 0
      %641 = vmatpush1.bf16.msra.mxu0 0
      %642 = vmatprep.subr.bf16.mxu0 0
      %643 = vmatpush1.bf16.msra.mxu0 0
      %644 = vmatprep.subr.bf16.mxu0 0
      %645 = vmatpush1.bf16.msra.mxu0 0
      %646 = vmatprep.subr.bf16.mxu0 0
      %647 = vmatpush1.bf16.msra.mxu0 0
      %648 = vmatprep.subr.bf16.mxu0 0
      %649 = vmatpush1.bf16.msra.mxu0 0
      %650 = vmatprep.subr.bf16.mxu0 0
      %651 = vmatpush1.bf16.msra.mxu0 0
      %652 = vmatprep.subr.bf16.mxu0 0
      %653 = vmatpush1.bf16.msra.mxu0 0
      %654 = vmatprep.mubr.bf16.mxu0 0
      %655 = vmatmul.mubr.bf16.gmra.mrb[0].mxu0 %v620
      %v656 = vpop.f32.mrb[0].mxu0
      %v657 = vadd.f32 %v604, %v656
      %v658 = vpop.f32.mrb[0].mxu0
      %v659 = vpop.f32.mrb[0].mxu0
      %v660 = vadd.f32 %v604, %v659
      %v661 = vpop.f32.mrb[0].mxu0
      %662 = vdwg.mxu0
      %v663 = vld [vmem:[%s4] sm:$0xf]
      %v664 = vld [vmem:[%s4 + $0x4] sm:$0xf]
      %v665 = vld [vmem:[%s4 + $0x8] sm:$0xf]
      %v666 = vld [vmem:[%s4 + $0xc] sm:$0xf]
      %v667 = vld [vmem:[%s5] sm:$0x1]
      %v669 = vlaneseq
      %v670 = vshrl.u32 %v669, 7
      %v671 = vsub.s32 0, %v670
      %v672 = vrot.slane %v667, %v671
      %v678 = vunpack.c.l.b16 %v663
      %v679 = vunpack.c.l.b16 %v664
      %v680 = vunpack.c.l.b16 %v665
      %v681 = vunpack.c.l.b16 %v666
      %v682 = vpack.c.b16 %v679, %v678
      %v683 = vpack.c.b16 %v681, %v680
      %686 = vmatprep.subr.bf16.mxu0 0
      %687 = vmatpush1.bf16.msra.mxu0 %v682
      %688 = vmatprep.subr.bf16.mxu0 0
      %689 = vmatpush1.bf16.msra.mxu0 %v683
      %690 = vmatprep.subr.bf16.mxu0 0
      %691 = vmatpush1.bf16.msra.mxu0 0
      %692 = vmatprep.subr.bf16.mxu0 0
      %693 = vmatpush1.bf16.msra.mxu0 0
      %694 = vmatprep.subr.bf16.mxu0 0
      %695 = vmatpush1.bf16.msra.mxu0 0
      %696 = vmatprep.subr.bf16.mxu0 0
      %697 = vmatpush1.bf16.msra.mxu0 0
      %698 = vmatprep.subr.bf16.mxu0 0
      %699 = vmatpush1.bf16.msra.mxu0 0
      %700 = vmatprep.subr.bf16.mxu0 0
      %701 = vmatpush1.bf16.msra.mxu0 0
      %702 = vmatprep.subr.bf16.mxu0 0
      %703 = vmatpush1.bf16.msra.mxu0 0
      %704 = vmatprep.subr.bf16.mxu0 0
      %705 = vmatpush1.bf16.msra.mxu0 0
      %706 = vmatprep.subr.bf16.mxu0 0
      %707 = vmatpush1.bf16.msra.mxu0 0
      %708 = vmatprep.subr.bf16.mxu0 0
      %709 = vmatpush1.bf16.msra.mxu0 0
      %710 = vmatprep.subr.bf16.mxu0 0
      %711 = vmatpush1.bf16.msra.mxu0 0
      %712 = vmatprep.subr.bf16.mxu0 0
      %713 = vmatpush1.bf16.msra.mxu0 0
      %714 = vmatprep.subr.bf16.mxu0 0
      %715 = vmatpush1.bf16.msra.mxu0 0
      %716 = vmatprep.subr.bf16.mxu0 0
      %717 = vmatpush1.bf16.msra.mxu0 0
      %718 = vmatprep.mubr.bf16.mxu0 0
      %719 = vmatmul.mubr.bf16.gmra.mrb[0].mxu0 %v620
      %v720 = vpop.f32.mrb[0].mxu0
      %v721 = vadd.f32 %v672, %v720
      %v722 = vpop.f32.mrb[0].mxu0
      %v723 = vpop.f32.mrb[0].mxu0
      %v724 = vadd.f32 %v672, %v723
      %v725 = vpop.f32.mrb[0].mxu0
      %726 = vdwg.mxu0
      %v727 = vld [vmem:[%s6] sm:$0xf]
      %v728 = vld [vmem:[%s6 + $0x4] sm:$0xf]
      %v729 = vld [vmem:[%s6 + $0x8] sm:$0xf]
      %v730 = vld [vmem:[%s6 + $0xc] sm:$0xf]
      %v731 = vld [vmem:[%s7] sm:$0x1]
      %v733 = vlaneseq
      %v734 = vshrl.u32 %v733, 7
      %v735 = vsub.s32 0, %v734
      %v736 = vrot.slane %v731, %v735
      %v742 = vunpack.c.l.b16 %v727
      %v743 = vunpack.c.l.b16 %v728
      %v744 = vunpack.c.l.b16 %v729
      %v745 = vunpack.c.l.b16 %v730
      %v746 = vpack.c.b16 %v743, %v742
      %v747 = vpack.c.b16 %v745, %v744
      %750 = vmatprep.subr.bf16.mxu0 0
      %751 = vmatpush1.bf16.msra.mxu0 %v746
      %752 = vmatprep.subr.bf16.mxu0 0
      %753 = vmatpush1.bf16.msra.mxu0 %v747
      %754 = vmatprep.subr.bf16.mxu0 0
      %755 = vmatpush1.bf16.msra.mxu0 0
      %756 = vmatprep.subr.bf16.mxu0 0
      %757 = vmatpush1.bf16.msra.mxu0 0
      %758 = vmatprep.subr.bf16.mxu0 0
      %759 = vmatpush1.bf16.msra.mxu0 0
      %760 = vmatprep.subr.bf16.mxu0 0
      %761 = vmatpush1.bf16.msra.mxu0 0
      %762 = vmatprep.subr.bf16.mxu0 0
      %763 = vmatpush1.bf16.msra.mxu0 0
      %764 = vmatprep.subr.bf16.mxu0 0
      %765 = vmatpush1.bf16.msra.mxu0 0
      %766 = vmatprep.subr.bf16.mxu0 0
      %767 = vmatpush1.bf16.msra.mxu0 0
      %768 = vmatprep.subr.bf16.mxu0 0
      %769 = vmatpush1.bf16.msra.mxu0 0
      %770 = vmatprep.subr.bf16.mxu0 0
      %771 = vmatpush1.bf16.msra.mxu0 0
      %772 = vmatprep.subr.bf16.mxu0 0
      %773 = vmatpush1.bf16.msra.mxu0 0
      %774 = vmatprep.subr.bf16.mxu0 0
      %775 = vmatpush1.bf16.msra.mxu0 0
      %776 = vmatprep.subr.bf16.mxu0 0
      %777 = vmatpush1.bf16.msra.mxu0 0
      %778 = vmatprep.subr.bf16.mxu0 0
      %779 = vmatpush1.bf16.msra.mxu0 0
      %780 = vmatprep.subr.bf16.mxu0 0
      %781 = vmatpush1.bf16.msra.mxu0 0
      %782 = vmatprep.mubr.bf16.mxu0 0
      %783 = vmatmul.mubr.bf16.gmra.mrb[0].mxu0 %v620
      %v784 = vpop.f32.mrb[0].mxu0
      %v785 = vadd.f32 %v736, %v784
      %v786 = vpop.f32.mrb[0].mxu0
      %v787 = vpop.f32.mrb[0].mxu0
      %v788 = vadd.f32 %v736, %v787
      %v789 = vpop.f32.mrb[0].mxu0
      %790 = vdwg.mxu0
      %v791 = vpack.c.bf16 %v660, %v657
      %v792 = vpack.c.bf16 %v724, %v721
      %v794 = vlaneseq
      %v795 = vshrl.u32 %v794, 7
      %v796 = vsub.s32 0, %v795
      %v797 = vrot.slane %v593, %v796
      %vm799 = vcmask 130048
      %v801 = vsel %vm799, %v791, 0
      %v804 = vsel %vm799, %v792, 0
      %806 = vmatprep.subr.bf16.mxu0 0
      %807 = vmatpush1.bf16.xpose.msra.mxu0 %v804
      %808 = vmatprep.subr.bf16.mxu0 0
      %809 = vmatpush1.bf16.xpose.msra.mxu0 0
      %810 = vmatprep.subr.bf16.mxu0 0
      %811 = vmatpush1.bf16.xpose.msra.mxu0 0
      %812 = vmatprep.subr.bf16.mxu0 0
      %813 = vmatpush1.bf16.xpose.msra.mxu0 0
      %814 = vmatprep.subr.bf16.mxu0 0
      %815 = vmatpush1.bf16.xpose.msra.mxu0 0
      %816 = vmatprep.subr.bf16.mxu0 0
      %817 = vmatpush1.bf16.xpose.msra.mxu0 0
      %818 = vmatprep.subr.bf16.mxu0 0
      %819 = vmatpush1.bf16.xpose.msra.mxu0 0
      %820 = vmatprep.subr.bf16.mxu0 0
      %821 = vmatpush1.bf16.xpose.msra.mxu0 0
      %822 = vmatprep.subr.bf16.mxu0 0
      %823 = vmatpush1.bf16.xpose.msra.mxu0 0
      %824 = vmatprep.subr.bf16.mxu0 0
      %825 = vmatpush1.bf16.xpose.msra.mxu0 0
      %826 = vmatprep.subr.bf16.mxu0 0
      %827 = vmatpush1.bf16.xpose.msra.mxu0 0
      %828 = vmatprep.subr.bf16.mxu0 0
      %829 = vmatpush1.bf16.xpose.msra.mxu0 0
      %830 = vmatprep.subr.bf16.mxu0 0
      %831 = vmatpush1.bf16.xpose.msra.mxu0 0
      %832 = vmatprep.subr.bf16.mxu0 0
      %833 = vmatpush1.bf16.xpose.msra.mxu0 0
      %834 = vmatprep.subr.bf16.mxu0 0
      %835 = vmatpush1.bf16.xpose.msra.mxu0 0
      %836 = vmatprep.subr.bf16.mxu0 0
      %837 = vmatpush1.bf16.xpose.msra.mxu0 0
      %838 = vmatprep.mubr.bf16.mxu0 0
      %839 = vmatmul.mubr.bf16.gmra.mrb[0].mxu0 %v801
      %v840 = vpop.f32.mrb[0].mxu0
      %v841 = vadd.f32 %v797, %v840
      %v842 = vpop.f32.mrb[0].mxu0
      %v843 = vpop.f32.mrb[0].mxu0
      %v844 = vadd.f32 %v797, %v843
      %v845 = vpop.f32.mrb[0].mxu0
      %846 = vdwg.mxu0
      %vm847 = vcmask 80896
      %v848 = vsel %vm847, %v841, -inf
      %849 = vmax.xlane.f32.xlu0 %v848
      %v850 = vpop.xlane.xlu0 %849
      %vm851 = vcmask 74752
      %v852 = vsel %vm851, %v844, -inf
      %853 = vmax.xlane.f32.xlu0 %v852
      %v854 = vpop.xlane.xlu0 %853
      %v855 = vsub.f32 %v841, %v850
      %v856 = vsub.f32 %v844, %v854
      %v857 = vmul.f32 %v855, 1.442695
      %v858 = vpow.pop %v857
      %v859 = vmul.f32 %v856, 1.442695
      %v860 = vpow.pop %v859
      %v861 = vsel %vm847, %v858, 0.0
      %862 = vadd.xlane.f32.xlu0 %v861
      %v863 = vpop.xlane.xlu0 %862
      %v864 = vsel %vm851, %v860, 0.0
      %865 = vadd.xlane.f32.xlu0 %v864
      %v866 = vpop.xlane.xlu0 %865
      %v867 = vrcp.pop %v863
      %v868 = vrcp.pop %v866
      %v869 = vmul.f32 %v858, %v867
      %v870 = vmul.f32 %v860, %v868
      %v871 = vpack.c.bf16 %v870, %v869
      %v872 = vpack.c.bf16 %v788, %v785
      %v874 = vsel %vm847, %v871, 0
      %vm876 = vcmask 1044480
      %v878 = vsel %vm876, %v872, 0
      %880 = vmatprep.subr.bf16.mxu0 0
      %881 = vmatpush1.bf16.msra.mxu0 %v878
      %882 = vmatprep.subr.bf16.mxu0 0
      %883 = vmatpush1.bf16.msra.mxu0 0
      %884 = vmatprep.subr.bf16.mxu0 0
      %885 = vmatpush1.bf16.msra.mxu0 0
      %886 = vmatprep.subr.bf16.mxu0 0
      %887 = vmatpush1.bf16.msra.mxu0 0
      %888 = vmatprep.subr.bf16.mxu0 0
      %889 = vmatpush1.bf16.msra.mxu0 0
      %890 = vmatprep.subr.bf16.mxu0 0
      %891 = vmatpush1.bf16.msra.mxu0 0
      %892 = vmatprep.subr.bf16.mxu0 0
      %893 = vmatpush1.bf16.msra.mxu0 0
      %894 = vmatprep.subr.bf16.mxu0 0
      %895 = vmatpush1.bf16.msra.mxu0 0
      %896 = vmatprep.subr.bf16.mxu0 0
      %897 = vmatpush1.bf16.msra.mxu0 0
      %898 = vmatprep.subr.bf16.mxu0 0
      %899 = vmatpush1.bf16.msra.mxu0 0
      %900 = vmatprep.subr.bf16.mxu0 0
      %901 = vmatpush1.bf16.msra.mxu0 0
      %902 = vmatprep.subr.bf16.mxu0 0
      %903 = vmatpush1.bf16.msra.mxu0 0
      %904 = vmatprep.subr.bf16.mxu0 0
      %905 = vmatpush1.bf16.msra.mxu0 0
      %906 = vmatprep.subr.bf16.mxu0 0
      %907 = vmatpush1.bf16.msra.mxu0 0
      %908 = vmatprep.subr.bf16.mxu0 0
      %909 = vmatpush1.bf16.msra.mxu0 0
      %910 = vmatprep.subr.bf16.mxu0 0
      %911 = vmatpush1.bf16.msra.mxu0 0
      %912 = vmatprep.mubr.bf16.mxu0 0
      %913 = vmatmul.mubr.bf16.gmra.mrb[0].mxu0 %v874
      %v914 = vpop.f32.mrb[0].mxu0
      %v915 = vadd.f32 0.0, %v914
      %v916 = vpop.f32.mrb[0].mxu0
      %v917 = vpop.f32.mrb[0].mxu0
      %v918 = vadd.f32 0.0, %v917
      %v919 = vpop.f32.mrb[0].mxu0
      %920 = vdwg.mxu0
      %v921 = vpack.c.bf16 %v918, %v915
      %v922 = vld [vmem:[%s8] sm:$0xf]
      %v923 = vld [vmem:[%s8 + $0x4] sm:$0xf]
      %s924 = scalar_lea.vmem %s2, 16
      %v925 = vld [vmem:[%s924] sm:$0xf]
      %v926 = vld [vmem:[%s924 + $0x4] sm:$0xf]
      %v927 = vld [vmem:[%s924 + $0x8] sm:$0xf]
      %v928 = vld [vmem:[%s924 + $0xc] sm:$0xf]
      %s929 = scalar_lea.vmem %s3, 1
      %v930 = vld [vmem:[%s929] sm:$0x1]
      %v932 = vlaneseq
      %v933 = vshrl.u32 %v932, 7
      %v934 = vsub.s32 0, %v933
      %v935 = vrot.slane %v930, %v934
      %v941 = vunpack.c.l.b16 %v925
      %v942 = vunpack.c.l.b16 %v926
      %v943 = vunpack.c.l.b16 %v927
      %v944 = vunpack.c.l.b16 %v928
      %v945 = vpack.c.b16 %v942, %v941
      %v946 = vpack.c.b16 %v944, %v943
      %949 = vmatprep.subr.bf16.mxu0 0
      %950 = vmatpush1.bf16.msra.mxu0 %v945
      %951 = vmatprep.subr.bf16.mxu0 0
      %952 = vmatpush1.bf16.msra.mxu0 %v946
      %953 = vmatprep.subr.bf16.mxu0 0
      %954 = vmatpush1.bf16.msra.mxu0 0
      %955 = vmatprep.subr.bf16.mxu0 0
      %956 = vmatpush1.bf16.msra.mxu0 0
      %957 = vmatprep.subr.bf16.mxu0 0
      %958 = vmatpush1.bf16.msra.mxu0 0
      %959 = vmatprep.subr.bf16.mxu0 0
      %960 = vmatpush1.bf16.msra.mxu0 0
      %961 = vmatprep.subr.bf16.mxu0 0
      %962 = vmatpush1.bf16.msra.mxu0 0
      %963 = vmatprep.subr.bf16.mxu0 0
      %964 = vmatpush1.bf16.msra.mxu0 0
      %965 = vmatprep.subr.bf16.mxu0 0
      %966 = vmatpush1.bf16.msra.mxu0 0
      %967 = vmatprep.subr.bf16.mxu0 0
      %968 = vmatpush1.bf16.msra.mxu0 0
      %969 = vmatprep.subr.bf16.mxu0 0
      %970 = vmatpush1.bf16.msra.mxu0 0
      %971 = vmatprep.subr.bf16.mxu0 0
      %972 = vmatpush1.bf16.msra.mxu0 0
      %973 = vmatprep.subr.bf16.mxu0 0
      %974 = vmatpush1.bf16.msra.mxu0 0
      %975 = vmatprep.subr.bf16.mxu0 0
      %976 = vmatpush1.bf16.msra.mxu0 0
      %977 = vmatprep.subr.bf16.mxu0 0
      %978 = vmatpush1.bf16.msra.mxu0 0
      %979 = vmatprep.subr.bf16.mxu0 0
      %980 = vmatpush1.bf16.msra.mxu0 0
      %981 = vmatprep.mubr.bf16.mxu0 0
      %982 = vmatmul.mubr.bf16.gmra.mrb[0].mxu0 %v620
      %v983 = vpop.f32.mrb[0].mxu0
      %v984 = vadd.f32 %v935, %v983
      %v985 = vpop.f32.mrb[0].mxu0
      %v986 = vpop.f32.mrb[0].mxu0
      %v987 = vadd.f32 %v935, %v986
      %v988 = vpop.f32.mrb[0].mxu0
      %989 = vdwg.mxu0
      %s990 = scalar_lea.vmem %s4, 16
      %v991 = vld [vmem:[%s990] sm:$0xf]
      %v992 = vld [vmem:[%s990 + $0x4] sm:$0xf]
      %v993 = vld [vmem:[%s990 + $0x8] sm:$0xf]
      %v994 = vld [vmem:[%s990 + $0xc] sm:$0xf]
      %s995 = scalar_lea.vmem %s5, 1
      %v996 = vld [vmem:[%s995] sm:$0x1]
      %v998 = vlaneseq
      %v999 = vshrl.u32 %v998, 7
      %v1000 = vsub.s32 0, %v999
      %v1001 = vrot.slane %v996, %v1000
      %v1007 = vunpack.c.l.b16 %v991
      %v1008 = vunpack.c.l.b16 %v992
      %v1009 = vunpack.c.l.b16 %v993
      %v1010 = vunpack.c.l.b16 %v994
      %v1011 = vpack.c.b16 %v1008, %v1007
      %v1012 = vpack.c.b16 %v1010, %v1009
      %1015 = vmatprep.subr.bf16.mxu0 0
      %1016 = vmatpush1.bf16.msra.mxu0 %v1011
      %1017 = vmatprep.subr.bf16.mxu0 0
      %1018 = vmatpush1.bf16.msra.mxu0 %v1012
      %1019 = vmatprep.subr.bf16.mxu0 0
      %1020 = vmatpush1.bf16.msra.mxu0 0
      %1021 = vmatprep.subr.bf16.mxu0 0
      %1022 = vmatpush1.bf16.msra.mxu0 0
      %1023 = vmatprep.subr.bf16.mxu0 0
      %1024 = vmatpush1.bf16.msra.mxu0 0
      %1025 = vmatprep.subr.bf16.mxu0 0
      %1026 = vmatpush1.bf16.msra.mxu0 0
      %1027 = vmatprep.subr.bf16.mxu0 0
      %1028 = vmatpush1.bf16.msra.mxu0 0
      %1029 = vmatprep.subr.bf16.mxu0 0
      %1030 = vmatpush1.bf16.msra.mxu0 0
      %1031 = vmatprep.subr.bf16.mxu0 0
      %1032 = vmatpush1.bf16.msra.mxu0 0
      %1033 = vmatprep.subr.bf16.mxu0 0
      %1034 = vmatpush1.bf16.msra.mxu0 0
      %1035 = vmatprep.subr.bf16.mxu0 0
      %1036 = vmatpush1.bf16.msra.mxu0 0
      %1037 = vmatprep.subr.bf16.mxu0 0
      %1038 = vmatpush1.bf16.msra.mxu0 0
      %1039 = vmatprep.subr.bf16.mxu0 0
      %1040 = vmatpush1.bf16.msra.mxu0 0
      %1041 = vmatprep.subr.bf16.mxu0 0
      %1042 = vmatpush1.bf16.msra.mxu0 0
      %1043 = vmatprep.subr.bf16.mxu0 0
      %1044 = vmatpush1.bf16.msra.mxu0 0
      %1045 = vmatprep.subr.bf16.mxu0 0
      %1046 = vmatpush1.bf16.msra.mxu0 0
      %1047 = vmatprep.mubr.bf16.mxu0 0
      %1048 = vmatmul.mubr.bf16.gmra.mrb[0].mxu0 %v620
      %v1049 = vpop.f32.mrb[0].mxu0
      %v1050 = vadd.f32 %v1001, %v1049
      %v1051 = vpop.f32.mrb[0].mxu0
      %v1052 = vpop.f32.mrb[0].mxu0
      %v1053 = vadd.f32 %v1001, %v1052
      %v1054 = vpop.f32.mrb[0].mxu0
      %1055 = vdwg.mxu0
      %s1056 = scalar_lea.vmem %s6, 16
      %v1057 = vld [vmem:[%s1056] sm:$0xf]
      %v1058 = vld [vmem:[%s1056 + $0x4] sm:$0xf]
      %v1059 = vld [vmem:[%s1056 + $0x8] sm:$0xf]
      %v1060 = vld [vmem:[%s1056 + $0xc] sm:$0xf]
      %s1061 = scalar_lea.vmem %s7, 1
      %v1062 = vld [vmem:[%s1061] sm:$0x1]
      %v1064 = vlaneseq
      %v1065 = vshrl.u32 %v1064, 7
      %v1066 = vsub.s32 0, %v1065
      %v1067 = vrot.slane %v1062, %v1066
      %v1073 = vunpack.c.l.b16 %v1057
      %v1074 = vunpack.c.l.b16 %v1058
      %v1075 = vunpack.c.l.b16 %v1059
      %v1076 = vunpack.c.l.b16 %v1060
      %v1077 = vpack.c.b16 %v1074, %v1073
      %v1078 = vpack.c.b16 %v1076, %v1075
      %1081 = vmatprep.subr.bf16.mxu0 0
      %1082 = vmatpush1.bf16.msra.mxu0 %v1077
      %1083 = vmatprep.subr.bf16.mxu0 0
      %1084 = vmatpush1.bf16.msra.mxu0 %v1078
      %1085 = vmatprep.subr.bf16.mxu0 0
      %1086 = vmatpush1.bf16.msra.mxu0 0
      %1087 = vmatprep.subr.bf16.mxu0 0
      %1088 = vmatpush1.bf16.msra.mxu0 0
      %1089 = vmatprep.subr.bf16.mxu0 0
      %1090 = vmatpush1.bf16.msra.mxu0 0
      %1091 = vmatprep.subr.bf16.mxu0 0
      %1092 = vmatpush1.bf16.msra.mxu0 0
      %1093 = vmatprep.subr.bf16.mxu0 0
      %1094 = vmatpush1.bf16.msra.mxu0 0
      %1095 = vmatprep.subr.bf16.mxu0 0
      %1096 = vmatpush1.bf16.msra.mxu0 0
      %1097 = vmatprep.subr.bf16.mxu0 0
      %1098 = vmatpush1.bf16.msra.mxu0 0
      %1099 = vmatprep.subr.bf16.mxu0 0
      %1100 = vmatpush1.bf16.msra.mxu0 0
      %1101 = vmatprep.subr.bf16.mxu0 0
      %1102 = vmatpush1.bf16.msra.mxu0 0
      %1103 = vmatprep.subr.bf16.mxu0 0
      %1104 = vmatpush1.bf16.msra.mxu0 0
      %1105 = vmatprep.subr.bf16.mxu0 0
      %1106 = vmatpush1.bf16.msra.mxu0 0
      %1107 = vmatprep.subr.bf16.mxu0 0
      %1108 = vmatpush1.bf16.msra.mxu0 0
      %1109 = vmatprep.subr.bf16.mxu0 0
      %1110 = vmatpush1.bf16.msra.mxu0 0
      %1111 = vmatprep.subr.bf16.mxu0 0
      %1112 = vmatpush1.bf16.msra.mxu0 0
      %1113 = vmatprep.mubr.bf16.mxu0 0
      %1114 = vmatmul.mubr.bf16.gmra.mrb[0].mxu0 %v620
      %v1115 = vpop.f32.mrb[0].mxu0
      %v1116 = vadd.f32 %v1067, %v1115
      %v1117 = vpop.f32.mrb[0].mxu0
      %v1118 = vpop.f32.mrb[0].mxu0
      %v1119 = vadd.f32 %v1067, %v1118
      %v1120 = vpop.f32.mrb[0].mxu0
      %1121 = vdwg.mxu0
      %v1122 = vpack.c.bf16 %v987, %v984
      %v1123 = vpack.c.bf16 %v1053, %v1050
      %v1125 = vsel %vm799, %v1122, 0
      %v1128 = vsel %vm799, %v1123, 0
      %1130 = vmatprep.subr.bf16.mxu0 0
      %1131 = vmatpush1.bf16.xpose.msra.mxu0 %v1128
      %1132 = vmatprep.subr.bf16.mxu0 0
      %1133 = vmatpush1.bf16.xpose.msra.mxu0 0
      %1134 = vmatprep.subr.bf16.mxu0 0
      %1135 = vmatpush1.bf16.xpose.msra.mxu0 0
      %1136 = vmatprep.subr.bf16.mxu0 0
      %1137 = vmatpush1.bf16.xpose.msra.mxu0 0
      %1138 = vmatprep.subr.bf16.mxu0 0
      %1139 = vmatpush1.bf16.xpose.msra.mxu0 0
      %1140 = vmatprep.subr.bf16.mxu0 0
      %1141 = vmatpush1.bf16.xpose.msra.mxu0 0
      %1142 = vmatprep.subr.bf16.mxu0 0
      %1143 = vmatpush1.bf16.xpose.msra.mxu0 0
      %1144 = vmatprep.subr.bf16.mxu0 0
      %1145 = vmatpush1.bf16.xpose.msra.mxu0 0
      %1146 = vmatprep.subr.bf16.mxu0 0
      %1147 = vmatpush1.bf16.xpose.msra.mxu0 0
      %1148 = vmatprep.subr.bf16.mxu0 0
      %1149 = vmatpush1.bf16.xpose.msra.mxu0 0
      %1150 = vmatprep.subr.bf16.mxu0 0
      %1151 = vmatpush1.bf16.xpose.msra.mxu0 0
      %1152 = vmatprep.subr.bf16.mxu0 0
      %1153 = vmatpush1.bf16.xpose.msra.mxu0 0
      %1154 = vmatprep.subr.bf16.mxu0 0
      %1155 = vmatpush1.bf16.xpose.msra.mxu0 0
      %1156 = vmatprep.subr.bf16.mxu0 0
      %1157 = vmatpush1.bf16.xpose.msra.mxu0 0
      %1158 = vmatprep.subr.bf16.mxu0 0
      %1159 = vmatpush1.bf16.xpose.msra.mxu0 0
      %1160 = vmatprep.subr.bf16.mxu0 0
      %1161 = vmatpush1.bf16.xpose.msra.mxu0 0
      %1162 = vmatprep.mubr.bf16.mxu0 0
      %1163 = vmatmul.mubr.bf16.gmra.mrb[0].mxu0 %v1125
      %v1164 = vpop.f32.mrb[0].mxu0
      %v1165 = vadd.f32 %v797, %v1164
      %v1166 = vpop.f32.mrb[0].mxu0
      %v1167 = vpop.f32.mrb[0].mxu0
      %v1168 = vadd.f32 %v797, %v1167
      %v1169 = vpop.f32.mrb[0].mxu0
      %1170 = vdwg.mxu0
      %v1171 = vsel %vm847, %v1165, -inf
      %1172 = vmax.xlane.f32.xlu0 %v1171
      %v1173 = vpop.xlane.xlu0 %1172
      %v1174 = vsel %vm851, %v1168, -inf
      %1175 = vmax.xlane.f32.xlu0 %v1174
      %v1176 = vpop.xlane.xlu0 %1175
      %v1177 = vsub.f32 %v1165, %v1173
      %v1178 = vsub.f32 %v1168, %v1176
      %v1179 = vmul.f32 %v1177, 1.442695
      %v1180 = vpow.pop %v1179
      %v1181 = vmul.f32 %v1178, 1.442695
      %v1182 = vpow.pop %v1181
      %v1183 = vsel %vm847, %v1180, 0.0
      %1184 = vadd.xlane.f32.xlu0 %v1183
      %v1185 = vpop.xlane.xlu0 %1184
      %v1186 = vsel %vm851, %v1182, 0.0
      %1187 = vadd.xlane.f32.xlu0 %v1186
      %v1188 = vpop.xlane.xlu0 %1187
      %v1189 = vrcp.pop %v1185
      %v1190 = vrcp.pop %v1188
      %v1191 = vmul.f32 %v1180, %v1189
      %v1192 = vmul.f32 %v1182, %v1190
      %v1193 = vpack.c.bf16 %v1192, %v1191
      %v1194 = vpack.c.bf16 %v1119, %v1116
      %v1196 = vsel %vm847, %v1193, 0
      %v1199 = vsel %vm876, %v1194, 0
      %1201 = vmatprep.subr.bf16.mxu0 0
      %1202 = vmatpush1.bf16.msra.mxu0 %v1199
      %1203 = vmatprep.subr.bf16.mxu0 0
      %1204 = vmatpush1.bf16.msra.mxu0 0
      %1205 = vmatprep.subr.bf16.mxu0 0
      %1206 = vmatpush1.bf16.msra.mxu0 0
      %1207 = vmatprep.subr.bf16.mxu0 0
      %1208 = vmatpush1.bf16.msra.mxu0 0
      %1209 = vmatprep.subr.bf16.mxu0 0
      %1210 = vmatpush1.bf16.msra.mxu0 0
      %1211 = vmatprep.subr.bf16.mxu0 0
      %1212 = vmatpush1.bf16.msra.mxu0 0
      %1213 = vmatprep.subr.bf16.mxu0 0
      %1214 = vmatpush1.bf16.msra.mxu0 0
      %1215 = vmatprep.subr.bf16.mxu0 0
      %1216 = vmatpush1.bf16.msra.mxu0 0
      %1217 = vmatprep.subr.bf16.mxu0 0
      %1218 = vmatpush1.bf16.msra.mxu0 0
      %1219 = vmatprep.subr.bf16.mxu0 0
      %1220 = vmatpush1.bf16.msra.mxu0 0
      %1221 = vmatprep.subr.bf16.mxu0 0
      %1222 = vmatpush1.bf16.msra.mxu0 0
      %1223 = vmatprep.subr.bf16.mxu0 0
      %1224 = vmatpush1.bf16.msra.mxu0 0
      %1225 = vmatprep.subr.bf16.mxu0 0
      %1226 = vmatpush1.bf16.msra.mxu0 0
      %1227 = vmatprep.subr.bf16.mxu0 0
      %1228 = vmatpush1.bf16.msra.mxu0 0
      %1229 = vmatprep.subr.bf16.mxu0 0
      %1230 = vmatpush1.bf16.msra.mxu0 0
      %1231 = vmatprep.subr.bf16.mxu0 0
      %1232 = vmatpush1.bf16.msra.mxu0 0
      %1233 = vmatprep.mubr.bf16.mxu0 0
      %1234 = vmatmul.mubr.bf16.gmra.mrb[0].mxu0 %v1196
      %v1235 = vpop.f32.mrb[0].mxu0
      %v1236 = vadd.f32 0.0, %v1235
      %v1237 = vpop.f32.mrb[0].mxu0
      %v1238 = vpop.f32.mrb[0].mxu0
      %v1239 = vadd.f32 0.0, %v1238
      %v1240 = vpop.f32.mrb[0].mxu0
      %1241 = vdwg.mxu0
      %v1242 = vpack.c.bf16 %v1239, %v1236
      %s1243 = scalar_lea.vmem %s8, 8
      %v1244 = vld [vmem:[%s1243] sm:$0xf]
      %v1245 = vld [vmem:[%s1243 + $0x4] sm:$0xf]
      %v1248 = vunpack.c.l.b16 %v1244
      %v1249 = vunpack.c.l.b16 %v1245
      %v1250 = vpack.c.b16 %v1249, %v1248
      %v1253 = vsel %vm799, %v1242, 0
      %1255 = vmatprep.subr.bf16.mxu0 0
      %1256 = vmatpush1.bf16.msra.mxu0 %v1250
      %1257 = vmatprep.subr.bf16.mxu0 0
      %1258 = vmatpush1.bf16.msra.mxu0 0
      %1259 = vmatprep.subr.bf16.mxu0 0
      %1260 = vmatpush1.bf16.msra.mxu0 0
      %1261 = vmatprep.subr.bf16.mxu0 0
      %1262 = vmatpush1.bf16.msra.mxu0 0
      %1263 = vmatprep.subr.bf16.mxu0 0
      %1264 = vmatpush1.bf16.msra.mxu0 0
      %1265 = vmatprep.subr.bf16.mxu0 0
      %1266 = vmatpush1.bf16.msra.mxu0 0
      %1267 = vmatprep.subr.bf16.mxu0 0
      %1268 = vmatpush1.bf16.msra.mxu0 0
      %1269 = vmatprep.subr.bf16.mxu0 0
      %1270 = vmatpush1.bf16.msra.mxu0 0
      %1271 = vmatprep.subr.bf16.mxu0 0
      %1272 = vmatpush1.bf16.msra.mxu0 0
      %1273 = vmatprep.subr.bf16.mxu0 0
      %1274 = vmatpush1.bf16.msra.mxu0 0
      %1275 = vmatprep.subr.bf16.mxu0 0
      %1276 = vmatpush1.bf16.msra.mxu0 0
      %1277 = vmatprep.subr.bf16.mxu0 0
      %1278 = vmatpush1.bf16.msra.mxu0 0
      %1279 = vmatprep.subr.bf16.mxu0 0
      %1280 = vmatpush1.bf16.msra.mxu0 0
      %1281 = vmatprep.subr.bf16.mxu0 0
      %1282 = vmatpush1.bf16.msra.mxu0 0
      %1283 = vmatprep.subr.bf16.mxu0 0
      %1284 = vmatpush1.bf16.msra.mxu0 0
      %1285 = vmatprep.subr.bf16.mxu0 0
      %1286 = vmatpush1.bf16.msra.mxu0 0
      %1287 = vmatprep.mubr.bf16.mxu0 0
      %1288 = vmatmul.mubr.bf16.gmra.mrb[0].mxu0 %v1253
      %v1289 = vpop.f32.mrb[0].mxu0
      %v1290 = vadd.f32 0.0, %v1289
      %v1291 = vpop.f32.mrb[0].mxu0
      %v1292 = vpop.f32.mrb[0].mxu0
      %v1293 = vadd.f32 0.0, %v1292
      %v1294 = vpop.f32.mrb[0].mxu0
      %1295 = vdwg.mxu0
      %v1298 = vunpack.c.l.b16 %v922
      %v1299 = vunpack.c.l.b16 %v923
      %v1300 = vpack.c.b16 %v1299, %v1298
      %v1303 = vsel %vm799, %v921, 0
      %1305 = vmatprep.subr.bf16.mxu0 0
      %1306 = vmatpush1.bf16.msra.mxu0 %v1300
      %1307 = vmatprep.subr.bf16.mxu0 0
      %1308 = vmatpush1.bf16.msra.mxu0 0
      %1309 = vmatprep.subr.bf16.mxu0 0
      %1310 = vmatpush1.bf16.msra.mxu0 0
      %1311 = vmatprep.subr.bf16.mxu0 0
      %1312 = vmatpush1.bf16.msra.mxu0 0
      %1313 = vmatprep.subr.bf16.mxu0 0
      %1314 = vmatpush1.bf16.msra.mxu0 0
      %1315 = vmatprep.subr.bf16.mxu0 0
      %1316 = vmatpush1.bf16.msra.mxu0 0
      %1317 = vmatprep.subr.bf16.mxu0 0
      %1318 = vmatpush1.bf16.msra.mxu0 0
      %1319 = vmatprep.subr.bf16.mxu0 0
      %1320 = vmatpush1.bf16.msra.mxu0 0
      %1321 = vmatprep.subr.bf16.mxu0 0
      %1322 = vmatpush1.bf16.msra.mxu0 0
      %1323 = vmatprep.subr.bf16.mxu0 0
      %1324 = vmatpush1.bf16.msra.mxu0 0
      %1325 = vmatprep.subr.bf16.mxu0 0
      %1326 = vmatpush1.bf16.msra.mxu0 0
      %1327 = vmatprep.subr.bf16.mxu0 0
      %1328 = vmatpush1.bf16.msra.mxu0 0
      %1329 = vmatprep.subr.bf16.mxu0 0
      %1330 = vmatpush1.bf16.msra.mxu0 0
      %1331 = vmatprep.subr.bf16.mxu0 0
      %1332 = vmatpush1.bf16.msra.mxu0 0
      %1333 = vmatprep.subr.bf16.mxu0 0
      %1334 = vmatpush1.bf16.msra.mxu0 0
      %1335 = vmatprep.subr.bf16.mxu0 0
      %1336 = vmatpush1.bf16.msra.mxu0 0
      %1337 = vmatprep.mubr.bf16.mxu0 0
      %1338 = vmatmul.mubr.bf16.gmra.mrb[0].mxu0 %v1303
      %v1339 = vpop.f32.mrb[0].mxu0
      %v1340 = vadd.f32 %v1290, %v1339
      %v1341 = vpop.f32.mrb[0].mxu0
      %v1342 = vpop.f32.mrb[0].mxu0
      %v1343 = vadd.f32 %v1293, %v1342
      %v1344 = vpop.f32.mrb[0].mxu0
      %1345 = vdwg.mxu0
      %v1346 = vld [vmem:[%s9] sm:$0x1]
      %v1348 = vlaneseq
      %v1349 = vshrl.u32 %v1348, 7
      %v1350 = vsub.s32 0, %v1349
      %v1351 = vrot.slane %v1346, %v1350
      %v1353 = vadd.f32 %v1340, %v1351
      %v1354 = vadd.f32 %v1343, %v1351
      %v1355 = vadd.f32 %v591, %v1353
      %v1356 = vadd.f32 %v592, %v1354
      %v1357 = vld [vmem:[%s10] sm:$0x1]
      %v1358 = vld [vmem:[%s11] sm:$0x1]
      %v1359 = vsel %vm618, %v1355, 0.0
      %1360 = vadd.xlane.f32.xlu0 %v1359
      %v1361 = vpop.xlane.xlu0 %1360
      %vm1362 = vcmask 254976
      %v1363 = vsel %vm1362, %v1356, 0.0
      %1364 = vadd.xlane.f32.xlu0 %v1363
      %v1365 = vpop.xlane.xlu0 %1364
      %v1366 = vrcp.pop 32.0
      %v1367 = vmul.f32 %v1361, %v1366
      %v1368 = vmul.f32 %v1365, %v1366
      %v1369 = vsub.f32 %v1355, %v1367
      %v1370 = vsub.f32 %v1356, %v1368
      %v1371 = vmul.f32 %v1369, %v1369
      %v1372 = vmul.f32 %v1370, %v1370
      %v1373 = vsel %vm618, %v1371, 0.0
      %1374 = vadd.xlane.f32.xlu0 %v1373
      %v1375 = vpop.xlane.xlu0 %1374
      %v1376 = vsel %vm1362, %v1372, 0.0
      %1377 = vadd.xlane.f32.xlu0 %v1376
      %v1378 = vpop.xlane.xlu0 %1377
      %v1379 = vmul.f32 %v1375, %v1366
      %v1380 = vmul.f32 %v1378, %v1366
      %v1381 = vadd.f32 %v1379, 1e-05
      %v1382 = vadd.f32 %v1380, 1e-05
      %v1383 = vrsqrt.pop %v1381
      %v1384 = vrsqrt.pop %v1382
      %v1385 = vmul.f32 %v1369, %v1383
      %v1386 = vmul.f32 %v1370, %v1384
      %v1388 = vlaneseq
      %v1389 = vshrl.u32 %v1388, 7
      %v1390 = vsub.s32 0, %v1389
      %v1391 = vrot.slane %v1357, %v1390
      %v1393 = vmul.f32 %v1385, %v1391
      %v1394 = vmul.f32 %v1386, %v1391
      %v1396 = vlaneseq
      %v1397 = vshrl.u32 %v1396, 7
      %v1398 = vsub.s32 0, %v1397
      %v1399 = vrot.slane %v1358, %v1398
      %v1401 = vadd.f32 %v1393, %v1399
      %v1402 = vadd.f32 %v1394, %v1399
      %v1403 = vpack.c.bf16 %v1402, %v1401
      %v1404 = vld [vmem:[%s12] sm:$0xf]
      %v1405 = vld [vmem:[%s12 + $0x4] sm:$0xf]
      %v1406 = vld [vmem:[%s12 + $0x8] sm:$0xf]
      %v1407 = vld [vmem:[%s12 + $0xc] sm:$0xf]
      %v1408 = vld [vmem:[%s13] sm:$0x1]
      %v1410 = vlaneseq
      %v1411 = vshrl.u32 %v1410, 7
      %v1412 = vsub.s32 0, %v1411
      %v1413 = vrot.slane %v1408, %v1412
      %v1419 = vunpack.c.l.b16 %v1404
      %v1420 = vunpack.c.l.b16 %v1405
      %v1421 = vunpack.c.l.b16 %v1406
      %v1422 = vunpack.c.l.b16 %v1407
      %v1423 = vpack.c.b16 %v1420, %v1419
      %v1424 = vpack.c.b16 %v1422, %v1421
      %v1428 = vsel %vm618, %v1403, 0
      %1430 = vmatprep.subr.bf16.mxu0 0
      %1431 = vmatpush1.bf16.msra.mxu0 %v1423
      %1432 = vmatprep.subr.bf16.mxu0 0
      %1433 = vmatpush1.bf16.msra.mxu0 %v1424
      %1434 = vmatprep.subr.bf16.mxu0 0
      %1435 = vmatpush1.bf16.msra.mxu0 0
      %1436 = vmatprep.subr.bf16.mxu0 0
      %1437 = vmatpush1.bf16.msra.mxu0 0
      %1438 = vmatprep.subr.bf16.mxu0 0
      %1439 = vmatpush1.bf16.msra.mxu0 0
      %1440 = vmatprep.subr.bf16.mxu0 0
      %1441 = vmatpush1.bf16.msra.mxu0 0
      %1442 = vmatprep.subr.bf16.mxu0 0
      %1443 = vmatpush1.bf16.msra.mxu0 0
      %1444 = vmatprep.subr.bf16.mxu0 0
      %1445 = vmatpush1.bf16.msra.mxu0 0
      %1446 = vmatprep.subr.bf16.mxu0 0
      %1447 = vmatpush1.bf16.msra.mxu0 0
      %1448 = vmatprep.subr.bf16.mxu0 0
      %1449 = vmatpush1.bf16.msra.mxu0 0
      %1450 = vmatprep.subr.bf16.mxu0 0
      %1451 = vmatpush1.bf16.msra.mxu0 0
      %1452 = vmatprep.subr.bf16.mxu0 0
      %1453 = vmatpush1.bf16.msra.mxu0 0
      %1454 = vmatprep.subr.bf16.mxu0 0
      %1455 = vmatpush1.bf16.msra.mxu0 0
      %1456 = vmatprep.subr.bf16.mxu0 0
      %1457 = vmatpush1.bf16.msra.mxu0 0
      %1458 = vmatprep.subr.bf16.mxu0 0
      %1459 = vmatpush1.bf16.msra.mxu0 0
      %1460 = vmatprep.subr.bf16.mxu0 0
      %1461 = vmatpush1.bf16.msra.mxu0 0
      %1462 = vmatprep.mubr.bf16.mxu0 0
      %1463 = vmatmul.mubr.bf16.gmra.mrb[0].mxu0 %v1428
      %v1464 = vpop.f32.mrb[0].mxu0
      %v1465 = vadd.f32 %v1413, %v1464
      %v1466 = vpop.f32.mrb[0].mxu0
      %v1467 = vpop.f32.mrb[0].mxu0
      %v1468 = vadd.f32 %v1413, %v1467
      %v1469 = vpop.f32.mrb[0].mxu0
      %1470 = vdwg.mxu0
      %v1471 = vmax.f32 %v1465, 0.0
      %v1472 = vmax.f32 %v1468, 0.0
      %v1473 = vpack.c.bf16 %v1472, %v1471
      %v1474 = vld [vmem:[%s14] sm:$0xf]
      %v1475 = vld [vmem:[%s14 + $0x4] sm:$0xf]
      %v1476 = vld [vmem:[%s14 + $0x8] sm:$0xf]
      %v1477 = vld [vmem:[%s14 + $0xc] sm:$0xf]
      %v1478 = vld [vmem:[%s14 + $0x10] sm:$0xf]
      %v1479 = vld [vmem:[%s14 + $0x14] sm:$0xf]
      %v1480 = vld [vmem:[%s14 + $0x18] sm:$0xf]
      %v1481 = vld [vmem:[%s14 + $0x1c] sm:$0xf]
      %v1482 = vld [vmem:[%s15] sm:$0x1]
      %v1484 = vlaneseq
      %v1485 = vshrl.u32 %v1484, 7
      %v1486 = vsub.s32 0, %v1485
      %v1487 = vrot.slane %v1482, %v1486
      %v1497 = vunpack.c.l.b16 %v1474
      %v1498 = vunpack.c.l.b16 %v1475
      %v1499 = vunpack.c.l.b16 %v1476
      %v1500 = vunpack.c.l.b16 %v1477
      %v1501 = vunpack.c.l.b16 %v1478
      %v1502 = vunpack.c.l.b16 %v1479
      %v1503 = vunpack.c.l.b16 %v1480
      %v1504 = vunpack.c.l.b16 %v1481
      %v1505 = vpack.c.b16 %v1498, %v1497
      %v1506 = vpack.c.b16 %v1500, %v1499
      %v1507 = vpack.c.b16 %v1502, %v1501
      %v1508 = vpack.c.b16 %v1504, %v1503
      %vm1513 = vcmask 523264
      %v1515 = vsel %vm1513, %v1473, 0
      %1517 = vmatprep.subr.bf16.mxu0 0
      %1518 = vmatpush1.bf16.msra.mxu0 %v1505
      %1519 = vmatprep.subr.bf16.mxu0 0
      %1520 = vmatpush1.bf16.msra.mxu0 %v1506
      %1521 = vmatprep.subr.bf16.mxu0 0
      %1522 = vmatpush1.bf16.msra.mxu0 %v1507
      %1523 = vmatprep.subr.bf16.mxu0 0
      %1524 = vmatpush1.bf16.msra.mxu0 %v1508
      %1525 = vmatprep.subr.bf16.mxu0 0
      %1526 = vmatpush1.bf16.msra.mxu0 0
      %1527 = vmatprep.subr.bf16.mxu0 0
      %1528 = vmatpush1.bf16.msra.mxu0 0
      %1529 = vmatprep.subr.bf16.mxu0 0
      %1530 = vmatpush1.bf16.msra.mxu0 0
      %1531 = vmatprep.subr.bf16.mxu0 0
      %1532 = vmatpush1.bf16.msra.mxu0 0
      %1533 = vmatprep.subr.bf16.mxu0 0
      %1534 = vmatpush1.bf16.msra.mxu0 0
      %1535 = vmatprep.subr.bf16.mxu0 0
      %1536 = vmatpush1.bf16.msra.mxu0 0
      %1537 = vmatprep.subr.bf16.mxu0 0
      %1538 = vmatpush1.bf16.msra.mxu0 0
      %1539 = vmatprep.subr.bf16.mxu0 0
      %1540 = vmatpush1.bf16.msra.mxu0 0
      %1541 = vmatprep.subr.bf16.mxu0 0
      %1542 = vmatpush1.bf16.msra.mxu0 0
      %1543 = vmatprep.subr.bf16.mxu0 0
      %1544 = vmatpush1.bf16.msra.mxu0 0
      %1545 = vmatprep.subr.bf16.mxu0 0
      %1546 = vmatpush1.bf16.msra.mxu0 0
      %1547 = vmatprep.subr.bf16.mxu0 0
      %1548 = vmatpush1.bf16.msra.mxu0 0
      %1549 = vmatprep.mubr.bf16.mxu0 0
      %1550 = vmatmul.mubr.bf16.gmra.mrb[0].mxu0 %v1515
      %v1551 = vpop.f32.mrb[0].mxu0
      %v1552 = vadd.f32 %v1487, %v1551
      %v1553 = vpop.f32.mrb[0].mxu0
      %v1554 = vpop.f32.mrb[0].mxu0
      %v1555 = vadd.f32 %v1487, %v1554
      %v1556 = vpop.f32.mrb[0].mxu0
      %1557 = vdwg.mxu0
      %v1558 = vadd.f32 %v1401, %v1552
      %v1559 = vadd.f32 %v1402, %v1555
      %v1560 = vld [vmem:[%s16] sm:$0x1]
      %v1561 = vld [vmem:[%s17] sm:$0x1]
      %v1562 = vsel %vm618, %v1558, 0.0
      %1563 = vadd.xlane.f32.xlu0 %v1562
      %v1564 = vpop.xlane.xlu0 %1563
      %v1565 = vsel %vm1362, %v1559, 0.0
      %1566 = vadd.xlane.f32.xlu0 %v1565
      %v1567 = vpop.xlane.xlu0 %1566
      %v1568 = vmul.f32 %v1564, %v1366
      %v1569 = vmul.f32 %v1567, %v1366
      %v1570 = vsub.f32 %v1558, %v1568
      %v1571 = vsub.f32 %v1559, %v1569
      %v1572 = vmul.f32 %v1570, %v1570
      %v1573 = vmul.f32 %v1571, %v1571
      %v1574 = vsel %vm618, %v1572, 0.0
      %1575 = vadd.xlane.f32.xlu0 %v1574
      %v1576 = vpop.xlane.xlu0 %1575
      %v1577 = vsel %vm1362, %v1573, 0.0
      %1578 = vadd.xlane.f32.xlu0 %v1577
      %v1579 = vpop.xlane.xlu0 %1578
      %v1580 = vmul.f32 %v1576, %v1366
      %v1581 = vmul.f32 %v1579, %v1366
      %v1582 = vadd.f32 %v1580, 1e-05
      %v1583 = vadd.f32 %v1581, 1e-05
      %v1584 = vrsqrt.pop %v1582
      %v1585 = vrsqrt.pop %v1583
      %v1586 = vmul.f32 %v1570, %v1584
      %v1587 = vmul.f32 %v1571, %v1585
      %v1589 = vlaneseq
      %v1590 = vshrl.u32 %v1589, 7
      %v1591 = vsub.s32 0, %v1590
      %v1592 = vrot.slane %v1560, %v1591
      %v1594 = vmul.f32 %v1586, %v1592
      %v1595 = vmul.f32 %v1587, %v1592
      %v1597 = vlaneseq
      %v1598 = vshrl.u32 %v1597, 7
      %v1599 = vsub.s32 0, %v1598
      %v1600 = vrot.slane %v1561, %v1599
      %v1602 = vadd.f32 %v1594, %v1600
      %v1603 = vadd.f32 %v1595, %v1600
      %1604 = vst.msk [vmem:[%s589] sm:$0xff] %vm618, %v1602
      %1605 = vst.msk [vmem:[%s589 + $0x8] sm:$0x3] %vm1362, %v1603
      %p1606 = scmp.lt.s32.totalorder %s29, 1
      %s1607 = scalar_select %p1606, %s29, 1
      %s1608 = smul.addr %s1607, 2
      %s1609 = smul.addr %s1608, 8
      %s1610 = scalar_lea.vmem %s18, %s1609
      // Predicated region
      $region93: #{transformer_forward.5} parent=91 // pred_check
        %p1611 = pneg %p435
      $region94: #{transformer_forward.5} parent=91 // pred_check_branch
        %1613 = sbr.rel (%p1611) target = $region96
      $region95: #{transformer_forward.5} parent=91 // pred_region
        _
      $region96: #{transformer_forward.5} parent=91 // pred_fallthru
        _
    $region92: #{transformer_forward.5} parent=5 // pred_fallthru
      _
    %p1614 = scmp.le.s32.totalorder 2, %s24
    // Predicated region
    $region97: #{transformer_forward.5} parent=5 // pred_check
      %p1615 = pneg %p1614
    $region98: #{transformer_forward.5} parent=5 // pred_check_branch
      %1617 = sbr.rel (%p1615) target = $region100
    $region99: #{transformer_forward.5} parent=5 // pred_region
      %s1618 = ssub.s32 %s24, 2
      // Predicated region
      $region101: #{transformer_forward.5} parent=99 // pred_check
        %p1619 = pneg %p441
      $region102: #{transformer_forward.5} parent=99 // pred_check_branch
        %1621 = sbr.rel (%p1619) target = $region104
      $region103: #{transformer_forward.5} parent=99 // pred_region
        %p1622 = scmp.lt.s32.totalorder %s30, 1
        %s1623 = scalar_select %p1622, %s30, 1
        %s1624 = smul.addr %s1623, 2
        %s1625 = smul.addr %s1624, 8
        %s1626 = scalar_lea.vmem %s18, %s1625
      $region104: #{transformer_forward.5} parent=99 // pred_fallthru
        _
    $region100: #{transformer_forward.5} parent=5 // pred_fallthru
      _
  $region6: #{transformer_forward.5} parent=0 // loop_footer
    %s28 = sadd.s32 1, %s24
  $region7: #{transformer_forward.5} parent=0 // loop_footer_branch
    %23 = sbr.rel target = $region3
  $region8: #{transformer_forward.5} parent=0 // loop_exit
    _

// kernel: transformer_forward.7
$region0: #{transformer_forward.7}
  #allocation0 [shape = 'u32[]', space=smem, size = 0x4, offset = 0x4, fixed_abs, tag = 'smem constant byte address 0x4 - core index']
  #allocation1 [shape = 'u32[144,128]{1,0:T(1,128)}', space=vmem, size = 0x12000, scoped, tag = 'internal scratch']
  %s0 = inlined_call_operand.vmem [shape: f32[2,8,32], index: 0, kind: input, shape index: {}]
  %s1 = inlined_call_operand.vmem [shape: f32[2,10,32], index: 1, kind: input, shape index: {}]
  %s2 = inlined_call_operand.vmem [shape: bf16[2,32,16], index: 2, kind: input, shape index: {}]
  %s3 = inlined_call_operand.vmem [shape: f32[2,1,16], index: 3, kind: input, shape index: {}]
  %s4 = inlined_call_operand.vmem [shape: bf16[2,32,16], index: 4, kind: input, shape index: {}]
  %s5 = inlined_call_operand.vmem [shape: f32[2,1,16], index: 5, kind: input, shape index: {}]
  %s6 = inlined_call_operand.vmem [shape: bf16[2,32,16], index: 6, kind: input, shape index: {}]
  %s7 = inlined_call_operand.vmem [shape: f32[2,1,16], index: 7, kind: input, shape index: {}]
  %s8 = inlined_call_operand.vmem [shape: bf16[2,16,32], index: 8, kind: input, shape index: {}]
  %s9 = inlined_call_operand.vmem [shape: f32[1,32], index: 9, kind: input, shape index: {}]
  %s10 = inlined_call_operand.vmem [shape: f32[1,32], index: 10, kind: input, shape index: {}]
  %s11 = inlined_call_operand.vmem [shape: f32[1,32], index: 11, kind: input, shape index: {}]
  %s12 = inlined_call_operand.vmem [shape: bf16[2,32,16], index: 12, kind: input, shape index: {}]
  %s13 = inlined_call_operand.vmem [shape: f32[2,1,16], index: 13, kind: input, shape index: {}]
  %s14 = inlined_call_operand.vmem [shape: bf16[2,32,16], index: 14, kind: input, shape index: {}]
  %s15 = inlined_call_operand.vmem [shape: f32[2,1,16], index: 15, kind: input, shape index: {}]
  %s16 = inlined_call_operand.vmem [shape: bf16[2,32,16], index: 16, kind: input, shape index: {}]
  %s17 = inlined_call_operand.vmem [shape: f32[2,1,16], index: 17, kind: input, shape index: {}]
  %s18 = inlined_call_operand.vmem [shape: bf16[2,16,32], index: 18, kind: input, shape index: {}]
  %s19 = inlined_call_operand.vmem [shape: f32[1,32], index: 19, kind: input, shape index: {}]
  %s20 = inlined_call_operand.vmem [shape: f32[1,32], index: 20, kind: input, shape index: {}]
  %s21 = inlined_call_operand.vmem [shape: f32[1,32], index: 21, kind: input, shape index: {}]
  %s22 = inlined_call_operand.vmem [shape: bf16[32,64], index: 22, kind: input, shape index: {}]
  %s23 = inlined_call_operand.vmem [shape: f32[1,64], index: 23, kind: input, shape index: {}]
  %s24 = inlined_call_operand.vmem [shape: bf16[64,32], index: 24, kind: input, shape index: {}]
  %s25 = inlined_call_operand.vmem [shape: f32[1,32], index: 25, kind: input, shape index: {}]
  %s26 = inlined_call_operand.vmem [shape: f32[1,32], index: 26, kind: input, shape index: {}]
  %s27 = inlined_call_operand.vmem [shape: f32[1,32], index: 27, kind: input, shape index: {}]
  %s28 = inlined_call_operand.vmem [shape: f32[2,8,32], index: 28, kind: output, shape index: {}]
  %s29 = sld [smem:[#allocation0]]
  $region145: #{transformer_forward.7} parent=0
    _
  %s31 = ssub.s32 1, %s29
  %s32 = scalar_select 0, %s31, %s29
  loop: start=0, step=1, limit=4
  $region2: #{transformer_forward.7} parent=0 // loop_pre_header
    _
  $region3: #{transformer_forward.7} parent=0 // loop_header
    %s34 = sphi 0, %s38
    %p35 = scmp.ge.s32.totalorder %s34, 4
    %s44 = sphi 0, %s46
    %s47 = sphi 0, %s44
    %s48 = sphi 0, %s47
    %s64 = sphi 0, %s48
    %s70 = sphi 0, %s72
    %s73 = sphi 0, %s70
    %s74 = sphi 0, %s73
    %s90 = sphi 0, %s74
    %s94 = sphi 0, %s94
    %s96 = sphi 0, %s94
    %s97 = sphi 0, %s96
    %s111 = sphi 0, %s97
    %s115 = sphi 0, %s115
    %s117 = sphi 0, %s115
    %s118 = sphi 0, %s117
    %s132 = sphi 0, %s118
    %s136 = sphi 0, %s136
    %s138 = sphi 0, %s136
    %s139 = sphi 0, %s138
    %s153 = sphi 0, %s139
    %s157 = sphi 0, %s157
    %s159 = sphi 0, %s157
    %s160 = sphi 0, %s159
    %s174 = sphi 0, %s160
    %s178 = sphi 0, %s178
    %s180 = sphi 0, %s178
    %s181 = sphi 0, %s180
    %s195 = sphi 0, %s181
    %s199 = sphi 0, %s199
    %s201 = sphi 0, %s199
    %s202 = sphi 0, %s201
    %s216 = sphi 0, %s202
    %s220 = sphi 0, %s220
    %s222 = sphi 0, %s220
    %s223 = sphi 0, %s222
    %s237 = sphi 0, %s223
    %s241 = sphi 0, %s241
    %s243 = sphi 0, %s241
    %s244 = sphi 0, %s243
    %s258 = sphi 0, %s244
    %s262 = sphi 0, %s262
    %s264 = sphi 0, %s262
    %s265 = sphi 0, %s264
    %s279 = sphi 0, %s265
    %s283 = sphi 0, %s283
    %s285 = sphi 0, %s283
    %s286 = sphi 0, %s285
    %s300 = sphi 0, %s286
    %s304 = sphi 0, %s304
    %s306 = sphi 0, %s304
    %s307 = sphi 0, %s306
    %s321 = sphi 0, %s307
    %s325 = sphi 0, %s325
    %s327 = sphi 0, %s325
    %s328 = sphi 0, %s327
    %s342 = sphi 0, %s328
    %s346 = sphi 0, %s346
    %s348 = sphi 0, %s346
    %s349 = sphi 0, %s348
    %s363 = sphi 0, %s349
    %s367 = sphi 0, %s367
    %s369 = sphi 0, %s367
    %s370 = sphi 0, %s369
    %s384 = sphi 0, %s370
    %s388 = sphi 0, %s388
    %s390 = sphi 0, %s388
    %s391 = sphi 0, %s390
    %s405 = sphi 0, %s391
    %s409 = sphi 0, %s409
    %s411 = sphi 0, %s409
    %s412 = sphi 0, %s411
    %s426 = sphi 0, %s412
    %s430 = sphi 0, %s430
    %s432 = sphi 0, %s430
    %s433 = sphi 0, %s432
    %s447 = sphi 0, %s433
    %s451 = sphi 0, %s451
    %s453 = sphi 0, %s451
    %s454 = sphi 0, %s453
    %s468 = sphi 0, %s454
    %s472 = sphi 0, %s472
    %s474 = sphi 0, %s472
    %s475 = sphi 0, %s474
    %s489 = sphi 0, %s475
    %s493 = sphi 0, %s493
    %s495 = sphi 0, %s493
    %s496 = sphi 0, %s495
    %s510 = sphi 0, %s496
    %s514 = sphi 0, %s514
    %s516 = sphi 0, %s514
    %s517 = sphi 0, %s516
    %s531 = sphi 0, %s517
    %s535 = sphi 0, %s535
    %s537 = sphi 0, %s535
    %s538 = sphi 0, %s537
    %s552 = sphi 0, %s538
    %s556 = sphi 0, %s556
    %s558 = sphi 0, %s556
    %s559 = sphi 0, %s558
    %s573 = sphi 0, %s559
    %s577 = sphi 0, %s577
    %s579 = sphi 0, %s577
    %s580 = sphi 0, %s579
    %s594 = sphi 0, %s580
    %s598 = sphi 0, %s598
    %s600 = sphi 0, %s598
    %s601 = sphi 0, %s600
    %s615 = sphi 0, %s601
    %s619 = sphi 0, %s619
    %s621 = sphi 0, %s619
    %s622 = sphi 0, %s621
    %s636 = sphi 0, %s622
    %s642 = sphi 0, %s644
    %s645 = sphi 0, %s642
    %s646 = sphi 0, %s645
    %s662 = sphi 0, %s646
  $region4: #{transformer_forward.7} parent=0 // loop_header_branch
    %37 = sbr.rel (%p35) target = $region8
  $region5: #{transformer_forward.7} parent=0 // loop_body
    %s39 = ssub.s32 %s34, 1
    %s40 = ssub.s32 %s34, 2
    %s41 = sadd.s32 %s34, 1
    %s42 = ssub.s32 %s34, %s41
    %p43 = scmp.eq.s32.totalorder %s42, 0
    %s45 = sadd.s32 %s44, 1
    %s46 = scalar_select %p43, %s44, %s45
    %p49 = pneg %p43
    %p50 = scmp.eq.s32.totalorder %s34, 1
    %p51 = por %p49, %p50
    %p52 = scmp.ne.s32.totalorder %s44, %s47
    %p53 = scmp.eq.s32.totalorder %s34, 0
    %p54 = por %p52, %p53
    %p55 = scmp.ne.s32.totalorder %s44, %s47
    %p56 = scmp.eq.s32.totalorder %s39, 1
    %p57 = por %p55, %p56
    %p58 = scmp.ne.s32.totalorder %s47, %s48
    %p59 = scmp.eq.s32.totalorder %s39, 0
    %p60 = por %p58, %p59
    %p61 = scmp.ne.s32.totalorder %s47, %s48
    %p62 = scmp.eq.s32.totalorder %s40, 1
    %p63 = por %p61, %p62
    %p65 = scmp.ne.s32.totalorder %s48, %s64
    %p66 = scmp.eq.s32.totalorder %s40, 0
    %p67 = por %p65, %p66
    %s68 = ssub.s32 %s34, %s41
    %p69 = scmp.eq.s32.totalorder %s68, 0
    %s71 = sadd.s32 %s70, 1
    %s72 = scalar_select %p69, %s70, %s71
    %p75 = pneg %p69
    %p76 = scmp.eq.s32.totalorder %s34, 1
    %p77 = por %p75, %p76
    %p78 = scmp.ne.s32.totalorder %s70, %s73
    %p79 = scmp.eq.s32.totalorder %s34, 0
    %p80 = por %p78, %p79
    %p81 = scmp.ne.s32.totalorder %s70, %s73
    %p82 = scmp.eq.s32.totalorder %s39, 1
    %p83 = por %p81, %p82
    %p84 = scmp.ne.s32.totalorder %s73, %s74
    %p85 = scmp.eq.s32.totalorder %s39, 0
    %p86 = por %p84, %p85
    %p87 = scmp.ne.s32.totalorder %s73, %s74
    %p88 = scmp.eq.s32.totalorder %s40, 1
    %p89 = por %p87, %p88
    %p91 = scmp.ne.s32.totalorder %s74, %s90
    %p92 = scmp.eq.s32.totalorder %s40, 0
    %p93 = por %p91, %p92
    %s95 = sadd.s32 %s94, 1
    %p98 = scmp.eq.s32.totalorder %s34, 1
    %p99 = scmp.ne.s32.totalorder %s94, %s96
    %p100 = scmp.eq.s32.totalorder %s34, 0
    %p101 = por %p99, %p100
    %p102 = scmp.ne.s32.totalorder %s94, %s96
    %p103 = scmp.eq.s32.totalorder %s39, 1
    %p104 = por %p102, %p103
    %p105 = scmp.ne.s32.totalorder %s96, %s97
    %p106 = scmp.eq.s32.totalorder %s39, 0
    %p107 = por %p105, %p106
    %p108 = scmp.ne.s32.totalorder %s96, %s97
    %p109 = scmp.eq.s32.totalorder %s40, 1
    %p110 = por %p108, %p109
    %p112 = scmp.ne.s32.totalorder %s97, %s111
    %p113 = scmp.eq.s32.totalorder %s40, 0
    %p114 = por %p112, %p113
    %s116 = sadd.s32 %s115, 1
    %p119 = scmp.eq.s32.totalorder %s34, 1
    %p120 = scmp.ne.s32.totalorder %s115, %s117
    %p121 = scmp.eq.s32.totalorder %s34, 0
    %p122 = por %p120, %p121
    %p123 = scmp.ne.s32.totalorder %s115, %s117
    %p124 = scmp.eq.s32.totalorder %s39, 1
    %p125 = por %p123, %p124
    %p126 = scmp.ne.s32.totalorder %s117, %s118
    %p127 = scmp.eq.s32.totalorder %s39, 0
    %p128 = por %p126, %p127
    %p129 = scmp.ne.s32.totalorder %s117, %s118
    %p130 = scmp.eq.s32.totalorder %s40, 1
    %p131 = por %p129, %p130
    %p133 = scmp.ne.s32.totalorder %s118, %s132
    %p134 = scmp.eq.s32.totalorder %s40, 0
    %p135 = por %p133, %p134
    %s137 = sadd.s32 %s136, 1
    %p140 = scmp.eq.s32.totalorder %s34, 1
    %p141 = scmp.ne.s32.totalorder %s136, %s138
    %p142 = scmp.eq.s32.totalorder %s34, 0
    %p143 = por %p141, %p142
    %p144 = scmp.ne.s32.totalorder %s136, %s138
    %p145 = scmp.eq.s32.totalorder %s39, 1
    %p146 = por %p144, %p145
    %p147 = scmp.ne.s32.totalorder %s138, %s139
    %p148 = scmp.eq.s32.totalorder %s39, 0
    %p149 = por %p147, %p148
    %p150 = scmp.ne.s32.totalorder %s138, %s139
    %p151 = scmp.eq.s32.totalorder %s40, 1
    %p152 = por %p150, %p151
    %p154 = scmp.ne.s32.totalorder %s139, %s153
    %p155 = scmp.eq.s32.totalorder %s40, 0
    %p156 = por %p154, %p155
    %s158 = sadd.s32 %s157, 1
    %p161 = scmp.eq.s32.totalorder %s34, 1
    %p162 = scmp.ne.s32.totalorder %s157, %s159
    %p163 = scmp.eq.s32.totalorder %s34, 0
    %p164 = por %p162, %p163
    %p165 = scmp.ne.s32.totalorder %s157, %s159
    %p166 = scmp.eq.s32.totalorder %s39, 1
    %p167 = por %p165, %p166
    %p168 = scmp.ne.s32.totalorder %s159, %s160
    %p169 = scmp.eq.s32.totalorder %s39, 0
    %p170 = por %p168, %p169
    %p171 = scmp.ne.s32.totalorder %s159, %s160
    %p172 = scmp.eq.s32.totalorder %s40, 1
    %p173 = por %p171, %p172
    %p175 = scmp.ne.s32.totalorder %s160, %s174
    %p176 = scmp.eq.s32.totalorder %s40, 0
    %p177 = por %p175, %p176
    %s179 = sadd.s32 %s178, 1
    %p182 = scmp.eq.s32.totalorder %s34, 1
    %p183 = scmp.ne.s32.totalorder %s178, %s180
    %p184 = scmp.eq.s32.totalorder %s34, 0
    %p185 = por %p183, %p184
    %p186 = scmp.ne.s32.totalorder %s178, %s180
    %p187 = scmp.eq.s32.totalorder %s39, 1
    %p188 = por %p186, %p187
    %p189 = scmp.ne.s32.totalorder %s180, %s181
    %p190 = scmp.eq.s32.totalorder %s39, 0
    %p191 = por %p189, %p190
    %p192 = scmp.ne.s32.totalorder %s180, %s181
    %p193 = scmp.eq.s32.totalorder %s40, 1
    %p194 = por %p192, %p193
    %p196 = scmp.ne.s32.totalorder %s181, %s195
    %p197 = scmp.eq.s32.totalorder %s40, 0
    %p198 = por %p196, %p197
    %s200 = sadd.s32 %s199, 1
    %p203 = scmp.eq.s32.totalorder %s34, 1
    %p204 = scmp.ne.s32.totalorder %s199, %s201
    %p205 = scmp.eq.s32.totalorder %s34, 0
    %p206 = por %p204, %p205
    %p207 = scmp.ne.s32.totalorder %s199, %s201
    %p208 = scmp.eq.s32.totalorder %s39, 1
    %p209 = por %p207, %p208
    %p210 = scmp.ne.s32.totalorder %s201, %s202
    %p211 = scmp.eq.s32.totalorder %s39, 0
    %p212 = por %p210, %p211
    %p213 = scmp.ne.s32.totalorder %s201, %s202
    %p214 = scmp.eq.s32.totalorder %s40, 1
    %p215 = por %p213, %p214
    %p217 = scmp.ne.s32.totalorder %s202, %s216
    %p218 = scmp.eq.s32.totalorder %s40, 0
    %p219 = por %p217, %p218
    %s221 = sadd.s32 %s220, 1
    %p224 = scmp.eq.s32.totalorder %s34, 1
    %p225 = scmp.ne.s32.totalorder %s220, %s222
    %p226 = scmp.eq.s32.totalorder %s34, 0
    %p227 = por %p225, %p226
    %p228 = scmp.ne.s32.totalorder %s220, %s222
    %p229 = scmp.eq.s32.totalorder %s39, 1
    %p230 = por %p228, %p229
    %p231 = scmp.ne.s32.totalorder %s222, %s223
    %p232 = scmp.eq.s32.totalorder %s39, 0
    %p233 = por %p231, %p232
    %p234 = scmp.ne.s32.totalorder %s222, %s223
    %p235 = scmp.eq.s32.totalorder %s40, 1
    %p236 = por %p234, %p235
    %p238 = scmp.ne.s32.totalorder %s223, %s237
    %p239 = scmp.eq.s32.totalorder %s40, 0
    %p240 = por %p238, %p239
    %s242 = sadd.s32 %s241, 1
    %p245 = scmp.eq.s32.totalorder %s34, 1
    %p246 = scmp.ne.s32.totalorder %s241, %s243
    %p247 = scmp.eq.s32.totalorder %s34, 0
    %p248 = por %p246, %p247
    %p249 = scmp.ne.s32.totalorder %s241, %s243
    %p250 = scmp.eq.s32.totalorder %s39, 1
    %p251 = por %p249, %p250
    %p252 = scmp.ne.s32.totalorder %s243, %s244
    %p253 = scmp.eq.s32.totalorder %s39, 0
    %p254 = por %p252, %p253
    %p255 = scmp.ne.s32.totalorder %s243, %s244
    %p256 = scmp.eq.s32.totalorder %s40, 1
    %p257 = por %p255, %p256
    %p259 = scmp.ne.s32.totalorder %s244, %s258
    %p260 = scmp.eq.s32.totalorder %s40, 0
    %p261 = por %p259, %p260
    %s263 = sadd.s32 %s262, 1
    %p266 = scmp.eq.s32.totalorder %s34, 1
    %p267 = scmp.ne.s32.totalorder %s262, %s264
    %p268 = scmp.eq.s32.totalorder %s34, 0
    %p269 = por %p267, %p268
    %p270 = scmp.ne.s32.totalorder %s262, %s264
    %p271 = scmp.eq.s32.totalorder %s39, 1
    %p272 = por %p270, %p271
    %p273 = scmp.ne.s32.totalorder %s264, %s265
    %p274 = scmp.eq.s32.totalorder %s39, 0
    %p275 = por %p273, %p274
    %p276 = scmp.ne.s32.totalorder %s264, %s265
    %p277 = scmp.eq.s32.totalorder %s40, 1
    %p278 = por %p276, %p277
    %p280 = scmp.ne.s32.totalorder %s265, %s279
    %p281 = scmp.eq.s32.totalorder %s40, 0
    %p282 = por %p280, %p281
    %s284 = sadd.s32 %s283, 1
    %p287 = scmp.eq.s32.totalorder %s34, 1
    %p288 = scmp.ne.s32.totalorder %s283, %s285
    %p289 = scmp.eq.s32.totalorder %s34, 0
    %p290 = por %p288, %p289
    %p291 = scmp.ne.s32.totalorder %s283, %s285
    %p292 = scmp.eq.s32.totalorder %s39, 1
    %p293 = por %p291, %p292
    %p294 = scmp.ne.s32.totalorder %s285, %s286
    %p295 = scmp.eq.s32.totalorder %s39, 0
    %p296 = por %p294, %p295
    %p297 = scmp.ne.s32.totalorder %s285, %s286
    %p298 = scmp.eq.s32.totalorder %s40, 1
    %p299 = por %p297, %p298
    %p301 = scmp.ne.s32.totalorder %s286, %s300
    %p302 = scmp.eq.s32.totalorder %s40, 0
    %p303 = por %p301, %p302
    %s305 = sadd.s32 %s304, 1
    %p308 = scmp.eq.s32.totalorder %s34, 1
    %p309 = scmp.ne.s32.totalorder %s304, %s306
    %p310 = scmp.eq.s32.totalorder %s34, 0
    %p311 = por %p309, %p310
    %p312 = scmp.ne.s32.totalorder %s304, %s306
    %p313 = scmp.eq.s32.totalorder %s39, 1
    %p314 = por %p312, %p313
    %p315 = scmp.ne.s32.totalorder %s306, %s307
    %p316 = scmp.eq.s32.totalorder %s39, 0
    %p317 = por %p315, %p316
    %p318 = scmp.ne.s32.totalorder %s306, %s307
    %p319 = scmp.eq.s32.totalorder %s40, 1
    %p320 = por %p318, %p319
    %p322 = scmp.ne.s32.totalorder %s307, %s321
    %p323 = scmp.eq.s32.totalorder %s40, 0
    %p324 = por %p322, %p323
    %s326 = sadd.s32 %s325, 1
    %p329 = scmp.eq.s32.totalorder %s34, 1
    %p330 = scmp.ne.s32.totalorder %s325, %s327
    %p331 = scmp.eq.s32.totalorder %s34, 0
    %p332 = por %p330, %p331
    %p333 = scmp.ne.s32.totalorder %s325, %s327
    %p334 = scmp.eq.s32.totalorder %s39, 1
    %p335 = por %p333, %p334
    %p336 = scmp.ne.s32.totalorder %s327, %s328
    %p337 = scmp.eq.s32.totalorder %s39, 0
    %p338 = por %p336, %p337
    %p339 = scmp.ne.s32.totalorder %s327, %s328
    %p340 = scmp.eq.s32.totalorder %s40, 1
    %p341 = por %p339, %p340
    %p343 = scmp.ne.s32.totalorder %s328, %s342
    %p344 = scmp.eq.s32.totalorder %s40, 0
    %p345 = por %p343, %p344
    %s347 = sadd.s32 %s346, 1
    %p350 = scmp.eq.s32.totalorder %s34, 1
    %p351 = scmp.ne.s32.totalorder %s346, %s348
    %p352 = scmp.eq.s32.totalorder %s34, 0
    %p353 = por %p351, %p352
    %p354 = scmp.ne.s32.totalorder %s346, %s348
    %p355 = scmp.eq.s32.totalorder %s39, 1
    %p356 = por %p354, %p355
    %p357 = scmp.ne.s32.totalorder %s348, %s349
    %p358 = scmp.eq.s32.totalorder %s39, 0
    %p359 = por %p357, %p358
    %p360 = scmp.ne.s32.totalorder %s348, %s349
    %p361 = scmp.eq.s32.totalorder %s40, 1
    %p362 = por %p360, %p361
    %p364 = scmp.ne.s32.totalorder %s349, %s363
    %p365 = scmp.eq.s32.totalorder %s40, 0
    %p366 = por %p364, %p365
    %s368 = sadd.s32 %s367, 1
    %p371 = scmp.eq.s32.totalorder %s34, 1
    %p372 = scmp.ne.s32.totalorder %s367, %s369
    %p373 = scmp.eq.s32.totalorder %s34, 0
    %p374 = por %p372, %p373
    %p375 = scmp.ne.s32.totalorder %s367, %s369
    %p376 = scmp.eq.s32.totalorder %s39, 1
    %p377 = por %p375, %p376
    %p378 = scmp.ne.s32.totalorder %s369, %s370
    %p379 = scmp.eq.s32.totalorder %s39, 0
    %p380 = por %p378, %p379
    %p381 = scmp.ne.s32.totalorder %s369, %s370
    %p382 = scmp.eq.s32.totalorder %s40, 1
    %p383 = por %p381, %p382
    %p385 = scmp.ne.s32.totalorder %s370, %s384
    %p386 = scmp.eq.s32.totalorder %s40, 0
    %p387 = por %p385, %p386
    %s389 = sadd.s32 %s388, 1
    %p392 = scmp.eq.s32.totalorder %s34, 1
    %p393 = scmp.ne.s32.totalorder %s388, %s390
    %p394 = scmp.eq.s32.totalorder %s34, 0
    %p395 = por %p393, %p394
    %p396 = scmp.ne.s32.totalorder %s388, %s390
    %p397 = scmp.eq.s32.totalorder %s39, 1
    %p398 = por %p396, %p397
    %p399 = scmp.ne.s32.totalorder %s390, %s391
    %p400 = scmp.eq.s32.totalorder %s39, 0
    %p401 = por %p399, %p400
    %p402 = scmp.ne.s32.totalorder %s390, %s391
    %p403 = scmp.eq.s32.totalorder %s40, 1
    %p404 = por %p402, %p403
    %p406 = scmp.ne.s32.totalorder %s391, %s405
    %p407 = scmp.eq.s32.totalorder %s40, 0
    %p408 = por %p406, %p407
    %s410 = sadd.s32 %s409, 1
    %p413 = scmp.eq.s32.totalorder %s34, 1
    %p414 = scmp.ne.s32.totalorder %s409, %s411
    %p415 = scmp.eq.s32.totalorder %s34, 0
    %p416 = por %p414, %p415
    %p417 = scmp.ne.s32.totalorder %s409, %s411
    %p418 = scmp.eq.s32.totalorder %s39, 1
    %p419 = por %p417, %p418
    %p420 = scmp.ne.s32.totalorder %s411, %s412
    %p421 = scmp.eq.s32.totalorder %s39, 0
    %p422 = por %p420, %p421
    %p423 = scmp.ne.s32.totalorder %s411, %s412
    %p424 = scmp.eq.s32.totalorder %s40, 1
    %p425 = por %p423, %p424
    %p427 = scmp.ne.s32.totalorder %s412, %s426
    %p428 = scmp.eq.s32.totalorder %s40, 0
    %p429 = por %p427, %p428
    %s431 = sadd.s32 %s430, 1
    %p434 = scmp.eq.s32.totalorder %s34, 1
    %p435 = scmp.ne.s32.totalorder %s430, %s432
    %p436 = scmp.eq.s32.totalorder %s34, 0
    %p437 = por %p435, %p436
    %p438 = scmp.ne.s32.totalorder %s430, %s432
    %p439 = scmp.eq.s32.totalorder %s39, 1
    %p440 = por %p438, %p439
    %p441 = scmp.ne.s32.totalorder %s432, %s433
    %p442 = scmp.eq.s32.totalorder %s39, 0
    %p443 = por %p441, %p442
    %p444 = scmp.ne.s32.totalorder %s432, %s433
    %p445 = scmp.eq.s32.totalorder %s40, 1
    %p446 = por %p444, %p445
    %p448 = scmp.ne.s32.totalorder %s433, %s447
    %p449 = scmp.eq.s32.totalorder %s40, 0
    %p450 = por %p448, %p449
    %s452 = sadd.s32 %s451, 1
    %p455 = scmp.eq.s32.totalorder %s34, 1
    %p456 = scmp.ne.s32.totalorder %s451, %s453
    %p457 = scmp.eq.s32.totalorder %s34, 0
    %p458 = por %p456, %p457
    %p459 = scmp.ne.s32.totalorder %s451, %s453
    %p460 = scmp.eq.s32.totalorder %s39, 1
    %p461 = por %p459, %p460
    %p462 = scmp.ne.s32.totalorder %s453, %s454
    %p463 = scmp.eq.s32.totalorder %s39, 0
    %p464 = por %p462, %p463
    %p465 = scmp.ne.s32.totalorder %s453, %s454
    %p466 = scmp.eq.s32.totalorder %s40, 1
    %p467 = por %p465, %p466
    %p469 = scmp.ne.s32.totalorder %s454, %s468
    %p470 = scmp.eq.s32.totalorder %s40, 0
    %p471 = por %p469, %p470
    %s473 = sadd.s32 %s472, 1
    %p476 = scmp.eq.s32.totalorder %s34, 1
    %p477 = scmp.ne.s32.totalorder %s472, %s474
    %p478 = scmp.eq.s32.totalorder %s34, 0
    %p479 = por %p477, %p478
    %p480 = scmp.ne.s32.totalorder %s472, %s474
    %p481 = scmp.eq.s32.totalorder %s39, 1
    %p482 = por %p480, %p481
    %p483 = scmp.ne.s32.totalorder %s474, %s475
    %p484 = scmp.eq.s32.totalorder %s39, 0
    %p485 = por %p483, %p484
    %p486 = scmp.ne.s32.totalorder %s474, %s475
    %p487 = scmp.eq.s32.totalorder %s40, 1
    %p488 = por %p486, %p487
    %p490 = scmp.ne.s32.totalorder %s475, %s489
    %p491 = scmp.eq.s32.totalorder %s40, 0
    %p492 = por %p490, %p491
    %s494 = sadd.s32 %s493, 1
    %p497 = scmp.eq.s32.totalorder %s34, 1
    %p498 = scmp.ne.s32.totalorder %s493, %s495
    %p499 = scmp.eq.s32.totalorder %s34, 0
    %p500 = por %p498, %p499
    %p501 = scmp.ne.s32.totalorder %s493, %s495
    %p502 = scmp.eq.s32.totalorder %s39, 1
    %p503 = por %p501, %p502
    %p504 = scmp.ne.s32.totalorder %s495, %s496
    %p505 = scmp.eq.s32.totalorder %s39, 0
    %p506 = por %p504, %p505
    %p507 = scmp.ne.s32.totalorder %s495, %s496
    %p508 = scmp.eq.s32.totalorder %s40, 1
    %p509 = por %p507, %p508
    %p511 = scmp.ne.s32.totalorder %s496, %s510
    %p512 = scmp.eq.s32.totalorder %s40, 0
    %p513 = por %p511, %p512
    %s515 = sadd.s32 %s514, 1
    %p518 = scmp.eq.s32.totalorder %s34, 1
    %p519 = scmp.ne.s32.totalorder %s514, %s516
    %p520 = scmp.eq.s32.totalorder %s34, 0
    %p521 = por %p519, %p520
    %p522 = scmp.ne.s32.totalorder %s514, %s516
    %p523 = scmp.eq.s32.totalorder %s39, 1
    %p524 = por %p522, %p523
    %p525 = scmp.ne.s32.totalorder %s516, %s517
    %p526 = scmp.eq.s32.totalorder %s39, 0
    %p527 = por %p525, %p526
    %p528 = scmp.ne.s32.totalorder %s516, %s517
    %p529 = scmp.eq.s32.totalorder %s40, 1
    %p530 = por %p528, %p529
    %p532 = scmp.ne.s32.totalorder %s517, %s531
    %p533 = scmp.eq.s32.totalorder %s40, 0
    %p534 = por %p532, %p533
    %s536 = sadd.s32 %s535, 1
    %p539 = scmp.eq.s32.totalorder %s34, 1
    %p540 = scmp.ne.s32.totalorder %s535, %s537
    %p541 = scmp.eq.s32.totalorder %s34, 0
    %p542 = por %p540, %p541
    %p543 = scmp.ne.s32.totalorder %s535, %s537
    %p544 = scmp.eq.s32.totalorder %s39, 1
    %p545 = por %p543, %p544
    %p546 = scmp.ne.s32.totalorder %s537, %s538
    %p547 = scmp.eq.s32.totalorder %s39, 0
    %p548 = por %p546, %p547
    %p549 = scmp.ne.s32.totalorder %s537, %s538
    %p550 = scmp.eq.s32.totalorder %s40, 1
    %p551 = por %p549, %p550
    %p553 = scmp.ne.s32.totalorder %s538, %s552
    %p554 = scmp.eq.s32.totalorder %s40, 0
    %p555 = por %p553, %p554
    %s557 = sadd.s32 %s556, 1
    %p560 = scmp.eq.s32.totalorder %s34, 1
    %p561 = scmp.ne.s32.totalorder %s556, %s558
    %p562 = scmp.eq.s32.totalorder %s34, 0
    %p563 = por %p561, %p562
    %p564 = scmp.ne.s32.totalorder %s556, %s558
    %p565 = scmp.eq.s32.totalorder %s39, 1
    %p566 = por %p564, %p565
    %p567 = scmp.ne.s32.totalorder %s558, %s559
    %p568 = scmp.eq.s32.totalorder %s39, 0
    %p569 = por %p567, %p568
    %p570 = scmp.ne.s32.totalorder %s558, %s559
    %p571 = scmp.eq.s32.totalorder %s40, 1
    %p572 = por %p570, %p571
    %p574 = scmp.ne.s32.totalorder %s559, %s573
    %p575 = scmp.eq.s32.totalorder %s40, 0
    %p576 = por %p574, %p575
    %s578 = sadd.s32 %s577, 1
    %p581 = scmp.eq.s32.totalorder %s34, 1
    %p582 = scmp.ne.s32.totalorder %s577, %s579
    %p583 = scmp.eq.s32.totalorder %s34, 0
    %p584 = por %p582, %p583
    %p585 = scmp.ne.s32.totalorder %s577, %s579
    %p586 = scmp.eq.s32.totalorder %s39, 1
    %p587 = por %p585, %p586
    %p588 = scmp.ne.s32.totalorder %s579, %s580
    %p589 = scmp.eq.s32.totalorder %s39, 0
    %p590 = por %p588, %p589
    %p591 = scmp.ne.s32.totalorder %s579, %s580
    %p592 = scmp.eq.s32.totalorder %s40, 1
    %p593 = por %p591, %p592
    %p595 = scmp.ne.s32.totalorder %s580, %s594
    %p596 = scmp.eq.s32.totalorder %s40, 0
    %p597 = por %p595, %p596
    %s599 = sadd.s32 %s598, 1
    %p602 = scmp.eq.s32.totalorder %s34, 1
    %p603 = scmp.ne.s32.totalorder %s598, %s600
    %p604 = scmp.eq.s32.totalorder %s34, 0
    %p605 = por %p603, %p604
    %p606 = scmp.ne.s32.totalorder %s598, %s600
    %p607 = scmp.eq.s32.totalorder %s39, 1
    %p608 = por %p606, %p607
    %p609 = scmp.ne.s32.totalorder %s600, %s601
    %p610 = scmp.eq.s32.totalorder %s39, 0
    %p611 = por %p609, %p610
    %p612 = scmp.ne.s32.totalorder %s600, %s601
    %p613 = scmp.eq.s32.totalorder %s40, 1
    %p614 = por %p612, %p613
    %p616 = scmp.ne.s32.totalorder %s601, %s615
    %p617 = scmp.eq.s32.totalorder %s40, 0
    %p618 = por %p616, %p617
    %s620 = sadd.s32 %s619, 1
    %p623 = scmp.eq.s32.totalorder %s34, 1
    %p624 = scmp.ne.s32.totalorder %s619, %s621
    %p625 = scmp.eq.s32.totalorder %s34, 0
    %p626 = por %p624, %p625
    %p627 = scmp.ne.s32.totalorder %s619, %s621
    %p628 = scmp.eq.s32.totalorder %s39, 1
    %p629 = por %p627, %p628
    %p630 = scmp.ne.s32.totalorder %s621, %s622
    %p631 = scmp.eq.s32.totalorder %s39, 0
    %p632 = por %p630, %p631
    %p633 = scmp.ne.s32.totalorder %s621, %s622
    %p634 = scmp.eq.s32.totalorder %s40, 1
    %p635 = por %p633, %p634
    %p637 = scmp.ne.s32.totalorder %s622, %s636
    %p638 = scmp.eq.s32.totalorder %s40, 0
    %p639 = por %p637, %p638
    %s640 = ssub.s32 %s34, %s41
    %p641 = scmp.eq.s32.totalorder %s640, 0
    %s643 = sadd.s32 %s642, 1
    %s644 = scalar_select %p641, %s642, %s643
    %p647 = pneg %p641
    %p648 = scmp.eq.s32.totalorder %s34, 1
    %p649 = por %p647, %p648
    %p650 = scmp.ne.s32.totalorder %s642, %s645
    %p651 = scmp.eq.s32.totalorder %s34, 0
    %p652 = por %p650, %p651
    %p653 = scmp.ne.s32.totalorder %s642, %s645
    %p654 = scmp.eq.s32.totalorder %s39, 1
    %p655 = por %p653, %p654
    %p656 = scmp.ne.s32.totalorder %s645, %s646
    %p657 = scmp.eq.s32.totalorder %s39, 0
    %p658 = por %p656, %p657
    %p659 = scmp.ne.s32.totalorder %s645, %s646
    %p660 = scmp.eq.s32.totalorder %s40, 1
    %p661 = por %p659, %p660
    %p663 = scmp.ne.s32.totalorder %s646, %s662
    %p664 = scmp.eq.s32.totalorder %s40, 0
    %p665 = por %p663, %p664
    %p666 = scmp.le.s32.totalorder 1, %s34
    %p667 = scmp.lt.s32.totalorder %s34, 3
    %p668 = pnand %p666, %p667
    %p669 = pneg %p668
    // Predicated region
    $region9: #{transformer_forward.7} parent=5 // pred_check
      _
    $region10: #{transformer_forward.7} parent=5 // pred_check_branch
      %671 = sbr.rel (%p668) target = $region12
    $region11: #{transformer_forward.7} parent=5 // pred_region
      %s672 = ssub.s32 %s34, 1
      // Predicated region
      $region13: #{transformer_forward.7} parent=11 // pred_check
        %p673 = pneg %p107
      $region14: #{transformer_forward.7} parent=11 // pred_check_branch
        %675 = sbr.rel (%p673) target = $region16
      $region15: #{transformer_forward.7} parent=11 // pred_region
        _
      $region16: #{transformer_forward.7} parent=11 // pred_fallthru
        _
      // Predicated region
      $region17: #{transformer_forward.7} parent=11 // pred_check
        %p676 = pneg %p128
      $region18: #{transformer_forward.7} parent=11 // pred_check_branch
        %678 = sbr.rel (%p676) target = $region20
      $region19: #{transformer_forward.7} parent=11 // pred_region
        _
      $region20: #{transformer_forward.7} parent=11 // pred_fallthru
        _
      // Predicated region
      $region21: #{transformer_forward.7} parent=11 // pred_check
        %p679 = pneg %p149
      $region22: #{transformer_forward.7} parent=11 // pred_check_branch
        %681 = sbr.rel (%p679) target = $region24
      $region23: #{transformer_forward.7} parent=11 // pred_region
        _
      $region24: #{transformer_forward.7} parent=11 // pred_fallthru
        _
      // Predicated region
      $region25: #{transformer_forward.7} parent=11 // pred_check
        %p682 = pneg %p170
      $region26: #{transformer_forward.7} parent=11 // pred_check_branch
        %684 = sbr.rel (%p682) target = $region28
      $region27: #{transformer_forward.7} parent=11 // pred_region
        _
      $region28: #{transformer_forward.7} parent=11 // pred_fallthru
        _
      // Predicated region
      $region29: #{transformer_forward.7} parent=11 // pred_check
        %p685 = pneg %p191
      $region30: #{transformer_forward.7} parent=11 // pred_check_branch
        %687 = sbr.rel (%p685) target = $region32
      $region31: #{transformer_forward.7} parent=11 // pred_region
        _
      $region32: #{transformer_forward.7} parent=11 // pred_fallthru
        _
      // Predicated region
      $region33: #{transformer_forward.7} parent=11 // pred_check
        %p688 = pneg %p212
      $region34: #{transformer_forward.7} parent=11 // pred_check_branch
        %690 = sbr.rel (%p688) target = $region36
      $region35: #{transformer_forward.7} parent=11 // pred_region
        _
      $region36: #{transformer_forward.7} parent=11 // pred_fallthru
        _
      // Predicated region
      $region37: #{transformer_forward.7} parent=11 // pred_check
        %p691 = pneg %p233
      $region38: #{transformer_forward.7} parent=11 // pred_check_branch
        %693 = sbr.rel (%p691) target = $region40
      $region39: #{transformer_forward.7} parent=11 // pred_region
        _
      $region40: #{transformer_forward.7} parent=11 // pred_fallthru
        _
      // Predicated region
      $region41: #{transformer_forward.7} parent=11 // pred_check
        %p694 = pneg %p254
      $region42: #{transformer_forward.7} parent=11 // pred_check_branch
        %696 = sbr.rel (%p694) target = $region44
      $region43: #{transformer_forward.7} parent=11 // pred_region
        _
      $region44: #{transformer_forward.7} parent=11 // pred_fallthru
        _
      // Predicated region
      $region45: #{transformer_forward.7} parent=11 // pred_check
        %p697 = pneg %p275
      $region46: #{transformer_forward.7} parent=11 // pred_check_branch
        %699 = sbr.rel (%p697) target = $region48
      $region47: #{transformer_forward.7} parent=11 // pred_region
        _
      $region48: #{transformer_forward.7} parent=11 // pred_fallthru
        _
      // Predicated region
      $region49: #{transformer_forward.7} parent=11 // pred_check
        %p700 = pneg %p296
      $region50: #{transformer_forward.7} parent=11 // pred_check_branch
        %702 = sbr.rel (%p700) target = $region52
      $region51: #{transformer_forward.7} parent=11 // pred_region
        _
      $region52: #{transformer_forward.7} parent=11 // pred_fallthru
        _
      // Predicated region
      $region53: #{transformer_forward.7} parent=11 // pred_check
        %p703 = pneg %p317
      $region54: #{transformer_forward.7} parent=11 // pred_check_branch
        %705 = sbr.rel (%p703) target = $region56
      $region55: #{transformer_forward.7} parent=11 // pred_region
        _
      $region56: #{transformer_forward.7} parent=11 // pred_fallthru
        _
      // Predicated region
      $region57: #{transformer_forward.7} parent=11 // pred_check
        %p706 = pneg %p338
      $region58: #{transformer_forward.7} parent=11 // pred_check_branch
        %708 = sbr.rel (%p706) target = $region60
      $region59: #{transformer_forward.7} parent=11 // pred_region
        _
      $region60: #{transformer_forward.7} parent=11 // pred_fallthru
        _
      // Predicated region
      $region61: #{transformer_forward.7} parent=11 // pred_check
        %p709 = pneg %p359
      $region62: #{transformer_forward.7} parent=11 // pred_check_branch
        %711 = sbr.rel (%p709) target = $region64
      $region63: #{transformer_forward.7} parent=11 // pred_region
        _
      $region64: #{transformer_forward.7} parent=11 // pred_fallthru
        _
      // Predicated region
      $region65: #{transformer_forward.7} parent=11 // pred_check
        %p712 = pneg %p380
      $region66: #{transformer_forward.7} parent=11 // pred_check_branch
        %714 = sbr.rel (%p712) target = $region68
      $region67: #{transformer_forward.7} parent=11 // pred_region
        _
      $region68: #{transformer_forward.7} parent=11 // pred_fallthru
        _
      // Predicated region
      $region69: #{transformer_forward.7} parent=11 // pred_check
        %p715 = pneg %p401
      $region70: #{transformer_forward.7} parent=11 // pred_check_branch
        %717 = sbr.rel (%p715) target = $region72
      $region71: #{transformer_forward.7} parent=11 // pred_region
        _
      $region72: #{transformer_forward.7} parent=11 // pred_fallthru
        _
      // Predicated region
      $region73: #{transformer_forward.7} parent=11 // pred_check
        %p718 = pneg %p422
      $region74: #{transformer_forward.7} parent=11 // pred_check_branch
        %720 = sbr.rel (%p718) target = $region76
      $region75: #{transformer_forward.7} parent=11 // pred_region
        _
      $region76: #{transformer_forward.7} parent=11 // pred_fallthru
        _
      // Predicated region
      $region77: #{transformer_forward.7} parent=11 // pred_check
        %p721 = pneg %p443
      $region78: #{transformer_forward.7} parent=11 // pred_check_branch
        %723 = sbr.rel (%p721) target = $region80
      $region79: #{transformer_forward.7} parent=11 // pred_region
        _
      $region80: #{transformer_forward.7} parent=11 // pred_fallthru
        _
      // Predicated region
      $region81: #{transformer_forward.7} parent=11 // pred_check
        %p724 = pneg %p464
      $region82: #{transformer_forward.7} parent=11 // pred_check_branch
        %726 = sbr.rel (%p724) target = $region84
      $region83: #{transformer_forward.7} parent=11 // pred_region
        _
      $region84: #{transformer_forward.7} parent=11 // pred_fallthru
        _
      // Predicated region
      $region85: #{transformer_forward.7} parent=11 // pred_check
        %p727 = pneg %p485
      $region86: #{transformer_forward.7} parent=11 // pred_check_branch
        %729 = sbr.rel (%p727) target = $region88
      $region87: #{transformer_forward.7} parent=11 // pred_region
        _
      $region88: #{transformer_forward.7} parent=11 // pred_fallthru
        _
      // Predicated region
      $region89: #{transformer_forward.7} parent=11 // pred_check
        %p730 = pneg %p506
      $region90: #{transformer_forward.7} parent=11 // pred_check_branch
        %732 = sbr.rel (%p730) target = $region92
      $region91: #{transformer_forward.7} parent=11 // pred_region
        _
      $region92: #{transformer_forward.7} parent=11 // pred_fallthru
        _
      // Predicated region
      $region93: #{transformer_forward.7} parent=11 // pred_check
        %p733 = pneg %p527
      $region94: #{transformer_forward.7} parent=11 // pred_check_branch
        %735 = sbr.rel (%p733) target = $region96
      $region95: #{transformer_forward.7} parent=11 // pred_region
        _
      $region96: #{transformer_forward.7} parent=11 // pred_fallthru
        _
      // Predicated region
      $region97: #{transformer_forward.7} parent=11 // pred_check
        %p736 = pneg %p548
      $region98: #{transformer_forward.7} parent=11 // pred_check_branch
        %738 = sbr.rel (%p736) target = $region100
      $region99: #{transformer_forward.7} parent=11 // pred_region
        _
      $region100: #{transformer_forward.7} parent=11 // pred_fallthru
        _
      // Predicated region
      $region101: #{transformer_forward.7} parent=11 // pred_check
        %p739 = pneg %p569
      $region102: #{transformer_forward.7} parent=11 // pred_check_branch
        %741 = sbr.rel (%p739) target = $region104
      $region103: #{transformer_forward.7} parent=11 // pred_region
        _
      $region104: #{transformer_forward.7} parent=11 // pred_fallthru
        _
      // Predicated region
      $region105: #{transformer_forward.7} parent=11 // pred_check
        %p742 = pneg %p590
      $region106: #{transformer_forward.7} parent=11 // pred_check_branch
        %744 = sbr.rel (%p742) target = $region108
      $region107: #{transformer_forward.7} parent=11 // pred_region
        _
      $region108: #{transformer_forward.7} parent=11 // pred_fallthru
        _
      // Predicated region
      $region109: #{transformer_forward.7} parent=11 // pred_check
        %p745 = pneg %p611
      $region110: #{transformer_forward.7} parent=11 // pred_check_branch
        %747 = sbr.rel (%p745) target = $region112
      $region111: #{transformer_forward.7} parent=11 // pred_region
        _
      $region112: #{transformer_forward.7} parent=11 // pred_fallthru
        _
      // Predicated region
      $region113: #{transformer_forward.7} parent=11 // pred_check
        %p748 = pneg %p632
      $region114: #{transformer_forward.7} parent=11 // pred_check_branch
        %750 = sbr.rel (%p748) target = $region116
      $region115: #{transformer_forward.7} parent=11 // pred_region
        _
      $region116: #{transformer_forward.7} parent=11 // pred_fallthru
        _
    $region12: #{transformer_forward.7} parent=5 // pred_fallthru
      _
    %p751 = scmp.lt.s32.totalorder %s34, 2
    // Predicated region
    $region117: #{transformer_forward.7} parent=5 // pred_check
      %p752 = pneg %p751
    $region118: #{transformer_forward.7} parent=5 // pred_check_branch
      %754 = sbr.rel (%p752) target = $region120
    $region119: #{transformer_forward.7} parent=5 // pred_region
      // Predicated region
      $region121: #{transformer_forward.7} parent=119 // pred_check
        %p755 = pneg %p54
      $region122: #{transformer_forward.7} parent=119 // pred_check_branch
        %757 = sbr.rel (%p755) target = $region124
      $region123: #{transformer_forward.7} parent=119 // pred_region
        %p758 = scmp.lt.s32.totalorder %s34, 1
        %s759 = scalar_select %p758, %s34, 1
        %s760 = smul.addr %s759, 8
        %s761 = scalar_lea.vmem %s0, %s760
      $region124: #{transformer_forward.7} parent=119 // pred_fallthru
        _
      // Predicated region
      $region125: #{transformer_forward.7} parent=119 // pred_check
        %p762 = pneg %p80
      $region126: #{transformer_forward.7} parent=119 // pred_check_branch
        %764 = sbr.rel (%p762) target = $region128
      $region127: #{transformer_forward.7} parent=119 // pred_region
        %p765 = scmp.lt.s32.totalorder %s34, 1
        %s766 = scalar_select %p765, %s34, 1
        %s767 = smul.addr %s766, 2
        %s768 = smul.addr %s767, 8
        %s769 = scalar_lea.vmem %s1, %s768
      $region128: #{transformer_forward.7} parent=119 // pred_fallthru
        _
    $region120: #{transformer_forward.7} parent=5 // pred_fallthru
      _
    %p770 = scmp.le.s32.totalorder 1, %s34
    %p771 = scmp.lt.s32.totalorder %s34, 3
    %p772 = pnand %p770, %p771
    %p773 = pneg %p772
    // Predicated region
    $region129: #{transformer_forward.7} parent=5 // pred_check
      _
    $region130: #{transformer_forward.7} parent=5 // pred_check_branch
      %775 = sbr.rel (%p772) target = $region132
    $region131: #{transformer_forward.7} parent=5 // pred_region
      %s776 = ssub.s32 %s34, 1
      %p777 = scmp.lt.s32.totalorder %s39, 1
      %s778 = scalar_select %p777, %s39, 1
      %s779 = smul.addr %s778, 8
      %s780 = scalar_lea.vmem %s0, %s779
      %p781 = pneg %p60
      %p782 = pneg %p57
      %p783 = scmp.lt.s32.totalorder %s39, 1
      %s784 = scalar_select %p783, %s39, 1
      %s785 = smul.addr %s784, 2
      %s786 = smul.addr %s785, 8
      %s787 = scalar_lea.vmem %s1, %s786
      %p788 = pneg %p86
      %p789 = pneg %p83
      %p790 = pneg %p107
      %p791 = pneg %p104
      %p792 = pneg %p128
      %p793 = pneg %p125
      %p794 = pneg %p149
      %p795 = pneg %p146
      %p796 = pneg %p170
      %p797 = pneg %p167
      %p798 = pneg %p191
      %p799 = pneg %p188
      %p800 = pneg %p212
      %p801 = pneg %p209
      %p802 = pneg %p233
      %p803 = pneg %p230
      %p804 = pneg %p254
      %p805 = pneg %p251
      %p806 = pneg %p275
      %p807 = pneg %p272
      %p808 = pneg %p296
      %p809 = pneg %p293
      %p810 = pneg %p317
      %p811 = pneg %p314
      %p812 = pneg %p338
      %p813 = pneg %p335
      %p814 = pneg %p359
      %p815 = pneg %p356
      %p816 = pneg %p380
      %p817 = pneg %p377
      %p818 = pneg %p401
      %p819 = pneg %p398
      %p820 = pneg %p422
      %p821 = pneg %p419
      %p822 = pneg %p443
      %p823 = pneg %p440
      %p824 = pneg %p464
      %p825 = pneg %p461
      %p826 = pneg %p485
      %p827 = pneg %p482
      %p828 = pneg %p506
      %p829 = pneg %p503
      %p830 = pneg %p527
      %p831 = pneg %p524
      %p832 = pneg %p548
      %p833 = pneg %p545
      %p834 = pneg %p569
      %p835 = pneg %p566
      %p836 = pneg %p590
      %p837 = pneg %p587
      %p838 = pneg %p611
      %p839 = pneg %p608
      %p840 = pneg %p632
      %p841 = pneg %p629
      %p842 = pneg %p658
      %p843 = pneg %p655
      %p844 = scmp.lt.s32.totalorder %s39, 1
      %s845 = scalar_select %p844, %s39, 1
      %s846 = smul.addr %s845, 8
      %s847 = scalar_lea.vmem %s28, %s846
      %p848 = scmp.lt.s32.totalorder %s39, 1
      %s849 = scalar_select %p848, %s39, 1
      %s850 = smul.addr %s849, 8
      %s851 = scalar_lea.vmem %s0, %s850
      %p852 = scmp.lt.s32.totalorder %s39, 1
      %s853 = scalar_select %p852, %s39, 1
      %s854 = smul.addr %s853, 2
      %s855 = smul.addr %s854, 8
      %s856 = scalar_lea.vmem %s1, %s855
      %p857 = scmp.lt.s32.totalorder %s39, 1
      %s858 = scalar_select %p857, %s39, 1
      %s859 = smul.addr %s858, 8
      %s860 = scalar_lea.vmem %s28, %s859
      %v862 = vld [vmem:[%s851] sm:$0xff]
      %v863 = vld [vmem:[%s856] sm:$0xff]
      %v864 = vld [vmem:[%s856 + $0x8] sm:$0x3]
      %v865 = vpack.c.bf16 %v862, %v862
      %v866 = vlaneseq
      %v867 = vshrl.u32 %v866, 7
      %v868 = vlaneseq
      %v869 = vand.u32 %v868, 127
      %vm870 = vcmp.gt.s32.totalorder %v869, %v867
      %v871 = vsel %vm870, -1e+09, 0.0
      %v872 = vld [vmem:[%s2] sm:$0xf]
      %v873 = vld [vmem:[%s2 + $0x4] sm:$0xf]
      %v874 = vld [vmem:[%s2 + $0x8] sm:$0xf]
      %v875 = vld [vmem:[%s2 + $0xc] sm:$0xf]
      %v876 = vld [vmem:[%s3] sm:$0x1]
      %v878 = vlaneseq
      %v879 = vshrl.u32 %v878, 7
      %v880 = vsub.s32 0, %v879
      %v881 = vrot.slane %v876, %v880
      %v887 = vunpack.c.l.b16 %v872
      %v888 = vunpack.c.l.b16 %v873
      %v889 = vunpack.c.l.b16 %v874
      %v890 = vunpack.c.l.b16 %v875
      %v891 = vpack.c.b16 %v888, %v887
      %v892 = vpack.c.b16 %v890, %v889
      %vm895 = vcmask 261120
      %v897 = vsel %vm895, %v865, 0
      %899 = vmatprep.subr.bf16.mxu0 0
      %900 = vmatpush1.bf16.msra.mxu0 %v891
      %901 = vmatprep.subr.bf16.mxu0 0
      %902 = vmatpush1.bf16.msra.mxu0 %v892
      %903 = vmatprep.subr.bf16.mxu0 0
      %904 = vmatpush1.bf16.msra.mxu0 0
      %905 = vmatprep.subr.bf16.mxu0 0
      %906 = vmatpush1.bf16.msra.mxu0 0
      %907 = vmatprep.subr.bf16.mxu0 0
      %908 = vmatpush1.bf16.msra.mxu0 0
      %909 = vmatprep.subr.bf16.mxu0 0
      %910 = vmatpush1.bf16.msra.mxu0 0
      %911 = vmatprep.subr.bf16.mxu0 0
      %912 = vmatpush1.bf16.msra.mxu0 0
      %913 = vmatprep.subr.bf16.mxu0 0
      %914 = vmatpush1.bf16.msra.mxu0 0
      %915 = vmatprep.subr.bf16.mxu0 0
      %916 = vmatpush1.bf16.msra.mxu0 0
      %917 = vmatprep.subr.bf16.mxu0 0
      %918 = vmatpush1.bf16.msra.mxu0 0
      %919 = vmatprep.subr.bf16.mxu0 0
      %920 = vmatpush1.bf16.msra.mxu0 0
      %921 = vmatprep.subr.bf16.mxu0 0
      %922 = vmatpush1.bf16.msra.mxu0 0
      %923 = vmatprep.subr.bf16.mxu0 0
      %924 = vmatpush1.bf16.msra.mxu0 0
      %925 = vmatprep.subr.bf16.mxu0 0
      %926 = vmatpush1.bf16.msra.mxu0 0
      %927 = vmatprep.subr.bf16.mxu0 0
      %928 = vmatpush1.bf16.msra.mxu0 0
      %929 = vmatprep.subr.bf16.mxu0 0
      %930 = vmatpush1.bf16.msra.mxu0 0
      %931 = vmatprep.mubr.bf16.mxu0 0
      %932 = vmatmul.mubr.bf16.gmra.mrb[0].mxu0 %v897
      %v933 = vpop.f32.mrb[0].mxu0
      %v934 = vadd.f32 %v881, %v933
      %v935 = vpop.f32.mrb[0].mxu0
      %v936 = vpop.f32.mrb[0].mxu0
      %v937 = vpop.f32.mrb[0].mxu0
      %938 = vdwg.mxu0
      %v939 = vld [vmem:[%s4] sm:$0xf]
      %v940 = vld [vmem:[%s4 + $0x4] sm:$0xf]
      %v941 = vld [vmem:[%s4 + $0x8] sm:$0xf]
      %v942 = vld [vmem:[%s4 + $0xc] sm:$0xf]
      %v943 = vld [vmem:[%s5] sm:$0x1]
      %v945 = vlaneseq
      %v946 = vshrl.u32 %v945, 7
      %v947 = vsub.s32 0, %v946
      %v948 = vrot.slane %v943, %v947
      %v954 = vunpack.c.l.b16 %v939
      %v955 = vunpack.c.l.b16 %v940
      %v956 = vunpack.c.l.b16 %v941
      %v957 = vunpack.c.l.b16 %v942
      %v958 = vpack.c.b16 %v955, %v954
      %v959 = vpack.c.b16 %v957, %v956
      %962 = vmatprep.subr.bf16.mxu0 0
      %963 = vmatpush1.bf16.msra.mxu0 %v958
      %964 = vmatprep.subr.bf16.mxu0 0
      %965 = vmatpush1.bf16.msra.mxu0 %v959
      %966 = vmatprep.subr.bf16.mxu0 0
      %967 = vmatpush1.bf16.msra.mxu0 0
      %968 = vmatprep.subr.bf16.mxu0 0
      %969 = vmatpush1.bf16.msra.mxu0 0
      %970 = vmatprep.subr.bf16.mxu0 0
      %971 = vmatpush1.bf16.msra.mxu0 0
      %972 = vmatprep.subr.bf16.mxu0 0
      %973 = vmatpush1.bf16.msra.mxu0 0
      %974 = vmatprep.subr.bf16.mxu0 0
      %975 = vmatpush1.bf16.msra.mxu0 0
      %976 = vmatprep.subr.bf16.mxu0 0
      %977 = vmatpush1.bf16.msra.mxu0 0
      %978 = vmatprep.subr.bf16.mxu0 0
      %979 = vmatpush1.bf16.msra.mxu0 0
      %980 = vmatprep.subr.bf16.mxu0 0
      %981 = vmatpush1.bf16.msra.mxu0 0
      %982 = vmatprep.subr.bf16.mxu0 0
      %983 = vmatpush1.bf16.msra.mxu0 0
      %984 = vmatprep.subr.bf16.mxu0 0
      %985 = vmatpush1.bf16.msra.mxu0 0
      %986 = vmatprep.subr.bf16.mxu0 0
      %987 = vmatpush1.bf16.msra.mxu0 0
      %988 = vmatprep.subr.bf16.mxu0 0
      %989 = vmatpush1.bf16.msra.mxu0 0
      %990 = vmatprep.subr.bf16.mxu0 0
      %991 = vmatpush1.bf16.msra.mxu0 0
      %992 = vmatprep.subr.bf16.mxu0 0
      %993 = vmatpush1.bf16.msra.mxu0 0
      %994 = vmatprep.mubr.bf16.mxu0 0
      %995 = vmatmul.mubr.bf16.gmra.mrb[0].mxu0 %v897
      %v996 = vpop.f32.mrb[0].mxu0
      %v997 = vadd.f32 %v948, %v996
      %v998 = vpop.f32.mrb[0].mxu0
      %v999 = vpop.f32.mrb[0].mxu0
      %v1000 = vpop.f32.mrb[0].mxu0
      %1001 = vdwg.mxu0
      %v1002 = vld [vmem:[%s6] sm:$0xf]
      %v1003 = vld [vmem:[%s6 + $0x4] sm:$0xf]
      %v1004 = vld [vmem:[%s6 + $0x8] sm:$0xf]
      %v1005 = vld [vmem:[%s6 + $0xc] sm:$0xf]
      %v1006 = vld [vmem:[%s7] sm:$0x1]
      %v1008 = vlaneseq
      %v1009 = vshrl.u32 %v1008, 7
      %v1010 = vsub.s32 0, %v1009
      %v1011 = vrot.slane %v1006, %v1010
      %v1017 = vunpack.c.l.b16 %v1002
      %v1018 = vunpack.c.l.b16 %v1003
      %v1019 = vunpack.c.l.b16 %v1004
      %v1020 = vunpack.c.l.b16 %v1005
      %v1021 = vpack.c.b16 %v1018, %v1017
      %v1022 = vpack.c.b16 %v1020, %v1019
      %1025 = vmatprep.subr.bf16.mxu0 0
      %1026 = vmatpush1.bf16.msra.mxu0 %v1021
      %1027 = vmatprep.subr.bf16.mxu0 0
      %1028 = vmatpush1.bf16.msra.mxu0 %v1022
      %1029 = vmatprep.subr.bf16.mxu0 0
      %1030 = vmatpush1.bf16.msra.mxu0 0
      %1031 = vmatprep.subr.bf16.mxu0 0
      %1032 = vmatpush1.bf16.msra.mxu0 0
      %1033 = vmatprep.subr.bf16.mxu0 0
      %1034 = vmatpush1.bf16.msra.mxu0 0
      %1035 = vmatprep.subr.bf16.mxu0 0
      %1036 = vmatpush1.bf16.msra.mxu0 0
      %1037 = vmatprep.subr.bf16.mxu0 0
      %1038 = vmatpush1.bf16.msra.mxu0 0
      %1039 = vmatprep.subr.bf16.mxu0 0
      %1040 = vmatpush1.bf16.msra.mxu0 0
      %1041 = vmatprep.subr.bf16.mxu0 0
      %1042 = vmatpush1.bf16.msra.mxu0 0
      %1043 = vmatprep.subr.bf16.mxu0 0
      %1044 = vmatpush1.bf16.msra.mxu0 0
      %1045 = vmatprep.subr.bf16.mxu0 0
      %1046 = vmatpush1.bf16.msra.mxu0 0
      %1047 = vmatprep.subr.bf16.mxu0 0
      %1048 = vmatpush1.bf16.msra.mxu0 0
      %1049 = vmatprep.subr.bf16.mxu0 0
      %1050 = vmatpush1.bf16.msra.mxu0 0
      %1051 = vmatprep.subr.bf16.mxu0 0
      %1052 = vmatpush1.bf16.msra.mxu0 0
      %1053 = vmatprep.subr.bf16.mxu0 0
      %1054 = vmatpush1.bf16.msra.mxu0 0
      %1055 = vmatprep.subr.bf16.mxu0 0
      %1056 = vmatpush1.bf16.msra.mxu0 0
      %1057 = vmatprep.mubr.bf16.mxu0 0
      %1058 = vmatmul.mubr.bf16.gmra.mrb[0].mxu0 %v897
      %v1059 = vpop.f32.mrb[0].mxu0
      %v1060 = vadd.f32 %v1011, %v1059
      %v1061 = vpop.f32.mrb[0].mxu0
      %v1062 = vpop.f32.mrb[0].mxu0
      %v1063 = vpop.f32.mrb[0].mxu0
      %1064 = vdwg.mxu0
      %v1065 = vpack.c.bf16 %v934, %v934
      %v1066 = vpack.c.bf16 %v997, %v997
      %vm1067 = vcmask 130048
      %v1069 = vsel %vm1067, %v1065, 0
      %v1072 = vsel %vm1067, %v1066, 0
      %1074 = vmatprep.subr.bf16.mxu0 0
      %1075 = vmatpush1.bf16.xpose.msra.mxu0 %v1072
      %1076 = vmatprep.subr.bf16.mxu0 0
      %1077 = vmatpush1.bf16.xpose.msra.mxu0 0
      %1078 = vmatprep.subr.bf16.mxu0 0
      %1079 = vmatpush1.bf16.xpose.msra.mxu0 0
      %1080 = vmatprep.subr.bf16.mxu0 0
      %1081 = vmatpush1.bf16.xpose.msra.mxu0 0
      %1082 = vmatprep.subr.bf16.mxu0 0
      %1083 = vmatpush1.bf16.xpose.msra.mxu0 0
      %1084 = vmatprep.subr.bf16.mxu0 0
      %1085 = vmatpush1.bf16.xpose.msra.mxu0 0
      %1086 = vmatprep.subr.bf16.mxu0 0
      %1087 = vmatpush1.bf16.xpose.msra.mxu0 0
      %1088 = vmatprep.subr.bf16.mxu0 0
      %1089 = vmatpush1.bf16.xpose.msra.mxu0 0
      %1090 = vmatprep.subr.bf16.mxu0 0
      %1091 = vmatpush1.bf16.xpose.msra.mxu0 0
      %1092 = vmatprep.subr.bf16.mxu0 0
      %1093 = vmatpush1.bf16.xpose.msra.mxu0 0
      %1094 = vmatprep.subr.bf16.mxu0 0
      %1095 = vmatpush1.bf16.xpose.msra.mxu0 0
      %1096 = vmatprep.subr.bf16.mxu0 0
      %1097 = vmatpush1.bf16.xpose.msra.mxu0 0
      %1098 = vmatprep.subr.bf16.mxu0 0
      %1099 = vmatpush1.bf16.xpose.msra.mxu0 0
      %1100 = vmatprep.subr.bf16.mxu0 0
      %1101 = vmatpush1.bf16.xpose.msra.mxu0 0
      %1102 = vmatprep.subr.bf16.mxu0 0
      %1103 = vmatpush1.bf16.xpose.msra.mxu0 0
      %1104 = vmatprep.subr.bf16.mxu0 0
      %1105 = vmatpush1.bf16.xpose.msra.mxu0 0
      %1106 = vmatprep.mubr.bf16.mxu0 0
      %1107 = vmatmul.mubr.bf16.gmra.mrb[0].mxu0 %v1069
      %v1108 = vpop.f32.mrb[0].mxu0
      %v1109 = vadd.f32 %v871, %v1108
      %v1110 = vpop.f32.mrb[0].mxu0
      %v1111 = vpop.f32.mrb[0].mxu0
      %v1112 = vpop.f32.mrb[0].mxu0
      %1113 = vdwg.mxu0
      %vm1114 = vcmask 64512
      %v1115 = vsel %vm1114, %v1109, -inf
      %1116 = vmax.xlane.f32.xlu0 %v1115
      %v1117 = vpop.xlane.xlu0 %1116
      %v1118 = vsub.f32 %v1109, %v1117
      %v1119 = vmul.f32 %v1118, 1.442695
      %v1120 = vpow.pop %v1119
      %v1121 = vsel %vm1114, %v1120, 0.0
      %1122 = vadd.xlane.f32.xlu0 %v1121
      %v1123 = vpop.xlane.xlu0 %1122
      %v1124 = vrcp.pop %v1123
      %v1125 = vmul.f32 %v1120, %v1124
      %v1126 = vpack.c.bf16 %v1125, %v1125
      %v1127 = vpack.c.bf16 %v1060, %v1060
      %v1129 = vsel %vm1114, %v1126, 0
      %vm1131 = vcmask 1043456
      %v1133 = vsel %vm1131, %v1127, 0
      %1135 = vmatprep.subr.bf16.mxu0 0
      %1136 = vmatpush1.bf16.msra.mxu0 %v1133
      %1137 = vmatprep.subr.bf16.mxu0 0
      %1138 = vmatpush1.bf16.msra.mxu0 0
      %1139 = vmatprep.subr.bf16.mxu0 0
      %1140 = vmatpush1.bf16.msra.mxu0 0
      %1141 = vmatprep.subr.bf16.mxu0 0
      %1142 = vmatpush1.bf16.msra.mxu0 0
      %1143 = vmatprep.subr.bf16.mxu0 0
      %1144 = vmatpush1.bf16.msra.mxu0 0
      %1145 = vmatprep.subr.bf16.mxu0 0
      %1146 = vmatpush1.bf16.msra.mxu0 0
      %1147 = vmatprep.subr.bf16.mxu0 0
      %1148 = vmatpush1.bf16.msra.mxu0 0
      %1149 = vmatprep.subr.bf16.mxu0 0
      %1150 = vmatpush1.bf16.msra.mxu0 0
      %1151 = vmatprep.subr.bf16.mxu0 0
      %1152 = vmatpush1.bf16.msra.mxu0 0
      %1153 = vmatprep.subr.bf16.mxu0 0
      %1154 = vmatpush1.bf16.msra.mxu0 0
      %1155 = vmatprep.subr.bf16.mxu0 0
      %1156 = vmatpush1.bf16.msra.mxu0 0
      %1157 = vmatprep.subr.bf16.mxu0 0
      %1158 = vmatpush1.bf16.msra.mxu0 0
      %1159 = vmatprep.subr.bf16.mxu0 0
      %1160 = vmatpush1.bf16.msra.mxu0 0
      %1161 = vmatprep.subr.bf16.mxu0 0
      %1162 = vmatpush1.bf16.msra.mxu0 0
      %1163 = vmatprep.subr.bf16.mxu0 0
      %1164 = vmatpush1.bf16.msra.mxu0 0
      %1165 = vmatprep.subr.bf16.mxu0 0
      %1166 = vmatpush1.bf16.msra.mxu0 0
      %1167 = vmatprep.mubr.bf16.mxu0 0
      %1168 = vmatmul.mubr.bf16.gmra.mrb[0].mxu0 %v1129
      %v1169 = vpop.f32.mrb[0].mxu0
      %v1170 = vadd.f32 0.0, %v1169
      %v1171 = vpop.f32.mrb[0].mxu0
      %v1172 = vpop.f32.mrb[0].mxu0
      %v1173 = vpop.f32.mrb[0].mxu0
      %1174 = vdwg.mxu0
      %v1175 = vpack.c.bf16 %v1170, %v1170
      %v1176 = vld [vmem:[%s8] sm:$0xf]
      %v1177 = vld [vmem:[%s8 + $0x4] sm:$0xf]
      %s1178 = scalar_lea.vmem %s2, 16
      %v1179 = vld [vmem:[%s1178] sm:$0xf]
      %v1180 = vld [vmem:[%s1178 + $0x4] sm:$0xf]
      %v1181 = vld [vmem:[%s1178 + $0x8] sm:$0xf]
      %v1182 = vld [vmem:[%s1178 + $0xc] sm:$0xf]
      %s1183 = scalar_lea.vmem %s3, 1
      %v1184 = vld [vmem:[%s1183] sm:$0x1]
      %v1186 = vlaneseq
      %v1187 = vshrl.u32 %v1186, 7
      %v1188 = vsub.s32 0, %v1187
      %v1189 = vrot.slane %v1184, %v1188
      %v1195 = vunpack.c.l.b16 %v1179
      %v1196 = vunpack.c.l.b16 %v1180
      %v1197 = vunpack.c.l.b16 %v1181
      %v1198 = vunpack.c.l.b16 %v1182
      %v1199 = vpack.c.b16 %v1196, %v1195
      %v1200 = vpack.c.b16 %v1198, %v1197
      %1203 = vmatprep.subr.bf16.mxu0 0
      %1204 = vmatpush1.bf16.msra.mxu0 %v1199
      %1205 = vmatprep.subr.bf16.mxu0 0
      %1206 = vmatpush1.bf16.msra.mxu0 %v1200
      %1207 = vmatprep.subr.bf16.mxu0 0
      %1208 = vmatpush1.bf16.msra.mxu0 0
      %1209 = vmatprep.subr.bf16.mxu0 0
      %1210 = vmatpush1.bf16.msra.mxu0 0
      %1211 = vmatprep.subr.bf16.mxu0 0
      %1212 = vmatpush1.bf16.msra.mxu0 0
      %1213 = vmatprep.subr.bf16.mxu0 0
      %1214 = vmatpush1.bf16.msra.mxu0 0
      %1215 = vmatprep.subr.bf16.mxu0 0
      %1216 = vmatpush1.bf16.msra.mxu0 0
      %1217 = vmatprep.subr.bf16.mxu0 0
      %1218 = vmatpush1.bf16.msra.mxu0 0
      %1219 = vmatprep.subr.bf16.mxu0 0
      %1220 = vmatpush1.bf16.msra.mxu0 0
      %1221 = vmatprep.subr.bf16.mxu0 0
      %1222 = vmatpush1.bf16.msra.mxu0 0
      %1223 = vmatprep.subr.bf16.mxu0 0
      %1224 = vmatpush1.bf16.msra.mxu0 0
      %1225 = vmatprep.subr.bf16.mxu0 0
      %1226 = vmatpush1.bf16.msra.mxu0 0
      %1227 = vmatprep.subr.bf16.mxu0 0
      %1228 = vmatpush1.bf16.msra.mxu0 0
      %1229 = vmatprep.subr.bf16.mxu0 0
      %1230 = vmatpush1.bf16.msra.mxu0 0
      %1231 = vmatprep.subr.bf16.mxu0 0
      %1232 = vmatpush1.bf16.msra.mxu0 0
      %1233 = vmatprep.subr.bf16.mxu0 0
      %1234 = vmatpush1.bf16.msra.mxu0 0
      %1235 = vmatprep.mubr.bf16.mxu0 0
      %1236 = vmatmul.mubr.bf16.gmra.mrb[0].mxu0 %v897
      %v1237 = vpop.f32.mrb[0].mxu0
      %v1238 = vadd.f32 %v1189, %v1237
      %v1239 = vpop.f32.mrb[0].mxu0
      %v1240 = vpop.f32.mrb[0].mxu0
      %v1241 = vpop.f32.mrb[0].mxu0
      %1242 = vdwg.mxu0
      %s1243 = scalar_lea.vmem %s4, 16
      %v1244 = vld [vmem:[%s1243] sm:$0xf]
      %v1245 = vld [vmem:[%s1243 + $0x4] sm:$0xf]
      %v1246 = vld [vmem:[%s1243 + $0x8] sm:$0xf]
      %v1247 = vld [vmem:[%s1243 + $0xc] sm:$0xf]
      %s1248 = scalar_lea.vmem %s5, 1
      %v1249 = vld [vmem:[%s1248] sm:$0x1]
      %v1251 = vlaneseq
      %v1252 = vshrl.u32 %v1251, 7
      %v1253 = vsub.s32 0, %v1252
      %v1254 = vrot.slane %v1249, %v1253
      %v1260 = vunpack.c.l.b16 %v1244
      %v1261 = vunpack.c.l.b16 %v1245
      %v1262 = vunpack.c.l.b16 %v1246
      %v1263 = vunpack.c.l.b16 %v1247
      %v1264 = vpack.c.b16 %v1261, %v1260
      %v1265 = vpack.c.b16 %v1263, %v1262
      %1268 = vmatprep.subr.bf16.mxu0 0
      %1269 = vmatpush1.bf16.msra.mxu0 %v1264
      %1270 = vmatprep.subr.bf16.mxu0 0
      %1271 = vmatpush1.bf16.msra.mxu0 %v1265
      %1272 = vmatprep.subr.bf16.mxu0 0
      %1273 = vmatpush1.bf16.msra.mxu0 0
      %1274 = vmatprep.subr.bf16.mxu0 0
      %1275 = vmatpush1.bf16.msra.mxu0 0
      %1276 = vmatprep.subr.bf16.mxu0 0
      %1277 = vmatpush1.bf16.msra.mxu0 0
      %1278 = vmatprep.subr.bf16.mxu0 0
      %1279 = vmatpush1.bf16.msra.mxu0 0
      %1280 = vmatprep.subr.bf16.mxu0 0
      %1281 = vmatpush1.bf16.msra.mxu0 0
      %1282 = vmatprep.subr.bf16.mxu0 0
      %1283 = vmatpush1.bf16.msra.mxu0 0
      %1284 = vmatprep.subr.bf16.mxu0 0
      %1285 = vmatpush1.bf16.msra.mxu0 0
      %1286 = vmatprep.subr.bf16.mxu0 0
      %1287 = vmatpush1.bf16.msra.mxu0 0
      %1288 = vmatprep.subr.bf16.mxu0 0
      %1289 = vmatpush1.bf16.msra.mxu0 0
      %1290 = vmatprep.subr.bf16.mxu0 0
      %1291 = vmatpush1.bf16.msra.mxu0 0
      %1292 = vmatprep.subr.bf16.mxu0 0
      %1293 = vmatpush1.bf16.msra.mxu0 0
      %1294 = vmatprep.subr.bf16.mxu0 0
      %1295 = vmatpush1.bf16.msra.mxu0 0
      %1296 = vmatprep.subr.bf16.mxu0 0
      %1297 = vmatpush1.bf16.msra.mxu0 0
      %1298 = vmatprep.subr.bf16.mxu0 0
      %1299 = vmatpush1.bf16.msra.mxu0 0
      %1300 = vmatprep.mubr.bf16.mxu0 0
      %1301 = vmatmul.mubr.bf16.gmra.mrb[0].mxu0 %v897
      %v1302 = vpop.f32.mrb[0].mxu0
      %v1303 = vadd.f32 %v1254, %v1302
      %v1304 = vpop.f32.mrb[0].mxu0
      %v1305 = vpop.f32.mrb[0].mxu0
      %v1306 = vpop.f32.mrb[0].mxu0
      %1307 = vdwg.mxu0
      %s1308 = scalar_lea.vmem %s6, 16
      %v1309 = vld [vmem:[%s1308] sm:$0xf]
      %v1310 = vld [vmem:[%s1308 + $0x4] sm:$0xf]
      %v1311 = vld [vmem:[%s1308 + $0x8] sm:$0xf]
      %v1312 = vld [vmem:[%s1308 + $0xc] sm:$0xf]
      %s1313 = scalar_lea.vmem %s7, 1
      %v1314 = vld [vmem:[%s1313] sm:$0x1]
      %v1316 = vlaneseq
      %v1317 = vshrl.u32 %v1316, 7
      %v1318 = vsub.s32 0, %v1317
      %v1319 = vrot.slane %v1314, %v1318
      %v1325 = vunpack.c.l.b16 %v1309
      %v1326 = vunpack.c.l.b16 %v1310
      %v1327 = vunpack.c.l.b16 %v1311
      %v1328 = vunpack.c.l.b16 %v1312
      %v1329 = vpack.c.b16 %v1326, %v1325
      %v1330 = vpack.c.b16 %v1328, %v1327
      %1333 = vmatprep.subr.bf16.mxu0 0
      %1334 = vmatpush1.bf16.msra.mxu0 %v1329
      %1335 = vmatprep.subr.bf16.mxu0 0
      %1336 = vmatpush1.bf16.msra.mxu0 %v1330
      %1337 = vmatprep.subr.bf16.mxu0 0
      %1338 = vmatpush1.bf16.msra.mxu0 0
      %1339 = vmatprep.subr.bf16.mxu0 0
      %1340 = vmatpush1.bf16.msra.mxu0 0
      %1341 = vmatprep.subr.bf16.mxu0 0
      %1342 = vmatpush1.bf16.msra.mxu0 0
      %1343 = vmatprep.subr.bf16.mxu0 0
      %1344 = vmatpush1.bf16.msra.mxu0 0
      %1345 = vmatprep.subr.bf16.mxu0 0
      %1346 = vmatpush1.bf16.msra.mxu0 0
      %1347 = vmatprep.subr.bf16.mxu0 0
      %1348 = vmatpush1.bf16.msra.mxu0 0
      %1349 = vmatprep.subr.bf16.mxu0 0
      %1350 = vmatpush1.bf16.msra.mxu0 0
      %1351 = vmatprep.subr.bf16.mxu0 0
      %1352 = vmatpush1.bf16.msra.mxu0 0
      %1353 = vmatprep.subr.bf16.mxu0 0
      %1354 = vmatpush1.bf16.msra.mxu0 0
      %1355 = vmatprep.subr.bf16.mxu0 0
      %1356 = vmatpush1.bf16.msra.mxu0 0
      %1357 = vmatprep.subr.bf16.mxu0 0
      %1358 = vmatpush1.bf16.msra.mxu0 0
      %1359 = vmatprep.subr.bf16.mxu0 0
      %1360 = vmatpush1.bf16.msra.mxu0 0
      %1361 = vmatprep.subr.bf16.mxu0 0
      %1362 = vmatpush1.bf16.msra.mxu0 0
      %1363 = vmatprep.subr.bf16.mxu0 0
      %1364 = vmatpush1.bf16.msra.mxu0 0
      %1365 = vmatprep.mubr.bf16.mxu0 0
      %1366 = vmatmul.mubr.bf16.gmra.mrb[0].mxu0 %v897
      %v1367 = vpop.f32.mrb[0].mxu0
      %v1368 = vadd.f32 %v1319, %v1367
      %v1369 = vpop.f32.mrb[0].mxu0
      %v1370 = vpop.f32.mrb[0].mxu0
      %v1371 = vpop.f32.mrb[0].mxu0
      %1372 = vdwg.mxu0
      %v1373 = vpack.c.bf16 %v1238, %v1238
      %v1374 = vpack.c.bf16 %v1303, %v1303
      %v1376 = vsel %vm1067, %v1373, 0
      %v1379 = vsel %vm1067, %v1374, 0
      %1381 = vmatprep.subr.bf16.mxu0 0
      %1382 = vmatpush1.bf16.xpose.msra.mxu0 %v1379
      %1383 = vmatprep.subr.bf16.mxu0 0
      %1384 = vmatpush1.bf16.xpose.msra.mxu0 0
      %1385 = vmatprep.subr.bf16.mxu0 0
      %1386 = vmatpush1.bf16.xpose.msra.mxu0 0
      %1387 = vmatprep.subr.bf16.mxu0 0
      %1388 = vmatpush1.bf16.xpose.msra.mxu0 0
      %1389 = vmatprep.subr.bf16.mxu0 0
      %1390 = vmatpush1.bf16.xpose.msra.mxu0 0
      %1391 = vmatprep.subr.bf16.mxu0 0
      %1392 = vmatpush1.bf16.xpose.msra.mxu0 0
      %1393 = vmatprep.subr.bf16.mxu0 0
      %1394 = vmatpush1.bf16.xpose.msra.mxu0 0
      %1395 = vmatprep.subr.bf16.mxu0 0
      %1396 = vmatpush1.bf16.xpose.msra.mxu0 0
      %1397 = vmatprep.subr.bf16.mxu0 0
      %1398 = vmatpush1.bf16.xpose.msra.mxu0 0
      %1399 = vmatprep.subr.bf16.mxu0 0
      %1400 = vmatpush1.bf16.xpose.msra.mxu0 0
      %1401 = vmatprep.subr.bf16.mxu0 0
      %1402 = vmatpush1.bf16.xpose.msra.mxu0 0
      %1403 = vmatprep.subr.bf16.mxu0 0
      %1404 = vmatpush1.bf16.xpose.msra.mxu0 0
      %1405 = vmatprep.subr.bf16.mxu0 0
      %1406 = vmatpush1.bf16.xpose.msra.mxu0 0
      %1407 = vmatprep.subr.bf16.mxu0 0
      %1408 = vmatpush1.bf16.xpose.msra.mxu0 0
      %1409 = vmatprep.subr.bf16.mxu0 0
      %1410 = vmatpush1.bf16.xpose.msra.mxu0 0
      %1411 = vmatprep.subr.bf16.mxu0 0
      %1412 = vmatpush1.bf16.xpose.msra.mxu0 0
      %1413 = vmatprep.mubr.bf16.mxu0 0
      %1414 = vmatmul.mubr.bf16.gmra.mrb[0].mxu0 %v1376
      %v1415 = vpop.f32.mrb[0].mxu0
      %v1416 = vadd.f32 %v871, %v1415
      %v1417 = vpop.f32.mrb[0].mxu0
      %v1418 = vpop.f32.mrb[0].mxu0
      %v1419 = vpop.f32.mrb[0].mxu0
      %1420 = vdwg.mxu0
      %v1421 = vsel %vm1114, %v1416, -inf
      %1422 = vmax.xlane.f32.xlu0 %v1421
      %v1423 = vpop.xlane.xlu0 %1422
      %v1424 = vsub.f32 %v1416, %v1423
      %v1425 = vmul.f32 %v1424, 1.442695
      %v1426 = vpow.pop %v1425
      %v1427 = vsel %vm1114, %v1426, 0.0
      %1428 = vadd.xlane.f32.xlu0 %v1427
      %v1429 = vpop.xlane.xlu0 %1428
      %v1430 = vrcp.pop %v1429
      %v1431 = vmul.f32 %v1426, %v1430
      %v1432 = vpack.c.bf16 %v1431, %v1431
      %v1433 = vpack.c.bf16 %v1368, %v1368
      %v1435 = vsel %vm1114, %v1432, 0
      %v1438 = vsel %vm1131, %v1433, 0
      %1440 = vmatprep.subr.bf16.mxu0 0
      %1441 = vmatpush1.bf16.msra.mxu0 %v1438
      %1442 = vmatprep.subr.bf16.mxu0 0
      %1443 = vmatpush1.bf16.msra.mxu0 0
      %1444 = vmatprep.subr.bf16.mxu0 0
      %1445 = vmatpush1.bf16.msra.mxu0 0
      %1446 = vmatprep.subr.bf16.mxu0 0
      %1447 = vmatpush1.bf16.msra.mxu0 0
      %1448 = vmatprep.subr.bf16.mxu0 0
      %1449 = vmatpush1.bf16.msra.mxu0 0
      %1450 = vmatprep.subr.bf16.mxu0 0
      %1451 = vmatpush1.bf16.msra.mxu0 0
      %1452 = vmatprep.subr.bf16.mxu0 0
      %1453 = vmatpush1.bf16.msra.mxu0 0
      %1454 = vmatprep.subr.bf16.mxu0 0
      %1455 = vmatpush1.bf16.msra.mxu0 0
      %1456 = vmatprep.subr.bf16.mxu0 0
      %1457 = vmatpush1.bf16.msra.mxu0 0
      %1458 = vmatprep.subr.bf16.mxu0 0
      %1459 = vmatpush1.bf16.msra.mxu0 0
      %1460 = vmatprep.subr.bf16.mxu0 0
      %1461 = vmatpush1.bf16.msra.mxu0 0
      %1462 = vmatprep.subr.bf16.mxu0 0
      %1463 = vmatpush1.bf16.msra.mxu0 0
      %1464 = vmatprep.subr.bf16.mxu0 0
      %1465 = vmatpush1.bf16.msra.mxu0 0
      %1466 = vmatprep.subr.bf16.mxu0 0
      %1467 = vmatpush1.bf16.msra.mxu0 0
      %1468 = vmatprep.subr.bf16.mxu0 0
      %1469 = vmatpush1.bf16.msra.mxu0 0
      %1470 = vmatprep.subr.bf16.mxu0 0
      %1471 = vmatpush1.bf16.msra.mxu0 0
      %1472 = vmatprep.mubr.bf16.mxu0 0
      %1473 = vmatmul.mubr.bf16.gmra.mrb[0].mxu0 %v1435
      %v1474 = vpop.f32.mrb[0].mxu0
      %v1475 = vadd.f32 0.0, %v1474
      %v1476 = vpop.f32.mrb[0].mxu0
      %v1477 = vpop.f32.mrb[0].mxu0
      %v1478 = vpop.f32.mrb[0].mxu0
      %1479 = vdwg.mxu0
      %v1480 = vpack.c.bf16 %v1475, %v1475
      %s1481 = scalar_lea.vmem %s8, 8
      %v1482 = vld [vmem:[%s1481] sm:$0xf]
      %v1483 = vld [vmem:[%s1481 + $0x4] sm:$0xf]
      %v1486 = vunpack.c.l.b16 %v1482
      %v1487 = vunpack.c.l.b16 %v1483
      %v1488 = vpack.c.b16 %v1487, %v1486
      %v1491 = vsel %vm1067, %v1480, 0
      %1493 = vmatprep.subr.bf16.mxu0 0
      %1494 = vmatpush1.bf16.msra.mxu0 %v1488
      %1495 = vmatprep.subr.bf16.mxu0 0
      %1496 = vmatpush1.bf16.msra.mxu0 0
      %1497 = vmatprep.subr.bf16.mxu0 0
      %1498 = vmatpush1.bf16.msra.mxu0 0
      %1499 = vmatprep.subr.bf16.mxu0 0
      %1500 = vmatpush1.bf16.msra.mxu0 0
      %1501 = vmatprep.subr.bf16.mxu0 0
      %1502 = vmatpush1.bf16.msra.mxu0 0
      %1503 = vmatprep.subr.bf16.mxu0 0
      %1504 = vmatpush1.bf16.msra.mxu0 0
      %1505 = vmatprep.subr.bf16.mxu0 0
      %1506 = vmatpush1.bf16.msra.mxu0 0
      %1507 = vmatprep.subr.bf16.mxu0 0
      %1508 = vmatpush1.bf16.msra.mxu0 0
      %1509 = vmatprep.subr.bf16.mxu0 0
      %1510 = vmatpush1.bf16.msra.mxu0 0
      %1511 = vmatprep.subr.bf16.mxu0 0
      %1512 = vmatpush1.bf16.msra.mxu0 0
      %1513 = vmatprep.subr.bf16.mxu0 0
      %1514 = vmatpush1.bf16.msra.mxu0 0
      %1515 = vmatprep.subr.bf16.mxu0 0
      %1516 = vmatpush1.bf16.msra.mxu0 0
      %1517 = vmatprep.subr.bf16.mxu0 0
      %1518 = vmatpush1.bf16.msra.mxu0 0
      %1519 = vmatprep.subr.bf16.mxu0 0
      %1520 = vmatpush1.bf16.msra.mxu0 0
      %1521 = vmatprep.subr.bf16.mxu0 0
      %1522 = vmatpush1.bf16.msra.mxu0 0
      %1523 = vmatprep.subr.bf16.mxu0 0
      %1524 = vmatpush1.bf16.msra.mxu0 0
      %1525 = vmatprep.mubr.bf16.mxu0 0
      %1526 = vmatmul.mubr.bf16.gmra.mrb[0].mxu0 %v1491
      %v1527 = vpop.f32.mrb[0].mxu0
      %v1528 = vadd.f32 0.0, %v1527
      %v1529 = vpop.f32.mrb[0].mxu0
      %v1530 = vpop.f32.mrb[0].mxu0
      %v1531 = vpop.f32.mrb[0].mxu0
      %1532 = vdwg.mxu0
      %v1535 = vunpack.c.l.b16 %v1176
      %v1536 = vunpack.c.l.b16 %v1177
      %v1537 = vpack.c.b16 %v1536, %v1535
      %v1540 = vsel %vm1067, %v1175, 0
      %1542 = vmatprep.subr.bf16.mxu0 0
      %1543 = vmatpush1.bf16.msra.mxu0 %v1537
      %1544 = vmatprep.subr.bf16.mxu0 0
      %1545 = vmatpush1.bf16.msra.mxu0 0
      %1546 = vmatprep.subr.bf16.mxu0 0
      %1547 = vmatpush1.bf16.msra.mxu0 0
      %1548 = vmatprep.subr.bf16.mxu0 0
      %1549 = vmatpush1.bf16.msra.mxu0 0
      %1550 = vmatprep.subr.bf16.mxu0 0
      %1551 = vmatpush1.bf16.msra.mxu0 0
      %1552 = vmatprep.subr.bf16.mxu0 0
      %1553 = vmatpush1.bf16.msra.mxu0 0
      %1554 = vmatprep.subr.bf16.mxu0 0
      %1555 = vmatpush1.bf16.msra.mxu0 0
      %1556 = vmatprep.subr.bf16.mxu0 0
      %1557 = vmatpush1.bf16.msra.mxu0 0
      %1558 = vmatprep.subr.bf16.mxu0 0
      %1559 = vmatpush1.bf16.msra.mxu0 0
      %1560 = vmatprep.subr.bf16.mxu0 0
      %1561 = vmatpush1.bf16.msra.mxu0 0
      %1562 = vmatprep.subr.bf16.mxu0 0
      %1563 = vmatpush1.bf16.msra.mxu0 0
      %1564 = vmatprep.subr.bf16.mxu0 0
      %1565 = vmatpush1.bf16.msra.mxu0 0
      %1566 = vmatprep.subr.bf16.mxu0 0
      %1567 = vmatpush1.bf16.msra.mxu0 0
      %1568 = vmatprep.subr.bf16.mxu0 0
      %1569 = vmatpush1.bf16.msra.mxu0 0
      %1570 = vmatprep.subr.bf16.mxu0 0
      %1571 = vmatpush1.bf16.msra.mxu0 0
      %1572 = vmatprep.subr.bf16.mxu0 0
      %1573 = vmatpush1.bf16.msra.mxu0 0
      %1574 = vmatprep.mubr.bf16.mxu0 0
      %1575 = vmatmul.mubr.bf16.gmra.mrb[0].mxu0 %v1540
      %v1576 = vpop.f32.mrb[0].mxu0
      %v1577 = vadd.f32 %v1528, %v1576
      %v1578 = vpop.f32.mrb[0].mxu0
      %v1579 = vpop.f32.mrb[0].mxu0
      %v1580 = vpop.f32.mrb[0].mxu0
      %1581 = vdwg.mxu0
      %v1582 = vld [vmem:[%s9] sm:$0x1]
      %v1584 = vlaneseq
      %v1585 = vshrl.u32 %v1584, 7
      %v1586 = vsub.s32 0, %v1585
      %v1587 = vrot.slane %v1582, %v1586
      %v1589 = vadd.f32 %v1577, %v1587
      %v1590 = vadd.f32 %v862, %v1589
      %v1591 = vld [vmem:[%s10] sm:$0x1]
      %v1592 = vld [vmem:[%s11] sm:$0x1]
      %v1593 = vsel %vm895, %v1590, 0.0
      %1594 = vadd.xlane.f32.xlu0 %v1593
      %v1595 = vpop.xlane.xlu0 %1594
      %v1596 = vrcp.pop 32.0
      %v1597 = vmul.f32 %v1595, %v1596
      %v1598 = vsub.f32 %v1590, %v1597
      %v1599 = vmul.f32 %v1598, %v1598
      %v1600 = vsel %vm895, %v1599, 0.0
      %1601 = vadd.xlane.f32.xlu0 %v1600
      %v1602 = vpop.xlane.xlu0 %1601
      %v1603 = vmul.f32 %v1602, %v1596
      %v1604 = vadd.f32 %v1603, 1e-05
      %v1605 = vrsqrt.pop %v1604
      %v1606 = vmul.f32 %v1598, %v1605
      %v1608 = vlaneseq
      %v1609 = vshrl.u32 %v1608, 7
      %v1610 = vsub.s32 0, %v1609
      %v1611 = vrot.slane %v1591, %v1610
      %v1613 = vmul.f32 %v1606, %v1611
      %v1615 = vlaneseq
      %v1616 = vshrl.u32 %v1615, 7
      %v1617 = vsub.s32 0, %v1616
      %v1618 = vrot.slane %v1592, %v1617
      %v1620 = vadd.f32 %v1613, %v1618
      %v1621 = vpack.c.bf16 %v1620, %v1620
      %v1622 = vpack.c.bf16 %v864, %v863
      %v1623 = vld [vmem:[%s12] sm:$0xf]
      %v1624 = vld [vmem:[%s12 + $0x4] sm:$0xf]
      %v1625 = vld [vmem:[%s12 + $0x8] sm:$0xf]
      %v1626 = vld [vmem:[%s12 + $0xc] sm:$0xf]
      %v1627 = vld [vmem:[%s13] sm:$0x1]
      %v1629 = vlaneseq
      %v1630 = vshrl.u32 %v1629, 7
      %v1631 = vsub.s32 0, %v1630
      %v1632 = vrot.slane %v1627, %v1631
      %v1638 = vunpack.c.l.b16 %v1623
      %v1639 = vunpack.c.l.b16 %v1624
      %v1640 = vunpack.c.l.b16 %v1625
      %v1641 = vunpack.c.l.b16 %v1626
      %v1642 = vpack.c.b16 %v1639, %v1638
      %v1643 = vpack.c.b16 %v1641, %v1640
      %v1647 = vsel %vm895, %v1621, 0
      %1649 = vmatprep.subr.bf16.mxu0 0
      %1650 = vmatpush1.bf16.msra.mxu0 %v1642
      %1651 = vmatprep.subr.bf16.mxu0 0
      %1652 = vmatpush1.bf16.msra.mxu0 %v1643
      %1653 = vmatprep.subr.bf16.mxu0 0
      %1654 = vmatpush1.bf16.msra.mxu0 0
      %1655 = vmatprep.subr.bf16.mxu0 0
      %1656 = vmatpush1.bf16.msra.mxu0 0
      %1657 = vmatprep.subr.bf16.mxu0 0
      %1658 = vmatpush1.bf16.msra.mxu0 0
      %1659 = vmatprep.subr.bf16.mxu0 0
      %1660 = vmatpush1.bf16.msra.mxu0 0
      %1661 = vmatprep.subr.bf16.mxu0 0
      %1662 = vmatpush1.bf16.msra.mxu0 0
      %1663 = vmatprep.subr.bf16.mxu0 0
      %1664 = vmatpush1.bf16.msra.mxu0 0
      %1665 = vmatprep.subr.bf16.mxu0 0
      %1666 = vmatpush1.bf16.msra.mxu0 0
      %1667 = vmatprep.subr.bf16.mxu0 0
      %1668 = vmatpush1.bf16.msra.mxu0 0
      %1669 = vmatprep.subr.bf16.mxu0 0
      %1670 = vmatpush1.bf16.msra.mxu0 0
      %1671 = vmatprep.subr.bf16.mxu0 0
      %1672 = vmatpush1.bf16.msra.mxu0 0
      %1673 = vmatprep.subr.bf16.mxu0 0
      %1674 = vmatpush1.bf16.msra.mxu0 0
      %1675 = vmatprep.subr.bf16.mxu0 0
      %1676 = vmatpush1.bf16.msra.mxu0 0
      %1677 = vmatprep.subr.bf16.mxu0 0
      %1678 = vmatpush1.bf16.msra.mxu0 0
      %1679 = vmatprep.subr.bf16.mxu0 0
      %1680 = vmatpush1.bf16.msra.mxu0 0
      %1681 = vmatprep.mubr.bf16.mxu0 0
      %1682 = vmatmul.mubr.bf16.gmra.mrb[0].mxu0 %v1647
      %v1683 = vpop.f32.mrb[0].mxu0
      %v1684 = vadd.f32 %v1632, %v1683
      %v1685 = vpop.f32.mrb[0].mxu0
      %v1686 = vpop.f32.mrb[0].mxu0
      %v1687 = vpop.f32.mrb[0].mxu0
      %1688 = vdwg.mxu0
      %v1689 = vld [vmem:[%s14] sm:$0xf]
      %v1690 = vld [vmem:[%s14 + $0x4] sm:$0xf]
      %v1691 = vld [vmem:[%s14 + $0x8] sm:$0xf]
      %v1692 = vld [vmem:[%s14 + $0xc] sm:$0xf]
      %v1693 = vld [vmem:[%s15] sm:$0x1]
      %v1695 = vlaneseq
      %v1696 = vshrl.u32 %v1695, 7
      %v1697 = vsub.s32 0, %v1696
      %v1698 = vrot.slane %v1693, %v1697
      %v1704 = vunpack.c.l.b16 %v1689
      %v1705 = vunpack.c.l.b16 %v1690
      %v1706 = vunpack.c.l.b16 %v1691
      %v1707 = vunpack.c.l.b16 %v1692
      %v1708 = vpack.c.b16 %v1705, %v1704
      %v1709 = vpack.c.b16 %v1707, %v1706
      %v1713 = vsel %vm895, %v1622, 0
      %1715 = vmatprep.subr.bf16.mxu0 0
      %1716 = vmatpush1.bf16.msra.mxu0 %v1708
      %1717 = vmatprep.subr.bf16.mxu0 0
      %1718 = vmatpush1.bf16.msra.mxu0 %v1709
      %1719 = vmatprep.subr.bf16.mxu0 0
      %1720 = vmatpush1.bf16.msra.mxu0 0
      %1721 = vmatprep.subr.bf16.mxu0 0
      %1722 = vmatpush1.bf16.msra.mxu0 0
      %1723 = vmatprep.subr.bf16.mxu0 0
      %1724 = vmatpush1.bf16.msra.mxu0 0
      %1725 = vmatprep.subr.bf16.mxu0 0
      %1726 = vmatpush1.bf16.msra.mxu0 0
      %1727 = vmatprep.subr.bf16.mxu0 0
      %1728 = vmatpush1.bf16.msra.mxu0 0
      %1729 = vmatprep.subr.bf16.mxu0 0
      %1730 = vmatpush1.bf16.msra.mxu0 0
      %1731 = vmatprep.subr.bf16.mxu0 0
      %1732 = vmatpush1.bf16.msra.mxu0 0
      %1733 = vmatprep.subr.bf16.mxu0 0
      %1734 = vmatpush1.bf16.msra.mxu0 0
      %1735 = vmatprep.subr.bf16.mxu0 0
      %1736 = vmatpush1.bf16.msra.mxu0 0
      %1737 = vmatprep.subr.bf16.mxu0 0
      %1738 = vmatpush1.bf16.msra.mxu0 0
      %1739 = vmatprep.subr.bf16.mxu0 0
      %1740 = vmatpush1.bf16.msra.mxu0 0
      %1741 = vmatprep.subr.bf16.mxu0 0
      %1742 = vmatpush1.bf16.msra.mxu0 0
      %1743 = vmatprep.subr.bf16.mxu0 0
      %1744 = vmatpush1.bf16.msra.mxu0 0
      %1745 = vmatprep.subr.bf16.mxu0 0
      %1746 = vmatpush1.bf16.msra.mxu0 0
      %1747 = vmatprep.mubr.bf16.mxu0 0
      %1748 = vmatmul.mubr.bf16.gmra.mrb[0].mxu0 %v1713
      %v1749 = vpop.f32.mrb[0].mxu0
      %v1750 = vadd.f32 %v1698, %v1749
      %v1751 = vpop.f32.mrb[0].mxu0
      %v1752 = vpop.f32.mrb[0].mxu0
      %v1753 = vadd.f32 %v1698, %v1752
      %v1754 = vpop.f32.mrb[0].mxu0
      %1755 = vdwg.mxu0
      %v1756 = vld [vmem:[%s16] sm:$0xf]
      %v1757 = vld [vmem:[%s16 + $0x4] sm:$0xf]
      %v1758 = vld [vmem:[%s16 + $0x8] sm:$0xf]
      %v1759 = vld [vmem:[%s16 + $0xc] sm:$0xf]
      %v1760 = vld [vmem:[%s17] sm:$0x1]
      %v1762 = vlaneseq
      %v1763 = vshrl.u32 %v1762, 7
      %v1764 = vsub.s32 0, %v1763
      %v1765 = vrot.slane %v1760, %v1764
      %v1771 = vunpack.c.l.b16 %v1756
      %v1772 = vunpack.c.l.b16 %v1757
      %v1773 = vunpack.c.l.b16 %v1758
      %v1774 = vunpack.c.l.b16 %v1759
      %v1775 = vpack.c.b16 %v1772, %v1771
      %v1776 = vpack.c.b16 %v1774, %v1773
      %1779 = vmatprep.subr.bf16.mxu0 0
      %1780 = vmatpush1.bf16.msra.mxu0 %v1775
      %1781 = vmatprep.subr.bf16.mxu0 0
      %1782 = vmatpush1.bf16.msra.mxu0 %v1776
      %1783 = vmatprep.subr.bf16.mxu0 0
      %1784 = vmatpush1.bf16.msra.mxu0 0
      %1785 = vmatprep.subr.bf16.mxu0 0
      %1786 = vmatpush1.bf16.msra.mxu0 0
      %1787 = vmatprep.subr.bf16.mxu0 0
      %1788 = vmatpush1.bf16.msra.mxu0 0
      %1789 = vmatprep.subr.bf16.mxu0 0
      %1790 = vmatpush1.bf16.msra.mxu0 0
      %1791 = vmatprep.subr.bf16.mxu0 0
      %1792 = vmatpush1.bf16.msra.mxu0 0
      %1793 = vmatprep.subr.bf16.mxu0 0
      %1794 = vmatpush1.bf16.msra.mxu0 0
      %1795 = vmatprep.subr.bf16.mxu0 0
      %1796 = vmatpush1.bf16.msra.mxu0 0
      %1797 = vmatprep.subr.bf16.mxu0 0
      %1798 = vmatpush1.bf16.msra.mxu0 0
      %1799 = vmatprep.subr.bf16.mxu0 0
      %1800 = vmatpush1.bf16.msra.mxu0 0
      %1801 = vmatprep.subr.bf16.mxu0 0
      %1802 = vmatpush1.bf16.msra.mxu0 0
      %1803 = vmatprep.subr.bf16.mxu0 0
      %1804 = vmatpush1.bf16.msra.mxu0 0
      %1805 = vmatprep.subr.bf16.mxu0 0
      %1806 = vmatpush1.bf16.msra.mxu0 0
      %1807 = vmatprep.subr.bf16.mxu0 0
      %1808 = vmatpush1.bf16.msra.mxu0 0
      %1809 = vmatprep.subr.bf16.mxu0 0
      %1810 = vmatpush1.bf16.msra.mxu0 0
      %1811 = vmatprep.mubr.bf16.mxu0 0
      %1812 = vmatmul.mubr.bf16.gmra.mrb[0].mxu0 %v1713
      %v1813 = vpop.f32.mrb[0].mxu0
      %v1814 = vadd.f32 %v1765, %v1813
      %v1815 = vpop.f32.mrb[0].mxu0
      %v1816 = vpop.f32.mrb[0].mxu0
      %v1817 = vadd.f32 %v1765, %v1816
      %v1818 = vpop.f32.mrb[0].mxu0
      %1819 = vdwg.mxu0
      %v1820 = vpack.c.bf16 %v1684, %v1684
      %v1821 = vpack.c.bf16 %v1753, %v1750
      %v1823 = vsel %vm1067, %v1820, 0
      %v1826 = vsel %vm1067, %v1821, 0
      %1828 = vmatprep.subr.bf16.mxu0 0
      %1829 = vmatpush1.bf16.xpose.msra.mxu0 %v1826
      %1830 = vmatprep.subr.bf16.mxu0 0
      %1831 = vmatpush1.bf16.xpose.msra.mxu0 0
      %1832 = vmatprep.subr.bf16.mxu0 0
      %1833 = vmatpush1.bf16.xpose.msra.mxu0 0
      %1834 = vmatprep.subr.bf16.mxu0 0
      %1835 = vmatpush1.bf16.xpose.msra.mxu0 0
      %1836 = vmatprep.subr.bf16.mxu0 0
      %1837 = vmatpush1.bf16.xpose.msra.mxu0 0
      %1838 = vmatprep.subr.bf16.mxu0 0
      %1839 = vmatpush1.bf16.xpose.msra.mxu0 0
      %1840 = vmatprep.subr.bf16.mxu0 0
      %1841 = vmatpush1.bf16.xpose.msra.mxu0 0
      %1842 = vmatprep.subr.bf16.mxu0 0
      %1843 = vmatpush1.bf16.xpose.msra.mxu0 0
      %1844 = vmatprep.subr.bf16.mxu0 0
      %1845 = vmatpush1.bf16.xpose.msra.mxu0 0
      %1846 = vmatprep.subr.bf16.mxu0 0
      %1847 = vmatpush1.bf16.xpose.msra.mxu0 0
      %1848 = vmatprep.subr.bf16.mxu0 0
      %1849 = vmatpush1.bf16.xpose.msra.mxu0 0
      %1850 = vmatprep.subr.bf16.mxu0 0
      %1851 = vmatpush1.bf16.xpose.msra.mxu0 0
      %1852 = vmatprep.subr.bf16.mxu0 0
      %1853 = vmatpush1.bf16.xpose.msra.mxu0 0
      %1854 = vmatprep.subr.bf16.mxu0 0
      %1855 = vmatpush1.bf16.xpose.msra.mxu0 0
      %1856 = vmatprep.subr.bf16.mxu0 0
      %1857 = vmatpush1.bf16.xpose.msra.mxu0 0
      %1858 = vmatprep.subr.bf16.mxu0 0
      %1859 = vmatpush1.bf16.xpose.msra.mxu0 0
      %1860 = vmatprep.mubr.bf16.mxu0 0
      %1861 = vmatmul.mubr.bf16.gmra.mrb[0].mxu0 %v1823
      %v1862 = vpop.f32.mrb[0].mxu0
      %v1863 = vadd.f32 0.0, %v1862
      %v1864 = vpop.f32.mrb[0].mxu0
      %v1865 = vpop.f32.mrb[0].mxu0
      %v1866 = vpop.f32.mrb[0].mxu0
      %1867 = vdwg.mxu0
      %vm1868 = vcmask 80896
      %v1869 = vsel %vm1868, %v1863, -inf
      %1870 = vmax.xlane.f32.xlu0 %v1869
      %v1871 = vpop.xlane.xlu0 %1870
      %v1872 = vsub.f32 %v1863, %v1871
      %v1873 = vmul.f32 %v1872, 1.442695
      %v1874 = vpow.pop %v1873
      %v1875 = vsel %vm1868, %v1874, 0.0
      %1876 = vadd.xlane.f32.xlu0 %v1875
      %v1877 = vpop.xlane.xlu0 %1876
      %v1878 = vrcp.pop %v1877
      %v1879 = vmul.f32 %v1874, %v1878
      %v1880 = vpack.c.bf16 %v1879, %v1879
      %v1881 = vpack.c.bf16 %v1817, %v1814
      %v1883 = vsel %vm1868, %v1880, 0
      %vm1885 = vcmask 1044480
      %v1887 = vsel %vm1885, %v1881, 0
      %1889 = vmatprep.subr.bf16.mxu0 0
      %1890 = vmatpush1.bf16.msra.mxu0 %v1887
      %1891 = vmatprep.subr.bf16.mxu0 0
      %1892 = vmatpush1.bf16.msra.mxu0 0
      %1893 = vmatprep.subr.bf16.mxu0 0
      %1894 = vmatpush1.bf16.msra.mxu0 0
      %1895 = vmatprep.subr.bf16.mxu0 0
      %1896 = vmatpush1.bf16.msra.mxu0 0
      %1897 = vmatprep.subr.bf16.mxu0 0
      %1898 = vmatpush1.bf16.msra.mxu0 0
      %1899 = vmatprep.subr.bf16.mxu0 0
      %1900 = vmatpush1.bf16.msra.mxu0 0
      %1901 = vmatprep.subr.bf16.mxu0 0
      %1902 = vmatpush1.bf16.msra.mxu0 0
      %1903 = vmatprep.subr.bf16.mxu0 0
      %1904 = vmatpush1.bf16.msra.mxu0 0
      %1905 = vmatprep.subr.bf16.mxu0 0
      %1906 = vmatpush1.bf16.msra.mxu0 0
      %1907 = vmatprep.subr.bf16.mxu0 0
      %1908 = vmatpush1.bf16.msra.mxu0 0
      %1909 = vmatprep.subr.bf16.mxu0 0
      %1910 = vmatpush1.bf16.msra.mxu0 0
      %1911 = vmatprep.subr.bf16.mxu0 0
      %1912 = vmatpush1.bf16.msra.mxu0 0
      %1913 = vmatprep.subr.bf16.mxu0 0
      %1914 = vmatpush1.bf16.msra.mxu0 0
      %1915 = vmatprep.subr.bf16.mxu0 0
      %1916 = vmatpush1.bf16.msra.mxu0 0
      %1917 = vmatprep.subr.bf16.mxu0 0
      %1918 = vmatpush1.bf16.msra.mxu0 0
      %1919 = vmatprep.subr.bf16.mxu0 0
      %1920 = vmatpush1.bf16.msra.mxu0 0
      %1921 = vmatprep.mubr.bf16.mxu0 0
      %1922 = vmatmul.mubr.bf16.gmra.mrb[0].mxu0 %v1883
      %v1923 = vpop.f32.mrb[0].mxu0
      %v1924 = vadd.f32 0.0, %v1923
      %v1925 = vpop.f32.mrb[0].mxu0
      %v1926 = vpop.f32.mrb[0].mxu0
      %v1927 = vpop.f32.mrb[0].mxu0
      %1928 = vdwg.mxu0
      %v1929 = vpack.c.bf16 %v1924, %v1924
      %v1930 = vld [vmem:[%s18] sm:$0xf]
      %v1931 = vld [vmem:[%s18 + $0x4] sm:$0xf]
      %s1932 = scalar_lea.vmem %s12, 16
      %v1933 = vld [vmem:[%s1932] sm:$0xf]
      %v1934 = vld [vmem:[%s1932 + $0x4] sm:$0xf]
      %v1935 = vld [vmem:[%s1932 + $0x8] sm:$0xf]
      %v1936 = vld [vmem:[%s1932 + $0xc] sm:$0xf]
      %s1937 = scalar_lea.vmem %s13, 1
      %v1938 = vld [vmem:[%s1937] sm:$0x1]
      %v1940 = vlaneseq
      %v1941 = vshrl.u32 %v1940, 7
      %v1942 = vsub.s32 0, %v1941
      %v1943 = vrot.slane %v1938, %v1942
      %v1949 = vunpack.c.l.b16 %v1933
      %v1950 = vunpack.c.l.b16 %v1934
      %v1951 = vunpack.c.l.b16 %v1935
      %v1952 = vunpack.c.l.b16 %v1936
      %v1953 = vpack.c.b16 %v1950, %v1949
      %v1954 = vpack.c.b16 %v1952, %v1951
      %1957 = vmatprep.subr.bf16.mxu0 0
      %1958 = vmatpush1.bf16.msra.mxu0 %v1953
      %1959 = vmatprep.subr.bf16.mxu0 0
      %1960 = vmatpush1.bf16.msra.mxu0 %v1954
      %1961 = vmatprep.subr.bf16.mxu0 0
      %1962 = vmatpush1.bf16.msra.mxu0 0
      %1963 = vmatprep.subr.bf16.mxu0 0
      %1964 = vmatpush1.bf16.msra.mxu0 0
      %1965 = vmatprep.subr.bf16.mxu0 0
      %1966 = vmatpush1.bf16.msra.mxu0 0
      %1967 = vmatprep.subr.bf16.mxu0 0
      %1968 = vmatpush1.bf16.msra.mxu0 0
      %1969 = vmatprep.subr.bf16.mxu0 0
      %1970 = vmatpush1.bf16.msra.mxu0 0
      %1971 = vmatprep.subr.bf16.mxu0 0
      %1972 = vmatpush1.bf16.msra.mxu0 0
      %1973 = vmatprep.subr.bf16.mxu0 0
      %1974 = vmatpush1.bf16.msra.mxu0 0
      %1975 = vmatprep.subr.bf16.mxu0 0
      %1976 = vmatpush1.bf16.msra.mxu0 0
      %1977 = vmatprep.subr.bf16.mxu0 0
      %1978 = vmatpush1.bf16.msra.mxu0 0
      %1979 = vmatprep.subr.bf16.mxu0 0
      %1980 = vmatpush1.bf16.msra.mxu0 0
      %1981 = vmatprep.subr.bf16.mxu0 0
      %1982 = vmatpush1.bf16.msra.mxu0 0
      %1983 = vmatprep.subr.bf16.mxu0 0
      %1984 = vmatpush1.bf16.msra.mxu0 0
      %1985 = vmatprep.subr.bf16.mxu0 0
      %1986 = vmatpush1.bf16.msra.mxu0 0
      %1987 = vmatprep.subr.bf16.mxu0 0
      %1988 = vmatpush1.bf16.msra.mxu0 0
      %1989 = vmatprep.mubr.bf16.mxu0 0
      %1990 = vmatmul.mubr.bf16.gmra.mrb[0].mxu0 %v1647
      %v1991 = vpop.f32.mrb[0].mxu0
      %v1992 = vadd.f32 %v1943, %v1991
      %v1993 = vpop.f32.mrb[0].mxu0
      %v1994 = vpop.f32.mrb[0].mxu0
      %v1995 = vpop.f32.mrb[0].mxu0
      %1996 = vdwg.mxu0
      %s1997 = scalar_lea.vmem %s14, 16
      %v1998 = vld [vmem:[%s1997] sm:$0xf]
      %v1999 = vld [vmem:[%s1997 + $0x4] sm:$0xf]
      %v2000 = vld [vmem:[%s1997 + $0x8] sm:$0xf]
      %v2001 = vld [vmem:[%s1997 + $0xc] sm:$0xf]
      %s2002 = scalar_lea.vmem %s15, 1
      %v2003 = vld [vmem:[%s2002] sm:$0x1]
      %v2005 = vlaneseq
      %v2006 = vshrl.u32 %v2005, 7
      %v2007 = vsub.s32 0, %v2006
      %v2008 = vrot.slane %v2003, %v2007
      %v2014 = vunpack.c.l.b16 %v1998
      %v2015 = vunpack.c.l.b16 %v1999
      %v2016 = vunpack.c.l.b16 %v2000
      %v2017 = vunpack.c.l.b16 %v2001
      %v2018 = vpack.c.b16 %v2015, %v2014
      %v2019 = vpack.c.b16 %v2017, %v2016
      %2022 = vmatprep.subr.bf16.mxu0 0
      %2023 = vmatpush1.bf16.msra.mxu0 %v2018
      %2024 = vmatprep.subr.bf16.mxu0 0
      %2025 = vmatpush1.bf16.msra.mxu0 %v2019
      %2026 = vmatprep.subr.bf16.mxu0 0
      %2027 = vmatpush1.bf16.msra.mxu0 0
      %2028 = vmatprep.subr.bf16.mxu0 0
      %2029 = vmatpush1.bf16.msra.mxu0 0
      %2030 = vmatprep.subr.bf16.mxu0 0
      %2031 = vmatpush1.bf16.msra.mxu0 0
      %2032 = vmatprep.subr.bf16.mxu0 0
      %2033 = vmatpush1.bf16.msra.mxu0 0
      %2034 = vmatprep.subr.bf16.mxu0 0
      %2035 = vmatpush1.bf16.msra.mxu0 0
      %2036 = vmatprep.subr.bf16.mxu0 0
      %2037 = vmatpush1.bf16.msra.mxu0 0
      %2038 = vmatprep.subr.bf16.mxu0 0
      %2039 = vmatpush1.bf16.msra.mxu0 0
      %2040 = vmatprep.subr.bf16.mxu0 0
      %2041 = vmatpush1.bf16.msra.mxu0 0
      %2042 = vmatprep.subr.bf16.mxu0 0
      %2043 = vmatpush1.bf16.msra.mxu0 0
      %2044 = vmatprep.subr.bf16.mxu0 0
      %2045 = vmatpush1.bf16.msra.mxu0 0
      %2046 = vmatprep.subr.bf16.mxu0 0
      %2047 = vmatpush1.bf16.msra.mxu0 0
      %2048 = vmatprep.subr.bf16.mxu0 0
      %2049 = vmatpush1.bf16.msra.mxu0 0
      %2050 = vmatprep.subr.bf16.mxu0 0
      %2051 = vmatpush1.bf16.msra.mxu0 0
      %2052 = vmatprep.subr.bf16.mxu0 0
      %2053 = vmatpush1.bf16.msra.mxu0 0
      %2054 = vmatprep.mubr.bf16.mxu0 0
      %2055 = vmatmul.mubr.bf16.gmra.mrb[0].mxu0 %v1713
      %v2056 = vpop.f32.mrb[0].mxu0
      %v2057 = vadd.f32 %v2008, %v2056
      %v2058 = vpop.f32.mrb[0].mxu0
      %v2059 = vpop.f32.mrb[0].mxu0
      %v2060 = vadd.f32 %v2008, %v2059
      %v2061 = vpop.f32.mrb[0].mxu0
      %2062 = vdwg.mxu0
      %s2063 = scalar_lea.vmem %s16, 16
      %v2064 = vld [vmem:[%s2063] sm:$0xf]
      %v2065 = vld [vmem:[%s2063 + $0x4] sm:$0xf]
      %v2066 = vld [vmem:[%s2063 + $0x8] sm:$0xf]
      %v2067 = vld [vmem:[%s2063 + $0xc] sm:$0xf]
      %s2068 = scalar_lea.vmem %s17, 1
      %v2069 = vld [vmem:[%s2068] sm:$0x1]
      %v2071 = vlaneseq
      %v2072 = vshrl.u32 %v2071, 7
      %v2073 = vsub.s32 0, %v2072
      %v2074 = vrot.slane %v2069, %v2073
      %v2080 = vunpack.c.l.b16 %v2064
      %v2081 = vunpack.c.l.b16 %v2065
      %v2082 = vunpack.c.l.b16 %v2066
      %v2083 = vunpack.c.l.b16 %v2067
      %v2084 = vpack.c.b16 %v2081, %v2080
      %v2085 = vpack.c.b16 %v2083, %v2082
      %2088 = vmatprep.subr.bf16.mxu0 0
      %2089 = vmatpush1.bf16.msra.mxu0 %v2084
      %2090 = vmatprep.subr.bf16.mxu0 0
      %2091 = vmatpush1.bf16.msra.mxu0 %v2085
      %2092 = vmatprep.subr.bf16.mxu0 0
      %2093 = vmatpush1.bf16.msra.mxu0 0
      %2094 = vmatprep.subr.bf16.mxu0 0
      %2095 = vmatpush1.bf16.msra.mxu0 0
      %2096 = vmatprep.subr.bf16.mxu0 0
      %2097 = vmatpush1.bf16.msra.mxu0 0
      %2098 = vmatprep.subr.bf16.mxu0 0
      %2099 = vmatpush1.bf16.msra.mxu0 0
      %2100 = vmatprep.subr.bf16.mxu0 0
      %2101 = vmatpush1.bf16.msra.mxu0 0
      %2102 = vmatprep.subr.bf16.mxu0 0
      %2103 = vmatpush1.bf16.msra.mxu0 0
      %2104 = vmatprep.subr.bf16.mxu0 0
      %2105 = vmatpush1.bf16.msra.mxu0 0
      %2106 = vmatprep.subr.bf16.mxu0 0
      %2107 = vmatpush1.bf16.msra.mxu0 0
      %2108 = vmatprep.subr.bf16.mxu0 0
      %2109 = vmatpush1.bf16.msra.mxu0 0
      %2110 = vmatprep.subr.bf16.mxu0 0
      %2111 = vmatpush1.bf16.msra.mxu0 0
      %2112 = vmatprep.subr.bf16.mxu0 0
      %2113 = vmatpush1.bf16.msra.mxu0 0
      %2114 = vmatprep.subr.bf16.mxu0 0
      %2115 = vmatpush1.bf16.msra.mxu0 0
      %2116 = vmatprep.subr.bf16.mxu0 0
      %2117 = vmatpush1.bf16.msra.mxu0 0
      %2118 = vmatprep.subr.bf16.mxu0 0
      %2119 = vmatpush1.bf16.msra.mxu0 0
      %2120 = vmatprep.mubr.bf16.mxu0 0
      %2121 = vmatmul.mubr.bf16.gmra.mrb[0].mxu0 %v1713
      %v2122 = vpop.f32.mrb[0].mxu0
      %v2123 = vadd.f32 %v2074, %v2122
      %v2124 = vpop.f32.mrb[0].mxu0
      %v2125 = vpop.f32.mrb[0].mxu0
      %v2126 = vadd.f32 %v2074, %v2125
      %v2127 = vpop.f32.mrb[0].mxu0
      %2128 = vdwg.mxu0
      %v2129 = vpack.c.bf16 %v1992, %v1992
      %v2130 = vpack.c.bf16 %v2060, %v2057
      %v2132 = vsel %vm1067, %v2129, 0
      %v2135 = vsel %vm1067, %v2130, 0
      %2137 = vmatprep.subr.bf16.mxu0 0
      %2138 = vmatpush1.bf16.xpose.msra.mxu0 %v2135
      %2139 = vmatprep.subr.bf16.mxu0 0
      %2140 = vmatpush1.bf16.xpose.msra.mxu0 0
      %2141 = vmatprep.subr.bf16.mxu0 0
      %2142 = vmatpush1.bf16.xpose.msra.mxu0 0
      %2143 = vmatprep.subr.bf16.mxu0 0
      %2144 = vmatpush1.bf16.xpose.msra.mxu0 0
      %2145 = vmatprep.subr.bf16.mxu0 0
      %2146 = vmatpush1.bf16.xpose.msra.mxu0 0
      %2147 = vmatprep.subr.bf16.mxu0 0
      %2148 = vmatpush1.bf16.xpose.msra.mxu0 0
      %2149 = vmatprep.subr.bf16.mxu0 0
      %2150 = vmatpush1.bf16.xpose.msra.mxu0 0
      %2151 = vmatprep.subr.bf16.mxu0 0
      %2152 = vmatpush1.bf16.xpose.msra.mxu0 0
      %2153 = vmatprep.subr.bf16.mxu0 0
      %2154 = vmatpush1.bf16.xpose.msra.mxu0 0
      %2155 = vmatprep.subr.bf16.mxu0 0
      %2156 = vmatpush1.bf16.xpose.msra.mxu0 0
      %2157 = vmatprep.subr.bf16.mxu0 0
      %2158 = vmatpush1.bf16.xpose.msra.mxu0 0
      %2159 = vmatprep.subr.bf16.mxu0 0
      %2160 = vmatpush1.bf16.xpose.msra.mxu0 0
      %2161 = vmatprep.subr.bf16.mxu0 0
      %2162 = vmatpush1.bf16.xpose.msra.mxu0 0
      %2163 = vmatprep.subr.bf16.mxu0 0
      %2164 = vmatpush1.bf16.xpose.msra.mxu0 0
      %2165 = vmatprep.subr.bf16.mxu0 0
      %2166 = vmatpush1.bf16.xpose.msra.mxu0 0
      %2167 = vmatprep.subr.bf16.mxu0 0
      %2168 = vmatpush1.bf16.xpose.msra.mxu0 0
      %2169 = vmatprep.mubr.bf16.mxu0 0
      %2170 = vmatmul.mubr.bf16.gmra.mrb[0].mxu0 %v2132
      %v2171 = vpop.f32.mrb[0].mxu0
      %v2172 = vadd.f32 0.0, %v2171
      %v2173 = vpop.f32.mrb[0].mxu0
      %v2174 = vpop.f32.mrb[0].mxu0
      %v2175 = vpop.f32.mrb[0].mxu0
      %2176 = vdwg.mxu0
      %v2177 = vsel %vm1868, %v2172, -inf
      %2178 = vmax.xlane.f32.xlu0 %v2177
      %v2179 = vpop.xlane.xlu0 %2178
      %v2180 = vsub.f32 %v2172, %v2179
      %v2181 = vmul.f32 %v2180, 1.442695
      %v2182 = vpow.pop %v2181
      %v2183 = vsel %vm1868, %v2182, 0.0
      %2184 = vadd.xlane.f32.xlu0 %v2183
      %v2185 = vpop.xlane.xlu0 %2184
      %v2186 = vrcp.pop %v2185
      %v2187 = vmul.f32 %v2182, %v2186
      %v2188 = vpack.c.bf16 %v2187, %v2187
      %v2189 = vpack.c.bf16 %v2126, %v2123
      %v2191 = vsel %vm1868, %v2188, 0
      %v2194 = vsel %vm1885, %v2189, 0
      %2196 = vmatprep.subr.bf16.mxu0 0
      %2197 = vmatpush1.bf16.msra.mxu0 %v2194
      %2198 = vmatprep.subr.bf16.mxu0 0
      %2199 = vmatpush1.bf16.msra.mxu0 0
      %2200 = vmatprep.subr.bf16.mxu0 0
      %2201 = vmatpush1.bf16.msra.mxu0 0
      %2202 = vmatprep.subr.bf16.mxu0 0
      %2203 = vmatpush1.bf16.msra.mxu0 0
      %2204 = vmatprep.subr.bf16.mxu0 0
      %2205 = vmatpush1.bf16.msra.mxu0 0
      %2206 = vmatprep.subr.bf16.mxu0 0
      %2207 = vmatpush1.bf16.msra.mxu0 0
      %2208 = vmatprep.subr.bf16.mxu0 0
      %2209 = vmatpush1.bf16.msra.mxu0 0
      %2210 = vmatprep.subr.bf16.mxu0 0
      %2211 = vmatpush1.bf16.msra.mxu0 0
      %2212 = vmatprep.subr.bf16.mxu0 0
      %2213 = vmatpush1.bf16.msra.mxu0 0
      %2214 = vmatprep.subr.bf16.mxu0 0
      %2215 = vmatpush1.bf16.msra.mxu0 0
      %2216 = vmatprep.subr.bf16.mxu0 0
      %2217 = vmatpush1.bf16.msra.mxu0 0
      %2218 = vmatprep.subr.bf16.mxu0 0
      %2219 = vmatpush1.bf16.msra.mxu0 0
      %2220 = vmatprep.subr.bf16.mxu0 0
      %2221 = vmatpush1.bf16.msra.mxu0 0
      %2222 = vmatprep.subr.bf16.mxu0 0
      %2223 = vmatpush1.bf16.msra.mxu0 0
      %2224 = vmatprep.subr.bf16.mxu0 0
      %2225 = vmatpush1.bf16.msra.mxu0 0
      %2226 = vmatprep.subr.bf16.mxu0 0
      %2227 = vmatpush1.bf16.msra.mxu0 0
      %2228 = vmatprep.mubr.bf16.mxu0 0
      %2229 = vmatmul.mubr.bf16.gmra.mrb[0].mxu0 %v2191
      %v2230 = vpop.f32.mrb[0].mxu0
      %v2231 = vadd.f32 0.0, %v2230
      %v2232 = vpop.f32.mrb[0].mxu0
      %v2233 = vpop.f32.mrb[0].mxu0
      %v2234 = vpop.f32.mrb[0].mxu0
      %2235 = vdwg.mxu0
      %v2236 = vpack.c.bf16 %v2231, %v2231
      %s2237 = scalar_lea.vmem %s18, 8
      %v2238 = vld [vmem:[%s2237] sm:$0xf]
      %v2239 = vld [vmem:[%s2237 + $0x4] sm:$0xf]
      %v2242 = vunpack.c.l.b16 %v2238
      %v2243 = vunpack.c.l.b16 %v2239
      %v2244 = vpack.c.b16 %v2243, %v2242
      %v2247 = vsel %vm1067, %v2236, 0
      %2249 = vmatprep.subr.bf16.mxu0 0
      %2250 = vmatpush1.bf16.msra.mxu0 %v2244
      %2251 = vmatprep.subr.bf16.mxu0 0
      %2252 = vmatpush1.bf16.msra.mxu0 0
      %2253 = vmatprep.subr.bf16.mxu0 0
      %2254 = vmatpush1.bf16.msra.mxu0 0
      %2255 = vmatprep.subr.bf16.mxu0 0
      %2256 = vmatpush1.bf16.msra.mxu0 0
      %2257 = vmatprep.subr.bf16.mxu0 0
      %2258 = vmatpush1.bf16.msra.mxu0 0
      %2259 = vmatprep.subr.bf16.mxu0 0
      %2260 = vmatpush1.bf16.msra.mxu0 0
      %2261 = vmatprep.subr.bf16.mxu0 0
      %2262 = vmatpush1.bf16.msra.mxu0 0
      %2263 = vmatprep.subr.bf16.mxu0 0
      %2264 = vmatpush1.bf16.msra.mxu0 0
      %2265 = vmatprep.subr.bf16.mxu0 0
      %2266 = vmatpush1.bf16.msra.mxu0 0
      %2267 = vmatprep.subr.bf16.mxu0 0
      %2268 = vmatpush1.bf16.msra.mxu0 0
      %2269 = vmatprep.subr.bf16.mxu0 0
      %2270 = vmatpush1.bf16.msra.mxu0 0
      %2271 = vmatprep.subr.bf16.mxu0 0
      %2272 = vmatpush1.bf16.msra.mxu0 0
      %2273 = vmatprep.subr.bf16.mxu0 0
      %2274 = vmatpush1.bf16.msra.mxu0 0
      %2275 = vmatprep.subr.bf16.mxu0 0
      %2276 = vmatpush1.bf16.msra.mxu0 0
      %2277 = vmatprep.subr.bf16.mxu0 0
      %2278 = vmatpush1.bf16.msra.mxu0 0
      %2279 = vmatprep.subr.bf16.mxu0 0
      %2280 = vmatpush1.bf16.msra.mxu0 0
      %2281 = vmatprep.mubr.bf16.mxu0 0
      %2282 = vmatmul.mubr.bf16.gmra.mrb[0].mxu0 %v2247
      %v2283 = vpop.f32.mrb[0].mxu0
      %v2284 = vadd.f32 0.0, %v2283
      %v2285 = vpop.f32.mrb[0].mxu0
      %v2286 = vpop.f32.mrb[0].mxu0
      %v2287 = vpop.f32.mrb[0].mxu0
      %2288 = vdwg.mxu0
      %v2291 = vunpack.c.l.b16 %v1930
      %v2292 = vunpack.c.l.b16 %v1931
      %v2293 = vpack.c.b16 %v2292, %v2291
      %v2296 = vsel %vm1067, %v1929, 0
      %2298 = vmatprep.subr.bf16.mxu0 0
      %2299 = vmatpush1.bf16.msra.mxu0 %v2293
      %2300 = vmatprep.subr.bf16.mxu0 0
      %2301 = vmatpush1.bf16.msra.mxu0 0
      %2302 = vmatprep.subr.bf16.mxu0 0
      %2303 = vmatpush1.bf16.msra.mxu0 0
      %2304 = vmatprep.subr.bf16.mxu0 0
      %2305 = vmatpush1.bf16.msra.mxu0 0
      %2306 = vmatprep.subr.bf16.mxu0 0
      %2307 = vmatpush1.bf16.msra.mxu0 0
      %2308 = vmatprep.subr.bf16.mxu0 0
      %2309 = vmatpush1.bf16.msra.mxu0 0
      %2310 = vmatprep.subr.bf16.mxu0 0
      %2311 = vmatpush1.bf16.msra.mxu0 0
      %2312 = vmatprep.subr.bf16.mxu0 0
      %2313 = vmatpush1.bf16.msra.mxu0 0
      %2314 = vmatprep.subr.bf16.mxu0 0
      %2315 = vmatpush1.bf16.msra.mxu0 0
      %2316 = vmatprep.subr.bf16.mxu0 0
      %2317 = vmatpush1.bf16.msra.mxu0 0
      %2318 = vmatprep.subr.bf16.mxu0 0
      %2319 = vmatpush1.bf16.msra.mxu0 0
      %2320 = vmatprep.subr.bf16.mxu0 0
      %2321 = vmatpush1.bf16.msra.mxu0 0
      %2322 = vmatprep.subr.bf16.mxu0 0
      %2323 = vmatpush1.bf16.msra.mxu0 0
      %2324 = vmatprep.subr.bf16.mxu0 0
      %2325 = vmatpush1.bf16.msra.mxu0 0
      %2326 = vmatprep.subr.bf16.mxu0 0
      %2327 = vmatpush1.bf16.msra.mxu0 0
      %2328 = vmatprep.subr.bf16.mxu0 0
      %2329 = vmatpush1.bf16.msra.mxu0 0
      %2330 = vmatprep.mubr.bf16.mxu0 0
      %2331 = vmatmul.mubr.bf16.gmra.mrb[0].mxu0 %v2296
      %v2332 = vpop.f32.mrb[0].mxu0
      %v2333 = vadd.f32 %v2284, %v2332
      %v2334 = vpop.f32.mrb[0].mxu0
      %v2335 = vpop.f32.mrb[0].mxu0
      %v2336 = vpop.f32.mrb[0].mxu0
      %2337 = vdwg.mxu0
      %v2338 = vld [vmem:[%s19] sm:$0x1]
      %v2340 = vlaneseq
      %v2341 = vshrl.u32 %v2340, 7
      %v2342 = vsub.s32 0, %v2341
      %v2343 = vrot.slane %v2338, %v2342
      %v2345 = vadd.f32 %v2333, %v2343
      %v2346 = vadd.f32 %v1620, %v2345
      %v2347 = vld [vmem:[%s20] sm:$0x1]
      %v2348 = vld [vmem:[%s21] sm:$0x1]
      %v2349 = vsel %vm895, %v2346, 0.0
      %2350 = vadd.xlane.f32.xlu0 %v2349
      %v2351 = vpop.xlane.xlu0 %2350
      %v2352 = vmul.f32 %v2351, %v1596
      %v2353 = vsub.f32 %v2346, %v2352
      %v2354 = vmul.f32 %v2353, %v2353
      %v2355 = vsel %vm895, %v2354, 0.0
      %2356 = vadd.xlane.f32.xlu0 %v2355
      %v2357 = vpop.xlane.xlu0 %2356
      %v2358 = vmul.f32 %v2357, %v1596
      %v2359 = vadd.f32 %v2358, 1e-05
      %v2360 = vrsqrt.pop %v2359
      %v2361 = vmul.f32 %v2353, %v2360
      %v2363 = vlaneseq
      %v2364 = vshrl.u32 %v2363, 7
      %v2365 = vsub.s32 0, %v2364
      %v2366 = vrot.slane %v2347, %v2365
      %v2368 = vmul.f32 %v2361, %v2366
      %v2370 = vlaneseq
      %v2371 = vshrl.u32 %v2370, 7
      %v2372 = vsub.s32 0, %v2371
      %v2373 = vrot.slane %v2348, %v2372
      %v2375 = vadd.f32 %v2368, %v2373
      %v2376 = vpack.c.bf16 %v2375, %v2375
      %v2377 = vld [vmem:[%s22] sm:$0xf]
      %v2378 = vld [vmem:[%s22 + $0x4] sm:$0xf]
      %v2379 = vld [vmem:[%s22 + $0x8] sm:$0xf]
      %v2380 = vld [vmem:[%s22 + $0xc] sm:$0xf]
      %v2381 = vld [vmem:[%s23] sm:$0x1]
      %v2383 = vlaneseq
      %v2384 = vshrl.u32 %v2383, 7
      %v2385 = vsub.s32 0, %v2384
      %v2386 = vrot.slane %v2381, %v2385
      %v2392 = vunpack.c.l.b16 %v2377
      %v2393 = vunpack.c.l.b16 %v2378
      %v2394 = vunpack.c.l.b16 %v2379
      %v2395 = vunpack.c.l.b16 %v2380
      %v2396 = vpack.c.b16 %v2393, %v2392
      %v2397 = vpack.c.b16 %v2395, %v2394
      %v2401 = vsel %vm895, %v2376, 0
      %2403 = vmatprep.subr.bf16.mxu0 0
      %2404 = vmatpush1.bf16.msra.mxu0 %v2396
      %2405 = vmatprep.subr.bf16.mxu0 0
      %2406 = vmatpush1.bf16.msra.mxu0 %v2397
      %2407 = vmatprep.subr.bf16.mxu0 0
      %2408 = vmatpush1.bf16.msra.mxu0 0
      %2409 = vmatprep.subr.bf16.mxu0 0
      %2410 = vmatpush1.bf16.msra.mxu0 0
      %2411 = vmatprep.subr.bf16.mxu0 0
      %2412 = vmatpush1.bf16.msra.mxu0 0
      %2413 = vmatprep.subr.bf16.mxu0 0
      %2414 = vmatpush1.bf16.msra.mxu0 0
      %2415 = vmatprep.subr.bf16.mxu0 0
      %2416 = vmatpush1.bf16.msra.mxu0 0
      %2417 = vmatprep.subr.bf16.mxu0 0
      %2418 = vmatpush1.bf16.msra.mxu0 0
      %2419 = vmatprep.subr.bf16.mxu0 0
      %2420 = vmatpush1.bf16.msra.mxu0 0
      %2421 = vmatprep.subr.bf16.mxu0 0
      %2422 = vmatpush1.bf16.msra.mxu0 0
      %2423 = vmatprep.subr.bf16.mxu0 0
      %2424 = vmatpush1.bf16.msra.mxu0 0
      %2425 = vmatprep.subr.bf16.mxu0 0
      %2426 = vmatpush1.bf16.msra.mxu0 0
      %2427 = vmatprep.subr.bf16.mxu0 0
      %2428 = vmatpush1.bf16.msra.mxu0 0
      %2429 = vmatprep.subr.bf16.mxu0 0
      %2430 = vmatpush1.bf16.msra.mxu0 0
      %2431 = vmatprep.subr.bf16.mxu0 0
      %2432 = vmatpush1.bf16.msra.mxu0 0
      %2433 = vmatprep.subr.bf16.mxu0 0
      %2434 = vmatpush1.bf16.msra.mxu0 0
      %2435 = vmatprep.mubr.bf16.mxu0 0
      %2436 = vmatmul.mubr.bf16.gmra.mrb[0].mxu0 %v2401
      %v2437 = vpop.f32.mrb[0].mxu0
      %v2438 = vadd.f32 %v2386, %v2437
      %v2439 = vpop.f32.mrb[0].mxu0
      %v2440 = vpop.f32.mrb[0].mxu0
      %v2441 = vpop.f32.mrb[0].mxu0
      %2442 = vdwg.mxu0
      %v2443 = vmax.f32 %v2438, 0.0
      %v2444 = vpack.c.bf16 %v2443, %v2443
      %v2445 = vld [vmem:[%s24] sm:$0xf]
      %v2446 = vld [vmem:[%s24 + $0x4] sm:$0xf]
      %v2447 = vld [vmem:[%s24 + $0x8] sm:$0xf]
      %v2448 = vld [vmem:[%s24 + $0xc] sm:$0xf]
      %v2449 = vld [vmem:[%s24 + $0x10] sm:$0xf]
      %v2450 = vld [vmem:[%s24 + $0x14] sm:$0xf]
      %v2451 = vld [vmem:[%s24 + $0x18] sm:$0xf]
      %v2452 = vld [vmem:[%s24 + $0x1c] sm:$0xf]
      %v2453 = vld [vmem:[%s25] sm:$0x1]
      %v2455 = vlaneseq
      %v2456 = vshrl.u32 %v2455, 7
      %v2457 = vsub.s32 0, %v2456
      %v2458 = vrot.slane %v2453, %v2457
      %v2468 = vunpack.c.l.b16 %v2445
      %v2469 = vunpack.c.l.b16 %v2446
      %v2470 = vunpack.c.l.b16 %v2447
      %v2471 = vunpack.c.l.b16 %v2448
      %v2472 = vunpack.c.l.b16 %v2449
      %v2473 = vunpack.c.l.b16 %v2450
      %v2474 = vunpack.c.l.b16 %v2451
      %v2475 = vunpack.c.l.b16 %v2452
      %v2476 = vpack.c.b16 %v2469, %v2468
      %v2477 = vpack.c.b16 %v2471, %v2470
      %v2478 = vpack.c.b16 %v2473, %v2472
      %v2479 = vpack.c.b16 %v2475, %v2474
      %vm2484 = vcmask 523264
      %v2486 = vsel %vm2484, %v2444, 0
      %2488 = vmatprep.subr.bf16.mxu0 0
      %2489 = vmatpush1.bf16.msra.mxu0 %v2476
      %2490 = vmatprep.subr.bf16.mxu0 0
      %2491 = vmatpush1.bf16.msra.mxu0 %v2477
      %2492 = vmatprep.subr.bf16.mxu0 0
      %2493 = vmatpush1.bf16.msra.mxu0 %v2478
      %2494 = vmatprep.subr.bf16.mxu0 0
      %2495 = vmatpush1.bf16.msra.mxu0 %v2479
      %2496 = vmatprep.subr.bf16.mxu0 0
      %2497 = vmatpush1.bf16.msra.mxu0 0
      %2498 = vmatprep.subr.bf16.mxu0 0
      %2499 = vmatpush1.bf16.msra.mxu0 0
      %2500 = vmatprep.subr.bf16.mxu0 0
      %2501 = vmatpush1.bf16.msra.mxu0 0
      %2502 = vmatprep.subr.bf16.mxu0 0
      %2503 = vmatpush1.bf16.msra.mxu0 0
      %2504 = vmatprep.subr.bf16.mxu0 0
      %2505 = vmatpush1.bf16.msra.mxu0 0
      %2506 = vmatprep.subr.bf16.mxu0 0
      %2507 = vmatpush1.bf16.msra.mxu0 0
      %2508 = vmatprep.subr.bf16.mxu0 0
      %2509 = vmatpush1.bf16.msra.mxu0 0
      %2510 = vmatprep.subr.bf16.mxu0 0
      %2511 = vmatpush1.bf16.msra.mxu0 0
      %2512 = vmatprep.subr.bf16.mxu0 0
      %2513 = vmatpush1.bf16.msra.mxu0 0
      %2514 = vmatprep.subr.bf16.mxu0 0
      %2515 = vmatpush1.bf16.msra.mxu0 0
      %2516 = vmatprep.subr.bf16.mxu0 0
      %2517 = vmatpush1.bf16.msra.mxu0 0
      %2518 = vmatprep.subr.bf16.mxu0 0
      %2519 = vmatpush1.bf16.msra.mxu0 0
      %2520 = vmatprep.mubr.bf16.mxu0 0
      %2521 = vmatmul.mubr.bf16.gmra.mrb[0].mxu0 %v2486
      %v2522 = vpop.f32.mrb[0].mxu0
      %v2523 = vadd.f32 %v2458, %v2522
      %v2524 = vpop.f32.mrb[0].mxu0
      %v2525 = vpop.f32.mrb[0].mxu0
      %v2526 = vpop.f32.mrb[0].mxu0
      %2527 = vdwg.mxu0
      %v2528 = vadd.f32 %v2375, %v2523
      %v2529 = vld [vmem:[%s26] sm:$0x1]
      %v2530 = vld [vmem:[%s27] sm:$0x1]
      %v2531 = vsel %vm895, %v2528, 0.0
      %2532 = vadd.xlane.f32.xlu0 %v2531
      %v2533 = vpop.xlane.xlu0 %2532
      %v2534 = vmul.f32 %v2533, %v1596
      %v2535 = vsub.f32 %v2528, %v2534
      %v2536 = vmul.f32 %v2535, %v2535
      %v2537 = vsel %vm895, %v2536, 0.0
      %2538 = vadd.xlane.f32.xlu0 %v2537
      %v2539 = vpop.xlane.xlu0 %2538
      %v2540 = vmul.f32 %v2539, %v1596
      %v2541 = vadd.f32 %v2540, 1e-05
      %v2542 = vrsqrt.pop %v2541
      %v2543 = vmul.f32 %v2535, %v2542
      %v2545 = vlaneseq
      %v2546 = vshrl.u32 %v2545, 7
      %v2547 = vsub.s32 0, %v2546
      %v2548 = vrot.slane %v2529, %v2547
      %v2550 = vmul.f32 %v2543, %v2548
      %v2552 = vlaneseq
      %v2553 = vshrl.u32 %v2552, 7
      %v2554 = vsub.s32 0, %v2553
      %v2555 = vrot.slane %v2530, %v2554
      %v2557 = vadd.f32 %v2550, %v2555
      %2558 = vst.msk [vmem:[%s860] sm:$0xff] %vm895, %v2557
      %p2559 = scmp.lt.s32.totalorder %s39, 1
      %s2560 = scalar_select %p2559, %s39, 1
      %s2561 = smul.addr %s2560, 8
      %s2562 = scalar_lea.vmem %s28, %s2561
      // Predicated region
      $region133: #{transformer_forward.7} parent=131 // pred_check
        %p2563 = pneg %p655
      $region134: #{transformer_forward.7} parent=131 // pred_check_branch
        %2565 = sbr.rel (%p2563) target = $region136
      $region135: #{transformer_forward.7} parent=131 // pred_region
        _
      $region136: #{transformer_forward.7} parent=131 // pred_fallthru
        _
    $region132: #{transformer_forward.7} parent=5 // pred_fallthru
      _
    %p2566 = scmp.le.s32.totalorder 2, %s34
    // Predicated region
    $region137: #{transformer_forward.7} parent=5 // pred_check
      %p2567 = pneg %p2566
    $region138: #{transformer_forward.7} parent=5 // pred_check_branch
      %2569 = sbr.rel (%p2567) target = $region140
    $region139: #{transformer_forward.7} parent=5 // pred_region
      %s2570 = ssub.s32 %s34, 2
      // Predicated region
      $region141: #{transformer_forward.7} parent=139 // pred_check
        %p2571 = pneg %p661
      $region142: #{transformer_forward.7} parent=139 // pred_check_branch
        %2573 = sbr.rel (%p2571) target = $region144
      $region143: #{transformer_forward.7} parent=139 // pred_region
        %p2574 = scmp.lt.s32.totalorder %s40, 1
        %s2575 = scalar_select %p2574, %s40, 1
        %s2576 = smul.addr %s2575, 8
        %s2577 = scalar_lea.vmem %s28, %s2576
      $region144: #{transformer_forward.7} parent=139 // pred_fallthru
        _
    $region140: #{transformer_forward.7} parent=5 // pred_fallthru
      _
  $region6: #{transformer_forward.7} parent=0 // loop_footer
    %s38 = sadd.s32 1, %s34
  $region7: #{transformer_forward.7} parent=0 // loop_footer_branch
    %33 = sbr.rel target = $region3
  $region8: #{transformer_forward.7} parent=0 // loop_exit
    _

</llo_original>
